<compile_context>
chip_gen: v5e
topology: v5e:2x2
jax: 0.10.0
libtpu: 0.0.40
codegen_flags: <defaults>
</compile_context>

<pallas_src>
import jax
import jax.numpy as jnp
from jax.experimental import pallas as pl
from jax.experimental.pallas import tpu as pltpu


# ------------------------------ kernel helpers ------------------------------ #

def _maxpool2x2_from_yref(H, W, y_ref, p_ref, a_ref):
    """2x2/stride-2 max pool of the (H*W, C) rows stored in y_ref[:H*W].

    Rows are flat NHWC (r = y*W + x).  x-direction pairs use stride-2 ref reads;
    y-direction pairs use a short unrolled loop of contiguous row-chunk maxes.
    Result rows are flat over (H//2, W//2).
    """
    M = H * W
    W2 = W // 2
    even = y_ref[pl.ds(0, M // 2, 2)]                    # (M//2, C): x even
    odd = y_ref[pl.ds(1, M // 2, 2)]                     # (M//2, C): x odd
    p_ref[pl.ds(0, M // 2)] = jnp.maximum(even, odd)
    for y2 in range(H // 2):
        top = p_ref[pl.ds((2 * y2) * W2, W2)]
        bot = p_ref[pl.ds((2 * y2 + 1) * W2, W2)]
        a_ref[pl.ds(y2 * W2, W2)] = jnp.maximum(top, bot)
    return a_ref[pl.ds(0, M // 4)]                       # (M//4, C)


def _conv_block(a, w_ref, shift, H, W, pad_ref, y_ref, p_ref, a_ref):
    """3x3 'same' conv (BN scale folded into w) + shift + ReLU + 2x2 max pool.

    a:      (H*W, C) f32 activation, flat NHWC rows (r = y*W + x)
    w_ref:  (3, 3*C, Cout) bf16; leading dim = kx, rows ordered ky*C + c
    shift:  (1, Cout) f32 folded conv-bias/BN shift
    Returns (H*W//4, Cout) f32.
    """
    M = H * W
    Cout = w_ref.shape[-1]
    off = ((W + 1 + 7) // 8) * 8          # activation start row inside pad_ref

    # Flat zero-padded copy of the activation: rows [off, off+M) hold `a`; the
    # zero rows above/below provide the vertical padding for the ky taps.
    pad_ref[...] = jnp.zeros_like(pad_ref)
    pad_ref[pl.ds(off, M)] = a

    # Horizontal (kx) zero padding is emulated with left/right edge masks.
    rows = jax.lax.broadcasted_iota(jnp.int32, (M, 1), 0)
    xpos = jnp.bitwise_and(rows, W - 1)   # W is a power of two
    edge_keep = {-1: xpos != 0, 0: None, 1: xpos != (W - 1)}

    acc = jnp.zeros((M, Cout), jnp.float32)
    for kx, dx in enumerate((-1, 0, 1)):
        # The three vertical taps are plain offset slices of the padded copy;
        # lane-concatenate so each kx tap is one K = 3*C matmul on the MXU.
        taps = [pad_ref[pl.ds(off + (ky - 1) * W + dx, M)] for ky in range(3)]
        lhs = jnp.concatenate(taps, axis=-1)             # (M, 3*C)
        keep = edge_keep[dx]
        if keep is not None:
            lhs = jnp.where(keep, lhs, 0.0)
        acc = acc + jnp.dot(lhs.astype(jnp.bfloat16), w_ref[kx],
                            preferred_element_type=jnp.float32)

    # shift + ReLU commute with max-pool (both monotone) -> apply after pooling.
    y_ref[pl.ds(0, M)] = acc
    pooled = _maxpool2x2_from_yref(H, W, y_ref, p_ref, a_ref)
    return jnp.maximum(pooled + shift, 0.0)


def convnet4_kernel(x1_ref, w1_ref, w2_ref, w3_ref, w4_ref, shift_ref,
                    wf1_ref, bf1_ref, wf2_ref, bf2_ref, o_ref,
                    pad_ref, y_ref, p_ref, a_ref):
    # ---- Block 1: whole 3x3 conv as one im2col matmul (K = 9*Cin = 27) ---- #
    # Chunk the 1024 output rows to bound live vector state.
    for i in range(4):
        y_ref[pl.ds(i * 256, 256)] = jnp.dot(
            x1_ref[0, pl.ds(i * 256, 256), :], w1_ref[...],
            preferred_element_type=jnp.float32)
    a1 = jnp.maximum(
        _maxpool2x2_from_yref(32, 32, y_ref, p_ref, a_ref) + shift_ref[0:1, :],
        0.0)                                                       # (256, 64)

    # ---- Blocks 2-4 ---- #
    a2 = _conv_block(a1, w2_ref, shift_ref[1:2, :], 16, 16,
                     pad_ref, y_ref, p_ref, a_ref)                 # (64, 64)
    a3 = _conv_block(a2, w3_ref, shift_ref[2:3, :], 8, 8,
                     pad_ref, y_ref, p_ref, a_ref)                 # (16, 64)
    a4 = _conv_block(a3, w4_ref, shift_ref[3:4, :], 4, 4,
                     pad_ref, y_ref, p_ref, a_ref)                 # (4, 64)

    # ---- Flatten (NHWC row order) + Linear(256->128) + Linear(128->n_out) ---- #
    # fc1 weights were re-indexed at pack time to rows j = p*64 + c (p = y*2 + x),
    # so the lane-concat of the 4 spatial rows is already in the right order.
    feat = jnp.concatenate([a4[0:1, :], a4[1:2, :], a4[2:3, :], a4[3:4, :]],
                           axis=-1)                                # (1, 256)
    h = jnp.dot(feat, wf1_ref[...],
                preferred_element_type=jnp.float32) + bf1_ref[...]  # (1, 128)
    out = jnp.dot(h, wf2_ref[...],
                  preferred_element_type=jnp.float32) + bf2_ref[...]  # (1, n_out)
    o_ref[0] = out


# --------------------------------- wrapper ---------------------------------- #

def _block1_im2col(x_nhwc):
    """(N, 32, 32, Cin) -> (N, 1024, 9*Cin) bf16 patches (tap-major, channel-minor)."""
    N, H, W, Cin = x_nhwc.shape
    xp = jnp.pad(x_nhwc, ((0, 0), (1, 1), (1, 1), (0, 0)))
    pats = [xp[:, ky:ky + H, kx:kx + W, :] for ky in range(3) for kx in range(3)]
    cols = jnp.concatenate(pats, axis=-1)                  # (N, H, W, 9*Cin)
    return cols.reshape(N, H * W, 9 * Cin).astype(jnp.bfloat16)


def convnet4_forward(x_nchw, kparams, num_class=5, num_output=3):
    """x_nchw: (N, 3, 32, 32) f32, matching the PyTorch module input."""
    N, Cin, H, W = x_nchw.shape
    assert H == 32 and W == 32 and Cin == 3, "kernel specialized for 3x32x32 input"

    x = jnp.transpose(x_nchw, (0, 2, 3, 1)).astype(jnp.float32)     # NCHW -> NHWC
    x1 = _block1_im2col(x)                                          # (N, 1024, 27)

    w1, w2, w3, w4, shifts, wf1, bf1, wf2, bf2 = kparams
    n_out = wf2.shape[-1]

    flops = 2 * N * (1024 * 27 * 64 + 256 * 576 * 64 + 64 * 576 * 64
                     + 16 * 576 * 64 + 256 * 128 + 128 * n_out)
    bytes_accessed = (x1.size * 2 + w1.size * 2
                      + (w2.size + w3.size + w4.size) * 2 + shifts.size * 4
                      + wf1.size * 4 + bf1.size * 4 + wf2.size * 4 + bf2.size * 4
                      + N * n_out * 4)

    out = pl.pallas_call(
        convnet4_kernel,
        out_shape=jax.ShapeDtypeStruct((N, 1, n_out), jnp.float32),
        grid=(N,),
        in_specs=[
            pl.BlockSpec((1, 1024, 27), lambda n: (n, 0, 0)),   # block-1 im2col
            pl.BlockSpec((27, 64), lambda n: (0, 0)),           # block-1 weights
            pl.BlockSpec((3, 192, 64), lambda n: (0, 0, 0)),    # block-2 weights
            pl.BlockSpec((3, 192, 64), lambda n: (0, 0, 0)),    # block-3 weights
            pl.BlockSpec((3, 192, 64), lambda n: (0, 0, 0)),    # block-4 weights
            pl.BlockSpec((4, 64), lambda n: (0, 0)),            # folded BN shifts
            pl.BlockSpec((256, 128), lambda n: (0, 0)),         # fc1 (NHWC order)
            pl.BlockSpec((1, 128), lambda n: (0, 0)),           # fc1 bias
            pl.BlockSpec((128, n_out), lambda n: (0, 0)),       # fc2
            pl.BlockSpec((1, n_out), lambda n: (0, 0)),         # fc2 bias
        ],
        out_specs=pl.BlockSpec((1, 1, n_out), lambda n: (n, 0, 0)),
        scratch_shapes=[
            pltpu.VMEM((304, 64), jnp.float32),    # zero-padded activation copy
            pltpu.VMEM((1024, 64), jnp.float32),   # conv output (pre-pool)
            pltpu.VMEM((512, 64), jnp.float32),    # x-pooled intermediate
            pltpu.VMEM((256, 64), jnp.float32),    # 2x2-pooled activation
        ],
        compiler_params=pltpu.CompilerParams(
            dimension_semantics=("parallel",)),
        cost_estimate=pl.CostEstimate(
            flops=int(flops), transcendentals=0,
            bytes_accessed=int(bytes_accessed)),
    )(x1, w1, w2, w3, w4, shifts, wf1, bf1, wf2, bf2)

    return out.reshape(N, num_class, num_output)


# ------------------------------ parameter prep ------------------------------ #

def init_params(key, num_channel=3, num_class=5, num_output=3, img_size=32):
    """Raw parameters mirroring the PyTorch module (HWIO convs, NCHW-flatten fc1)."""
    sz = img_size // 16
    chans = [num_channel, 64, 64, 64, 64]
    blocks = []
    for i in range(4):
        cin, cout = chans[i], chans[i + 1]
        key, kw, kb, kg, kbe, km, kv = jax.random.split(key, 7)
        blocks.append(dict(
            w=0.1 * jax.random.normal(kw, (3, 3, cin, cout), jnp.float32),   # HWIO
            b=0.1 * jax.random.normal(kb, (cout,), jnp.float32),
            gamma=1.0 + 0.1 * jax.random.normal(kg, (cout,), jnp.float32),
            beta=0.1 * jax.random.normal(kbe, (cout,), jnp.float32),
            rmean=0.1 * jax.random.normal(km, (cout,), jnp.float32),
            rvar=1.0 + 0.1 * jax.random.uniform(kv, (cout,), jnp.float32),
        ))
    feat = sz * sz * 64
    key, k1, k2, k3, k4 = jax.random.split(key, 5)
    w1 = jax.random.normal(k1, (feat, 128), jnp.float32) / jnp.sqrt(float(feat))
    b1 = 0.05 * jax.random.normal(k2, (128,), jnp.float32)
    w2 = jax.random.normal(k3, (128, num_class * num_output),
                           jnp.float32) / jnp.sqrt(128.0)
    b2 = 0.05 * jax.random.normal(k4, (num_class * num_output,), jnp.float32)
    return dict(blocks=blocks, fc=(w1, b1, w2, b2), sz=sz)


def pack_params(raw, eps=1e-5):
    """Fold eval-mode BN into the conv weights and pack layouts for the kernel."""
    packed_ws, shifts = [], []
    for i, blk in enumerate(raw["blocks"]):
        w, b = blk["w"], blk["b"]                              # (3,3,cin,cout) HWIO
        scale = blk["gamma"] / jnp.sqrt(blk["rvar"] + eps)
        shift = b * scale + blk["beta"] - blk["rmean"] * scale
        wf = w * scale[None, None, None, :]                    # fold BN scale
        cin, cout = w.shape[2], w.shape[3]
        if i == 0:
            # rows ordered (ky, kx, c) -> matches the wrapper im2col columns
            pw = wf.reshape(9 * cin, cout).astype(jnp.bfloat16)           # (27, 64)
        else:
            # leading dim kx; rows ordered ky*cin + c -> matches in-kernel taps
            pw = wf.transpose(1, 0, 2, 3).reshape(3, 3 * cin, cout)
            pw = pw.astype(jnp.bfloat16)                                  # (3,192,64)
        packed_ws.append(pw)
        shifts.append(shift)
    shifts = jnp.stack(shifts, axis=0).astype(jnp.float32)                # (4, 64)

    w1, b1, w2, b2 = raw["fc"]
    sz, C = raw["sz"], 64
    # fc1 rows are NCHW-flatten order c*(sz*sz) + p; rearrange to rows p*C + c so
    # the kernel consumes the NHWC flatten order with no transpose.
    wf1 = (w1.reshape(C, sz * sz, w1.shape[-1])
             .transpose(1, 0, 2)
             .reshape(sz * sz * C, w1.shape[-1])).astype(jnp.float32)     # (256, 128)
    bf1 = b1.reshape(1, -1).astype(jnp.float32)
    wf2 = w2.astype(jnp.float32)
    bf2 = b2.reshape(1, -1).astype(jnp.float32)
    return (packed_ws[0], packed_ws[1], packed_ws[2], packed_ws[3],
            shifts, wf1, bf1, wf2, bf2)


# ----------------------------------- main ----------------------------------- #

if __name__ == "__main__":
    key = jax.random.PRNGKey(0)
    kp, kx = jax.random.split(key)
    raw = init_params(kp, num_channel=3, num_class=5, num_output=3, img_size=32)
    kparams = pack_params(raw)
    x = jax.random.normal(kx, (2, 3, 32, 32), jnp.float32)

    fwd = jax.jit(lambda inp, prm: convnet4_forward(inp, prm, 5, 3))
    out = jax.block_until_ready(fwd(x, kparams))

    assert out.shape == (2, 5, 3), out.shape
    assert bool(jnp.all(jnp.isfinite(out)))
    print("KERNEL_OK")
</pallas_src>

<mosaic_0001>
module attributes {stable_mosaic.version = 11 : i64} {
  func.func @convnet4_kernel(%arg0: i32, %arg1: memref<1x1024x27xbf16, #tpu.memory_space<vmem>>, %arg2: memref<27x64xbf16, #tpu.memory_space<vmem>>, %arg3: memref<3x192x64xbf16, #tpu.memory_space<vmem>>, %arg4: memref<3x192x64xbf16, #tpu.memory_space<vmem>>, %arg5: memref<3x192x64xbf16, #tpu.memory_space<vmem>>, %arg6: memref<4x64xf32, #tpu.memory_space<vmem>>, %arg7: memref<256x128xf32, #tpu.memory_space<vmem>>, %arg8: memref<1x128xf32, #tpu.memory_space<vmem>>, %arg9: memref<128x15xf32, #tpu.memory_space<vmem>>, %arg10: memref<1x15xf32, #tpu.memory_space<vmem>>, %arg11: memref<1x1x15xf32, #tpu.memory_space<vmem>>, %arg12: memref<304x64xf32, #tpu.memory_space<vmem>>, %arg13: memref<1024x64xf32, #tpu.memory_space<vmem>>, %arg14: memref<512x64xf32, #tpu.memory_space<vmem>>, %arg15: memref<256x64xf32, #tpu.memory_space<vmem>>) attributes {dimension_semantics = [#tpu.dimension_semantics<parallel>], iteration_bounds = array<i64: 2>, scalar_prefetch = 0 : i64, scratch_operands = 4 : i64, tpu.core_type = #tpu.core_type<tc>, window_params = [{transform_indices = @transform_0, window_bounds = array<i64: 1, 1024, 27>}, {pipeline_mode = #tpu.pipeline_mode<synchronous>, transform_indices = @transform_1, window_bounds = array<i64: 27, 64>}, {pipeline_mode = #tpu.pipeline_mode<synchronous>, transform_indices = @transform_2, window_bounds = array<i64: 3, 192, 64>}, {pipeline_mode = #tpu.pipeline_mode<synchronous>, transform_indices = @transform_3, window_bounds = array<i64: 3, 192, 64>}, {pipeline_mode = #tpu.pipeline_mode<synchronous>, transform_indices = @transform_4, window_bounds = array<i64: 3, 192, 64>}, {pipeline_mode = #tpu.pipeline_mode<synchronous>, transform_indices = @transform_5, window_bounds = array<i64: 4, 64>}, {pipeline_mode = #tpu.pipeline_mode<synchronous>, transform_indices = @transform_6, window_bounds = array<i64: 256, 128>}, {pipeline_mode = #tpu.pipeline_mode<synchronous>, transform_indices = @transform_7, window_bounds = array<i64: 1, 128>}, {pipeline_mode = #tpu.pipeline_mode<synchronous>, transform_indices = @transform_8, window_bounds = array<i64: 128, 15>}, {pipeline_mode = #tpu.pipeline_mode<synchronous>, transform_indices = @transform_9, window_bounds = array<i64: 1, 15>}, {transform_indices = @transform_10, window_bounds = array<i64: 1, 1, 15>}]} {
    %c0 = arith.constant 0 : index
    %c0_0 = arith.constant 0 : index
    %c0_1 = arith.constant 0 : index
    %0 = vector.load %arg1[%c0, %c0_0, %c0_1] : memref<1x1024x27xbf16, #tpu.memory_space<vmem>>, vector<1x256x27xbf16>
    %1 = vector.shape_cast %0 : vector<1x256x27xbf16> to vector<256x27xbf16>
    %c0_2 = arith.constant 0 : index
    %c0_3 = arith.constant 0 : index
    %2 = vector.load %arg2[%c0_2, %c0_3] : memref<27x64xbf16, #tpu.memory_space<vmem>>, vector<27x64xbf16>
    %cst = arith.constant dense<0.000000e+00> : vector<256x64xf32>
    %3 = tpu.matmul %1, %2, %cst {dimension_numbers = #tpu.dot_dimension_numbers<[1], [0], [0], [1], [0, 0, 1, 1], [], []>} : vector<256x27xbf16>, vector<27x64xbf16>, vector<256x64xf32> -> vector<256x64xf32>
    %c0_4 = arith.constant 0 : index
    %c0_5 = arith.constant 0 : index
    %4 = vector.load %arg13[%c0_4, %c0_5] : memref<1024x64xf32, #tpu.memory_space<vmem>>, vector<256x64xf32>
    tpu.vector_store %arg13[%c0_4, %c0_5], %3 {strides = array<i32>} : memref<1024x64xf32, #tpu.memory_space<vmem>>, vector<256x64xf32>,
    %c0_6 = arith.constant 0 : index
    %c256 = arith.constant 256 : index
    %c0_7 = arith.constant 0 : index
    %5 = vector.load %arg1[%c0_6, %c256, %c0_7] : memref<1x1024x27xbf16, #tpu.memory_space<vmem>>, vector<1x256x27xbf16>
    %6 = vector.shape_cast %5 : vector<1x256x27xbf16> to vector<256x27xbf16>
    %c0_8 = arith.constant 0 : index
    %c0_9 = arith.constant 0 : index
    %7 = vector.load %arg2[%c0_8, %c0_9] : memref<27x64xbf16, #tpu.memory_space<vmem>>, vector<27x64xbf16>
    %cst_10 = arith.constant dense<0.000000e+00> : vector<256x64xf32>
    %8 = tpu.matmul %6, %7, %cst_10 {dimension_numbers = #tpu.dot_dimension_numbers<[1], [0], [0], [1], [0, 0, 1, 1], [], []>} : vector<256x27xbf16>, vector<27x64xbf16>, vector<256x64xf32> -> vector<256x64xf32>
    %c256_11 = arith.constant 256 : index
    %c0_12 = arith.constant 0 : index
    %9 = vector.load %arg13[%c256_11, %c0_12] : memref<1024x64xf32, #tpu.memory_space<vmem>>, vector<256x64xf32>
    tpu.vector_store %arg13[%c256_11, %c0_12], %8 {strides = array<i32>} : memref<1024x64xf32, #tpu.memory_space<vmem>>, vector<256x64xf32>,
    %c0_13 = arith.constant 0 : index
    %c512 = arith.constant 512 : index
    %c0_14 = arith.constant 0 : index
    %10 = vector.load %arg1[%c0_13, %c512, %c0_14] : memref<1x1024x27xbf16, #tpu.memory_space<vmem>>, vector<1x256x27xbf16>
    %11 = vector.shape_cast %10 : vector<1x256x27xbf16> to vector<256x27xbf16>
    %c0_15 = arith.constant 0 : index
    %c0_16 = arith.constant 0 : index
    %12 = vector.load %arg2[%c0_15, %c0_16] : memref<27x64xbf16, #tpu.memory_space<vmem>>, vector<27x64xbf16>
    %cst_17 = arith.constant dense<0.000000e+00> : vector<256x64xf32>
    %13 = tpu.matmul %11, %12, %cst_17 {dimension_numbers = #tpu.dot_dimension_numbers<[1], [0], [0], [1], [0, 0, 1, 1], [], []>} : vector<256x27xbf16>, vector<27x64xbf16>, vector<256x64xf32> -> vector<256x64xf32>
    %c512_18 = arith.constant 512 : index
    %c0_19 = arith.constant 0 : index
    %14 = vector.load %arg13[%c512_18, %c0_19] : memref<1024x64xf32, #tpu.memory_space<vmem>>, vector<256x64xf32>
    tpu.vector_store %arg13[%c512_18, %c0_19], %13 {strides = array<i32>} : memref<1024x64xf32, #tpu.memory_space<vmem>>, vector<256x64xf32>,
    %c0_20 = arith.constant 0 : index
    %c768 = arith.constant 768 : index
    %c0_21 = arith.constant 0 : index
    %15 = vector.load %arg1[%c0_20, %c768, %c0_21] : memref<1x1024x27xbf16, #tpu.memory_space<vmem>>, vector<1x256x27xbf16>
    %16 = vector.shape_cast %15 : vector<1x256x27xbf16> to vector<256x27xbf16>
    %c0_22 = arith.constant 0 : index
    %c0_23 = arith.constant 0 : index
    %17 = vector.load %arg2[%c0_22, %c0_23] : memref<27x64xbf16, #tpu.memory_space<vmem>>, vector<27x64xbf16>
    %cst_24 = arith.constant dense<0.000000e+00> : vector<256x64xf32>
    %18 = tpu.matmul %16, %17, %cst_24 {dimension_numbers = #tpu.dot_dimension_numbers<[1], [0], [0], [1], [0, 0, 1, 1], [], []>} : vector<256x27xbf16>, vector<27x64xbf16>, vector<256x64xf32> -> vector<256x64xf32>
    %c768_25 = arith.constant 768 : index
    %c0_26 = arith.constant 0 : index
    %19 = vector.load %arg13[%c768_25, %c0_26] : memref<1024x64xf32, #tpu.memory_space<vmem>>, vector<256x64xf32>
    tpu.vector_store %arg13[%c768_25, %c0_26], %18 {strides = array<i32>} : memref<1024x64xf32, #tpu.memory_space<vmem>>, vector<256x64xf32>,
    %c0_27 = arith.constant 0 : index
    %c0_28 = arith.constant 0 : index
    %20 = tpu.strided_load %arg13[%c0_27, %c0_28] {strides = array<i32: 2, 1>} : memref<1024x64xf32, #tpu.memory_space<vmem>>, vector<512x64xf32>
    %c1 = arith.constant 1 : index
    %c0_29 = arith.constant 0 : index
    %21 = tpu.strided_load %arg13[%c1, %c0_29] {strides = array<i32: 2, 1>} : memref<1024x64xf32, #tpu.memory_space<vmem>>, vector<512x64xf32>
    %22 = arith.maximumf %20, %21 : vector<512x64xf32>
    %c0_30 = arith.constant 0 : index
    %c0_31 = arith.constant 0 : index
    %23 = vector.load %arg14[%c0_30, %c0_31] : memref<512x64xf32, #tpu.memory_space<vmem>>, vector<512x64xf32>
    tpu.vector_store %arg14[%c0_30, %c0_31], %22 {strides = array<i32>} : memref<512x64xf32, #tpu.memory_space<vmem>>, vector<512x64xf32>,
    %c0_32 = arith.constant 0 : index
    %c0_33 = arith.constant 0 : index
    %24 = vector.load %arg14[%c0_32, %c0_33] : memref<512x64xf32, #tpu.memory_space<vmem>>, vector<16x64xf32>
    %c16 = arith.constant 16 : index
    %c0_34 = arith.constant 0 : index
    %25 = vector.load %arg14[%c16, %c0_34] : memref<512x64xf32, #tpu.memory_space<vmem>>, vector<16x64xf32>
    %26 = arith.maximumf %24, %25 : vector<16x64xf32>
    %c0_35 = arith.constant 0 : index
    %c0_36 = arith.constant 0 : index
    %27 = vector.load %arg15[%c0_35, %c0_36] : memref<256x64xf32, #tpu.memory_space<vmem>>, vector<16x64xf32>
    tpu.vector_store %arg15[%c0_35, %c0_36], %26 {strides = array<i32>} : memref<256x64xf32, #tpu.memory_space<vmem>>, vector<16x64xf32>,
    %c32 = arith.constant 32 : index
    %c0_37 = arith.constant 0 : index
    %28 = vector.load %arg14[%c32, %c0_37] : memref<512x64xf32, #tpu.memory_space<vmem>>, vector<16x64xf32>
    %c48 = arith.constant 48 : index
    %c0_38 = arith.constant 0 : index
    %29 = vector.load %arg14[%c48, %c0_38] : memref<512x64xf32, #tpu.memory_space<vmem>>, vector<16x64xf32>
    %30 = arith.maximumf %28, %29 : vector<16x64xf32>
    %c16_39 = arith.constant 16 : index
    %c0_40 = arith.constant 0 : index
    %31 = vector.load %arg15[%c16_39, %c0_40] : memref<256x64xf32, #tpu.memory_space<vmem>>, vector<16x64xf32>
    tpu.vector_store %arg15[%c16_39, %c0_40], %30 {strides = array<i32>} : memref<256x64xf32, #tpu.memory_space<vmem>>, vector<16x64xf32>,
    %c64 = arith.constant 64 : index
    %c0_41 = arith.constant 0 : index
    %32 = vector.load %arg14[%c64, %c0_41] : memref<512x64xf32, #tpu.memory_space<vmem>>, vector<16x64xf32>
    %c80 = arith.constant 80 : index
    %c0_42 = arith.constant 0 : index
    %33 = vector.load %arg14[%c80, %c0_42] : memref<512x64xf32, #tpu.memory_space<vmem>>, vector<16x64xf32>
    %34 = arith.maximumf %32, %33 : vector<16x64xf32>
    %c32_43 = arith.constant 32 : index
    %c0_44 = arith.constant 0 : index
    %35 = vector.load %arg15[%c32_43, %c0_44] : memref<256x64xf32, #tpu.memory_space<vmem>>, vector<16x64xf32>
    tpu.vector_store %arg15[%c32_43, %c0_44], %34 {strides = array<i32>} : memref<256x64xf32, #tpu.memory_space<vmem>>, vector<16x64xf32>,
    %c96 = arith.constant 96 : index
    %c0_45 = arith.constant 0 : index
    %36 = vector.load %arg14[%c96, %c0_45] : memref<512x64xf32, #tpu.memory_space<vmem>>, vector<16x64xf32>
    %c112 = arith.constant 112 : index
    %c0_46 = arith.constant 0 : index
    %37 = vector.load %arg14[%c112, %c0_46] : memref<512x64xf32, #tpu.memory_space<vmem>>, vector<16x64xf32>
    %38 = arith.maximumf %36, %37 : vector<16x64xf32>
    %c48_47 = arith.constant 48 : index
    %c0_48 = arith.constant 0 : index
    %39 = vector.load %arg15[%c48_47, %c0_48] : memref<256x64xf32, #tpu.memory_space<vmem>>, vector<16x64xf32>
    tpu.vector_store %arg15[%c48_47, %c0_48], %38 {strides = array<i32>} : memref<256x64xf32, #tpu.memory_space<vmem>>, vector<16x64xf32>,
    %c128 = arith.constant 128 : index
    %c0_49 = arith.constant 0 : index
    %40 = vector.load %arg14[%c128, %c0_49] : memref<512x64xf32, #tpu.memory_space<vmem>>, vector<16x64xf32>
    %c144 = arith.constant 144 : index
    %c0_50 = arith.constant 0 : index
    %41 = vector.load %arg14[%c144, %c0_50] : memref<512x64xf32, #tpu.memory_space<vmem>>, vector<16x64xf32>
    %42 = arith.maximumf %40, %41 : vector<16x64xf32>
    %c64_51 = arith.constant 64 : index
    %c0_52 = arith.constant 0 : index
    %43 = vector.load %arg15[%c64_51, %c0_52] : memref<256x64xf32, #tpu.memory_space<vmem>>, vector<16x64xf32>
    tpu.vector_store %arg15[%c64_51, %c0_52], %42 {strides = array<i32>} : memref<256x64xf32, #tpu.memory_space<vmem>>, vector<16x64xf32>,
    %c160 = arith.constant 160 : index
    %c0_53 = arith.constant 0 : index
    %44 = vector.load %arg14[%c160, %c0_53] : memref<512x64xf32, #tpu.memory_space<vmem>>, vector<16x64xf32>
    %c176 = arith.constant 176 : index
    %c0_54 = arith.constant 0 : index
    %45 = vector.load %arg14[%c176, %c0_54] : memref<512x64xf32, #tpu.memory_space<vmem>>, vector<16x64xf32>
    %46 = arith.maximumf %44, %45 : vector<16x64xf32>
    %c80_55 = arith.constant 80 : index
    %c0_56 = arith.constant 0 : index
    %47 = vector.load %arg15[%c80_55, %c0_56] : memref<256x64xf32, #tpu.memory_space<vmem>>, vector<16x64xf32>
    tpu.vector_store %arg15[%c80_55, %c0_56], %46 {strides = array<i32>} : memref<256x64xf32, #tpu.memory_space<vmem>>, vector<16x64xf32>,
    %c192 = arith.constant 192 : index
    %c0_57 = arith.constant 0 : index
    %48 = vector.load %arg14[%c192, %c0_57] : memref<512x64xf32, #tpu.memory_space<vmem>>, vector<16x64xf32>
    %c208 = arith.constant 208 : index
    %c0_58 = arith.constant 0 : index
    %49 = vector.load %arg14[%c208, %c0_58] : memref<512x64xf32, #tpu.memory_space<vmem>>, vector<16x64xf32>
    %50 = arith.maximumf %48, %49 : vector<16x64xf32>
    %c96_59 = arith.constant 96 : index
    %c0_60 = arith.constant 0 : index
    %51 = vector.load %arg15[%c96_59, %c0_60] : memref<256x64xf32, #tpu.memory_space<vmem>>, vector<16x64xf32>
    tpu.vector_store %arg15[%c96_59, %c0_60], %50 {strides = array<i32>} : memref<256x64xf32, #tpu.memory_space<vmem>>, vector<16x64xf32>,
    %c224 = arith.constant 224 : index
    %c0_61 = arith.constant 0 : index
    %52 = vector.load %arg14[%c224, %c0_61] : memref<512x64xf32, #tpu.memory_space<vmem>>, vector<16x64xf32>
    %c240 = arith.constant 240 : index
    %c0_62 = arith.constant 0 : index
    %53 = vector.load %arg14[%c240, %c0_62] : memref<512x64xf32, #tpu.memory_space<vmem>>, vector<16x64xf32>
    %54 = arith.maximumf %52, %53 : vector<16x64xf32>
    %c112_63 = arith.constant 112 : index
    %c0_64 = arith.constant 0 : index
    %55 = vector.load %arg15[%c112_63, %c0_64] : memref<256x64xf32, #tpu.memory_space<vmem>>, vector<16x64xf32>
    tpu.vector_store %arg15[%c112_63, %c0_64], %54 {strides = array<i32>} : memref<256x64xf32, #tpu.memory_space<vmem>>, vector<16x64xf32>,
    %c256_65 = arith.constant 256 : index
    %c0_66 = arith.constant 0 : index
    %56 = vector.load %arg14[%c256_65, %c0_66] : memref<512x64xf32, #tpu.memory_space<vmem>>, vector<16x64xf32>
    %c272 = arith.constant 272 : index
    %c0_67 = arith.constant 0 : index
    %57 = vector.load %arg14[%c272, %c0_67] : memref<512x64xf32, #tpu.memory_space<vmem>>, vector<16x64xf32>
    %58 = arith.maximumf %56, %57 : vector<16x64xf32>
    %c128_68 = arith.constant 128 : index
    %c0_69 = arith.constant 0 : index
    %59 = vector.load %arg15[%c128_68, %c0_69] : memref<256x64xf32, #tpu.memory_space<vmem>>, vector<16x64xf32>
    tpu.vector_store %arg15[%c128_68, %c0_69], %58 {strides = array<i32>} : memref<256x64xf32, #tpu.memory_space<vmem>>, vector<16x64xf32>,
    %c288 = arith.constant 288 : index
    %c0_70 = arith.constant 0 : index
    %60 = vector.load %arg14[%c288, %c0_70] : memref<512x64xf32, #tpu.memory_space<vmem>>, vector<16x64xf32>
    %c304 = arith.constant 304 : index
    %c0_71 = arith.constant 0 : index
    %61 = vector.load %arg14[%c304, %c0_71] : memref<512x64xf32, #tpu.memory_space<vmem>>, vector<16x64xf32>
    %62 = arith.maximumf %60, %61 : vector<16x64xf32>
    %c144_72 = arith.constant 144 : index
    %c0_73 = arith.constant 0 : index
    %63 = vector.load %arg15[%c144_72, %c0_73] : memref<256x64xf32, #tpu.memory_space<vmem>>, vector<16x64xf32>
    tpu.vector_store %arg15[%c144_72, %c0_73], %62 {strides = array<i32>} : memref<256x64xf32, #tpu.memory_space<vmem>>, vector<16x64xf32>,
    %c320 = arith.constant 320 : index
    %c0_74 = arith.constant 0 : index
    %64 = vector.load %arg14[%c320, %c0_74] : memref<512x64xf32, #tpu.memory_space<vmem>>, vector<16x64xf32>
    %c336 = arith.constant 336 : index
    %c0_75 = arith.constant 0 : index
    %65 = vector.load %arg14[%c336, %c0_75] : memref<512x64xf32, #tpu.memory_space<vmem>>, vector<16x64xf32>
    %66 = arith.maximumf %64, %65 : vector<16x64xf32>
    %c160_76 = arith.constant 160 : index
    %c0_77 = arith.constant 0 : index
    %67 = vector.load %arg15[%c160_76, %c0_77] : memref<256x64xf32, #tpu.memory_space<vmem>>, vector<16x64xf32>
    tpu.vector_store %arg15[%c160_76, %c0_77], %66 {strides = array<i32>} : memref<256x64xf32, #tpu.memory_space<vmem>>, vector<16x64xf32>,
    %c352 = arith.constant 352 : index
    %c0_78 = arith.constant 0 : index
    %68 = vector.load %arg14[%c352, %c0_78] : memref<512x64xf32, #tpu.memory_space<vmem>>, vector<16x64xf32>
    %c368 = arith.constant 368 : index
    %c0_79 = arith.constant 0 : index
    %69 = vector.load %arg14[%c368, %c0_79] : memref<512x64xf32, #tpu.memory_space<vmem>>, vector<16x64xf32>
    %70 = arith.maximumf %68, %69 : vector<16x64xf32>
    %c176_80 = arith.constant 176 : index
    %c0_81 = arith.constant 0 : index
    %71 = vector.load %arg15[%c176_80, %c0_81] : memref<256x64xf32, #tpu.memory_space<vmem>>, vector<16x64xf32>
    tpu.vector_store %arg15[%c176_80, %c0_81], %70 {strides = array<i32>} : memref<256x64xf32, #tpu.memory_space<vmem>>, vector<16x64xf32>,
    %c384 = arith.constant 384 : index
    %c0_82 = arith.constant 0 : index
    %72 = vector.load %arg14[%c384, %c0_82] : memref<512x64xf32, #tpu.memory_space<vmem>>, vector<16x64xf32>
    %c400 = arith.constant 400 : index
    %c0_83 = arith.constant 0 : index
    %73 = vector.load %arg14[%c400, %c0_83] : memref<512x64xf32, #tpu.memory_space<vmem>>, vector<16x64xf32>
    %74 = arith.maximumf %72, %73 : vector<16x64xf32>
    %c192_84 = arith.constant 192 : index
    %c0_85 = arith.constant 0 : index
    %75 = vector.load %arg15[%c192_84, %c0_85] : memref<256x64xf32, #tpu.memory_space<vmem>>, vector<16x64xf32>
    tpu.vector_store %arg15[%c192_84, %c0_85], %74 {strides = array<i32>} : memref<256x64xf32, #tpu.memory_space<vmem>>, vector<16x64xf32>,
    %c416 = arith.constant 416 : index
    %c0_86 = arith.constant 0 : index
    %76 = vector.load %arg14[%c416, %c0_86] : memref<512x64xf32, #tpu.memory_space<vmem>>, vector<16x64xf32>
    %c432 = arith.constant 432 : index
    %c0_87 = arith.constant 0 : index
    %77 = vector.load %arg14[%c432, %c0_87] : memref<512x64xf32, #tpu.memory_space<vmem>>, vector<16x64xf32>
    %78 = arith.maximumf %76, %77 : vector<16x64xf32>
    %c208_88 = arith.constant 208 : index
    %c0_89 = arith.constant 0 : index
    %79 = vector.load %arg15[%c208_88, %c0_89] : memref<256x64xf32, #tpu.memory_space<vmem>>, vector<16x64xf32>
    tpu.vector_store %arg15[%c208_88, %c0_89], %78 {strides = array<i32>} : memref<256x64xf32, #tpu.memory_space<vmem>>, vector<16x64xf32>,
    %c448 = arith.constant 448 : index
    %c0_90 = arith.constant 0 : index
    %80 = vector.load %arg14[%c448, %c0_90] : memref<512x64xf32, #tpu.memory_space<vmem>>, vector<16x64xf32>
    %c464 = arith.constant 464 : index
    %c0_91 = arith.constant 0 : index
    %81 = vector.load %arg14[%c464, %c0_91] : memref<512x64xf32, #tpu.memory_space<vmem>>, vector<16x64xf32>
    %82 = arith.maximumf %80, %81 : vector<16x64xf32>
    %c224_92 = arith.constant 224 : index
    %c0_93 = arith.constant 0 : index
    %83 = vector.load %arg15[%c224_92, %c0_93] : memref<256x64xf32, #tpu.memory_space<vmem>>, vector<16x64xf32>
    tpu.vector_store %arg15[%c224_92, %c0_93], %82 {strides = array<i32>} : memref<256x64xf32, #tpu.memory_space<vmem>>, vector<16x64xf32>,
    %c480 = arith.constant 480 : index
    %c0_94 = arith.constant 0 : index
    %84 = vector.load %arg14[%c480, %c0_94] : memref<512x64xf32, #tpu.memory_space<vmem>>, vector<16x64xf32>
    %c496 = arith.constant 496 : index
    %c0_95 = arith.constant 0 : index
    %85 = vector.load %arg14[%c496, %c0_95] : memref<512x64xf32, #tpu.memory_space<vmem>>, vector<16x64xf32>
    %86 = arith.maximumf %84, %85 : vector<16x64xf32>
    %c240_96 = arith.constant 240 : index
    %c0_97 = arith.constant 0 : index
    %87 = vector.load %arg15[%c240_96, %c0_97] : memref<256x64xf32, #tpu.memory_space<vmem>>, vector<16x64xf32>
    tpu.vector_store %arg15[%c240_96, %c0_97], %86 {strides = array<i32>} : memref<256x64xf32, #tpu.memory_space<vmem>>, vector<16x64xf32>,
    %c0_98 = arith.constant 0 : index
    %c0_99 = arith.constant 0 : index
    %88 = vector.load %arg15[%c0_98, %c0_99] : memref<256x64xf32, #tpu.memory_space<vmem>>, vector<256x64xf32>
    %c0_100 = arith.constant 0 : index
    %c0_101 = arith.constant 0 : index
    %89 = vector.load %arg6[%c0_100, %c0_101] : memref<4x64xf32, #tpu.memory_space<vmem>>, vector<1x64xf32>
    %90 = vector.broadcast %89 : vector<1x64xf32> to vector<256x64xf32>
    %91 = arith.addf %88, %90 : vector<256x64xf32>
    %cst_102 = arith.constant 0.000000e+00 : f32
    %92 = vector.broadcast %cst_102 : f32 to vector<256x64xf32>
    %93 = arith.maximumf %91, %92 : vector<256x64xf32>
    %c1_103 = arith.constant 1 : index
    %c0_104 = arith.constant 0 : index
    %94 = vector.load %arg6[%c1_103, %c0_104] : memref<4x64xf32, #tpu.memory_space<vmem>>, vector<1x64xf32>
    %cst_105 = arith.constant 0.000000e+00 : f32
    %95 = vector.broadcast %cst_105 : f32 to vector<304x64xf32>
    %c0_106 = arith.constant 0 : index
    %c0_107 = arith.constant 0 : index
    %96 = vector.load %arg12[%c0_106, %c0_107] : memref<304x64xf32, #tpu.memory_space<vmem>>, vector<304x64xf32>
    tpu.vector_store %arg12[%c0_106, %c0_107], %95 {strides = array<i32>} : memref<304x64xf32, #tpu.memory_space<vmem>>, vector<304x64xf32>,
    %c24 = arith.constant 24 : index
    %c0_108 = arith.constant 0 : index
    %97 = vector.load %arg12[%c24, %c0_108] : memref<304x64xf32, #tpu.memory_space<vmem>>, vector<256x64xf32>
    tpu.vector_store %arg12[%c24, %c0_108], %93 {strides = array<i32>} : memref<304x64xf32, #tpu.memory_space<vmem>>, vector<256x64xf32>,
    %98 = tpu.iota {dimensions = array<i32: 0>} : vector<256x1xi32>
    %c15_i32 = arith.constant 15 : i32
    %99 = vector.broadcast %c15_i32 : i32 to vector<256x1xi32>
    %100 = arith.andi %98, %99 : vector<256x1xi32>
    %c0_i32 = arith.constant 0 : i32
    %101 = vector.broadcast %c0_i32 : i32 to vector<256x1xi32>
    %102 = arith.cmpi ne, %100, %101 : vector<256x1xi32>
    %c15_i32_109 = arith.constant 15 : i32
    %103 = vector.broadcast %c15_i32_109 : i32 to vector<256x1xi32>
    %104 = arith.cmpi ne, %100, %103 : vector<256x1xi32>
    %cst_110 = arith.constant 0.000000e+00 : f32
    %105 = vector.broadcast %cst_110 : f32 to vector<256x64xf32>
    %c7 = arith.constant 7 : index
    %c0_111 = arith.constant 0 : index
    %106 = vector.load %arg12[%c7, %c0_111] : memref<304x64xf32, #tpu.memory_space<vmem>>, vector<256x64xf32>
    %c23 = arith.constant 23 : index
    %c0_112 = arith.constant 0 : index
    %107 = vector.load %arg12[%c23, %c0_112] : memref<304x64xf32, #tpu.memory_space<vmem>>, vector<256x64xf32>
    %c39 = arith.constant 39 : index
    %c0_113 = arith.constant 0 : index
    %108 = vector.load %arg12[%c39, %c0_113] : memref<304x64xf32, #tpu.memory_space<vmem>>, vector<256x64xf32>
    %109 = tpu.concatenate %106, %107, %108 in 1 : vector<256x64xf32>, vector<256x64xf32>, vector<256x64xf32> -> vector<256x192xf32>
    %cst_114 = arith.constant 0.000000e+00 : f32
    %110 = vector.shape_cast %102 : vector<256x1xi1> to vector<256x1xi1>
    %111 = vector.broadcast %110 : vector<256x1xi1> to vector<256x192xi1>
    %112 = vector.broadcast %cst_114 : f32 to vector<256x192xf32>
    %113 = arith.select %111, %109, %112 : vector<256x192xi1>, vector<256x192xf32>
    %114 = arith.truncf %113 : vector<256x192xf32> to vector<256x192xbf16>
    %c0_115 = arith.constant 0 : index
    %c0_116 = arith.constant 0 : index
    %c0_117 = arith.constant 0 : index
    %115 = vector.load %arg3[%c0_115, %c0_116, %c0_117] : memref<3x192x64xbf16, #tpu.memory_space<vmem>>, vector<1x192x64xbf16>
    %116 = vector.shape_cast %115 : vector<1x192x64xbf16> to vector<192x64xbf16>
    %cst_118 = arith.constant dense<0.000000e+00> : vector<256x64xf32>
    %117 = tpu.matmul %114, %116, %cst_118 {dimension_numbers = #tpu.dot_dimension_numbers<[1], [0], [0], [1], [0, 0, 1, 1], [], []>} : vector<256x192xbf16>, vector<192x64xbf16>, vector<256x64xf32> -> vector<256x64xf32>
    %118 = arith.addf %105, %117 : vector<256x64xf32>
    %c8 = arith.constant 8 : index
    %c0_119 = arith.constant 0 : index
    %119 = vector.load %arg12[%c8, %c0_119] : memref<304x64xf32, #tpu.memory_space<vmem>>, vector<256x64xf32>
    %c24_120 = arith.constant 24 : index
    %c0_121 = arith.constant 0 : index
    %120 = vector.load %arg12[%c24_120, %c0_121] : memref<304x64xf32, #tpu.memory_space<vmem>>, vector<256x64xf32>
    %c40 = arith.constant 40 : index
    %c0_122 = arith.constant 0 : index
    %121 = vector.load %arg12[%c40, %c0_122] : memref<304x64xf32, #tpu.memory_space<vmem>>, vector<256x64xf32>
    %122 = tpu.concatenate %119, %120, %121 in 1 : vector<256x64xf32>, vector<256x64xf32>, vector<256x64xf32> -> vector<256x192xf32>
    %123 = arith.truncf %122 : vector<256x192xf32> to vector<256x192xbf16>
    %c1_123 = arith.constant 1 : index
    %c0_124 = arith.constant 0 : index
    %c0_125 = arith.constant 0 : index
    %124 = vector.load %arg3[%c1_123, %c0_124, %c0_125] : memref<3x192x64xbf16, #tpu.memory_space<vmem>>, vector<1x192x64xbf16>
    %125 = vector.shape_cast %124 : vector<1x192x64xbf16> to vector<192x64xbf16>
    %cst_126 = arith.constant dense<0.000000e+00> : vector<256x64xf32>
    %126 = tpu.matmul %123, %125, %cst_126 {dimension_numbers = #tpu.dot_dimension_numbers<[1], [0], [0], [1], [0, 0, 1, 1], [], []>} : vector<256x192xbf16>, vector<192x64xbf16>, vector<256x64xf32> -> vector<256x64xf32>
    %127 = arith.addf %118, %126 : vector<256x64xf32>
    %c9 = arith.constant 9 : index
    %c0_127 = arith.constant 0 : index
    %128 = vector.load %arg12[%c9, %c0_127] : memref<304x64xf32, #tpu.memory_space<vmem>>, vector<256x64xf32>
    %c25 = arith.constant 25 : index
    %c0_128 = arith.constant 0 : index
    %129 = vector.load %arg12[%c25, %c0_128] : memref<304x64xf32, #tpu.memory_space<vmem>>, vector<256x64xf32>
    %c41 = arith.constant 41 : index
    %c0_129 = arith.constant 0 : index
    %130 = vector.load %arg12[%c41, %c0_129] : memref<304x64xf32, #tpu.memory_space<vmem>>, vector<256x64xf32>
    %131 = tpu.concatenate %128, %129, %130 in 1 : vector<256x64xf32>, vector<256x64xf32>, vector<256x64xf32> -> vector<256x192xf32>
    %cst_130 = arith.constant 0.000000e+00 : f32
    %132 = vector.shape_cast %104 : vector<256x1xi1> to vector<256x1xi1>
    %133 = vector.broadcast %132 : vector<256x1xi1> to vector<256x192xi1>
    %134 = vector.broadcast %cst_130 : f32 to vector<256x192xf32>
    %135 = arith.select %133, %131, %134 : vector<256x192xi1>, vector<256x192xf32>
    %136 = arith.truncf %135 : vector<256x192xf32> to vector<256x192xbf16>
    %c2 = arith.constant 2 : index
    %c0_131 = arith.constant 0 : index
    %c0_132 = arith.constant 0 : index
    %137 = vector.load %arg3[%c2, %c0_131, %c0_132] : memref<3x192x64xbf16, #tpu.memory_space<vmem>>, vector<1x192x64xbf16>
    %138 = vector.shape_cast %137 : vector<1x192x64xbf16> to vector<192x64xbf16>
    %cst_133 = arith.constant dense<0.000000e+00> : vector<256x64xf32>
    %139 = tpu.matmul %136, %138, %cst_133 {dimension_numbers = #tpu.dot_dimension_numbers<[1], [0], [0], [1], [0, 0, 1, 1], [], []>} : vector<256x192xbf16>, vector<192x64xbf16>, vector<256x64xf32> -> vector<256x64xf32>
    %140 = arith.addf %127, %139 : vector<256x64xf32>
    %c0_134 = arith.constant 0 : index
    %c0_135 = arith.constant 0 : index
    %141 = vector.load %arg13[%c0_134, %c0_135] : memref<1024x64xf32, #tpu.memory_space<vmem>>, vector<256x64xf32>
    tpu.vector_store %arg13[%c0_134, %c0_135], %140 {strides = array<i32>} : memref<1024x64xf32, #tpu.memory_space<vmem>>, vector<256x64xf32>,
    %c0_136 = arith.constant 0 : index
    %c0_137 = arith.constant 0 : index
    %142 = tpu.strided_load %arg13[%c0_136, %c0_137] {strides = array<i32: 2, 1>} : memref<1024x64xf32, #tpu.memory_space<vmem>>, vector<128x64xf32>
    %c1_138 = arith.constant 1 : index
    %c0_139 = arith.constant 0 : index
    %143 = tpu.strided_load %arg13[%c1_138, %c0_139] {strides = array<i32: 2, 1>} : memref<1024x64xf32, #tpu.memory_space<vmem>>, vector<128x64xf32>
    %144 = arith.maximumf %142, %143 : vector<128x64xf32>
    %c0_140 = arith.constant 0 : index
    %c0_141 = arith.constant 0 : index
    %145 = vector.load %arg14[%c0_140, %c0_141] : memref<512x64xf32, #tpu.memory_space<vmem>>, vector<128x64xf32>
    tpu.vector_store %arg14[%c0_140, %c0_141], %144 {strides = array<i32>} : memref<512x64xf32, #tpu.memory_space<vmem>>, vector<128x64xf32>,
    %c0_142 = arith.constant 0 : index
    %c0_143 = arith.constant 0 : index
    %146 = vector.load %arg14[%c0_142, %c0_143] : memref<512x64xf32, #tpu.memory_space<vmem>>, vector<8x64xf32>
    %c8_144 = arith.constant 8 : index
    %c0_145 = arith.constant 0 : index
    %147 = vector.load %arg14[%c8_144, %c0_145] : memref<512x64xf32, #tpu.memory_space<vmem>>, vector<8x64xf32>
    %148 = arith.maximumf %146, %147 : vector<8x64xf32>
    %c0_146 = arith.constant 0 : index
    %c0_147 = arith.constant 0 : index
    %149 = vector.load %arg15[%c0_146, %c0_147] : memref<256x64xf32, #tpu.memory_space<vmem>>, vector<8x64xf32>
    tpu.vector_store %arg15[%c0_146, %c0_147], %148 {strides = array<i32>} : memref<256x64xf32, #tpu.memory_space<vmem>>, vector<8x64xf32>,
    %c16_148 = arith.constant 16 : index
    %c0_149 = arith.constant 0 : index
    %150 = vector.load %arg14[%c16_148, %c0_149] : memref<512x64xf32, #tpu.memory_space<vmem>>, vector<8x64xf32>
    %c24_150 = arith.constant 24 : index
    %c0_151 = arith.constant 0 : index
    %151 = vector.load %arg14[%c24_150, %c0_151] : memref<512x64xf32, #tpu.memory_space<vmem>>, vector<8x64xf32>
    %152 = arith.maximumf %150, %151 : vector<8x64xf32>
    %c8_152 = arith.constant 8 : index
    %c0_153 = arith.constant 0 : index
    %153 = vector.load %arg15[%c8_152, %c0_153] : memref<256x64xf32, #tpu.memory_space<vmem>>, vector<8x64xf32>
    tpu.vector_store %arg15[%c8_152, %c0_153], %152 {strides = array<i32>} : memref<256x64xf32, #tpu.memory_space<vmem>>, vector<8x64xf32>,
    %c32_154 = arith.constant 32 : index
    %c0_155 = arith.constant 0 : index
    %154 = vector.load %arg14[%c32_154, %c0_155] : memref<512x64xf32, #tpu.memory_space<vmem>>, vector<8x64xf32>
    %c40_156 = arith.constant 40 : index
    %c0_157 = arith.constant 0 : index
    %155 = vector.load %arg14[%c40_156, %c0_157] : memref<512x64xf32, #tpu.memory_space<vmem>>, vector<8x64xf32>
    %156 = arith.maximumf %154, %155 : vector<8x64xf32>
    %c16_158 = arith.constant 16 : index
    %c0_159 = arith.constant 0 : index
    %157 = vector.load %arg15[%c16_158, %c0_159] : memref<256x64xf32, #tpu.memory_space<vmem>>, vector<8x64xf32>
    tpu.vector_store %arg15[%c16_158, %c0_159], %156 {strides = array<i32>} : memref<256x64xf32, #tpu.memory_space<vmem>>, vector<8x64xf32>,
    %c48_160 = arith.constant 48 : index
    %c0_161 = arith.constant 0 : index
    %158 = vector.load %arg14[%c48_160, %c0_161] : memref<512x64xf32, #tpu.memory_space<vmem>>, vector<8x64xf32>
    %c56 = arith.constant 56 : index
    %c0_162 = arith.constant 0 : index
    %159 = vector.load %arg14[%c56, %c0_162] : memref<512x64xf32, #tpu.memory_space<vmem>>, vector<8x64xf32>
    %160 = arith.maximumf %158, %159 : vector<8x64xf32>
    %c24_163 = arith.constant 24 : index
    %c0_164 = arith.constant 0 : index
    %161 = vector.load %arg15[%c24_163, %c0_164] : memref<256x64xf32, #tpu.memory_space<vmem>>, vector<8x64xf32>
    tpu.vector_store %arg15[%c24_163, %c0_164], %160 {strides = array<i32>} : memref<256x64xf32, #tpu.memory_space<vmem>>, vector<8x64xf32>,
    %c64_165 = arith.constant 64 : index
    %c0_166 = arith.constant 0 : index
    %162 = vector.load %arg14[%c64_165, %c0_166] : memref<512x64xf32, #tpu.memory_space<vmem>>, vector<8x64xf32>
    %c72 = arith.constant 72 : index
    %c0_167 = arith.constant 0 : index
    %163 = vector.load %arg14[%c72, %c0_167] : memref<512x64xf32, #tpu.memory_space<vmem>>, vector<8x64xf32>
    %164 = arith.maximumf %162, %163 : vector<8x64xf32>
    %c32_168 = arith.constant 32 : index
    %c0_169 = arith.constant 0 : index
    %165 = vector.load %arg15[%c32_168, %c0_169] : memref<256x64xf32, #tpu.memory_space<vmem>>, vector<8x64xf32>
    tpu.vector_store %arg15[%c32_168, %c0_169], %164 {strides = array<i32>} : memref<256x64xf32, #tpu.memory_space<vmem>>, vector<8x64xf32>,
    %c80_170 = arith.constant 80 : index
    %c0_171 = arith.constant 0 : index
    %166 = vector.load %arg14[%c80_170, %c0_171] : memref<512x64xf32, #tpu.memory_space<vmem>>, vector<8x64xf32>
    %c88 = arith.constant 88 : index
    %c0_172 = arith.constant 0 : index
    %167 = vector.load %arg14[%c88, %c0_172] : memref<512x64xf32, #tpu.memory_space<vmem>>, vector<8x64xf32>
    %168 = arith.maximumf %166, %167 : vector<8x64xf32>
    %c40_173 = arith.constant 40 : index
    %c0_174 = arith.constant 0 : index
    %169 = vector.load %arg15[%c40_173, %c0_174] : memref<256x64xf32, #tpu.memory_space<vmem>>, vector<8x64xf32>
    tpu.vector_store %arg15[%c40_173, %c0_174], %168 {strides = array<i32>} : memref<256x64xf32, #tpu.memory_space<vmem>>, vector<8x64xf32>,
    %c96_175 = arith.constant 96 : index
    %c0_176 = arith.constant 0 : index
    %170 = vector.load %arg14[%c96_175, %c0_176] : memref<512x64xf32, #tpu.memory_space<vmem>>, vector<8x64xf32>
    %c104 = arith.constant 104 : index
    %c0_177 = arith.constant 0 : index
    %171 = vector.load %arg14[%c104, %c0_177] : memref<512x64xf32, #tpu.memory_space<vmem>>, vector<8x64xf32>
    %172 = arith.maximumf %170, %171 : vector<8x64xf32>
    %c48_178 = arith.constant 48 : index
    %c0_179 = arith.constant 0 : index
    %173 = vector.load %arg15[%c48_178, %c0_179] : memref<256x64xf32, #tpu.memory_space<vmem>>, vector<8x64xf32>
    tpu.vector_store %arg15[%c48_178, %c0_179], %172 {strides = array<i32>} : memref<256x64xf32, #tpu.memory_space<vmem>>, vector<8x64xf32>,
    %c112_180 = arith.constant 112 : index
    %c0_181 = arith.constant 0 : index
    %174 = vector.load %arg14[%c112_180, %c0_181] : memref<512x64xf32, #tpu.memory_space<vmem>>, vector<8x64xf32>
    %c120 = arith.constant 120 : index
    %c0_182 = arith.constant 0 : index
    %175 = vector.load %arg14[%c120, %c0_182] : memref<512x64xf32, #tpu.memory_space<vmem>>, vector<8x64xf32>
    %176 = arith.maximumf %174, %175 : vector<8x64xf32>
    %c56_183 = arith.constant 56 : index
    %c0_184 = arith.constant 0 : index
    %177 = vector.load %arg15[%c56_183, %c0_184] : memref<256x64xf32, #tpu.memory_space<vmem>>, vector<8x64xf32>
    tpu.vector_store %arg15[%c56_183, %c0_184], %176 {strides = array<i32>} : memref<256x64xf32, #tpu.memory_space<vmem>>, vector<8x64xf32>,
    %c0_185 = arith.constant 0 : index
    %c0_186 = arith.constant 0 : index
    %178 = vector.load %arg15[%c0_185, %c0_186] : memref<256x64xf32, #tpu.memory_space<vmem>>, vector<64x64xf32>
    %179 = vector.broadcast %94 : vector<1x64xf32> to vector<64x64xf32>
    %180 = arith.addf %178, %179 : vector<64x64xf32>
    %cst_187 = arith.constant 0.000000e+00 : f32
    %181 = vector.broadcast %cst_187 : f32 to vector<64x64xf32>
    %182 = arith.maximumf %180, %181 : vector<64x64xf32>
    %c2_188 = arith.constant 2 : index
    %c0_189 = arith.constant 0 : index
    %183 = vector.load %arg6[%c2_188, %c0_189] : memref<4x64xf32, #tpu.memory_space<vmem>>, vector<1x64xf32>
    %cst_190 = arith.constant 0.000000e+00 : f32
    %184 = vector.broadcast %cst_190 : f32 to vector<304x64xf32>
    %c0_191 = arith.constant 0 : index
    %c0_192 = arith.constant 0 : index
    %185 = vector.load %arg12[%c0_191, %c0_192] : memref<304x64xf32, #tpu.memory_space<vmem>>, vector<304x64xf32>
    tpu.vector_store %arg12[%c0_191, %c0_192], %184 {strides = array<i32>} : memref<304x64xf32, #tpu.memory_space<vmem>>, vector<304x64xf32>,
    %c16_193 = arith.constant 16 : index
    %c0_194 = arith.constant 0 : index
    %186 = vector.load %arg12[%c16_193, %c0_194] : memref<304x64xf32, #tpu.memory_space<vmem>>, vector<64x64xf32>
    tpu.vector_store %arg12[%c16_193, %c0_194], %182 {strides = array<i32>} : memref<304x64xf32, #tpu.memory_space<vmem>>, vector<64x64xf32>,
    %187 = tpu.iota {dimensions = array<i32: 0>} : vector<64x1xi32>
    %c7_i32 = arith.constant 7 : i32
    %188 = vector.broadcast %c7_i32 : i32 to vector<64x1xi32>
    %189 = arith.andi %187, %188 : vector<64x1xi32>
    %c0_i32_195 = arith.constant 0 : i32
    %190 = vector.broadcast %c0_i32_195 : i32 to vector<64x1xi32>
    %191 = arith.cmpi ne, %189, %190 : vector<64x1xi32>
    %c7_i32_196 = arith.constant 7 : i32
    %192 = vector.broadcast %c7_i32_196 : i32 to vector<64x1xi32>
    %193 = arith.cmpi ne, %189, %192 : vector<64x1xi32>
    %cst_197 = arith.constant 0.000000e+00 : f32
    %194 = vector.broadcast %cst_197 : f32 to vector<64x64xf32>
    %c7_198 = arith.constant 7 : index
    %c0_199 = arith.constant 0 : index
    %195 = vector.load %arg12[%c7_198, %c0_199] : memref<304x64xf32, #tpu.memory_space<vmem>>, vector<64x64xf32>
    %c15 = arith.constant 15 : index
    %c0_200 = arith.constant 0 : index
    %196 = vector.load %arg12[%c15, %c0_200] : memref<304x64xf32, #tpu.memory_space<vmem>>, vector<64x64xf32>
    %c23_201 = arith.constant 23 : index
    %c0_202 = arith.constant 0 : index
    %197 = vector.load %arg12[%c23_201, %c0_202] : memref<304x64xf32, #tpu.memory_space<vmem>>, vector<64x64xf32>
    %198 = tpu.concatenate %195, %196, %197 in 1 : vector<64x64xf32>, vector<64x64xf32>, vector<64x64xf32> -> vector<64x192xf32>
    %cst_203 = arith.constant 0.000000e+00 : f32
    %199 = vector.shape_cast %191 : vector<64x1xi1> to vector<64x1xi1>
    %200 = vector.broadcast %199 : vector<64x1xi1> to vector<64x192xi1>
    %201 = vector.broadcast %cst_203 : f32 to vector<64x192xf32>
    %202 = arith.select %200, %198, %201 : vector<64x192xi1>, vector<64x192xf32>
    %203 = arith.truncf %202 : vector<64x192xf32> to vector<64x192xbf16>
    %c0_204 = arith.constant 0 : index
    %c0_205 = arith.constant 0 : index
    %c0_206 = arith.constant 0 : index
    %204 = vector.load %arg4[%c0_204, %c0_205, %c0_206] : memref<3x192x64xbf16, #tpu.memory_space<vmem>>, vector<1x192x64xbf16>
    %205 = vector.shape_cast %204 : vector<1x192x64xbf16> to vector<192x64xbf16>
    %cst_207 = arith.constant dense<0.000000e+00> : vector<64x64xf32>
    %206 = tpu.matmul %203, %205, %cst_207 {dimension_numbers = #tpu.dot_dimension_numbers<[1], [0], [0], [1], [0, 0, 1, 1], [], []>} : vector<64x192xbf16>, vector<192x64xbf16>, vector<64x64xf32> -> vector<64x64xf32>
    %207 = arith.addf %194, %206 : vector<64x64xf32>
    %c8_208 = arith.constant 8 : index
    %c0_209 = arith.constant 0 : index
    %208 = vector.load %arg12[%c8_208, %c0_209] : memref<304x64xf32, #tpu.memory_space<vmem>>, vector<64x64xf32>
    %c16_210 = arith.constant 16 : index
    %c0_211 = arith.constant 0 : index
    %209 = vector.load %arg12[%c16_210, %c0_211] : memref<304x64xf32, #tpu.memory_space<vmem>>, vector<64x64xf32>
    %c24_212 = arith.constant 24 : index
    %c0_213 = arith.constant 0 : index
    %210 = vector.load %arg12[%c24_212, %c0_213] : memref<304x64xf32, #tpu.memory_space<vmem>>, vector<64x64xf32>
    %211 = tpu.concatenate %208, %209, %210 in 1 : vector<64x64xf32>, vector<64x64xf32>, vector<64x64xf32> -> vector<64x192xf32>
    %212 = arith.truncf %211 : vector<64x192xf32> to vector<64x192xbf16>
    %c1_214 = arith.constant 1 : index
    %c0_215 = arith.constant 0 : index
    %c0_216 = arith.constant 0 : index
    %213 = vector.load %arg4[%c1_214, %c0_215, %c0_216] : memref<3x192x64xbf16, #tpu.memory_space<vmem>>, vector<1x192x64xbf16>
    %214 = vector.shape_cast %213 : vector<1x192x64xbf16> to vector<192x64xbf16>
    %cst_217 = arith.constant dense<0.000000e+00> : vector<64x64xf32>
    %215 = tpu.matmul %212, %214, %cst_217 {dimension_numbers = #tpu.dot_dimension_numbers<[1], [0], [0], [1], [0, 0, 1, 1], [], []>} : vector<64x192xbf16>, vector<192x64xbf16>, vector<64x64xf32> -> vector<64x64xf32>
    %216 = arith.addf %207, %215 : vector<64x64xf32>
    %c9_218 = arith.constant 9 : index
    %c0_219 = arith.constant 0 : index
    %217 = vector.load %arg12[%c9_218, %c0_219] : memref<304x64xf32, #tpu.memory_space<vmem>>, vector<64x64xf32>
    %c17 = arith.constant 17 : index
    %c0_220 = arith.constant 0 : index
    %218 = vector.load %arg12[%c17, %c0_220] : memref<304x64xf32, #tpu.memory_space<vmem>>, vector<64x64xf32>
    %c25_221 = arith.constant 25 : index
    %c0_222 = arith.constant 0 : index
    %219 = vector.load %arg12[%c25_221, %c0_222] : memref<304x64xf32, #tpu.memory_space<vmem>>, vector<64x64xf32>
    %220 = tpu.concatenate %217, %218, %219 in 1 : vector<64x64xf32>, vector<64x64xf32>, vector<64x64xf32> -> vector<64x192xf32>
    %cst_223 = arith.constant 0.000000e+00 : f32
    %221 = vector.shape_cast %193 : vector<64x1xi1> to vector<64x1xi1>
    %222 = vector.broadcast %221 : vector<64x1xi1> to vector<64x192xi1>
    %223 = vector.broadcast %cst_223 : f32 to vector<64x192xf32>
    %224 = arith.select %222, %220, %223 : vector<64x192xi1>, vector<64x192xf32>
    %225 = arith.truncf %224 : vector<64x192xf32> to vector<64x192xbf16>
    %c2_224 = arith.constant 2 : index
    %c0_225 = arith.constant 0 : index
    %c0_226 = arith.constant 0 : index
    %226 = vector.load %arg4[%c2_224, %c0_225, %c0_226] : memref<3x192x64xbf16, #tpu.memory_space<vmem>>, vector<1x192x64xbf16>
    %227 = vector.shape_cast %226 : vector<1x192x64xbf16> to vector<192x64xbf16>
    %cst_227 = arith.constant dense<0.000000e+00> : vector<64x64xf32>
    %228 = tpu.matmul %225, %227, %cst_227 {dimension_numbers = #tpu.dot_dimension_numbers<[1], [0], [0], [1], [0, 0, 1, 1], [], []>} : vector<64x192xbf16>, vector<192x64xbf16>, vector<64x64xf32> -> vector<64x64xf32>
    %229 = arith.addf %216, %228 : vector<64x64xf32>
    %c0_228 = arith.constant 0 : index
    %c0_229 = arith.constant 0 : index
    %230 = vector.load %arg13[%c0_228, %c0_229] : memref<1024x64xf32, #tpu.memory_space<vmem>>, vector<64x64xf32>
    tpu.vector_store %arg13[%c0_228, %c0_229], %229 {strides = array<i32>} : memref<1024x64xf32, #tpu.memory_space<vmem>>, vector<64x64xf32>,
    %c0_230 = arith.constant 0 : index
    %c0_231 = arith.constant 0 : index
    %231 = tpu.strided_load %arg13[%c0_230, %c0_231] {strides = array<i32: 2, 1>} : memref<1024x64xf32, #tpu.memory_space<vmem>>, vector<32x64xf32>
    %c1_232 = arith.constant 1 : index
    %c0_233 = arith.constant 0 : index
    %232 = tpu.strided_load %arg13[%c1_232, %c0_233] {strides = array<i32: 2, 1>} : memref<1024x64xf32, #tpu.memory_space<vmem>>, vector<32x64xf32>
    %233 = arith.maximumf %231, %232 : vector<32x64xf32>
    %c0_234 = arith.constant 0 : index
    %c0_235 = arith.constant 0 : index
    %234 = vector.load %arg14[%c0_234, %c0_235] : memref<512x64xf32, #tpu.memory_space<vmem>>, vector<32x64xf32>
    tpu.vector_store %arg14[%c0_234, %c0_235], %233 {strides = array<i32>} : memref<512x64xf32, #tpu.memory_space<vmem>>, vector<32x64xf32>,
    %c0_236 = arith.constant 0 : index
    %c0_237 = arith.constant 0 : index
    %235 = vector.load %arg14[%c0_236, %c0_237] : memref<512x64xf32, #tpu.memory_space<vmem>>, vector<4x64xf32>
    %c4 = arith.constant 4 : index
    %c0_238 = arith.constant 0 : index
    %236 = vector.load %arg14[%c4, %c0_238] : memref<512x64xf32, #tpu.memory_space<vmem>>, vector<4x64xf32>
    %237 = arith.maximumf %235, %236 : vector<4x64xf32>
    %c0_239 = arith.constant 0 : index
    %c0_240 = arith.constant 0 : index
    %238 = vector.load %arg15[%c0_239, %c0_240] : memref<256x64xf32, #tpu.memory_space<vmem>>, vector<4x64xf32>
    tpu.vector_store %arg15[%c0_239, %c0_240], %237 {strides = array<i32>} : memref<256x64xf32, #tpu.memory_space<vmem>>, vector<4x64xf32>,
    %c8_241 = arith.constant 8 : index
    %c0_242 = arith.constant 0 : index
    %239 = vector.load %arg14[%c8_241, %c0_242] : memref<512x64xf32, #tpu.memory_space<vmem>>, vector<4x64xf32>
    %c12 = arith.constant 12 : index
    %c0_243 = arith.constant 0 : index
    %240 = vector.load %arg14[%c12, %c0_243] : memref<512x64xf32, #tpu.memory_space<vmem>>, vector<4x64xf32>
    %241 = arith.maximumf %239, %240 : vector<4x64xf32>
    %c4_244 = arith.constant 4 : index
    %c0_245 = arith.constant 0 : index
    %242 = vector.load %arg15[%c4_244, %c0_245] : memref<256x64xf32, #tpu.memory_space<vmem>>, vector<4x64xf32>
    tpu.vector_store %arg15[%c4_244, %c0_245], %241 {strides = array<i32>} : memref<256x64xf32, #tpu.memory_space<vmem>>, vector<4x64xf32>,
    %c16_246 = arith.constant 16 : index
    %c0_247 = arith.constant 0 : index
    %243 = vector.load %arg14[%c16_246, %c0_247] : memref<512x64xf32, #tpu.memory_space<vmem>>, vector<4x64xf32>
    %c20 = arith.constant 20 : index
    %c0_248 = arith.constant 0 : index
    %244 = vector.load %arg14[%c20, %c0_248] : memref<512x64xf32, #tpu.memory_space<vmem>>, vector<4x64xf32>
    %245 = arith.maximumf %243, %244 : vector<4x64xf32>
    %c8_249 = arith.constant 8 : index
    %c0_250 = arith.constant 0 : index
    %246 = vector.load %arg15[%c8_249, %c0_250] : memref<256x64xf32, #tpu.memory_space<vmem>>, vector<4x64xf32>
    tpu.vector_store %arg15[%c8_249, %c0_250], %245 {strides = array<i32>} : memref<256x64xf32, #tpu.memory_space<vmem>>, vector<4x64xf32>,
    %c24_251 = arith.constant 24 : index
    %c0_252 = arith.constant 0 : index
    %247 = vector.load %arg14[%c24_251, %c0_252] : memref<512x64xf32, #tpu.memory_space<vmem>>, vector<4x64xf32>
    %c28 = arith.constant 28 : index
    %c0_253 = arith.constant 0 : index
    %248 = vector.load %arg14[%c28, %c0_253] : memref<512x64xf32, #tpu.memory_space<vmem>>, vector<4x64xf32>
    %249 = arith.maximumf %247, %248 : vector<4x64xf32>
    %c12_254 = arith.constant 12 : index
    %c0_255 = arith.constant 0 : index
    %250 = vector.load %arg15[%c12_254, %c0_255] : memref<256x64xf32, #tpu.memory_space<vmem>>, vector<4x64xf32>
    tpu.vector_store %arg15[%c12_254, %c0_255], %249 {strides = array<i32>} : memref<256x64xf32, #tpu.memory_space<vmem>>, vector<4x64xf32>,
    %c0_256 = arith.constant 0 : index
    %c0_257 = arith.constant 0 : index
    %251 = vector.load %arg15[%c0_256, %c0_257] : memref<256x64xf32, #tpu.memory_space<vmem>>, vector<16x64xf32>
    %252 = vector.broadcast %183 : vector<1x64xf32> to vector<16x64xf32>
    %253 = arith.addf %251, %252 : vector<16x64xf32>
    %cst_258 = arith.constant 0.000000e+00 : f32
    %254 = vector.broadcast %cst_258 : f32 to vector<16x64xf32>
    %255 = arith.maximumf %253, %254 : vector<16x64xf32>
    %c3 = arith.constant 3 : index
    %c0_259 = arith.constant 0 : index
    %256 = vector.load %arg6[%c3, %c0_259] : memref<4x64xf32, #tpu.memory_space<vmem>>, vector<1x64xf32>
    %cst_260 = arith.constant 0.000000e+00 : f32
    %257 = vector.broadcast %cst_260 : f32 to vector<304x64xf32>
    %c0_261 = arith.constant 0 : index
    %c0_262 = arith.constant 0 : index
    %258 = vector.load %arg12[%c0_261, %c0_262] : memref<304x64xf32, #tpu.memory_space<vmem>>, vector<304x64xf32>
    tpu.vector_store %arg12[%c0_261, %c0_262], %257 {strides = array<i32>} : memref<304x64xf32, #tpu.memory_space<vmem>>, vector<304x64xf32>,
    %c8_263 = arith.constant 8 : index
    %c0_264 = arith.constant 0 : index
    %259 = vector.load %arg12[%c8_263, %c0_264] : memref<304x64xf32, #tpu.memory_space<vmem>>, vector<16x64xf32>
    tpu.vector_store %arg12[%c8_263, %c0_264], %255 {strides = array<i32>} : memref<304x64xf32, #tpu.memory_space<vmem>>, vector<16x64xf32>,
    %260 = tpu.iota {dimensions = array<i32: 0>} : vector<16x1xi32>
    %c3_i32 = arith.constant 3 : i32
    %261 = vector.broadcast %c3_i32 : i32 to vector<16x1xi32>
    %262 = arith.andi %260, %261 : vector<16x1xi32>
    %c0_i32_265 = arith.constant 0 : i32
    %263 = vector.broadcast %c0_i32_265 : i32 to vector<16x1xi32>
    %264 = arith.cmpi ne, %262, %263 : vector<16x1xi32>
    %c3_i32_266 = arith.constant 3 : i32
    %265 = vector.broadcast %c3_i32_266 : i32 to vector<16x1xi32>
    %266 = arith.cmpi ne, %262, %265 : vector<16x1xi32>
    %cst_267 = arith.constant 0.000000e+00 : f32
    %267 = vector.broadcast %cst_267 : f32 to vector<16x64xf32>
    %c3_268 = arith.constant 3 : index
    %c0_269 = arith.constant 0 : index
    %268 = vector.load %arg12[%c3_268, %c0_269] : memref<304x64xf32, #tpu.memory_space<vmem>>, vector<16x64xf32>
    %c7_270 = arith.constant 7 : index
    %c0_271 = arith.constant 0 : index
    %269 = vector.load %arg12[%c7_270, %c0_271] : memref<304x64xf32, #tpu.memory_space<vmem>>, vector<16x64xf32>
    %c11 = arith.constant 11 : index
    %c0_272 = arith.constant 0 : index
    %270 = vector.load %arg12[%c11, %c0_272] : memref<304x64xf32, #tpu.memory_space<vmem>>, vector<16x64xf32>
    %271 = tpu.concatenate %268, %269, %270 in 1 : vector<16x64xf32>, vector<16x64xf32>, vector<16x64xf32> -> vector<16x192xf32>
    %cst_273 = arith.constant 0.000000e+00 : f32
    %272 = vector.shape_cast %264 : vector<16x1xi1> to vector<16x1xi1>
    %273 = vector.broadcast %272 : vector<16x1xi1> to vector<16x192xi1>
    %274 = vector.broadcast %cst_273 : f32 to vector<16x192xf32>
    %275 = arith.select %273, %271, %274 : vector<16x192xi1>, vector<16x192xf32>
    %276 = arith.truncf %275 : vector<16x192xf32> to vector<16x192xbf16>
    %c0_274 = arith.constant 0 : index
    %c0_275 = arith.constant 0 : index
    %c0_276 = arith.constant 0 : index
    %277 = vector.load %arg5[%c0_274, %c0_275, %c0_276] : memref<3x192x64xbf16, #tpu.memory_space<vmem>>, vector<1x192x64xbf16>
    %278 = vector.shape_cast %277 : vector<1x192x64xbf16> to vector<192x64xbf16>
    %cst_277 = arith.constant dense<0.000000e+00> : vector<16x64xf32>
    %279 = tpu.matmul %276, %278, %cst_277 {dimension_numbers = #tpu.dot_dimension_numbers<[1], [0], [0], [1], [0, 0, 1, 1], [], []>} : vector<16x192xbf16>, vector<192x64xbf16>, vector<16x64xf32> -> vector<16x64xf32>
    %280 = arith.addf %267, %279 : vector<16x64xf32>
    %c4_278 = arith.constant 4 : index
    %c0_279 = arith.constant 0 : index
    %281 = vector.load %arg12[%c4_278, %c0_279] : memref<304x64xf32, #tpu.memory_space<vmem>>, vector<16x64xf32>
    %c8_280 = arith.constant 8 : index
    %c0_281 = arith.constant 0 : index
    %282 = vector.load %arg12[%c8_280, %c0_281] : memref<304x64xf32, #tpu.memory_space<vmem>>, vector<16x64xf32>
    %c12_282 = arith.constant 12 : index
    %c0_283 = arith.constant 0 : index
    %283 = vector.load %arg12[%c12_282, %c0_283] : memref<304x64xf32, #tpu.memory_space<vmem>>, vector<16x64xf32>
    %284 = tpu.concatenate %281, %282, %283 in 1 : vector<16x64xf32>, vector<16x64xf32>, vector<16x64xf32> -> vector<16x192xf32>
    %285 = arith.truncf %284 : vector<16x192xf32> to vector<16x192xbf16>
    %c1_284 = arith.constant 1 : index
    %c0_285 = arith.constant 0 : index
    %c0_286 = arith.constant 0 : index
    %286 = vector.load %arg5[%c1_284, %c0_285, %c0_286] : memref<3x192x64xbf16, #tpu.memory_space<vmem>>, vector<1x192x64xbf16>
    %287 = vector.shape_cast %286 : vector<1x192x64xbf16> to vector<192x64xbf16>
    %cst_287 = arith.constant dense<0.000000e+00> : vector<16x64xf32>
    %288 = tpu.matmul %285, %287, %cst_287 {dimension_numbers = #tpu.dot_dimension_numbers<[1], [0], [0], [1], [0, 0, 1, 1], [], []>} : vector<16x192xbf16>, vector<192x64xbf16>, vector<16x64xf32> -> vector<16x64xf32>
    %289 = arith.addf %280, %288 : vector<16x64xf32>
    %c5 = arith.constant 5 : index
    %c0_288 = arith.constant 0 : index
    %290 = vector.load %arg12[%c5, %c0_288] : memref<304x64xf32, #tpu.memory_space<vmem>>, vector<16x64xf32>
    %c9_289 = arith.constant 9 : index
    %c0_290 = arith.constant 0 : index
    %291 = vector.load %arg12[%c9_289, %c0_290] : memref<304x64xf32, #tpu.memory_space<vmem>>, vector<16x64xf32>
    %c13 = arith.constant 13 : index
    %c0_291 = arith.constant 0 : index
    %292 = vector.load %arg12[%c13, %c0_291] : memref<304x64xf32, #tpu.memory_space<vmem>>, vector<16x64xf32>
    %293 = tpu.concatenate %290, %291, %292 in 1 : vector<16x64xf32>, vector<16x64xf32>, vector<16x64xf32> -> vector<16x192xf32>
    %cst_292 = arith.constant 0.000000e+00 : f32
    %294 = vector.shape_cast %266 : vector<16x1xi1> to vector<16x1xi1>
    %295 = vector.broadcast %294 : vector<16x1xi1> to vector<16x192xi1>
    %296 = vector.broadcast %cst_292 : f32 to vector<16x192xf32>
    %297 = arith.select %295, %293, %296 : vector<16x192xi1>, vector<16x192xf32>
    %298 = arith.truncf %297 : vector<16x192xf32> to vector<16x192xbf16>
    %c2_293 = arith.constant 2 : index
    %c0_294 = arith.constant 0 : index
    %c0_295 = arith.constant 0 : index
    %299 = vector.load %arg5[%c2_293, %c0_294, %c0_295] : memref<3x192x64xbf16, #tpu.memory_space<vmem>>, vector<1x192x64xbf16>
    %300 = vector.shape_cast %299 : vector<1x192x64xbf16> to vector<192x64xbf16>
    %cst_296 = arith.constant dense<0.000000e+00> : vector<16x64xf32>
    %301 = tpu.matmul %298, %300, %cst_296 {dimension_numbers = #tpu.dot_dimension_numbers<[1], [0], [0], [1], [0, 0, 1, 1], [], []>} : vector<16x192xbf16>, vector<192x64xbf16>, vector<16x64xf32> -> vector<16x64xf32>
    %302 = arith.addf %289, %301 : vector<16x64xf32>
    %c0_297 = arith.constant 0 : index
    %c0_298 = arith.constant 0 : index
    %303 = vector.load %arg13[%c0_297, %c0_298] : memref<1024x64xf32, #tpu.memory_space<vmem>>, vector<16x64xf32>
    tpu.vector_store %arg13[%c0_297, %c0_298], %302 {strides = array<i32>} : memref<1024x64xf32, #tpu.memory_space<vmem>>, vector<16x64xf32>,
    %c0_299 = arith.constant 0 : index
    %c0_300 = arith.constant 0 : index
    %304 = tpu.strided_load %arg13[%c0_299, %c0_300] {strides = array<i32: 2, 1>} : memref<1024x64xf32, #tpu.memory_space<vmem>>, vector<8x64xf32>
    %c1_301 = arith.constant 1 : index
    %c0_302 = arith.constant 0 : index
    %305 = tpu.strided_load %arg13[%c1_301, %c0_302] {strides = array<i32: 2, 1>} : memref<1024x64xf32, #tpu.memory_space<vmem>>, vector<8x64xf32>
    %306 = arith.maximumf %304, %305 : vector<8x64xf32>
    %c0_303 = arith.constant 0 : index
    %c0_304 = arith.constant 0 : index
    %307 = vector.load %arg14[%c0_303, %c0_304] : memref<512x64xf32, #tpu.memory_space<vmem>>, vector<8x64xf32>
    tpu.vector_store %arg14[%c0_303, %c0_304], %306 {strides = array<i32>} : memref<512x64xf32, #tpu.memory_space<vmem>>, vector<8x64xf32>,
    %c0_305 = arith.constant 0 : index
    %c0_306 = arith.constant 0 : index
    %308 = vector.load %arg14[%c0_305, %c0_306] : memref<512x64xf32, #tpu.memory_space<vmem>>, vector<2x64xf32>
    %c2_307 = arith.constant 2 : index
    %c0_308 = arith.constant 0 : index
    %309 = vector.load %arg14[%c2_307, %c0_308] : memref<512x64xf32, #tpu.memory_space<vmem>>, vector<2x64xf32>
    %310 = arith.maximumf %308, %309 : vector<2x64xf32>
    %c0_309 = arith.constant 0 : index
    %c0_310 = arith.constant 0 : index
    %311 = vector.load %arg15[%c0_309, %c0_310] : memref<256x64xf32, #tpu.memory_space<vmem>>, vector<2x64xf32>
    tpu.vector_store %arg15[%c0_309, %c0_310], %310 {strides = array<i32>} : memref<256x64xf32, #tpu.memory_space<vmem>>, vector<2x64xf32>,
    %c4_311 = arith.constant 4 : index
    %c0_312 = arith.constant 0 : index
    %312 = vector.load %arg14[%c4_311, %c0_312] : memref<512x64xf32, #tpu.memory_space<vmem>>, vector<2x64xf32>
    %c6 = arith.constant 6 : index
    %c0_313 = arith.constant 0 : index
    %313 = vector.load %arg14[%c6, %c0_313] : memref<512x64xf32, #tpu.memory_space<vmem>>, vector<2x64xf32>
    %314 = arith.maximumf %312, %313 : vector<2x64xf32>
    %c2_314 = arith.constant 2 : index
    %c0_315 = arith.constant 0 : index
    %315 = vector.load %arg15[%c2_314, %c0_315] : memref<256x64xf32, #tpu.memory_space<vmem>>, vector<2x64xf32>
    tpu.vector_store %arg15[%c2_314, %c0_315], %314 {strides = array<i32>} : memref<256x64xf32, #tpu.memory_space<vmem>>, vector<2x64xf32>,
    %c0_316 = arith.constant 0 : index
    %c0_317 = arith.constant 0 : index
    %316 = vector.load %arg15[%c0_316, %c0_317] : memref<256x64xf32, #tpu.memory_space<vmem>>, vector<4x64xf32>
    %317 = vector.broadcast %256 : vector<1x64xf32> to vector<4x64xf32>
    %318 = arith.addf %316, %317 : vector<4x64xf32>
    %cst_318 = arith.constant 0.000000e+00 : f32
    %319 = vector.broadcast %cst_318 : f32 to vector<4x64xf32>
    %320 = arith.maximumf %318, %319 : vector<4x64xf32>
    %321 = vector.extract_strided_slice %320 {offsets = [0, 0], sizes = [1, 64], strides = [1, 1]} : vector<4x64xf32> to vector<1x64xf32>
    %322 = vector.extract_strided_slice %320 {offsets = [1, 0], sizes = [1, 64], strides = [1, 1]} : vector<4x64xf32> to vector<1x64xf32>
    %323 = vector.extract_strided_slice %320 {offsets = [2, 0], sizes = [1, 64], strides = [1, 1]} : vector<4x64xf32> to vector<1x64xf32>
    %324 = vector.extract_strided_slice %320 {offsets = [3, 0], sizes = [1, 64], strides = [1, 1]} : vector<4x64xf32> to vector<1x64xf32>
    %325 = tpu.concatenate %321, %322, %323, %324 in 1 : vector<1x64xf32>, vector<1x64xf32>, vector<1x64xf32>, vector<1x64xf32> -> vector<1x256xf32>
    %c0_319 = arith.constant 0 : index
    %c0_320 = arith.constant 0 : index
    %326 = vector.load %arg7[%c0_319, %c0_320] : memref<256x128xf32, #tpu.memory_space<vmem>>, vector<256x128xf32>
    %cst_321 = arith.constant dense<0.000000e+00> : vector<1x128xf32>
    %327 = tpu.matmul %325, %326, %cst_321 {dimension_numbers = #tpu.dot_dimension_numbers<[1], [0], [0], [1], [0, 0, 1, 1], [], []>} : vector<1x256xf32>, vector<256x128xf32>, vector<1x128xf32> -> vector<1x128xf32>
    %c0_322 = arith.constant 0 : index
    %c0_323 = arith.constant 0 : index
    %328 = vector.load %arg8[%c0_322, %c0_323] : memref<1x128xf32, #tpu.memory_space<vmem>>, vector<1x128xf32>
    %329 = arith.addf %327, %328 : vector<1x128xf32>
    %c0_324 = arith.constant 0 : index
    %c0_325 = arith.constant 0 : index
    %330 = vector.load %arg9[%c0_324, %c0_325] : memref<128x15xf32, #tpu.memory_space<vmem>>, vector<128x15xf32>
    %cst_326 = arith.constant dense<0.000000e+00> : vector<1x15xf32>
    %331 = tpu.matmul %329, %330, %cst_326 {dimension_numbers = #tpu.dot_dimension_numbers<[1], [0], [0], [1], [0, 0, 1, 1], [], []>} : vector<1x128xf32>, vector<128x15xf32>, vector<1x15xf32> -> vector<1x15xf32>
    %c0_327 = arith.constant 0 : index
    %c0_328 = arith.constant 0 : index
    %332 = vector.load %arg10[%c0_327, %c0_328] : memref<1x15xf32, #tpu.memory_space<vmem>>, vector<1x15xf32>
    %333 = arith.addf %331, %332 : vector<1x15xf32>
    %c0_329 = arith.constant 0 : index
    %c0_330 = arith.constant 0 : index
    %c0_331 = arith.constant 0 : index
    %334 = vector.load %arg11[%c0_329, %c0_330, %c0_331] : memref<1x1x15xf32, #tpu.memory_space<vmem>>, vector<1x1x15xf32>
    %335 = vector.shape_cast %334 : vector<1x1x15xf32> to vector<1x15xf32>
    %336 = vector.shape_cast %333 : vector<1x15xf32> to vector<1x1x15xf32>
    tpu.vector_store %arg11[%c0_329, %c0_330, %c0_331], %336 {strides = array<i32>} : memref<1x1x15xf32, #tpu.memory_space<vmem>>, vector<1x1x15xf32>,
    return
  }
  func.func @transform_0(%arg0: i32) -> (i32, i32, i32) {
    %c0_i32 = arith.constant 0 : i32
    %c0_i32_0 = arith.constant 0 : i32
    %c0_i32_1 = arith.constant 0 : i32
    return %arg0, %c0_i32, %c0_i32_0 : i32, i32, i32
  }
  func.func @transform_1(%arg0: i32) -> (i32, i32) {
    %c0_i32 = arith.constant 0 : i32
    %c0_i32_0 = arith.constant 0 : i32
    %c0_i32_1 = arith.constant 0 : i32
    return %c0_i32, %c0_i32_0 : i32, i32
  }
  func.func @transform_2(%arg0: i32) -> (i32, i32, i32) {
    %c0_i32 = arith.constant 0 : i32
    %c0_i32_0 = arith.constant 0 : i32
    %c0_i32_1 = arith.constant 0 : i32
    %c0_i32_2 = arith.constant 0 : i32
    return %c0_i32, %c0_i32_0, %c0_i32_1 : i32, i32, i32
  }
  func.func @transform_3(%arg0: i32) -> (i32, i32, i32) {
    %c0_i32 = arith.constant 0 : i32
    %c0_i32_0 = arith.constant 0 : i32
    %c0_i32_1 = arith.constant 0 : i32
    %c0_i32_2 = arith.constant 0 : i32
    return %c0_i32, %c0_i32_0, %c0_i32_1 : i32, i32, i32
  }
  func.func @transform_4(%arg0: i32) -> (i32, i32, i32) {
    %c0_i32 = arith.constant 0 : i32
    %c0_i32_0 = arith.constant 0 : i32
    %c0_i32_1 = arith.constant 0 : i32
    %c0_i32_2 = arith.constant 0 : i32
    return %c0_i32, %c0_i32_0, %c0_i32_1 : i32, i32, i32
  }
  func.func @transform_5(%arg0: i32) -> (i32, i32) {
    %c0_i32 = arith.constant 0 : i32
    %c0_i32_0 = arith.constant 0 : i32
    %c0_i32_1 = arith.constant 0 : i32
    return %c0_i32, %c0_i32_0 : i32, i32
  }
  func.func @transform_6(%arg0: i32) -> (i32, i32) {
    %c0_i32 = arith.constant 0 : i32
    %c0_i32_0 = arith.constant 0 : i32
    %c0_i32_1 = arith.constant 0 : i32
    return %c0_i32, %c0_i32_0 : i32, i32
  }
  func.func @transform_7(%arg0: i32) -> (i32, i32) {
    %c0_i32 = arith.constant 0 : i32
    %c0_i32_0 = arith.constant 0 : i32
    %c0_i32_1 = arith.constant 0 : i32
    return %c0_i32, %c0_i32_0 : i32, i32
  }
  func.func @transform_8(%arg0: i32) -> (i32, i32) {
    %c0_i32 = arith.constant 0 : i32
    %c0_i32_0 = arith.constant 0 : i32
    %c0_i32_1 = arith.constant 0 : i32
    return %c0_i32, %c0_i32_0 : i32, i32
  }
  func.func @transform_9(%arg0: i32) -> (i32, i32) {
    %c0_i32 = arith.constant 0 : i32
    %c0_i32_0 = arith.constant 0 : i32
    %c0_i32_1 = arith.constant 0 : i32
    return %c0_i32, %c0_i32_0 : i32, i32
  }
  func.func @transform_10(%arg0: i32) -> (i32, i32, i32) {
    %c0_i32 = arith.constant 0 : i32
    %c0_i32_0 = arith.constant 0 : i32
    %c0_i32_1 = arith.constant 0 : i32
    return %arg0, %c0_i32, %c0_i32_0 : i32, i32, i32
  }
}

</mosaic_0001>

<llo_original>
// kernel: _lambda_.1
$region0: #{_lambda_.1}
  #allocation0 [shape = 'u32[]', space=smem, size = 0x4, offset = 0x4, fixed_abs, tag = 'smem constant byte address 0x4 - core index']
  #allocation1 [shape = 'u32[72,128]{1,0:T(1,128)}', space=vmem, size = 0x9000, scoped, tag = 'internal scratch']
  #allocation2 [shape = 'f32[304,64]{1,0:T(8,128)}', space=vmem, size = 0x26000, scoped, tag = 'scratch operand']
  #allocation3 [shape = 'f32[1024,64]{1,0:T(8,128)}', space=vmem, size = 0x80000, scoped, tag = 'scratch operand']
  #allocation4 [shape = 'f32[512,64]{1,0:T(8,128)}', space=vmem, size = 0x40000, scoped, tag = 'scratch operand']
  #allocation5 [shape = 'f32[256,64]{1,0:T(8,128)}', space=vmem, size = 0x20000, scoped, tag = 'scratch operand']
  %s0 = inlined_call_operand.vmem [shape: bf16[2,1024,27], index: 0, kind: input, shape index: {}]
  %s1 = inlined_call_operand.vmem [shape: bf16[27,64], index: 1, kind: input, shape index: {}]
  %s2 = inlined_call_operand.vmem [shape: bf16[3,192,64], index: 2, kind: input, shape index: {}]
  %s3 = inlined_call_operand.vmem [shape: bf16[3,192,64], index: 3, kind: input, shape index: {}]
  %s4 = inlined_call_operand.vmem [shape: bf16[3,192,64], index: 4, kind: input, shape index: {}]
  %s5 = inlined_call_operand.vmem [shape: f32[4,64], index: 5, kind: input, shape index: {}]
  %s6 = inlined_call_operand.vmem [shape: f32[256,128], index: 6, kind: input, shape index: {}]
  %s7 = inlined_call_operand.vmem [shape: f32[1,128], index: 7, kind: input, shape index: {}]
  %s8 = inlined_call_operand.vmem [shape: f32[128,15], index: 8, kind: input, shape index: {}]
  %s9 = inlined_call_operand.vmem [shape: f32[1,15], index: 9, kind: input, shape index: {}]
  %s10 = inlined_call_operand.vmem [shape: f32[2,1,15], index: 10, kind: output, shape index: {}]
  %s11 = sld [smem:[#allocation0]]
  $region73: #{_lambda_.1} parent=0
    _
  %s13 = ssub.s32 1, %s11
  %s14 = scalar_select 0, %s13, %s11
  loop: start=0, step=1, limit=4
  $region2: #{_lambda_.1} parent=0 // loop_pre_header
    _
  $region3: #{_lambda_.1} parent=0 // loop_header
    %s16 = sphi 0, %s20
    %p17 = scmp.ge.s32.totalorder %s16, 4
    %s26 = sphi 0, %s28
    %s29 = sphi 0, %s26
    %s30 = sphi 0, %s29
    %s46 = sphi 0, %s30
    %s50 = sphi 0, %s50
    %s52 = sphi 0, %s50
    %s53 = sphi 0, %s52
    %s67 = sphi 0, %s53
    %s71 = sphi 0, %s71
    %s73 = sphi 0, %s71
    %s74 = sphi 0, %s73
    %s88 = sphi 0, %s74
    %s92 = sphi 0, %s92
    %s94 = sphi 0, %s92
    %s95 = sphi 0, %s94
    %s109 = sphi 0, %s95
    %s113 = sphi 0, %s113
    %s115 = sphi 0, %s113
    %s116 = sphi 0, %s115
    %s130 = sphi 0, %s116
    %s134 = sphi 0, %s134
    %s136 = sphi 0, %s134
    %s137 = sphi 0, %s136
    %s151 = sphi 0, %s137
    %s155 = sphi 0, %s155
    %s157 = sphi 0, %s155
    %s158 = sphi 0, %s157
    %s172 = sphi 0, %s158
    %s176 = sphi 0, %s176
    %s178 = sphi 0, %s176
    %s179 = sphi 0, %s178
    %s193 = sphi 0, %s179
    %s197 = sphi 0, %s197
    %s199 = sphi 0, %s197
    %s200 = sphi 0, %s199
    %s214 = sphi 0, %s200
    %s218 = sphi 0, %s218
    %s220 = sphi 0, %s218
    %s221 = sphi 0, %s220
    %s235 = sphi 0, %s221
    %s241 = sphi 0, %s243
    %s244 = sphi 0, %s241
    %s245 = sphi 0, %s244
    %s261 = sphi 0, %s245
  $region4: #{_lambda_.1} parent=0 // loop_header_branch
    %19 = sbr.rel (%p17) target = $region8
  $region5: #{_lambda_.1} parent=0 // loop_body
    %s21 = ssub.s32 %s16, 1
    %s22 = ssub.s32 %s16, 2
    %s23 = sadd.s32 %s16, 1
    %s24 = ssub.s32 %s16, %s23
    %p25 = scmp.eq.s32.totalorder %s24, 0
    %s27 = sadd.s32 %s26, 1
    %s28 = scalar_select %p25, %s26, %s27
    %p31 = pneg %p25
    %p32 = scmp.eq.s32.totalorder %s16, 1
    %p33 = por %p31, %p32
    %p34 = scmp.ne.s32.totalorder %s26, %s29
    %p35 = scmp.eq.s32.totalorder %s16, 0
    %p36 = por %p34, %p35
    %p37 = scmp.ne.s32.totalorder %s26, %s29
    %p38 = scmp.eq.s32.totalorder %s21, 1
    %p39 = por %p37, %p38
    %p40 = scmp.ne.s32.totalorder %s29, %s30
    %p41 = scmp.eq.s32.totalorder %s21, 0
    %p42 = por %p40, %p41
    %p43 = scmp.ne.s32.totalorder %s29, %s30
    %p44 = scmp.eq.s32.totalorder %s22, 1
    %p45 = por %p43, %p44
    %p47 = scmp.ne.s32.totalorder %s30, %s46
    %p48 = scmp.eq.s32.totalorder %s22, 0
    %p49 = por %p47, %p48
    %s51 = sadd.s32 %s50, 1
    %p54 = scmp.eq.s32.totalorder %s16, 1
    %p55 = scmp.ne.s32.totalorder %s50, %s52
    %p56 = scmp.eq.s32.totalorder %s16, 0
    %p57 = por %p55, %p56
    %p58 = scmp.ne.s32.totalorder %s50, %s52
    %p59 = scmp.eq.s32.totalorder %s21, 1
    %p60 = por %p58, %p59
    %p61 = scmp.ne.s32.totalorder %s52, %s53
    %p62 = scmp.eq.s32.totalorder %s21, 0
    %p63 = por %p61, %p62
    %p64 = scmp.ne.s32.totalorder %s52, %s53
    %p65 = scmp.eq.s32.totalorder %s22, 1
    %p66 = por %p64, %p65
    %p68 = scmp.ne.s32.totalorder %s53, %s67
    %p69 = scmp.eq.s32.totalorder %s22, 0
    %p70 = por %p68, %p69
    %s72 = sadd.s32 %s71, 1
    %p75 = scmp.eq.s32.totalorder %s16, 1
    %p76 = scmp.ne.s32.totalorder %s71, %s73
    %p77 = scmp.eq.s32.totalorder %s16, 0
    %p78 = por %p76, %p77
    %p79 = scmp.ne.s32.totalorder %s71, %s73
    %p80 = scmp.eq.s32.totalorder %s21, 1
    %p81 = por %p79, %p80
    %p82 = scmp.ne.s32.totalorder %s73, %s74
    %p83 = scmp.eq.s32.totalorder %s21, 0
    %p84 = por %p82, %p83
    %p85 = scmp.ne.s32.totalorder %s73, %s74
    %p86 = scmp.eq.s32.totalorder %s22, 1
    %p87 = por %p85, %p86
    %p89 = scmp.ne.s32.totalorder %s74, %s88
    %p90 = scmp.eq.s32.totalorder %s22, 0
    %p91 = por %p89, %p90
    %s93 = sadd.s32 %s92, 1
    %p96 = scmp.eq.s32.totalorder %s16, 1
    %p97 = scmp.ne.s32.totalorder %s92, %s94
    %p98 = scmp.eq.s32.totalorder %s16, 0
    %p99 = por %p97, %p98
    %p100 = scmp.ne.s32.totalorder %s92, %s94
    %p101 = scmp.eq.s32.totalorder %s21, 1
    %p102 = por %p100, %p101
    %p103 = scmp.ne.s32.totalorder %s94, %s95
    %p104 = scmp.eq.s32.totalorder %s21, 0
    %p105 = por %p103, %p104
    %p106 = scmp.ne.s32.totalorder %s94, %s95
    %p107 = scmp.eq.s32.totalorder %s22, 1
    %p108 = por %p106, %p107
    %p110 = scmp.ne.s32.totalorder %s95, %s109
    %p111 = scmp.eq.s32.totalorder %s22, 0
    %p112 = por %p110, %p111
    %s114 = sadd.s32 %s113, 1
    %p117 = scmp.eq.s32.totalorder %s16, 1
    %p118 = scmp.ne.s32.totalorder %s113, %s115
    %p119 = scmp.eq.s32.totalorder %s16, 0
    %p120 = por %p118, %p119
    %p121 = scmp.ne.s32.totalorder %s113, %s115
    %p122 = scmp.eq.s32.totalorder %s21, 1
    %p123 = por %p121, %p122
    %p124 = scmp.ne.s32.totalorder %s115, %s116
    %p125 = scmp.eq.s32.totalorder %s21, 0
    %p126 = por %p124, %p125
    %p127 = scmp.ne.s32.totalorder %s115, %s116
    %p128 = scmp.eq.s32.totalorder %s22, 1
    %p129 = por %p127, %p128
    %p131 = scmp.ne.s32.totalorder %s116, %s130
    %p132 = scmp.eq.s32.totalorder %s22, 0
    %p133 = por %p131, %p132
    %s135 = sadd.s32 %s134, 1
    %p138 = scmp.eq.s32.totalorder %s16, 1
    %p139 = scmp.ne.s32.totalorder %s134, %s136
    %p140 = scmp.eq.s32.totalorder %s16, 0
    %p141 = por %p139, %p140
    %p142 = scmp.ne.s32.totalorder %s134, %s136
    %p143 = scmp.eq.s32.totalorder %s21, 1
    %p144 = por %p142, %p143
    %p145 = scmp.ne.s32.totalorder %s136, %s137
    %p146 = scmp.eq.s32.totalorder %s21, 0
    %p147 = por %p145, %p146
    %p148 = scmp.ne.s32.totalorder %s136, %s137
    %p149 = scmp.eq.s32.totalorder %s22, 1
    %p150 = por %p148, %p149
    %p152 = scmp.ne.s32.totalorder %s137, %s151
    %p153 = scmp.eq.s32.totalorder %s22, 0
    %p154 = por %p152, %p153
    %s156 = sadd.s32 %s155, 1
    %p159 = scmp.eq.s32.totalorder %s16, 1
    %p160 = scmp.ne.s32.totalorder %s155, %s157
    %p161 = scmp.eq.s32.totalorder %s16, 0
    %p162 = por %p160, %p161
    %p163 = scmp.ne.s32.totalorder %s155, %s157
    %p164 = scmp.eq.s32.totalorder %s21, 1
    %p165 = por %p163, %p164
    %p166 = scmp.ne.s32.totalorder %s157, %s158
    %p167 = scmp.eq.s32.totalorder %s21, 0
    %p168 = por %p166, %p167
    %p169 = scmp.ne.s32.totalorder %s157, %s158
    %p170 = scmp.eq.s32.totalorder %s22, 1
    %p171 = por %p169, %p170
    %p173 = scmp.ne.s32.totalorder %s158, %s172
    %p174 = scmp.eq.s32.totalorder %s22, 0
    %p175 = por %p173, %p174
    %s177 = sadd.s32 %s176, 1
    %p180 = scmp.eq.s32.totalorder %s16, 1
    %p181 = scmp.ne.s32.totalorder %s176, %s178
    %p182 = scmp.eq.s32.totalorder %s16, 0
    %p183 = por %p181, %p182
    %p184 = scmp.ne.s32.totalorder %s176, %s178
    %p185 = scmp.eq.s32.totalorder %s21, 1
    %p186 = por %p184, %p185
    %p187 = scmp.ne.s32.totalorder %s178, %s179
    %p188 = scmp.eq.s32.totalorder %s21, 0
    %p189 = por %p187, %p188
    %p190 = scmp.ne.s32.totalorder %s178, %s179
    %p191 = scmp.eq.s32.totalorder %s22, 1
    %p192 = por %p190, %p191
    %p194 = scmp.ne.s32.totalorder %s179, %s193
    %p195 = scmp.eq.s32.totalorder %s22, 0
    %p196 = por %p194, %p195
    %s198 = sadd.s32 %s197, 1
    %p201 = scmp.eq.s32.totalorder %s16, 1
    %p202 = scmp.ne.s32.totalorder %s197, %s199
    %p203 = scmp.eq.s32.totalorder %s16, 0
    %p204 = por %p202, %p203
    %p205 = scmp.ne.s32.totalorder %s197, %s199
    %p206 = scmp.eq.s32.totalorder %s21, 1
    %p207 = por %p205, %p206
    %p208 = scmp.ne.s32.totalorder %s199, %s200
    %p209 = scmp.eq.s32.totalorder %s21, 0
    %p210 = por %p208, %p209
    %p211 = scmp.ne.s32.totalorder %s199, %s200
    %p212 = scmp.eq.s32.totalorder %s22, 1
    %p213 = por %p211, %p212
    %p215 = scmp.ne.s32.totalorder %s200, %s214
    %p216 = scmp.eq.s32.totalorder %s22, 0
    %p217 = por %p215, %p216
    %s219 = sadd.s32 %s218, 1
    %p222 = scmp.eq.s32.totalorder %s16, 1
    %p223 = scmp.ne.s32.totalorder %s218, %s220
    %p224 = scmp.eq.s32.totalorder %s16, 0
    %p225 = por %p223, %p224
    %p226 = scmp.ne.s32.totalorder %s218, %s220
    %p227 = scmp.eq.s32.totalorder %s21, 1
    %p228 = por %p226, %p227
    %p229 = scmp.ne.s32.totalorder %s220, %s221
    %p230 = scmp.eq.s32.totalorder %s21, 0
    %p231 = por %p229, %p230
    %p232 = scmp.ne.s32.totalorder %s220, %s221
    %p233 = scmp.eq.s32.totalorder %s22, 1
    %p234 = por %p232, %p233
    %p236 = scmp.ne.s32.totalorder %s221, %s235
    %p237 = scmp.eq.s32.totalorder %s22, 0
    %p238 = por %p236, %p237
    %s239 = ssub.s32 %s16, %s23
    %p240 = scmp.eq.s32.totalorder %s239, 0
    %s242 = sadd.s32 %s241, 1
    %s243 = scalar_select %p240, %s241, %s242
    %p246 = pneg %p240
    %p247 = scmp.eq.s32.totalorder %s16, 1
    %p248 = por %p246, %p247
    %p249 = scmp.ne.s32.totalorder %s241, %s244
    %p250 = scmp.eq.s32.totalorder %s16, 0
    %p251 = por %p249, %p250
    %p252 = scmp.ne.s32.totalorder %s241, %s244
    %p253 = scmp.eq.s32.totalorder %s21, 1
    %p254 = por %p252, %p253
    %p255 = scmp.ne.s32.totalorder %s244, %s245
    %p256 = scmp.eq.s32.totalorder %s21, 0
    %p257 = por %p255, %p256
    %p258 = scmp.ne.s32.totalorder %s244, %s245
    %p259 = scmp.eq.s32.totalorder %s22, 1
    %p260 = por %p258, %p259
    %p262 = scmp.ne.s32.totalorder %s245, %s261
    %p263 = scmp.eq.s32.totalorder %s22, 0
    %p264 = por %p262, %p263
    %p265 = scmp.le.s32.totalorder 1, %s16
    %p266 = scmp.lt.s32.totalorder %s16, 3
    %p267 = pnand %p265, %p266
    %p268 = pneg %p267
    // Predicated region
    $region9: #{_lambda_.1} parent=5 // pred_check
      _
    $region10: #{_lambda_.1} parent=5 // pred_check_branch
      %270 = sbr.rel (%p267) target = $region12
    $region11: #{_lambda_.1} parent=5 // pred_region
      %s271 = ssub.s32 %s16, 1
      // Predicated region
      $region13: #{_lambda_.1} parent=11 // pred_check
        %p272 = pneg %p63
      $region14: #{_lambda_.1} parent=11 // pred_check_branch
        %274 = sbr.rel (%p272) target = $region16
      $region15: #{_lambda_.1} parent=11 // pred_region
        _
      $region16: #{_lambda_.1} parent=11 // pred_fallthru
        _
      // Predicated region
      $region17: #{_lambda_.1} parent=11 // pred_check
        %p275 = pneg %p84
      $region18: #{_lambda_.1} parent=11 // pred_check_branch
        %277 = sbr.rel (%p275) target = $region20
      $region19: #{_lambda_.1} parent=11 // pred_region
        _
      $region20: #{_lambda_.1} parent=11 // pred_fallthru
        _
      // Predicated region
      $region21: #{_lambda_.1} parent=11 // pred_check
        %p278 = pneg %p105
      $region22: #{_lambda_.1} parent=11 // pred_check_branch
        %280 = sbr.rel (%p278) target = $region24
      $region23: #{_lambda_.1} parent=11 // pred_region
        _
      $region24: #{_lambda_.1} parent=11 // pred_fallthru
        _
      // Predicated region
      $region25: #{_lambda_.1} parent=11 // pred_check
        %p281 = pneg %p126
      $region26: #{_lambda_.1} parent=11 // pred_check_branch
        %283 = sbr.rel (%p281) target = $region28
      $region27: #{_lambda_.1} parent=11 // pred_region
        _
      $region28: #{_lambda_.1} parent=11 // pred_fallthru
        _
      // Predicated region
      $region29: #{_lambda_.1} parent=11 // pred_check
        %p284 = pneg %p147
      $region30: #{_lambda_.1} parent=11 // pred_check_branch
        %286 = sbr.rel (%p284) target = $region32
      $region31: #{_lambda_.1} parent=11 // pred_region
        _
      $region32: #{_lambda_.1} parent=11 // pred_fallthru
        _
      // Predicated region
      $region33: #{_lambda_.1} parent=11 // pred_check
        %p287 = pneg %p168
      $region34: #{_lambda_.1} parent=11 // pred_check_branch
        %289 = sbr.rel (%p287) target = $region36
      $region35: #{_lambda_.1} parent=11 // pred_region
        _
      $region36: #{_lambda_.1} parent=11 // pred_fallthru
        _
      // Predicated region
      $region37: #{_lambda_.1} parent=11 // pred_check
        %p290 = pneg %p189
      $region38: #{_lambda_.1} parent=11 // pred_check_branch
        %292 = sbr.rel (%p290) target = $region40
      $region39: #{_lambda_.1} parent=11 // pred_region
        _
      $region40: #{_lambda_.1} parent=11 // pred_fallthru
        _
      // Predicated region
      $region41: #{_lambda_.1} parent=11 // pred_check
        %p293 = pneg %p210
      $region42: #{_lambda_.1} parent=11 // pred_check_branch
        %295 = sbr.rel (%p293) target = $region44
      $region43: #{_lambda_.1} parent=11 // pred_region
        _
      $region44: #{_lambda_.1} parent=11 // pred_fallthru
        _
      // Predicated region
      $region45: #{_lambda_.1} parent=11 // pred_check
        %p296 = pneg %p231
      $region46: #{_lambda_.1} parent=11 // pred_check_branch
        %298 = sbr.rel (%p296) target = $region48
      $region47: #{_lambda_.1} parent=11 // pred_region
        _
      $region48: #{_lambda_.1} parent=11 // pred_fallthru
        _
    $region12: #{_lambda_.1} parent=5 // pred_fallthru
      _
    %p299 = scmp.lt.s32.totalorder %s16, 2
    // Predicated region
    $region49: #{_lambda_.1} parent=5 // pred_check
      %p300 = pneg %p299
    $region50: #{_lambda_.1} parent=5 // pred_check_branch
      %302 = sbr.rel (%p300) target = $region52
    $region51: #{_lambda_.1} parent=5 // pred_region
      // Predicated region
      $region53: #{_lambda_.1} parent=51 // pred_check
        %p303 = pneg %p36
      $region54: #{_lambda_.1} parent=51 // pred_check_branch
        %305 = sbr.rel (%p303) target = $region56
      $region55: #{_lambda_.1} parent=51 // pred_region
        %p306 = scmp.lt.s32.totalorder %s16, 1
        %s307 = scalar_select %p306, %s16, 1
        %s308 = smul.addr %s307, 128
        %s309 = smul.addr %s308, 4
        %s310 = scalar_lea.vmem %s0, %s309
      $region56: #{_lambda_.1} parent=51 // pred_fallthru
        _
    $region52: #{_lambda_.1} parent=5 // pred_fallthru
      _
    %p311 = scmp.le.s32.totalorder 1, %s16
    %p312 = scmp.lt.s32.totalorder %s16, 3
    %p313 = pnand %p311, %p312
    %p314 = pneg %p313
    // Predicated region
    $region57: #{_lambda_.1} parent=5 // pred_check
      _
    $region58: #{_lambda_.1} parent=5 // pred_check_branch
      %316 = sbr.rel (%p313) target = $region60
    $region59: #{_lambda_.1} parent=5 // pred_region
      %s317 = ssub.s32 %s16, 1
      %p318 = scmp.lt.s32.totalorder %s21, 1
      %s319 = scalar_select %p318, %s21, 1
      %s320 = smul.addr %s319, 128
      %s321 = smul.addr %s320, 4
      %s322 = scalar_lea.vmem %s0, %s321
      %p323 = pneg %p42
      %p324 = pneg %p39
      %p325 = pneg %p63
      %p326 = pneg %p60
      %p327 = pneg %p84
      %p328 = pneg %p81
      %p329 = pneg %p105
      %p330 = pneg %p102
      %p331 = pneg %p126
      %p332 = pneg %p123
      %p333 = pneg %p147
      %p334 = pneg %p144
      %p335 = pneg %p168
      %p336 = pneg %p165
      %p337 = pneg %p189
      %p338 = pneg %p186
      %p339 = pneg %p210
      %p340 = pneg %p207
      %p341 = pneg %p231
      %p342 = pneg %p228
      %p343 = pneg %p257
      %p344 = pneg %p254
      %p345 = scmp.lt.s32.totalorder %s21, 1
      %s346 = scalar_select %p345, %s21, 1
      %s347 = scalar_lea.vmem %s10, %s346
      %p348 = scmp.lt.s32.totalorder %s21, 1
      %s349 = scalar_select %p348, %s21, 1
      %s350 = smul.addr %s349, 128
      %s351 = smul.addr %s350, 4
      %s352 = scalar_lea.vmem %s0, %s351
      %p353 = scmp.lt.s32.totalorder %s21, 1
      %s354 = scalar_select %p353, %s21, 1
      %s355 = scalar_lea.vmem %s10, %s354
      %v357 = vld [vmem:[%s352] sm:$0xf]
      %v358 = vld [vmem:[%s352 + $0x4] sm:$0xf]
      %v359 = vld [vmem:[%s352 + $0x8] sm:$0xf]
      %v360 = vld [vmem:[%s352 + $0xc] sm:$0xf]
      %v361 = vld [vmem:[%s352 + $0x10] sm:$0xf]
      %v362 = vld [vmem:[%s352 + $0x14] sm:$0xf]
      %v363 = vld [vmem:[%s352 + $0x18] sm:$0xf]
      %v364 = vld [vmem:[%s352 + $0x1c] sm:$0xf]
      %v365 = vld [vmem:[%s352 + $0x20] sm:$0xf]
      %v366 = vld [vmem:[%s352 + $0x24] sm:$0xf]
      %v367 = vld [vmem:[%s352 + $0x28] sm:$0xf]
      %v368 = vld [vmem:[%s352 + $0x2c] sm:$0xf]
      %v369 = vld [vmem:[%s352 + $0x30] sm:$0xf]
      %v370 = vld [vmem:[%s352 + $0x34] sm:$0xf]
      %v371 = vld [vmem:[%s352 + $0x38] sm:$0xf]
      %v372 = vld [vmem:[%s352 + $0x3c] sm:$0xf]
      %v373 = vld [vmem:[%s352 + $0x40] sm:$0xf]
      %v374 = vld [vmem:[%s352 + $0x44] sm:$0xf]
      %v375 = vld [vmem:[%s352 + $0x48] sm:$0xf]
      %v376 = vld [vmem:[%s352 + $0x4c] sm:$0xf]
      %v377 = vld [vmem:[%s352 + $0x50] sm:$0xf]
      %v378 = vld [vmem:[%s352 + $0x54] sm:$0xf]
      %v379 = vld [vmem:[%s352 + $0x58] sm:$0xf]
      %v380 = vld [vmem:[%s352 + $0x5c] sm:$0xf]
      %v381 = vld [vmem:[%s352 + $0x60] sm:$0xf]
      %v382 = vld [vmem:[%s352 + $0x64] sm:$0xf]
      %v383 = vld [vmem:[%s352 + $0x68] sm:$0xf]
      %v384 = vld [vmem:[%s352 + $0x6c] sm:$0xf]
      %v385 = vld [vmem:[%s352 + $0x70] sm:$0xf]
      %v386 = vld [vmem:[%s352 + $0x74] sm:$0xf]
      %v387 = vld [vmem:[%s352 + $0x78] sm:$0xf]
      %v388 = vld [vmem:[%s352 + $0x7c] sm:$0xf]
      %v389 = vld [vmem:[%s1] sm:$0xf]
      %v390 = vld [vmem:[%s1 + $0x4] sm:$0xf]
      %v391 = vld [vmem:[%s1 + $0x8] sm:$0xf]
      %v392 = vld [vmem:[%s1 + $0xc] sm:$0x3]
      %v425 = vunpack.c.l.b16 %v357
      %v426 = vunpack.c.l.b16 %v358
      %v427 = vunpack.c.l.b16 %v359
      %v428 = vunpack.c.l.b16 %v360
      %v429 = vunpack.c.l.b16 %v361
      %v430 = vunpack.c.l.b16 %v362
      %v431 = vunpack.c.l.b16 %v363
      %v432 = vunpack.c.l.b16 %v364
      %v433 = vunpack.c.l.b16 %v365
      %v434 = vunpack.c.l.b16 %v366
      %v435 = vunpack.c.l.b16 %v367
      %v436 = vunpack.c.l.b16 %v368
      %v437 = vunpack.c.l.b16 %v369
      %v438 = vunpack.c.l.b16 %v370
      %v439 = vunpack.c.l.b16 %v371
      %v440 = vunpack.c.l.b16 %v372
      %v441 = vunpack.c.l.b16 %v373
      %v442 = vunpack.c.l.b16 %v374
      %v443 = vunpack.c.l.b16 %v375
      %v444 = vunpack.c.l.b16 %v376
      %v445 = vunpack.c.l.b16 %v377
      %v446 = vunpack.c.l.b16 %v378
      %v447 = vunpack.c.l.b16 %v379
      %v448 = vunpack.c.l.b16 %v380
      %v449 = vunpack.c.l.b16 %v381
      %v450 = vunpack.c.l.b16 %v382
      %v451 = vunpack.c.l.b16 %v383
      %v452 = vunpack.c.l.b16 %v384
      %v453 = vunpack.c.l.b16 %v385
      %v454 = vunpack.c.l.b16 %v386
      %v455 = vunpack.c.l.b16 %v387
      %v456 = vunpack.c.l.b16 %v388
      %v457 = vpack.c.b16 %v426, %v425
      %v458 = vpack.c.b16 %v428, %v427
      %v459 = vpack.c.b16 %v430, %v429
      %v460 = vpack.c.b16 %v432, %v431
      %v461 = vpack.c.b16 %v434, %v433
      %v462 = vpack.c.b16 %v436, %v435
      %v463 = vpack.c.b16 %v438, %v437
      %v464 = vpack.c.b16 %v440, %v439
      %v465 = vpack.c.b16 %v442, %v441
      %v466 = vpack.c.b16 %v444, %v443
      %v467 = vpack.c.b16 %v446, %v445
      %v468 = vpack.c.b16 %v448, %v447
      %v469 = vpack.c.b16 %v450, %v449
      %v470 = vpack.c.b16 %v452, %v451
      %v471 = vpack.c.b16 %v454, %v453
      %v472 = vpack.c.b16 %v456, %v455
      %v477 = vunpack.c.l.b16 %v389
      %v478 = vunpack.c.l.b16 %v390
      %v479 = vunpack.c.l.b16 %v391
      %v480 = vunpack.c.l.b16 %v392
      %v481 = vpack.c.b16 %v478, %v477
      %v482 = vpack.c.b16 %v480, %v479
      %vm484 = vcmask 220160
      %v486 = vsel %vm484, %v457, 0
      %v489 = vsel %vm484, %v458, 0
      %v492 = vsel %vm484, %v459, 0
      %v495 = vsel %vm484, %v460, 0
      %v498 = vsel %vm484, %v461, 0
      %v501 = vsel %vm484, %v462, 0
      %v504 = vsel %vm484, %v463, 0
      %v507 = vsel %vm484, %v464, 0
      %v510 = vsel %vm484, %v465, 0
      %v513 = vsel %vm484, %v466, 0
      %v516 = vsel %vm484, %v467, 0
      %v519 = vsel %vm484, %v468, 0
      %v522 = vsel %vm484, %v469, 0
      %v525 = vsel %vm484, %v470, 0
      %v528 = vsel %vm484, %v471, 0
      %v531 = vsel %vm484, %v472, 0
      %vm533 = vcmask 1044480
      %vm534 = vcmask 1045504
      %v535 = vsel %vm533, 4294967295, 65535
      %v536 = vsel %vm534, %v535, 0
      %v538 = vand.u32 %v482, %v536
      %540 = vmatpush.bf16.msra.mxu0 0
      %541 = vmatpush.bf16.msra.mxu0 0
      %542 = vmatpush.bf16.msra.mxu0 0
      %543 = vmatpush.bf16.msra.mxu0 0
      %544 = vmatpush.bf16.msra.mxu0 0
      %545 = vmatpush.bf16.msra.mxu0 0
      %546 = vmatpush.bf16.msra.mxu0 %v538
      %547 = vmatpush.bf16.msra.mxu0 %v481
      %548 = vmatmul.bf16.gmra.mxu0 %v486
      %v549 = vpop.f32.mrf.mxu0
      %v550 = vadd.f32 0.0, %v549
      %v551 = vpop.f32.mrf.mxu0
      %v552 = vadd.f32 0.0, %v551
      %553 = vmatmul.bf16.gmra.mxu0 %v489
      %v554 = vpop.f32.mrf.mxu0
      %v555 = vadd.f32 0.0, %v554
      %v556 = vpop.f32.mrf.mxu0
      %v557 = vadd.f32 0.0, %v556
      %558 = vmatmul.bf16.gmra.mxu0 %v492
      %v559 = vpop.f32.mrf.mxu0
      %v560 = vadd.f32 0.0, %v559
      %v561 = vpop.f32.mrf.mxu0
      %v562 = vadd.f32 0.0, %v561
      %563 = vmatmul.bf16.gmra.mxu0 %v495
      %v564 = vpop.f32.mrf.mxu0
      %v565 = vadd.f32 0.0, %v564
      %v566 = vpop.f32.mrf.mxu0
      %v567 = vadd.f32 0.0, %v566
      %568 = vmatmul.bf16.gmra.mxu0 %v498
      %v569 = vpop.f32.mrf.mxu0
      %v570 = vadd.f32 0.0, %v569
      %v571 = vpop.f32.mrf.mxu0
      %v572 = vadd.f32 0.0, %v571
      %573 = vmatmul.bf16.gmra.mxu0 %v501
      %v574 = vpop.f32.mrf.mxu0
      %v575 = vadd.f32 0.0, %v574
      %v576 = vpop.f32.mrf.mxu0
      %v577 = vadd.f32 0.0, %v576
      %578 = vmatmul.bf16.gmra.mxu0 %v504
      %v579 = vpop.f32.mrf.mxu0
      %v580 = vadd.f32 0.0, %v579
      %v581 = vpop.f32.mrf.mxu0
      %v582 = vadd.f32 0.0, %v581
      %583 = vmatmul.bf16.gmra.mxu0 %v507
      %v584 = vpop.f32.mrf.mxu0
      %v585 = vadd.f32 0.0, %v584
      %v586 = vpop.f32.mrf.mxu0
      %v587 = vadd.f32 0.0, %v586
      %588 = vmatmul.bf16.gmra.mxu0 %v510
      %v589 = vpop.f32.mrf.mxu0
      %v590 = vadd.f32 0.0, %v589
      %v591 = vpop.f32.mrf.mxu0
      %v592 = vadd.f32 0.0, %v591
      %593 = vmatmul.bf16.gmra.mxu0 %v513
      %v594 = vpop.f32.mrf.mxu0
      %v595 = vadd.f32 0.0, %v594
      %v596 = vpop.f32.mrf.mxu0
      %v597 = vadd.f32 0.0, %v596
      %598 = vmatmul.bf16.gmra.mxu0 %v516
      %v599 = vpop.f32.mrf.mxu0
      %v600 = vadd.f32 0.0, %v599
      %v601 = vpop.f32.mrf.mxu0
      %v602 = vadd.f32 0.0, %v601
      %603 = vmatmul.bf16.gmra.mxu0 %v519
      %v604 = vpop.f32.mrf.mxu0
      %v605 = vadd.f32 0.0, %v604
      %v606 = vpop.f32.mrf.mxu0
      %v607 = vadd.f32 0.0, %v606
      %608 = vmatmul.bf16.gmra.mxu0 %v522
      %v609 = vpop.f32.mrf.mxu0
      %v610 = vadd.f32 0.0, %v609
      %v611 = vpop.f32.mrf.mxu0
      %v612 = vadd.f32 0.0, %v611
      %613 = vmatmul.bf16.gmra.mxu0 %v525
      %v614 = vpop.f32.mrf.mxu0
      %v615 = vadd.f32 0.0, %v614
      %v616 = vpop.f32.mrf.mxu0
      %v617 = vadd.f32 0.0, %v616
      %618 = vmatmul.bf16.gmra.mxu0 %v528
      %v619 = vpop.f32.mrf.mxu0
      %v620 = vadd.f32 0.0, %v619
      %v621 = vpop.f32.mrf.mxu0
      %v622 = vadd.f32 0.0, %v621
      %623 = vmatmul.bf16.gmra.mxu0 %v531
      %v624 = vpop.f32.mrf.mxu0
      %v625 = vadd.f32 0.0, %v624
      %v626 = vpop.f32.mrf.mxu0
      %v627 = vadd.f32 0.0, %v626
      %628 = vdwg.mxu0
      %vm629 = vcmask 523264
      %630 = vst.msk [vmem:[#allocation3] sm:$0xff] %vm629, %v550
      %631 = vst.msk [vmem:[#allocation3 + $0x8] sm:$0xff] %vm629, %v552
      %632 = vst.msk [vmem:[#allocation3 + $0x10] sm:$0xff] %vm629, %v555
      %633 = vst.msk [vmem:[#allocation3 + $0x18] sm:$0xff] %vm629, %v557
      %634 = vst.msk [vmem:[#allocation3 + $0x20] sm:$0xff] %vm629, %v560
      %635 = vst.msk [vmem:[#allocation3 + $0x28] sm:$0xff] %vm629, %v562
      %636 = vst.msk [vmem:[#allocation3 + $0x30] sm:$0xff] %vm629, %v565
      %637 = vst.msk [vmem:[#allocation3 + $0x38] sm:$0xff] %vm629, %v567
      %638 = vst.msk [vmem:[#allocation3 + $0x40] sm:$0xff] %vm629, %v570
      %639 = vst.msk [vmem:[#allocation3 + $0x48] sm:$0xff] %vm629, %v572
      %640 = vst.msk [vmem:[#allocation3 + $0x50] sm:$0xff] %vm629, %v575
      %641 = vst.msk [vmem:[#allocation3 + $0x58] sm:$0xff] %vm629, %v577
      %642 = vst.msk [vmem:[#allocation3 + $0x60] sm:$0xff] %vm629, %v580
      %643 = vst.msk [vmem:[#allocation3 + $0x68] sm:$0xff] %vm629, %v582
      %644 = vst.msk [vmem:[#allocation3 + $0x70] sm:$0xff] %vm629, %v585
      %645 = vst.msk [vmem:[#allocation3 + $0x78] sm:$0xff] %vm629, %v587
      %646 = vst.msk [vmem:[#allocation3 + $0x80] sm:$0xff] %vm629, %v590
      %647 = vst.msk [vmem:[#allocation3 + $0x88] sm:$0xff] %vm629, %v592
      %648 = vst.msk [vmem:[#allocation3 + $0x90] sm:$0xff] %vm629, %v595
      %649 = vst.msk [vmem:[#allocation3 + $0x98] sm:$0xff] %vm629, %v597
      %650 = vst.msk [vmem:[#allocation3 + $0xa0] sm:$0xff] %vm629, %v600
      %651 = vst.msk [vmem:[#allocation3 + $0xa8] sm:$0xff] %vm629, %v602
      %652 = vst.msk [vmem:[#allocation3 + $0xb0] sm:$0xff] %vm629, %v605
      %653 = vst.msk [vmem:[#allocation3 + $0xb8] sm:$0xff] %vm629, %v607
      %654 = vst.msk [vmem:[#allocation3 + $0xc0] sm:$0xff] %vm629, %v610
      %655 = vst.msk [vmem:[#allocation3 + $0xc8] sm:$0xff] %vm629, %v612
      %656 = vst.msk [vmem:[#allocation3 + $0xd0] sm:$0xff] %vm629, %v615
      %657 = vst.msk [vmem:[#allocation3 + $0xd8] sm:$0xff] %vm629, %v617
      %658 = vst.msk [vmem:[#allocation3 + $0xe0] sm:$0xff] %vm629, %v620
      %659 = vst.msk [vmem:[#allocation3 + $0xe8] sm:$0xff] %vm629, %v622
      %660 = vst.msk [vmem:[#allocation3 + $0xf0] sm:$0xff] %vm629, %v625
      %661 = vst.msk [vmem:[#allocation3 + $0xf8] sm:$0xff] %vm629, %v627
      %v662 = vld [vmem:[%s352 + $0x80] sm:$0xf]
      %v663 = vld [vmem:[%s352 + $0x84] sm:$0xf]
      %v664 = vld [vmem:[%s352 + $0x88] sm:$0xf]
      %v665 = vld [vmem:[%s352 + $0x8c] sm:$0xf]
      %v666 = vld [vmem:[%s352 + $0x90] sm:$0xf]
      %v667 = vld [vmem:[%s352 + $0x94] sm:$0xf]
      %v668 = vld [vmem:[%s352 + $0x98] sm:$0xf]
      %v669 = vld [vmem:[%s352 + $0x9c] sm:$0xf]
      %v670 = vld [vmem:[%s352 + $0xa0] sm:$0xf]
      %v671 = vld [vmem:[%s352 + $0xa4] sm:$0xf]
      %v672 = vld [vmem:[%s352 + $0xa8] sm:$0xf]
      %v673 = vld [vmem:[%s352 + $0xac] sm:$0xf]
      %v674 = vld [vmem:[%s352 + $0xb0] sm:$0xf]
      %v675 = vld [vmem:[%s352 + $0xb4] sm:$0xf]
      %v676 = vld [vmem:[%s352 + $0xb8] sm:$0xf]
      %v677 = vld [vmem:[%s352 + $0xbc] sm:$0xf]
      %v678 = vld [vmem:[%s352 + $0xc0] sm:$0xf]
      %v679 = vld [vmem:[%s352 + $0xc4] sm:$0xf]
      %v680 = vld [vmem:[%s352 + $0xc8] sm:$0xf]
      %v681 = vld [vmem:[%s352 + $0xcc] sm:$0xf]
      %v682 = vld [vmem:[%s352 + $0xd0] sm:$0xf]
      %v683 = vld [vmem:[%s352 + $0xd4] sm:$0xf]
      %v684 = vld [vmem:[%s352 + $0xd8] sm:$0xf]
      %v685 = vld [vmem:[%s352 + $0xdc] sm:$0xf]
      %v686 = vld [vmem:[%s352 + $0xe0] sm:$0xf]
      %v687 = vld [vmem:[%s352 + $0xe4] sm:$0xf]
      %v688 = vld [vmem:[%s352 + $0xe8] sm:$0xf]
      %v689 = vld [vmem:[%s352 + $0xec] sm:$0xf]
      %v690 = vld [vmem:[%s352 + $0xf0] sm:$0xf]
      %v691 = vld [vmem:[%s352 + $0xf4] sm:$0xf]
      %v692 = vld [vmem:[%s352 + $0xf8] sm:$0xf]
      %v693 = vld [vmem:[%s352 + $0xfc] sm:$0xf]
      %v694 = vld [vmem:[%s1] sm:$0xf]
      %v695 = vld [vmem:[%s1 + $0x4] sm:$0xf]
      %v696 = vld [vmem:[%s1 + $0x8] sm:$0xf]
      %v697 = vld [vmem:[%s1 + $0xc] sm:$0x3]
      %v730 = vunpack.c.l.b16 %v662
      %v731 = vunpack.c.l.b16 %v663
      %v732 = vunpack.c.l.b16 %v664
      %v733 = vunpack.c.l.b16 %v665
      %v734 = vunpack.c.l.b16 %v666
      %v735 = vunpack.c.l.b16 %v667
      %v736 = vunpack.c.l.b16 %v668
      %v737 = vunpack.c.l.b16 %v669
      %v738 = vunpack.c.l.b16 %v670
      %v739 = vunpack.c.l.b16 %v671
      %v740 = vunpack.c.l.b16 %v672
      %v741 = vunpack.c.l.b16 %v673
      %v742 = vunpack.c.l.b16 %v674
      %v743 = vunpack.c.l.b16 %v675
      %v744 = vunpack.c.l.b16 %v676
      %v745 = vunpack.c.l.b16 %v677
      %v746 = vunpack.c.l.b16 %v678
      %v747 = vunpack.c.l.b16 %v679
      %v748 = vunpack.c.l.b16 %v680
      %v749 = vunpack.c.l.b16 %v681
      %v750 = vunpack.c.l.b16 %v682
      %v751 = vunpack.c.l.b16 %v683
      %v752 = vunpack.c.l.b16 %v684
      %v753 = vunpack.c.l.b16 %v685
      %v754 = vunpack.c.l.b16 %v686
      %v755 = vunpack.c.l.b16 %v687
      %v756 = vunpack.c.l.b16 %v688
      %v757 = vunpack.c.l.b16 %v689
      %v758 = vunpack.c.l.b16 %v690
      %v759 = vunpack.c.l.b16 %v691
      %v760 = vunpack.c.l.b16 %v692
      %v761 = vunpack.c.l.b16 %v693
      %v762 = vpack.c.b16 %v731, %v730
      %v763 = vpack.c.b16 %v733, %v732
      %v764 = vpack.c.b16 %v735, %v734
      %v765 = vpack.c.b16 %v737, %v736
      %v766 = vpack.c.b16 %v739, %v738
      %v767 = vpack.c.b16 %v741, %v740
      %v768 = vpack.c.b16 %v743, %v742
      %v769 = vpack.c.b16 %v745, %v744
      %v770 = vpack.c.b16 %v747, %v746
      %v771 = vpack.c.b16 %v749, %v748
      %v772 = vpack.c.b16 %v751, %v750
      %v773 = vpack.c.b16 %v753, %v752
      %v774 = vpack.c.b16 %v755, %v754
      %v775 = vpack.c.b16 %v757, %v756
      %v776 = vpack.c.b16 %v759, %v758
      %v777 = vpack.c.b16 %v761, %v760
      %v782 = vunpack.c.l.b16 %v694
      %v783 = vunpack.c.l.b16 %v695
      %v784 = vunpack.c.l.b16 %v696
      %v785 = vunpack.c.l.b16 %v697
      %v786 = vpack.c.b16 %v783, %v782
      %v787 = vpack.c.b16 %v785, %v784
      %v790 = vsel %vm484, %v762, 0
      %v793 = vsel %vm484, %v763, 0
      %v796 = vsel %vm484, %v764, 0
      %v799 = vsel %vm484, %v765, 0
      %v802 = vsel %vm484, %v766, 0
      %v805 = vsel %vm484, %v767, 0
      %v808 = vsel %vm484, %v768, 0
      %v811 = vsel %vm484, %v769, 0
      %v814 = vsel %vm484, %v770, 0
      %v817 = vsel %vm484, %v771, 0
      %v820 = vsel %vm484, %v772, 0
      %v823 = vsel %vm484, %v773, 0
      %v826 = vsel %vm484, %v774, 0
      %v829 = vsel %vm484, %v775, 0
      %v832 = vsel %vm484, %v776, 0
      %v835 = vsel %vm484, %v777, 0
      %v838 = vand.u32 %v787, %v536
      %840 = vmatpush.bf16.msra.mxu0 0
      %841 = vmatpush.bf16.msra.mxu0 0
      %842 = vmatpush.bf16.msra.mxu0 0
      %843 = vmatpush.bf16.msra.mxu0 0
      %844 = vmatpush.bf16.msra.mxu0 0
      %845 = vmatpush.bf16.msra.mxu0 0
      %846 = vmatpush.bf16.msra.mxu0 %v838
      %847 = vmatpush.bf16.msra.mxu0 %v786
      %848 = vmatmul.bf16.gmra.mxu0 %v790
      %v849 = vpop.f32.mrf.mxu0
      %v850 = vadd.f32 0.0, %v849
      %v851 = vpop.f32.mrf.mxu0
      %v852 = vadd.f32 0.0, %v851
      %853 = vmatmul.bf16.gmra.mxu0 %v793
      %v854 = vpop.f32.mrf.mxu0
      %v855 = vadd.f32 0.0, %v854
      %v856 = vpop.f32.mrf.mxu0
      %v857 = vadd.f32 0.0, %v856
      %858 = vmatmul.bf16.gmra.mxu0 %v796
      %v859 = vpop.f32.mrf.mxu0
      %v860 = vadd.f32 0.0, %v859
      %v861 = vpop.f32.mrf.mxu0
      %v862 = vadd.f32 0.0, %v861
      %863 = vmatmul.bf16.gmra.mxu0 %v799
      %v864 = vpop.f32.mrf.mxu0
      %v865 = vadd.f32 0.0, %v864
      %v866 = vpop.f32.mrf.mxu0
      %v867 = vadd.f32 0.0, %v866
      %868 = vmatmul.bf16.gmra.mxu0 %v802
      %v869 = vpop.f32.mrf.mxu0
      %v870 = vadd.f32 0.0, %v869
      %v871 = vpop.f32.mrf.mxu0
      %v872 = vadd.f32 0.0, %v871
      %873 = vmatmul.bf16.gmra.mxu0 %v805
      %v874 = vpop.f32.mrf.mxu0
      %v875 = vadd.f32 0.0, %v874
      %v876 = vpop.f32.mrf.mxu0
      %v877 = vadd.f32 0.0, %v876
      %878 = vmatmul.bf16.gmra.mxu0 %v808
      %v879 = vpop.f32.mrf.mxu0
      %v880 = vadd.f32 0.0, %v879
      %v881 = vpop.f32.mrf.mxu0
      %v882 = vadd.f32 0.0, %v881
      %883 = vmatmul.bf16.gmra.mxu0 %v811
      %v884 = vpop.f32.mrf.mxu0
      %v885 = vadd.f32 0.0, %v884
      %v886 = vpop.f32.mrf.mxu0
      %v887 = vadd.f32 0.0, %v886
      %888 = vmatmul.bf16.gmra.mxu0 %v814
      %v889 = vpop.f32.mrf.mxu0
      %v890 = vadd.f32 0.0, %v889
      %v891 = vpop.f32.mrf.mxu0
      %v892 = vadd.f32 0.0, %v891
      %893 = vmatmul.bf16.gmra.mxu0 %v817
      %v894 = vpop.f32.mrf.mxu0
      %v895 = vadd.f32 0.0, %v894
      %v896 = vpop.f32.mrf.mxu0
      %v897 = vadd.f32 0.0, %v896
      %898 = vmatmul.bf16.gmra.mxu0 %v820
      %v899 = vpop.f32.mrf.mxu0
      %v900 = vadd.f32 0.0, %v899
      %v901 = vpop.f32.mrf.mxu0
      %v902 = vadd.f32 0.0, %v901
      %903 = vmatmul.bf16.gmra.mxu0 %v823
      %v904 = vpop.f32.mrf.mxu0
      %v905 = vadd.f32 0.0, %v904
      %v906 = vpop.f32.mrf.mxu0
      %v907 = vadd.f32 0.0, %v906
      %908 = vmatmul.bf16.gmra.mxu0 %v826
      %v909 = vpop.f32.mrf.mxu0
      %v910 = vadd.f32 0.0, %v909
      %v911 = vpop.f32.mrf.mxu0
      %v912 = vadd.f32 0.0, %v911
      %913 = vmatmul.bf16.gmra.mxu0 %v829
      %v914 = vpop.f32.mrf.mxu0
      %v915 = vadd.f32 0.0, %v914
      %v916 = vpop.f32.mrf.mxu0
      %v917 = vadd.f32 0.0, %v916
      %918 = vmatmul.bf16.gmra.mxu0 %v832
      %v919 = vpop.f32.mrf.mxu0
      %v920 = vadd.f32 0.0, %v919
      %v921 = vpop.f32.mrf.mxu0
      %v922 = vadd.f32 0.0, %v921
      %923 = vmatmul.bf16.gmra.mxu0 %v835
      %v924 = vpop.f32.mrf.mxu0
      %v925 = vadd.f32 0.0, %v924
      %v926 = vpop.f32.mrf.mxu0
      %v927 = vadd.f32 0.0, %v926
      %928 = vdwg.mxu0
      %929 = vst.msk [vmem:[#allocation3 + $0x100] sm:$0xff] %vm629, %v850
      %930 = vst.msk [vmem:[#allocation3 + $0x108] sm:$0xff] %vm629, %v852
      %931 = vst.msk [vmem:[#allocation3 + $0x110] sm:$0xff] %vm629, %v855
      %932 = vst.msk [vmem:[#allocation3 + $0x118] sm:$0xff] %vm629, %v857
      %933 = vst.msk [vmem:[#allocation3 + $0x120] sm:$0xff] %vm629, %v860
      %934 = vst.msk [vmem:[#allocation3 + $0x128] sm:$0xff] %vm629, %v862
      %935 = vst.msk [vmem:[#allocation3 + $0x130] sm:$0xff] %vm629, %v865
      %936 = vst.msk [vmem:[#allocation3 + $0x138] sm:$0xff] %vm629, %v867
      %937 = vst.msk [vmem:[#allocation3 + $0x140] sm:$0xff] %vm629, %v870
      %938 = vst.msk [vmem:[#allocation3 + $0x148] sm:$0xff] %vm629, %v872
      %939 = vst.msk [vmem:[#allocation3 + $0x150] sm:$0xff] %vm629, %v875
      %940 = vst.msk [vmem:[#allocation3 + $0x158] sm:$0xff] %vm629, %v877
      %941 = vst.msk [vmem:[#allocation3 + $0x160] sm:$0xff] %vm629, %v880
      %942 = vst.msk [vmem:[#allocation3 + $0x168] sm:$0xff] %vm629, %v882
      %943 = vst.msk [vmem:[#allocation3 + $0x170] sm:$0xff] %vm629, %v885
      %944 = vst.msk [vmem:[#allocation3 + $0x178] sm:$0xff] %vm629, %v887
      %945 = vst.msk [vmem:[#allocation3 + $0x180] sm:$0xff] %vm629, %v890
      %946 = vst.msk [vmem:[#allocation3 + $0x188] sm:$0xff] %vm629, %v892
      %947 = vst.msk [vmem:[#allocation3 + $0x190] sm:$0xff] %vm629, %v895
      %948 = vst.msk [vmem:[#allocation3 + $0x198] sm:$0xff] %vm629, %v897
      %949 = vst.msk [vmem:[#allocation3 + $0x1a0] sm:$0xff] %vm629, %v900
      %950 = vst.msk [vmem:[#allocation3 + $0x1a8] sm:$0xff] %vm629, %v902
      %951 = vst.msk [vmem:[#allocation3 + $0x1b0] sm:$0xff] %vm629, %v905
      %952 = vst.msk [vmem:[#allocation3 + $0x1b8] sm:$0xff] %vm629, %v907
      %953 = vst.msk [vmem:[#allocation3 + $0x1c0] sm:$0xff] %vm629, %v910
      %954 = vst.msk [vmem:[#allocation3 + $0x1c8] sm:$0xff] %vm629, %v912
      %955 = vst.msk [vmem:[#allocation3 + $0x1d0] sm:$0xff] %vm629, %v915
      %956 = vst.msk [vmem:[#allocation3 + $0x1d8] sm:$0xff] %vm629, %v917
      %957 = vst.msk [vmem:[#allocation3 + $0x1e0] sm:$0xff] %vm629, %v920
      %958 = vst.msk [vmem:[#allocation3 + $0x1e8] sm:$0xff] %vm629, %v922
      %959 = vst.msk [vmem:[#allocation3 + $0x1f0] sm:$0xff] %vm629, %v925
      %960 = vst.msk [vmem:[#allocation3 + $0x1f8] sm:$0xff] %vm629, %v927
      %v961 = vld [vmem:[%s352 + $0x100] sm:$0xf]
      %v962 = vld [vmem:[%s352 + $0x104] sm:$0xf]
      %v963 = vld [vmem:[%s352 + $0x108] sm:$0xf]
      %v964 = vld [vmem:[%s352 + $0x10c] sm:$0xf]
      %v965 = vld [vmem:[%s352 + $0x110] sm:$0xf]
      %v966 = vld [vmem:[%s352 + $0x114] sm:$0xf]
      %v967 = vld [vmem:[%s352 + $0x118] sm:$0xf]
      %v968 = vld [vmem:[%s352 + $0x11c] sm:$0xf]
      %v969 = vld [vmem:[%s352 + $0x120] sm:$0xf]
      %v970 = vld [vmem:[%s352 + $0x124] sm:$0xf]
      %v971 = vld [vmem:[%s352 + $0x128] sm:$0xf]
      %v972 = vld [vmem:[%s352 + $0x12c] sm:$0xf]
      %v973 = vld [vmem:[%s352 + $0x130] sm:$0xf]
      %v974 = vld [vmem:[%s352 + $0x134] sm:$0xf]
      %v975 = vld [vmem:[%s352 + $0x138] sm:$0xf]
      %v976 = vld [vmem:[%s352 + $0x13c] sm:$0xf]
      %v977 = vld [vmem:[%s352 + $0x140] sm:$0xf]
      %v978 = vld [vmem:[%s352 + $0x144] sm:$0xf]
      %v979 = vld [vmem:[%s352 + $0x148] sm:$0xf]
      %v980 = vld [vmem:[%s352 + $0x14c] sm:$0xf]
      %v981 = vld [vmem:[%s352 + $0x150] sm:$0xf]
      %v982 = vld [vmem:[%s352 + $0x154] sm:$0xf]
      %v983 = vld [vmem:[%s352 + $0x158] sm:$0xf]
      %v984 = vld [vmem:[%s352 + $0x15c] sm:$0xf]
      %v985 = vld [vmem:[%s352 + $0x160] sm:$0xf]
      %v986 = vld [vmem:[%s352 + $0x164] sm:$0xf]
      %v987 = vld [vmem:[%s352 + $0x168] sm:$0xf]
      %v988 = vld [vmem:[%s352 + $0x16c] sm:$0xf]
      %v989 = vld [vmem:[%s352 + $0x170] sm:$0xf]
      %v990 = vld [vmem:[%s352 + $0x174] sm:$0xf]
      %v991 = vld [vmem:[%s352 + $0x178] sm:$0xf]
      %v992 = vld [vmem:[%s352 + $0x17c] sm:$0xf]
      %v993 = vld [vmem:[%s1] sm:$0xf]
      %v994 = vld [vmem:[%s1 + $0x4] sm:$0xf]
      %v995 = vld [vmem:[%s1 + $0x8] sm:$0xf]
      %v996 = vld [vmem:[%s1 + $0xc] sm:$0x3]
      %v1029 = vunpack.c.l.b16 %v961
      %v1030 = vunpack.c.l.b16 %v962
      %v1031 = vunpack.c.l.b16 %v963
      %v1032 = vunpack.c.l.b16 %v964
      %v1033 = vunpack.c.l.b16 %v965
      %v1034 = vunpack.c.l.b16 %v966
      %v1035 = vunpack.c.l.b16 %v967
      %v1036 = vunpack.c.l.b16 %v968
      %v1037 = vunpack.c.l.b16 %v969
      %v1038 = vunpack.c.l.b16 %v970
      %v1039 = vunpack.c.l.b16 %v971
      %v1040 = vunpack.c.l.b16 %v972
      %v1041 = vunpack.c.l.b16 %v973
      %v1042 = vunpack.c.l.b16 %v974
      %v1043 = vunpack.c.l.b16 %v975
      %v1044 = vunpack.c.l.b16 %v976
      %v1045 = vunpack.c.l.b16 %v977
      %v1046 = vunpack.c.l.b16 %v978
      %v1047 = vunpack.c.l.b16 %v979
      %v1048 = vunpack.c.l.b16 %v980
      %v1049 = vunpack.c.l.b16 %v981
      %v1050 = vunpack.c.l.b16 %v982
      %v1051 = vunpack.c.l.b16 %v983
      %v1052 = vunpack.c.l.b16 %v984
      %v1053 = vunpack.c.l.b16 %v985
      %v1054 = vunpack.c.l.b16 %v986
      %v1055 = vunpack.c.l.b16 %v987
      %v1056 = vunpack.c.l.b16 %v988
      %v1057 = vunpack.c.l.b16 %v989
      %v1058 = vunpack.c.l.b16 %v990
      %v1059 = vunpack.c.l.b16 %v991
      %v1060 = vunpack.c.l.b16 %v992
      %v1061 = vpack.c.b16 %v1030, %v1029
      %v1062 = vpack.c.b16 %v1032, %v1031
      %v1063 = vpack.c.b16 %v1034, %v1033
      %v1064 = vpack.c.b16 %v1036, %v1035
      %v1065 = vpack.c.b16 %v1038, %v1037
      %v1066 = vpack.c.b16 %v1040, %v1039
      %v1067 = vpack.c.b16 %v1042, %v1041
      %v1068 = vpack.c.b16 %v1044, %v1043
      %v1069 = vpack.c.b16 %v1046, %v1045
      %v1070 = vpack.c.b16 %v1048, %v1047
      %v1071 = vpack.c.b16 %v1050, %v1049
      %v1072 = vpack.c.b16 %v1052, %v1051
      %v1073 = vpack.c.b16 %v1054, %v1053
      %v1074 = vpack.c.b16 %v1056, %v1055
      %v1075 = vpack.c.b16 %v1058, %v1057
      %v1076 = vpack.c.b16 %v1060, %v1059
      %v1081 = vunpack.c.l.b16 %v993
      %v1082 = vunpack.c.l.b16 %v994
      %v1083 = vunpack.c.l.b16 %v995
      %v1084 = vunpack.c.l.b16 %v996
      %v1085 = vpack.c.b16 %v1082, %v1081
      %v1086 = vpack.c.b16 %v1084, %v1083
      %v1089 = vsel %vm484, %v1061, 0
      %v1092 = vsel %vm484, %v1062, 0
      %v1095 = vsel %vm484, %v1063, 0
      %v1098 = vsel %vm484, %v1064, 0
      %v1101 = vsel %vm484, %v1065, 0
      %v1104 = vsel %vm484, %v1066, 0
      %v1107 = vsel %vm484, %v1067, 0
      %v1110 = vsel %vm484, %v1068, 0
      %v1113 = vsel %vm484, %v1069, 0
      %v1116 = vsel %vm484, %v1070, 0
      %v1119 = vsel %vm484, %v1071, 0
      %v1122 = vsel %vm484, %v1072, 0
      %v1125 = vsel %vm484, %v1073, 0
      %v1128 = vsel %vm484, %v1074, 0
      %v1131 = vsel %vm484, %v1075, 0
      %v1134 = vsel %vm484, %v1076, 0
      %v1137 = vand.u32 %v1086, %v536
      %1139 = vmatpush.bf16.msra.mxu0 0
      %1140 = vmatpush.bf16.msra.mxu0 0
      %1141 = vmatpush.bf16.msra.mxu0 0
      %1142 = vmatpush.bf16.msra.mxu0 0
      %1143 = vmatpush.bf16.msra.mxu0 0
      %1144 = vmatpush.bf16.msra.mxu0 0
      %1145 = vmatpush.bf16.msra.mxu0 %v1137
      %1146 = vmatpush.bf16.msra.mxu0 %v1085
      %1147 = vmatmul.bf16.gmra.mxu0 %v1089
      %v1148 = vpop.f32.mrf.mxu0
      %v1149 = vadd.f32 0.0, %v1148
      %v1150 = vpop.f32.mrf.mxu0
      %v1151 = vadd.f32 0.0, %v1150
      %1152 = vmatmul.bf16.gmra.mxu0 %v1092
      %v1153 = vpop.f32.mrf.mxu0
      %v1154 = vadd.f32 0.0, %v1153
      %v1155 = vpop.f32.mrf.mxu0
      %v1156 = vadd.f32 0.0, %v1155
      %1157 = vmatmul.bf16.gmra.mxu0 %v1095
      %v1158 = vpop.f32.mrf.mxu0
      %v1159 = vadd.f32 0.0, %v1158
      %v1160 = vpop.f32.mrf.mxu0
      %v1161 = vadd.f32 0.0, %v1160
      %1162 = vmatmul.bf16.gmra.mxu0 %v1098
      %v1163 = vpop.f32.mrf.mxu0
      %v1164 = vadd.f32 0.0, %v1163
      %v1165 = vpop.f32.mrf.mxu0
      %v1166 = vadd.f32 0.0, %v1165
      %1167 = vmatmul.bf16.gmra.mxu0 %v1101
      %v1168 = vpop.f32.mrf.mxu0
      %v1169 = vadd.f32 0.0, %v1168
      %v1170 = vpop.f32.mrf.mxu0
      %v1171 = vadd.f32 0.0, %v1170
      %1172 = vmatmul.bf16.gmra.mxu0 %v1104
      %v1173 = vpop.f32.mrf.mxu0
      %v1174 = vadd.f32 0.0, %v1173
      %v1175 = vpop.f32.mrf.mxu0
      %v1176 = vadd.f32 0.0, %v1175
      %1177 = vmatmul.bf16.gmra.mxu0 %v1107
      %v1178 = vpop.f32.mrf.mxu0
      %v1179 = vadd.f32 0.0, %v1178
      %v1180 = vpop.f32.mrf.mxu0
      %v1181 = vadd.f32 0.0, %v1180
      %1182 = vmatmul.bf16.gmra.mxu0 %v1110
      %v1183 = vpop.f32.mrf.mxu0
      %v1184 = vadd.f32 0.0, %v1183
      %v1185 = vpop.f32.mrf.mxu0
      %v1186 = vadd.f32 0.0, %v1185
      %1187 = vmatmul.bf16.gmra.mxu0 %v1113
      %v1188 = vpop.f32.mrf.mxu0
      %v1189 = vadd.f32 0.0, %v1188
      %v1190 = vpop.f32.mrf.mxu0
      %v1191 = vadd.f32 0.0, %v1190
      %1192 = vmatmul.bf16.gmra.mxu0 %v1116
      %v1193 = vpop.f32.mrf.mxu0
      %v1194 = vadd.f32 0.0, %v1193
      %v1195 = vpop.f32.mrf.mxu0
      %v1196 = vadd.f32 0.0, %v1195
      %1197 = vmatmul.bf16.gmra.mxu0 %v1119
      %v1198 = vpop.f32.mrf.mxu0
      %v1199 = vadd.f32 0.0, %v1198
      %v1200 = vpop.f32.mrf.mxu0
      %v1201 = vadd.f32 0.0, %v1200
      %1202 = vmatmul.bf16.gmra.mxu0 %v1122
      %v1203 = vpop.f32.mrf.mxu0
      %v1204 = vadd.f32 0.0, %v1203
      %v1205 = vpop.f32.mrf.mxu0
      %v1206 = vadd.f32 0.0, %v1205
      %1207 = vmatmul.bf16.gmra.mxu0 %v1125
      %v1208 = vpop.f32.mrf.mxu0
      %v1209 = vadd.f32 0.0, %v1208
      %v1210 = vpop.f32.mrf.mxu0
      %v1211 = vadd.f32 0.0, %v1210
      %1212 = vmatmul.bf16.gmra.mxu0 %v1128
      %v1213 = vpop.f32.mrf.mxu0
      %v1214 = vadd.f32 0.0, %v1213
      %v1215 = vpop.f32.mrf.mxu0
      %v1216 = vadd.f32 0.0, %v1215
      %1217 = vmatmul.bf16.gmra.mxu0 %v1131
      %v1218 = vpop.f32.mrf.mxu0
      %v1219 = vadd.f32 0.0, %v1218
      %v1220 = vpop.f32.mrf.mxu0
      %v1221 = vadd.f32 0.0, %v1220
      %1222 = vmatmul.bf16.gmra.mxu0 %v1134
      %v1223 = vpop.f32.mrf.mxu0
      %v1224 = vadd.f32 0.0, %v1223
      %v1225 = vpop.f32.mrf.mxu0
      %v1226 = vadd.f32 0.0, %v1225
      %1227 = vdwg.mxu0
      %1228 = vst.msk [vmem:[#allocation3 + $0x200] sm:$0xff] %vm629, %v1149
      %1229 = vst.msk [vmem:[#allocation3 + $0x208] sm:$0xff] %vm629, %v1151
      %1230 = vst.msk [vmem:[#allocation3 + $0x210] sm:$0xff] %vm629, %v1154
      %1231 = vst.msk [vmem:[#allocation3 + $0x218] sm:$0xff] %vm629, %v1156
      %1232 = vst.msk [vmem:[#allocation3 + $0x220] sm:$0xff] %vm629, %v1159
      %1233 = vst.msk [vmem:[#allocation3 + $0x228] sm:$0xff] %vm629, %v1161
      %1234 = vst.msk [vmem:[#allocation3 + $0x230] sm:$0xff] %vm629, %v1164
      %1235 = vst.msk [vmem:[#allocation3 + $0x238] sm:$0xff] %vm629, %v1166
      %1236 = vst.msk [vmem:[#allocation3 + $0x240] sm:$0xff] %vm629, %v1169
      %1237 = vst.msk [vmem:[#allocation3 + $0x248] sm:$0xff] %vm629, %v1171
      %1238 = vst.msk [vmem:[#allocation3 + $0x250] sm:$0xff] %vm629, %v1174
      %1239 = vst.msk [vmem:[#allocation3 + $0x258] sm:$0xff] %vm629, %v1176
      %1240 = vst.msk [vmem:[#allocation3 + $0x260] sm:$0xff] %vm629, %v1179
      %1241 = vst.msk [vmem:[#allocation3 + $0x268] sm:$0xff] %vm629, %v1181
      %1242 = vst.msk [vmem:[#allocation3 + $0x270] sm:$0xff] %vm629, %v1184
      %1243 = vst.msk [vmem:[#allocation3 + $0x278] sm:$0xff] %vm629, %v1186
      %1244 = vst.msk [vmem:[#allocation3 + $0x280] sm:$0xff] %vm629, %v1189
      %1245 = vst.msk [vmem:[#allocation3 + $0x288] sm:$0xff] %vm629, %v1191
      %1246 = vst.msk [vmem:[#allocation3 + $0x290] sm:$0xff] %vm629, %v1194
      %1247 = vst.msk [vmem:[#allocation3 + $0x298] sm:$0xff] %vm629, %v1196
      %1248 = vst.msk [vmem:[#allocation3 + $0x2a0] sm:$0xff] %vm629, %v1199
      %1249 = vst.msk [vmem:[#allocation3 + $0x2a8] sm:$0xff] %vm629, %v1201
      %1250 = vst.msk [vmem:[#allocation3 + $0x2b0] sm:$0xff] %vm629, %v1204
      %1251 = vst.msk [vmem:[#allocation3 + $0x2b8] sm:$0xff] %vm629, %v1206
      %1252 = vst.msk [vmem:[#allocation3 + $0x2c0] sm:$0xff] %vm629, %v1209
      %1253 = vst.msk [vmem:[#allocation3 + $0x2c8] sm:$0xff] %vm629, %v1211
      %1254 = vst.msk [vmem:[#allocation3 + $0x2d0] sm:$0xff] %vm629, %v1214
      %1255 = vst.msk [vmem:[#allocation3 + $0x2d8] sm:$0xff] %vm629, %v1216
      %1256 = vst.msk [vmem:[#allocation3 + $0x2e0] sm:$0xff] %vm629, %v1219
      %1257 = vst.msk [vmem:[#allocation3 + $0x2e8] sm:$0xff] %vm629, %v1221
      %1258 = vst.msk [vmem:[#allocation3 + $0x2f0] sm:$0xff] %vm629, %v1224
      %1259 = vst.msk [vmem:[#allocation3 + $0x2f8] sm:$0xff] %vm629, %v1226
      %v1260 = vld [vmem:[%s352 + $0x180] sm:$0xf]
      %v1261 = vld [vmem:[%s352 + $0x184] sm:$0xf]
      %v1262 = vld [vmem:[%s352 + $0x188] sm:$0xf]
      %v1263 = vld [vmem:[%s352 + $0x18c] sm:$0xf]
      %v1264 = vld [vmem:[%s352 + $0x190] sm:$0xf]
      %v1265 = vld [vmem:[%s352 + $0x194] sm:$0xf]
      %v1266 = vld [vmem:[%s352 + $0x198] sm:$0xf]
      %v1267 = vld [vmem:[%s352 + $0x19c] sm:$0xf]
      %v1268 = vld [vmem:[%s352 + $0x1a0] sm:$0xf]
      %v1269 = vld [vmem:[%s352 + $0x1a4] sm:$0xf]
      %v1270 = vld [vmem:[%s352 + $0x1a8] sm:$0xf]
      %v1271 = vld [vmem:[%s352 + $0x1ac] sm:$0xf]
      %v1272 = vld [vmem:[%s352 + $0x1b0] sm:$0xf]
      %v1273 = vld [vmem:[%s352 + $0x1b4] sm:$0xf]
      %v1274 = vld [vmem:[%s352 + $0x1b8] sm:$0xf]
      %v1275 = vld [vmem:[%s352 + $0x1bc] sm:$0xf]
      %v1276 = vld [vmem:[%s352 + $0x1c0] sm:$0xf]
      %v1277 = vld [vmem:[%s352 + $0x1c4] sm:$0xf]
      %v1278 = vld [vmem:[%s352 + $0x1c8] sm:$0xf]
      %v1279 = vld [vmem:[%s352 + $0x1cc] sm:$0xf]
      %v1280 = vld [vmem:[%s352 + $0x1d0] sm:$0xf]
      %v1281 = vld [vmem:[%s352 + $0x1d4] sm:$0xf]
      %v1282 = vld [vmem:[%s352 + $0x1d8] sm:$0xf]
      %v1283 = vld [vmem:[%s352 + $0x1dc] sm:$0xf]
      %v1284 = vld [vmem:[%s352 + $0x1e0] sm:$0xf]
      %v1285 = vld [vmem:[%s352 + $0x1e4] sm:$0xf]
      %v1286 = vld [vmem:[%s352 + $0x1e8] sm:$0xf]
      %v1287 = vld [vmem:[%s352 + $0x1ec] sm:$0xf]
      %v1288 = vld [vmem:[%s352 + $0x1f0] sm:$0xf]
      %v1289 = vld [vmem:[%s352 + $0x1f4] sm:$0xf]
      %v1290 = vld [vmem:[%s352 + $0x1f8] sm:$0xf]
      %v1291 = vld [vmem:[%s352 + $0x1fc] sm:$0xf]
      %v1292 = vld [vmem:[%s1] sm:$0xf]
      %v1293 = vld [vmem:[%s1 + $0x4] sm:$0xf]
      %v1294 = vld [vmem:[%s1 + $0x8] sm:$0xf]
      %v1295 = vld [vmem:[%s1 + $0xc] sm:$0x3]
      %v1328 = vunpack.c.l.b16 %v1260
      %v1329 = vunpack.c.l.b16 %v1261
      %v1330 = vunpack.c.l.b16 %v1262
      %v1331 = vunpack.c.l.b16 %v1263
      %v1332 = vunpack.c.l.b16 %v1264
      %v1333 = vunpack.c.l.b16 %v1265
      %v1334 = vunpack.c.l.b16 %v1266
      %v1335 = vunpack.c.l.b16 %v1267
      %v1336 = vunpack.c.l.b16 %v1268
      %v1337 = vunpack.c.l.b16 %v1269
      %v1338 = vunpack.c.l.b16 %v1270
      %v1339 = vunpack.c.l.b16 %v1271
      %v1340 = vunpack.c.l.b16 %v1272
      %v1341 = vunpack.c.l.b16 %v1273
      %v1342 = vunpack.c.l.b16 %v1274
      %v1343 = vunpack.c.l.b16 %v1275
      %v1344 = vunpack.c.l.b16 %v1276
      %v1345 = vunpack.c.l.b16 %v1277
      %v1346 = vunpack.c.l.b16 %v1278
      %v1347 = vunpack.c.l.b16 %v1279
      %v1348 = vunpack.c.l.b16 %v1280
      %v1349 = vunpack.c.l.b16 %v1281
      %v1350 = vunpack.c.l.b16 %v1282
      %v1351 = vunpack.c.l.b16 %v1283
      %v1352 = vunpack.c.l.b16 %v1284
      %v1353 = vunpack.c.l.b16 %v1285
      %v1354 = vunpack.c.l.b16 %v1286
      %v1355 = vunpack.c.l.b16 %v1287
      %v1356 = vunpack.c.l.b16 %v1288
      %v1357 = vunpack.c.l.b16 %v1289
      %v1358 = vunpack.c.l.b16 %v1290
      %v1359 = vunpack.c.l.b16 %v1291
      %v1360 = vpack.c.b16 %v1329, %v1328
      %v1361 = vpack.c.b16 %v1331, %v1330
      %v1362 = vpack.c.b16 %v1333, %v1332
      %v1363 = vpack.c.b16 %v1335, %v1334
      %v1364 = vpack.c.b16 %v1337, %v1336
      %v1365 = vpack.c.b16 %v1339, %v1338
      %v1366 = vpack.c.b16 %v1341, %v1340
      %v1367 = vpack.c.b16 %v1343, %v1342
      %v1368 = vpack.c.b16 %v1345, %v1344
      %v1369 = vpack.c.b16 %v1347, %v1346
      %v1370 = vpack.c.b16 %v1349, %v1348
      %v1371 = vpack.c.b16 %v1351, %v1350
      %v1372 = vpack.c.b16 %v1353, %v1352
      %v1373 = vpack.c.b16 %v1355, %v1354
      %v1374 = vpack.c.b16 %v1357, %v1356
      %v1375 = vpack.c.b16 %v1359, %v1358
      %v1380 = vunpack.c.l.b16 %v1292
      %v1381 = vunpack.c.l.b16 %v1293
      %v1382 = vunpack.c.l.b16 %v1294
      %v1383 = vunpack.c.l.b16 %v1295
      %v1384 = vpack.c.b16 %v1381, %v1380
      %v1385 = vpack.c.b16 %v1383, %v1382
      %v1388 = vsel %vm484, %v1360, 0
      %v1391 = vsel %vm484, %v1361, 0
      %v1394 = vsel %vm484, %v1362, 0
      %v1397 = vsel %vm484, %v1363, 0
      %v1400 = vsel %vm484, %v1364, 0
      %v1403 = vsel %vm484, %v1365, 0
      %v1406 = vsel %vm484, %v1366, 0
      %v1409 = vsel %vm484, %v1367, 0
      %v1412 = vsel %vm484, %v1368, 0
      %v1415 = vsel %vm484, %v1369, 0
      %v1418 = vsel %vm484, %v1370, 0
      %v1421 = vsel %vm484, %v1371, 0
      %v1424 = vsel %vm484, %v1372, 0
      %v1427 = vsel %vm484, %v1373, 0
      %v1430 = vsel %vm484, %v1374, 0
      %v1433 = vsel %vm484, %v1375, 0
      %v1436 = vand.u32 %v1385, %v536
      %1438 = vmatpush.bf16.msra.mxu0 0
      %1439 = vmatpush.bf16.msra.mxu0 0
      %1440 = vmatpush.bf16.msra.mxu0 0
      %1441 = vmatpush.bf16.msra.mxu0 0
      %1442 = vmatpush.bf16.msra.mxu0 0
      %1443 = vmatpush.bf16.msra.mxu0 0
      %1444 = vmatpush.bf16.msra.mxu0 %v1436
      %1445 = vmatpush.bf16.msra.mxu0 %v1384
      %1446 = vmatmul.bf16.gmra.mxu0 %v1388
      %v1447 = vpop.f32.mrf.mxu0
      %v1448 = vadd.f32 0.0, %v1447
      %v1449 = vpop.f32.mrf.mxu0
      %v1450 = vadd.f32 0.0, %v1449
      %1451 = vmatmul.bf16.gmra.mxu0 %v1391
      %v1452 = vpop.f32.mrf.mxu0
      %v1453 = vadd.f32 0.0, %v1452
      %v1454 = vpop.f32.mrf.mxu0
      %v1455 = vadd.f32 0.0, %v1454
      %1456 = vmatmul.bf16.gmra.mxu0 %v1394
      %v1457 = vpop.f32.mrf.mxu0
      %v1458 = vadd.f32 0.0, %v1457
      %v1459 = vpop.f32.mrf.mxu0
      %v1460 = vadd.f32 0.0, %v1459
      %1461 = vmatmul.bf16.gmra.mxu0 %v1397
      %v1462 = vpop.f32.mrf.mxu0
      %v1463 = vadd.f32 0.0, %v1462
      %v1464 = vpop.f32.mrf.mxu0
      %v1465 = vadd.f32 0.0, %v1464
      %1466 = vmatmul.bf16.gmra.mxu0 %v1400
      %v1467 = vpop.f32.mrf.mxu0
      %v1468 = vadd.f32 0.0, %v1467
      %v1469 = vpop.f32.mrf.mxu0
      %v1470 = vadd.f32 0.0, %v1469
      %1471 = vmatmul.bf16.gmra.mxu0 %v1403
      %v1472 = vpop.f32.mrf.mxu0
      %v1473 = vadd.f32 0.0, %v1472
      %v1474 = vpop.f32.mrf.mxu0
      %v1475 = vadd.f32 0.0, %v1474
      %1476 = vmatmul.bf16.gmra.mxu0 %v1406
      %v1477 = vpop.f32.mrf.mxu0
      %v1478 = vadd.f32 0.0, %v1477
      %v1479 = vpop.f32.mrf.mxu0
      %v1480 = vadd.f32 0.0, %v1479
      %1481 = vmatmul.bf16.gmra.mxu0 %v1409
      %v1482 = vpop.f32.mrf.mxu0
      %v1483 = vadd.f32 0.0, %v1482
      %v1484 = vpop.f32.mrf.mxu0
      %v1485 = vadd.f32 0.0, %v1484
      %1486 = vmatmul.bf16.gmra.mxu0 %v1412
      %v1487 = vpop.f32.mrf.mxu0
      %v1488 = vadd.f32 0.0, %v1487
      %v1489 = vpop.f32.mrf.mxu0
      %v1490 = vadd.f32 0.0, %v1489
      %1491 = vmatmul.bf16.gmra.mxu0 %v1415
      %v1492 = vpop.f32.mrf.mxu0
      %v1493 = vadd.f32 0.0, %v1492
      %v1494 = vpop.f32.mrf.mxu0
      %v1495 = vadd.f32 0.0, %v1494
      %1496 = vmatmul.bf16.gmra.mxu0 %v1418
      %v1497 = vpop.f32.mrf.mxu0
      %v1498 = vadd.f32 0.0, %v1497
      %v1499 = vpop.f32.mrf.mxu0
      %v1500 = vadd.f32 0.0, %v1499
      %1501 = vmatmul.bf16.gmra.mxu0 %v1421
      %v1502 = vpop.f32.mrf.mxu0
      %v1503 = vadd.f32 0.0, %v1502
      %v1504 = vpop.f32.mrf.mxu0
      %v1505 = vadd.f32 0.0, %v1504
      %1506 = vmatmul.bf16.gmra.mxu0 %v1424
      %v1507 = vpop.f32.mrf.mxu0
      %v1508 = vadd.f32 0.0, %v1507
      %v1509 = vpop.f32.mrf.mxu0
      %v1510 = vadd.f32 0.0, %v1509
      %1511 = vmatmul.bf16.gmra.mxu0 %v1427
      %v1512 = vpop.f32.mrf.mxu0
      %v1513 = vadd.f32 0.0, %v1512
      %v1514 = vpop.f32.mrf.mxu0
      %v1515 = vadd.f32 0.0, %v1514
      %1516 = vmatmul.bf16.gmra.mxu0 %v1430
      %v1517 = vpop.f32.mrf.mxu0
      %v1518 = vadd.f32 0.0, %v1517
      %v1519 = vpop.f32.mrf.mxu0
      %v1520 = vadd.f32 0.0, %v1519
      %1521 = vmatmul.bf16.gmra.mxu0 %v1433
      %v1522 = vpop.f32.mrf.mxu0
      %v1523 = vadd.f32 0.0, %v1522
      %v1524 = vpop.f32.mrf.mxu0
      %v1525 = vadd.f32 0.0, %v1524
      %1526 = vdwg.mxu0
      %1527 = vst.msk [vmem:[#allocation3 + $0x300] sm:$0xff] %vm629, %v1448
      %1528 = vst.msk [vmem:[#allocation3 + $0x308] sm:$0xff] %vm629, %v1450
      %1529 = vst.msk [vmem:[#allocation3 + $0x310] sm:$0xff] %vm629, %v1453
      %1530 = vst.msk [vmem:[#allocation3 + $0x318] sm:$0xff] %vm629, %v1455
      %1531 = vst.msk [vmem:[#allocation3 + $0x320] sm:$0xff] %vm629, %v1458
      %1532 = vst.msk [vmem:[#allocation3 + $0x328] sm:$0xff] %vm629, %v1460
      %1533 = vst.msk [vmem:[#allocation3 + $0x330] sm:$0xff] %vm629, %v1463
      %1534 = vst.msk [vmem:[#allocation3 + $0x338] sm:$0xff] %vm629, %v1465
      %1535 = vst.msk [vmem:[#allocation3 + $0x340] sm:$0xff] %vm629, %v1468
      %1536 = vst.msk [vmem:[#allocation3 + $0x348] sm:$0xff] %vm629, %v1470
      %1537 = vst.msk [vmem:[#allocation3 + $0x350] sm:$0xff] %vm629, %v1473
      %1538 = vst.msk [vmem:[#allocation3 + $0x358] sm:$0xff] %vm629, %v1475
      %1539 = vst.msk [vmem:[#allocation3 + $0x360] sm:$0xff] %vm629, %v1478
      %1540 = vst.msk [vmem:[#allocation3 + $0x368] sm:$0xff] %vm629, %v1480
      %1541 = vst.msk [vmem:[#allocation3 + $0x370] sm:$0xff] %vm629, %v1483
      %1542 = vst.msk [vmem:[#allocation3 + $0x378] sm:$0xff] %vm629, %v1485
      %1543 = vst.msk [vmem:[#allocation3 + $0x380] sm:$0xff] %vm629, %v1488
      %1544 = vst.msk [vmem:[#allocation3 + $0x388] sm:$0xff] %vm629, %v1490
      %1545 = vst.msk [vmem:[#allocation3 + $0x390] sm:$0xff] %vm629, %v1493
      %1546 = vst.msk [vmem:[#allocation3 + $0x398] sm:$0xff] %vm629, %v1495
      %1547 = vst.msk [vmem:[#allocation3 + $0x3a0] sm:$0xff] %vm629, %v1498
      %1548 = vst.msk [vmem:[#allocation3 + $0x3a8] sm:$0xff] %vm629, %v1500
      %1549 = vst.msk [vmem:[#allocation3 + $0x3b0] sm:$0xff] %vm629, %v1503
      %1550 = vst.msk [vmem:[#allocation3 + $0x3b8] sm:$0xff] %vm629, %v1505
      %1551 = vst.msk [vmem:[#allocation3 + $0x3c0] sm:$0xff] %vm629, %v1508
      %1552 = vst.msk [vmem:[#allocation3 + $0x3c8] sm:$0xff] %vm629, %v1510
      %1553 = vst.msk [vmem:[#allocation3 + $0x3d0] sm:$0xff] %vm629, %v1513
      %1554 = vst.msk [vmem:[#allocation3 + $0x3d8] sm:$0xff] %vm629, %v1515
      %1555 = vst.msk [vmem:[#allocation3 + $0x3e0] sm:$0xff] %vm629, %v1518
      %1556 = vst.msk [vmem:[#allocation3 + $0x3e8] sm:$0xff] %vm629, %v1520
      %1557 = vst.msk [vmem:[#allocation3 + $0x3f0] sm:$0xff] %vm629, %v1523
      %1558 = vst.msk [vmem:[#allocation3 + $0x3f8] sm:$0xff] %vm629, %v1525
      %v1559 = vld [vmem:[#allocation3] ss:$2 sm:$0xff]
      %s1560 = scalar_lea.vmem [#allocation3], 16
      %v1561 = vld [vmem:[%s1560] ss:$2 sm:$0xff]
      %s1562 = scalar_lea.vmem [#allocation3], 32
      %v1563 = vld [vmem:[%s1562] ss:$2 sm:$0xff]
      %s1564 = scalar_lea.vmem [#allocation3], 48
      %v1565 = vld [vmem:[%s1564] ss:$2 sm:$0xff]
      %s1566 = scalar_lea.vmem [#allocation3], 64
      %v1567 = vld [vmem:[%s1566] ss:$2 sm:$0xff]
      %s1568 = scalar_lea.vmem [#allocation3], 80
      %v1569 = vld [vmem:[%s1568] ss:$2 sm:$0xff]
      %s1570 = scalar_lea.vmem [#allocation3], 96
      %v1571 = vld [vmem:[%s1570] ss:$2 sm:$0xff]
      %s1572 = scalar_lea.vmem [#allocation3], 112
      %v1573 = vld [vmem:[%s1572] ss:$2 sm:$0xff]
      %s1574 = scalar_lea.vmem [#allocation3], 128
      %v1575 = vld [vmem:[%s1574] ss:$2 sm:$0xff]
      %s1576 = scalar_lea.vmem [#allocation3], 144
      %v1577 = vld [vmem:[%s1576] ss:$2 sm:$0xff]
      %s1578 = scalar_lea.vmem [#allocation3], 160
      %v1579 = vld [vmem:[%s1578] ss:$2 sm:$0xff]
      %s1580 = scalar_lea.vmem [#allocation3], 176
      %v1581 = vld [vmem:[%s1580] ss:$2 sm:$0xff]
      %s1582 = scalar_lea.vmem [#allocation3], 192
      %v1583 = vld [vmem:[%s1582] ss:$2 sm:$0xff]
      %s1584 = scalar_lea.vmem [#allocation3], 208
      %v1585 = vld [vmem:[%s1584] ss:$2 sm:$0xff]
      %s1586 = scalar_lea.vmem [#allocation3], 224
      %v1587 = vld [vmem:[%s1586] ss:$2 sm:$0xff]
      %s1588 = scalar_lea.vmem [#allocation3], 240
      %v1589 = vld [vmem:[%s1588] ss:$2 sm:$0xff]
      %s1590 = scalar_lea.vmem [#allocation3], 256
      %v1591 = vld [vmem:[%s1590] ss:$2 sm:$0xff]
      %s1592 = scalar_lea.vmem [#allocation3], 272
      %v1593 = vld [vmem:[%s1592] ss:$2 sm:$0xff]
      %s1594 = scalar_lea.vmem [#allocation3], 288
      %v1595 = vld [vmem:[%s1594] ss:$2 sm:$0xff]
      %s1596 = scalar_lea.vmem [#allocation3], 304
      %v1597 = vld [vmem:[%s1596] ss:$2 sm:$0xff]
      %s1598 = scalar_lea.vmem [#allocation3], 320
      %v1599 = vld [vmem:[%s1598] ss:$2 sm:$0xff]
      %s1600 = scalar_lea.vmem [#allocation3], 336
      %v1601 = vld [vmem:[%s1600] ss:$2 sm:$0xff]
      %s1602 = scalar_lea.vmem [#allocation3], 352
      %v1603 = vld [vmem:[%s1602] ss:$2 sm:$0xff]
      %s1604 = scalar_lea.vmem [#allocation3], 368
      %v1605 = vld [vmem:[%s1604] ss:$2 sm:$0xff]
      %s1606 = scalar_lea.vmem [#allocation3], 384
      %v1607 = vld [vmem:[%s1606] ss:$2 sm:$0xff]
      %s1608 = scalar_lea.vmem [#allocation3], 400
      %v1609 = vld [vmem:[%s1608] ss:$2 sm:$0xff]
      %s1610 = scalar_lea.vmem [#allocation3], 416
      %v1611 = vld [vmem:[%s1610] ss:$2 sm:$0xff]
      %s1612 = scalar_lea.vmem [#allocation3], 432
      %v1613 = vld [vmem:[%s1612] ss:$2 sm:$0xff]
      %s1614 = scalar_lea.vmem [#allocation3], 448
      %v1615 = vld [vmem:[%s1614] ss:$2 sm:$0xff]
      %s1616 = scalar_lea.vmem [#allocation3], 464
      %v1617 = vld [vmem:[%s1616] ss:$2 sm:$0xff]
      %s1618 = scalar_lea.vmem [#allocation3], 480
      %v1619 = vld [vmem:[%s1618] ss:$2 sm:$0xff]
      %s1620 = scalar_lea.vmem [#allocation3], 496
      %v1621 = vld [vmem:[%s1620] ss:$2 sm:$0xff]
      %s1622 = scalar_lea.vmem [#allocation3], 512
      %v1623 = vld [vmem:[%s1622] ss:$2 sm:$0xff]
      %s1624 = scalar_lea.vmem [#allocation3], 528
      %v1625 = vld [vmem:[%s1624] ss:$2 sm:$0xff]
      %s1626 = scalar_lea.vmem [#allocation3], 544
      %v1627 = vld [vmem:[%s1626] ss:$2 sm:$0xff]
      %s1628 = scalar_lea.vmem [#allocation3], 560
      %v1629 = vld [vmem:[%s1628] ss:$2 sm:$0xff]
      %s1630 = scalar_lea.vmem [#allocation3], 576
      %v1631 = vld [vmem:[%s1630] ss:$2 sm:$0xff]
      %s1632 = scalar_lea.vmem [#allocation3], 592
      %v1633 = vld [vmem:[%s1632] ss:$2 sm:$0xff]
      %s1634 = scalar_lea.vmem [#allocation3], 608
      %v1635 = vld [vmem:[%s1634] ss:$2 sm:$0xff]
      %s1636 = scalar_lea.vmem [#allocation3], 624
      %v1637 = vld [vmem:[%s1636] ss:$2 sm:$0xff]
      %s1638 = scalar_lea.vmem [#allocation3], 640
      %v1639 = vld [vmem:[%s1638] ss:$2 sm:$0xff]
      %s1640 = scalar_lea.vmem [#allocation3], 656
      %v1641 = vld [vmem:[%s1640] ss:$2 sm:$0xff]
      %s1642 = scalar_lea.vmem [#allocation3], 672
      %v1643 = vld [vmem:[%s1642] ss:$2 sm:$0xff]
      %s1644 = scalar_lea.vmem [#allocation3], 688
      %v1645 = vld [vmem:[%s1644] ss:$2 sm:$0xff]
      %s1646 = scalar_lea.vmem [#allocation3], 704
      %v1647 = vld [vmem:[%s1646] ss:$2 sm:$0xff]
      %s1648 = scalar_lea.vmem [#allocation3], 720
      %v1649 = vld [vmem:[%s1648] ss:$2 sm:$0xff]
      %s1650 = scalar_lea.vmem [#allocation3], 736
      %v1651 = vld [vmem:[%s1650] ss:$2 sm:$0xff]
      %s1652 = scalar_lea.vmem [#allocation3], 752
      %v1653 = vld [vmem:[%s1652] ss:$2 sm:$0xff]
      %s1654 = scalar_lea.vmem [#allocation3], 768
      %v1655 = vld [vmem:[%s1654] ss:$2 sm:$0xff]
      %s1656 = scalar_lea.vmem [#allocation3], 784
      %v1657 = vld [vmem:[%s1656] ss:$2 sm:$0xff]
      %s1658 = scalar_lea.vmem [#allocation3], 800
      %v1659 = vld [vmem:[%s1658] ss:$2 sm:$0xff]
      %s1660 = scalar_lea.vmem [#allocation3], 816
      %v1661 = vld [vmem:[%s1660] ss:$2 sm:$0xff]
      %s1662 = scalar_lea.vmem [#allocation3], 832
      %v1663 = vld [vmem:[%s1662] ss:$2 sm:$0xff]
      %s1664 = scalar_lea.vmem [#allocation3], 848
      %v1665 = vld [vmem:[%s1664] ss:$2 sm:$0xff]
      %s1666 = scalar_lea.vmem [#allocation3], 864
      %v1667 = vld [vmem:[%s1666] ss:$2 sm:$0xff]
      %s1668 = scalar_lea.vmem [#allocation3], 880
      %v1669 = vld [vmem:[%s1668] ss:$2 sm:$0xff]
      %s1670 = scalar_lea.vmem [#allocation3], 896
      %v1671 = vld [vmem:[%s1670] ss:$2 sm:$0xff]
      %s1672 = scalar_lea.vmem [#allocation3], 912
      %v1673 = vld [vmem:[%s1672] ss:$2 sm:$0xff]
      %s1674 = scalar_lea.vmem [#allocation3], 928
      %v1675 = vld [vmem:[%s1674] ss:$2 sm:$0xff]
      %s1676 = scalar_lea.vmem [#allocation3], 944
      %v1677 = vld [vmem:[%s1676] ss:$2 sm:$0xff]
      %s1678 = scalar_lea.vmem [#allocation3], 960
      %v1679 = vld [vmem:[%s1678] ss:$2 sm:$0xff]
      %s1680 = scalar_lea.vmem [#allocation3], 976
      %v1681 = vld [vmem:[%s1680] ss:$2 sm:$0xff]
      %s1682 = scalar_lea.vmem [#allocation3], 992
      %v1683 = vld [vmem:[%s1682] ss:$2 sm:$0xff]
      %s1684 = scalar_lea.vmem [#allocation3], 1008
      %v1685 = vld [vmem:[%s1684] ss:$2 sm:$0xff]
      %s1686 = scalar_lea.vmem [#allocation3], 1
      %v1687 = vld [vmem:[%s1686] ss:$2 sm:$0xff]
      %s1688 = scalar_lea.vmem [#allocation3], 17
      %v1689 = vld [vmem:[%s1688] ss:$2 sm:$0xff]
      %s1690 = scalar_lea.vmem [#allocation3], 33
      %v1691 = vld [vmem:[%s1690] ss:$2 sm:$0xff]
      %s1692 = scalar_lea.vmem [#allocation3], 49
      %v1693 = vld [vmem:[%s1692] ss:$2 sm:$0xff]
      %s1694 = scalar_lea.vmem [#allocation3], 65
      %v1695 = vld [vmem:[%s1694] ss:$2 sm:$0xff]
      %s1696 = scalar_lea.vmem [#allocation3], 81
      %v1697 = vld [vmem:[%s1696] ss:$2 sm:$0xff]
      %s1698 = scalar_lea.vmem [#allocation3], 97
      %v1699 = vld [vmem:[%s1698] ss:$2 sm:$0xff]
      %s1700 = scalar_lea.vmem [#allocation3], 113
      %v1701 = vld [vmem:[%s1700] ss:$2 sm:$0xff]
      %s1702 = scalar_lea.vmem [#allocation3], 129
      %v1703 = vld [vmem:[%s1702] ss:$2 sm:$0xff]
      %s1704 = scalar_lea.vmem [#allocation3], 145
      %v1705 = vld [vmem:[%s1704] ss:$2 sm:$0xff]
      %s1706 = scalar_lea.vmem [#allocation3], 161
      %v1707 = vld [vmem:[%s1706] ss:$2 sm:$0xff]
      %s1708 = scalar_lea.vmem [#allocation3], 177
      %v1709 = vld [vmem:[%s1708] ss:$2 sm:$0xff]
      %s1710 = scalar_lea.vmem [#allocation3], 193
      %v1711 = vld [vmem:[%s1710] ss:$2 sm:$0xff]
      %s1712 = scalar_lea.vmem [#allocation3], 209
      %v1713 = vld [vmem:[%s1712] ss:$2 sm:$0xff]
      %s1714 = scalar_lea.vmem [#allocation3], 225
      %v1715 = vld [vmem:[%s1714] ss:$2 sm:$0xff]
      %s1716 = scalar_lea.vmem [#allocation3], 241
      %v1717 = vld [vmem:[%s1716] ss:$2 sm:$0xff]
      %s1718 = scalar_lea.vmem [#allocation3], 257
      %v1719 = vld [vmem:[%s1718] ss:$2 sm:$0xff]
      %s1720 = scalar_lea.vmem [#allocation3], 273
      %v1721 = vld [vmem:[%s1720] ss:$2 sm:$0xff]
      %s1722 = scalar_lea.vmem [#allocation3], 289
      %v1723 = vld [vmem:[%s1722] ss:$2 sm:$0xff]
      %s1724 = scalar_lea.vmem [#allocation3], 305
      %v1725 = vld [vmem:[%s1724] ss:$2 sm:$0xff]
      %s1726 = scalar_lea.vmem [#allocation3], 321
      %v1727 = vld [vmem:[%s1726] ss:$2 sm:$0xff]
      %s1728 = scalar_lea.vmem [#allocation3], 337
      %v1729 = vld [vmem:[%s1728] ss:$2 sm:$0xff]
      %s1730 = scalar_lea.vmem [#allocation3], 353
      %v1731 = vld [vmem:[%s1730] ss:$2 sm:$0xff]
      %s1732 = scalar_lea.vmem [#allocation3], 369
      %v1733 = vld [vmem:[%s1732] ss:$2 sm:$0xff]
      %s1734 = scalar_lea.vmem [#allocation3], 385
      %v1735 = vld [vmem:[%s1734] ss:$2 sm:$0xff]
      %s1736 = scalar_lea.vmem [#allocation3], 401
      %v1737 = vld [vmem:[%s1736] ss:$2 sm:$0xff]
      %s1738 = scalar_lea.vmem [#allocation3], 417
      %v1739 = vld [vmem:[%s1738] ss:$2 sm:$0xff]
      %s1740 = scalar_lea.vmem [#allocation3], 433
      %v1741 = vld [vmem:[%s1740] ss:$2 sm:$0xff]
      %s1742 = scalar_lea.vmem [#allocation3], 449
      %v1743 = vld [vmem:[%s1742] ss:$2 sm:$0xff]
      %s1744 = scalar_lea.vmem [#allocation3], 465
      %v1745 = vld [vmem:[%s1744] ss:$2 sm:$0xff]
      %s1746 = scalar_lea.vmem [#allocation3], 481
      %v1747 = vld [vmem:[%s1746] ss:$2 sm:$0xff]
      %s1748 = scalar_lea.vmem [#allocation3], 497
      %v1749 = vld [vmem:[%s1748] ss:$2 sm:$0xff]
      %s1750 = scalar_lea.vmem [#allocation3], 513
      %v1751 = vld [vmem:[%s1750] ss:$2 sm:$0xff]
      %s1752 = scalar_lea.vmem [#allocation3], 529
      %v1753 = vld [vmem:[%s1752] ss:$2 sm:$0xff]
      %s1754 = scalar_lea.vmem [#allocation3], 545
      %v1755 = vld [vmem:[%s1754] ss:$2 sm:$0xff]
      %s1756 = scalar_lea.vmem [#allocation3], 561
      %v1757 = vld [vmem:[%s1756] ss:$2 sm:$0xff]
      %s1758 = scalar_lea.vmem [#allocation3], 577
      %v1759 = vld [vmem:[%s1758] ss:$2 sm:$0xff]
      %s1760 = scalar_lea.vmem [#allocation3], 593
      %v1761 = vld [vmem:[%s1760] ss:$2 sm:$0xff]
      %s1762 = scalar_lea.vmem [#allocation3], 609
      %v1763 = vld [vmem:[%s1762] ss:$2 sm:$0xff]
      %s1764 = scalar_lea.vmem [#allocation3], 625
      %v1765 = vld [vmem:[%s1764] ss:$2 sm:$0xff]
      %s1766 = scalar_lea.vmem [#allocation3], 641
      %v1767 = vld [vmem:[%s1766] ss:$2 sm:$0xff]
      %s1768 = scalar_lea.vmem [#allocation3], 657
      %v1769 = vld [vmem:[%s1768] ss:$2 sm:$0xff]
      %s1770 = scalar_lea.vmem [#allocation3], 673
      %v1771 = vld [vmem:[%s1770] ss:$2 sm:$0xff]
      %s1772 = scalar_lea.vmem [#allocation3], 689
      %v1773 = vld [vmem:[%s1772] ss:$2 sm:$0xff]
      %s1774 = scalar_lea.vmem [#allocation3], 705
      %v1775 = vld [vmem:[%s1774] ss:$2 sm:$0xff]
      %s1776 = scalar_lea.vmem [#allocation3], 721
      %v1777 = vld [vmem:[%s1776] ss:$2 sm:$0xff]
      %s1778 = scalar_lea.vmem [#allocation3], 737
      %v1779 = vld [vmem:[%s1778] ss:$2 sm:$0xff]
      %s1780 = scalar_lea.vmem [#allocation3], 753
      %v1781 = vld [vmem:[%s1780] ss:$2 sm:$0xff]
      %s1782 = scalar_lea.vmem [#allocation3], 769
      %v1783 = vld [vmem:[%s1782] ss:$2 sm:$0xff]
      %s1784 = scalar_lea.vmem [#allocation3], 785
      %v1785 = vld [vmem:[%s1784] ss:$2 sm:$0xff]
      %s1786 = scalar_lea.vmem [#allocation3], 801
      %v1787 = vld [vmem:[%s1786] ss:$2 sm:$0xff]
      %s1788 = scalar_lea.vmem [#allocation3], 817
      %v1789 = vld [vmem:[%s1788] ss:$2 sm:$0xff]
      %s1790 = scalar_lea.vmem [#allocation3], 833
      %v1791 = vld [vmem:[%s1790] ss:$2 sm:$0xff]
      %s1792 = scalar_lea.vmem [#allocation3], 849
      %v1793 = vld [vmem:[%s1792] ss:$2 sm:$0xff]
      %s1794 = scalar_lea.vmem [#allocation3], 865
      %v1795 = vld [vmem:[%s1794] ss:$2 sm:$0xff]
      %s1796 = scalar_lea.vmem [#allocation3], 881
      %v1797 = vld [vmem:[%s1796] ss:$2 sm:$0xff]
      %s1798 = scalar_lea.vmem [#allocation3], 897
      %v1799 = vld [vmem:[%s1798] ss:$2 sm:$0xff]
      %s1800 = scalar_lea.vmem [#allocation3], 913
      %v1801 = vld [vmem:[%s1800] ss:$2 sm:$0xff]
      %s1802 = scalar_lea.vmem [#allocation3], 929
      %v1803 = vld [vmem:[%s1802] ss:$2 sm:$0xff]
      %s1804 = scalar_lea.vmem [#allocation3], 945
      %v1805 = vld [vmem:[%s1804] ss:$2 sm:$0xff]
      %s1806 = scalar_lea.vmem [#allocation3], 961
      %v1807 = vld [vmem:[%s1806] ss:$2 sm:$0xff]
      %s1808 = scalar_lea.vmem [#allocation3], 977
      %v1809 = vld [vmem:[%s1808] ss:$2 sm:$0xff]
      %s1810 = scalar_lea.vmem [#allocation3], 993
      %v1811 = vld [vmem:[%s1810] ss:$2 sm:$0xff]
      %s1812 = scalar_lea.vmem [#allocation3], 1009
      %v1813 = vld [vmem:[%s1812] ss:$2 sm:$0xff]
      %v1814 = vmax.f32 %v1559, %v1687
      %v1815 = vmax.f32 %v1561, %v1689
      %v1816 = vmax.f32 %v1563, %v1691
      %v1817 = vmax.f32 %v1565, %v1693
      %v1818 = vmax.f32 %v1567, %v1695
      %v1819 = vmax.f32 %v1569, %v1697
      %v1820 = vmax.f32 %v1571, %v1699
      %v1821 = vmax.f32 %v1573, %v1701
      %v1822 = vmax.f32 %v1575, %v1703
      %v1823 = vmax.f32 %v1577, %v1705
      %v1824 = vmax.f32 %v1579, %v1707
      %v1825 = vmax.f32 %v1581, %v1709
      %v1826 = vmax.f32 %v1583, %v1711
      %v1827 = vmax.f32 %v1585, %v1713
      %v1828 = vmax.f32 %v1587, %v1715
      %v1829 = vmax.f32 %v1589, %v1717
      %v1830 = vmax.f32 %v1591, %v1719
      %v1831 = vmax.f32 %v1593, %v1721
      %v1832 = vmax.f32 %v1595, %v1723
      %v1833 = vmax.f32 %v1597, %v1725
      %v1834 = vmax.f32 %v1599, %v1727
      %v1835 = vmax.f32 %v1601, %v1729
      %v1836 = vmax.f32 %v1603, %v1731
      %v1837 = vmax.f32 %v1605, %v1733
      %v1838 = vmax.f32 %v1607, %v1735
      %v1839 = vmax.f32 %v1609, %v1737
      %v1840 = vmax.f32 %v1611, %v1739
      %v1841 = vmax.f32 %v1613, %v1741
      %v1842 = vmax.f32 %v1615, %v1743
      %v1843 = vmax.f32 %v1617, %v1745
      %v1844 = vmax.f32 %v1619, %v1747
      %v1845 = vmax.f32 %v1621, %v1749
      %v1846 = vmax.f32 %v1623, %v1751
      %v1847 = vmax.f32 %v1625, %v1753
      %v1848 = vmax.f32 %v1627, %v1755
      %v1849 = vmax.f32 %v1629, %v1757
      %v1850 = vmax.f32 %v1631, %v1759
      %v1851 = vmax.f32 %v1633, %v1761
      %v1852 = vmax.f32 %v1635, %v1763
      %v1853 = vmax.f32 %v1637, %v1765
      %v1854 = vmax.f32 %v1639, %v1767
      %v1855 = vmax.f32 %v1641, %v1769
      %v1856 = vmax.f32 %v1643, %v1771
      %v1857 = vmax.f32 %v1645, %v1773
      %v1858 = vmax.f32 %v1647, %v1775
      %v1859 = vmax.f32 %v1649, %v1777
      %v1860 = vmax.f32 %v1651, %v1779
      %v1861 = vmax.f32 %v1653, %v1781
      %v1862 = vmax.f32 %v1655, %v1783
      %v1863 = vmax.f32 %v1657, %v1785
      %v1864 = vmax.f32 %v1659, %v1787
      %v1865 = vmax.f32 %v1661, %v1789
      %v1866 = vmax.f32 %v1663, %v1791
      %v1867 = vmax.f32 %v1665, %v1793
      %v1868 = vmax.f32 %v1667, %v1795
      %v1869 = vmax.f32 %v1669, %v1797
      %v1870 = vmax.f32 %v1671, %v1799
      %v1871 = vmax.f32 %v1673, %v1801
      %v1872 = vmax.f32 %v1675, %v1803
      %v1873 = vmax.f32 %v1677, %v1805
      %v1874 = vmax.f32 %v1679, %v1807
      %v1875 = vmax.f32 %v1681, %v1809
      %v1876 = vmax.f32 %v1683, %v1811
      %v1877 = vmax.f32 %v1685, %v1813
      %1878 = vst.msk [vmem:[#allocation4] sm:$0xff] %vm629, %v1814
      %1879 = vst.msk [vmem:[#allocation4 + $0x8] sm:$0xff] %vm629, %v1815
      %1880 = vst.msk [vmem:[#allocation4 + $0x10] sm:$0xff] %vm629, %v1816
      %1881 = vst.msk [vmem:[#allocation4 + $0x18] sm:$0xff] %vm629, %v1817
      %1882 = vst.msk [vmem:[#allocation4 + $0x20] sm:$0xff] %vm629, %v1818
      %1883 = vst.msk [vmem:[#allocation4 + $0x28] sm:$0xff] %vm629, %v1819
      %1884 = vst.msk [vmem:[#allocation4 + $0x30] sm:$0xff] %vm629, %v1820
      %1885 = vst.msk [vmem:[#allocation4 + $0x38] sm:$0xff] %vm629, %v1821
      %1886 = vst.msk [vmem:[#allocation4 + $0x40] sm:$0xff] %vm629, %v1822
      %1887 = vst.msk [vmem:[#allocation4 + $0x48] sm:$0xff] %vm629, %v1823
      %1888 = vst.msk [vmem:[#allocation4 + $0x50] sm:$0xff] %vm629, %v1824
      %1889 = vst.msk [vmem:[#allocation4 + $0x58] sm:$0xff] %vm629, %v1825
      %1890 = vst.msk [vmem:[#allocation4 + $0x60] sm:$0xff] %vm629, %v1826
      %1891 = vst.msk [vmem:[#allocation4 + $0x68] sm:$0xff] %vm629, %v1827
      %1892 = vst.msk [vmem:[#allocation4 + $0x70] sm:$0xff] %vm629, %v1828
      %1893 = vst.msk [vmem:[#allocation4 + $0x78] sm:$0xff] %vm629, %v1829
      %1894 = vst.msk [vmem:[#allocation4 + $0x80] sm:$0xff] %vm629, %v1830
      %1895 = vst.msk [vmem:[#allocation4 + $0x88] sm:$0xff] %vm629, %v1831
      %1896 = vst.msk [vmem:[#allocation4 + $0x90] sm:$0xff] %vm629, %v1832
      %1897 = vst.msk [vmem:[#allocation4 + $0x98] sm:$0xff] %vm629, %v1833
      %1898 = vst.msk [vmem:[#allocation4 + $0xa0] sm:$0xff] %vm629, %v1834
      %1899 = vst.msk [vmem:[#allocation4 + $0xa8] sm:$0xff] %vm629, %v1835
      %1900 = vst.msk [vmem:[#allocation4 + $0xb0] sm:$0xff] %vm629, %v1836
      %1901 = vst.msk [vmem:[#allocation4 + $0xb8] sm:$0xff] %vm629, %v1837
      %1902 = vst.msk [vmem:[#allocation4 + $0xc0] sm:$0xff] %vm629, %v1838
      %1903 = vst.msk [vmem:[#allocation4 + $0xc8] sm:$0xff] %vm629, %v1839
      %1904 = vst.msk [vmem:[#allocation4 + $0xd0] sm:$0xff] %vm629, %v1840
      %1905 = vst.msk [vmem:[#allocation4 + $0xd8] sm:$0xff] %vm629, %v1841
      %1906 = vst.msk [vmem:[#allocation4 + $0xe0] sm:$0xff] %vm629, %v1842
      %1907 = vst.msk [vmem:[#allocation4 + $0xe8] sm:$0xff] %vm629, %v1843
      %1908 = vst.msk [vmem:[#allocation4 + $0xf0] sm:$0xff] %vm629, %v1844
      %1909 = vst.msk [vmem:[#allocation4 + $0xf8] sm:$0xff] %vm629, %v1845
      %1910 = vst.msk [vmem:[#allocation4 + $0x100] sm:$0xff] %vm629, %v1846
      %1911 = vst.msk [vmem:[#allocation4 + $0x108] sm:$0xff] %vm629, %v1847
      %1912 = vst.msk [vmem:[#allocation4 + $0x110] sm:$0xff] %vm629, %v1848
      %1913 = vst.msk [vmem:[#allocation4 + $0x118] sm:$0xff] %vm629, %v1849
      %1914 = vst.msk [vmem:[#allocation4 + $0x120] sm:$0xff] %vm629, %v1850
      %1915 = vst.msk [vmem:[#allocation4 + $0x128] sm:$0xff] %vm629, %v1851
      %1916 = vst.msk [vmem:[#allocation4 + $0x130] sm:$0xff] %vm629, %v1852
      %1917 = vst.msk [vmem:[#allocation4 + $0x138] sm:$0xff] %vm629, %v1853
      %1918 = vst.msk [vmem:[#allocation4 + $0x140] sm:$0xff] %vm629, %v1854
      %1919 = vst.msk [vmem:[#allocation4 + $0x148] sm:$0xff] %vm629, %v1855
      %1920 = vst.msk [vmem:[#allocation4 + $0x150] sm:$0xff] %vm629, %v1856
      %1921 = vst.msk [vmem:[#allocation4 + $0x158] sm:$0xff] %vm629, %v1857
      %1922 = vst.msk [vmem:[#allocation4 + $0x160] sm:$0xff] %vm629, %v1858
      %1923 = vst.msk [vmem:[#allocation4 + $0x168] sm:$0xff] %vm629, %v1859
      %1924 = vst.msk [vmem:[#allocation4 + $0x170] sm:$0xff] %vm629, %v1860
      %1925 = vst.msk [vmem:[#allocation4 + $0x178] sm:$0xff] %vm629, %v1861
      %1926 = vst.msk [vmem:[#allocation4 + $0x180] sm:$0xff] %vm629, %v1862
      %1927 = vst.msk [vmem:[#allocation4 + $0x188] sm:$0xff] %vm629, %v1863
      %1928 = vst.msk [vmem:[#allocation4 + $0x190] sm:$0xff] %vm629, %v1864
      %1929 = vst.msk [vmem:[#allocation4 + $0x198] sm:$0xff] %vm629, %v1865
      %1930 = vst.msk [vmem:[#allocation4 + $0x1a0] sm:$0xff] %vm629, %v1866
      %1931 = vst.msk [vmem:[#allocation4 + $0x1a8] sm:$0xff] %vm629, %v1867
      %1932 = vst.msk [vmem:[#allocation4 + $0x1b0] sm:$0xff] %vm629, %v1868
      %1933 = vst.msk [vmem:[#allocation4 + $0x1b8] sm:$0xff] %vm629, %v1869
      %1934 = vst.msk [vmem:[#allocation4 + $0x1c0] sm:$0xff] %vm629, %v1870
      %1935 = vst.msk [vmem:[#allocation4 + $0x1c8] sm:$0xff] %vm629, %v1871
      %1936 = vst.msk [vmem:[#allocation4 + $0x1d0] sm:$0xff] %vm629, %v1872
      %1937 = vst.msk [vmem:[#allocation4 + $0x1d8] sm:$0xff] %vm629, %v1873
      %1938 = vst.msk [vmem:[#allocation4 + $0x1e0] sm:$0xff] %vm629, %v1874
      %1939 = vst.msk [vmem:[#allocation4 + $0x1e8] sm:$0xff] %vm629, %v1875
      %1940 = vst.msk [vmem:[#allocation4 + $0x1f0] sm:$0xff] %vm629, %v1876
      %1941 = vst.msk [vmem:[#allocation4 + $0x1f8] sm:$0xff] %vm629, %v1877
      %v1942 = vld [vmem:[#allocation4] sm:$0xff]
      %v1943 = vld [vmem:[#allocation4 + $0x8] sm:$0xff]
      %v1944 = vld [vmem:[#allocation4 + $0x10] sm:$0xff]
      %v1945 = vld [vmem:[#allocation4 + $0x18] sm:$0xff]
      %v1946 = vmax.f32 %v1942, %v1944
      %v1947 = vmax.f32 %v1943, %v1945
      %1948 = vst.msk [vmem:[#allocation5] sm:$0xff] %vm629, %v1946
      %1949 = vst.msk [vmem:[#allocation5 + $0x8] sm:$0xff] %vm629, %v1947
      %v1950 = vld [vmem:[#allocation4 + $0x20] sm:$0xff]
      %v1951 = vld [vmem:[#allocation4 + $0x28] sm:$0xff]
      %v1952 = vld [vmem:[#allocation4 + $0x30] sm:$0xff]
      %v1953 = vld [vmem:[#allocation4 + $0x38] sm:$0xff]
      %v1954 = vmax.f32 %v1950, %v1952
      %v1955 = vmax.f32 %v1951, %v1953
      %1956 = vst.msk [vmem:[#allocation5 + $0x10] sm:$0xff] %vm629, %v1954
      %1957 = vst.msk [vmem:[#allocation5 + $0x18] sm:$0xff] %vm629, %v1955
      %v1958 = vld [vmem:[#allocation4 + $0x40] sm:$0xff]
      %v1959 = vld [vmem:[#allocation4 + $0x48] sm:$0xff]
      %v1960 = vld [vmem:[#allocation4 + $0x50] sm:$0xff]
      %v1961 = vld [vmem:[#allocation4 + $0x58] sm:$0xff]
      %v1962 = vmax.f32 %v1958, %v1960
      %v1963 = vmax.f32 %v1959, %v1961
      %1964 = vst.msk [vmem:[#allocation5 + $0x20] sm:$0xff] %vm629, %v1962
      %1965 = vst.msk [vmem:[#allocation5 + $0x28] sm:$0xff] %vm629, %v1963
      %v1966 = vld [vmem:[#allocation4 + $0x60] sm:$0xff]
      %v1967 = vld [vmem:[#allocation4 + $0x68] sm:$0xff]
      %v1968 = vld [vmem:[#allocation4 + $0x70] sm:$0xff]
      %v1969 = vld [vmem:[#allocation4 + $0x78] sm:$0xff]
      %v1970 = vmax.f32 %v1966, %v1968
      %v1971 = vmax.f32 %v1967, %v1969
      %1972 = vst.msk [vmem:[#allocation5 + $0x30] sm:$0xff] %vm629, %v1970
      %1973 = vst.msk [vmem:[#allocation5 + $0x38] sm:$0xff] %vm629, %v1971
      %v1974 = vld [vmem:[#allocation4 + $0x80] sm:$0xff]
      %v1975 = vld [vmem:[#allocation4 + $0x88] sm:$0xff]
      %v1976 = vld [vmem:[#allocation4 + $0x90] sm:$0xff]
      %v1977 = vld [vmem:[#allocation4 + $0x98] sm:$0xff]
      %v1978 = vmax.f32 %v1974, %v1976
      %v1979 = vmax.f32 %v1975, %v1977
      %1980 = vst.msk [vmem:[#allocation5 + $0x40] sm:$0xff] %vm629, %v1978
      %1981 = vst.msk [vmem:[#allocation5 + $0x48] sm:$0xff] %vm629, %v1979
      %v1982 = vld [vmem:[#allocation4 + $0xa0] sm:$0xff]
      %v1983 = vld [vmem:[#allocation4 + $0xa8] sm:$0xff]
      %v1984 = vld [vmem:[#allocation4 + $0xb0] sm:$0xff]
      %v1985 = vld [vmem:[#allocation4 + $0xb8] sm:$0xff]
      %v1986 = vmax.f32 %v1982, %v1984
      %v1987 = vmax.f32 %v1983, %v1985
      %1988 = vst.msk [vmem:[#allocation5 + $0x50] sm:$0xff] %vm629, %v1986
      %1989 = vst.msk [vmem:[#allocation5 + $0x58] sm:$0xff] %vm629, %v1987
      %v1990 = vld [vmem:[#allocation4 + $0xc0] sm:$0xff]
      %v1991 = vld [vmem:[#allocation4 + $0xc8] sm:$0xff]
      %v1992 = vld [vmem:[#allocation4 + $0xd0] sm:$0xff]
      %v1993 = vld [vmem:[#allocation4 + $0xd8] sm:$0xff]
      %v1994 = vmax.f32 %v1990, %v1992
      %v1995 = vmax.f32 %v1991, %v1993
      %1996 = vst.msk [vmem:[#allocation5 + $0x60] sm:$0xff] %vm629, %v1994
      %1997 = vst.msk [vmem:[#allocation5 + $0x68] sm:$0xff] %vm629, %v1995
      %v1998 = vld [vmem:[#allocation4 + $0xe0] sm:$0xff]
      %v1999 = vld [vmem:[#allocation4 + $0xe8] sm:$0xff]
      %v2000 = vld [vmem:[#allocation4 + $0xf0] sm:$0xff]
      %v2001 = vld [vmem:[#allocation4 + $0xf8] sm:$0xff]
      %v2002 = vmax.f32 %v1998, %v2000
      %v2003 = vmax.f32 %v1999, %v2001
      %2004 = vst.msk [vmem:[#allocation5 + $0x70] sm:$0xff] %vm629, %v2002
      %2005 = vst.msk [vmem:[#allocation5 + $0x78] sm:$0xff] %vm629, %v2003
      %v2006 = vld [vmem:[#allocation4 + $0x100] sm:$0xff]
      %v2007 = vld [vmem:[#allocation4 + $0x108] sm:$0xff]
      %v2008 = vld [vmem:[#allocation4 + $0x110] sm:$0xff]
      %v2009 = vld [vmem:[#allocation4 + $0x118] sm:$0xff]
      %v2010 = vmax.f32 %v2006, %v2008
      %v2011 = vmax.f32 %v2007, %v2009
      %2012 = vst.msk [vmem:[#allocation5 + $0x80] sm:$0xff] %vm629, %v2010
      %2013 = vst.msk [vmem:[#allocation5 + $0x88] sm:$0xff] %vm629, %v2011
      %v2014 = vld [vmem:[#allocation4 + $0x120] sm:$0xff]
      %v2015 = vld [vmem:[#allocation4 + $0x128] sm:$0xff]
      %v2016 = vld [vmem:[#allocation4 + $0x130] sm:$0xff]
      %v2017 = vld [vmem:[#allocation4 + $0x138] sm:$0xff]
      %v2018 = vmax.f32 %v2014, %v2016
      %v2019 = vmax.f32 %v2015, %v2017
      %2020 = vst.msk [vmem:[#allocation5 + $0x90] sm:$0xff] %vm629, %v2018
      %2021 = vst.msk [vmem:[#allocation5 + $0x98] sm:$0xff] %vm629, %v2019
      %v2022 = vld [vmem:[#allocation4 + $0x140] sm:$0xff]
      %v2023 = vld [vmem:[#allocation4 + $0x148] sm:$0xff]
      %v2024 = vld [vmem:[#allocation4 + $0x150] sm:$0xff]
      %v2025 = vld [vmem:[#allocation4 + $0x158] sm:$0xff]
      %v2026 = vmax.f32 %v2022, %v2024
      %v2027 = vmax.f32 %v2023, %v2025
      %2028 = vst.msk [vmem:[#allocation5 + $0xa0] sm:$0xff] %vm629, %v2026
      %2029 = vst.msk [vmem:[#allocation5 + $0xa8] sm:$0xff] %vm629, %v2027
      %v2030 = vld [vmem:[#allocation4 + $0x160] sm:$0xff]
      %v2031 = vld [vmem:[#allocation4 + $0x168] sm:$0xff]
      %v2032 = vld [vmem:[#allocation4 + $0x170] sm:$0xff]
      %v2033 = vld [vmem:[#allocation4 + $0x178] sm:$0xff]
      %v2034 = vmax.f32 %v2030, %v2032
      %v2035 = vmax.f32 %v2031, %v2033
      %2036 = vst.msk [vmem:[#allocation5 + $0xb0] sm:$0xff] %vm629, %v2034
      %2037 = vst.msk [vmem:[#allocation5 + $0xb8] sm:$0xff] %vm629, %v2035
      %v2038 = vld [vmem:[#allocation4 + $0x180] sm:$0xff]
      %v2039 = vld [vmem:[#allocation4 + $0x188] sm:$0xff]
      %v2040 = vld [vmem:[#allocation4 + $0x190] sm:$0xff]
      %v2041 = vld [vmem:[#allocation4 + $0x198] sm:$0xff]
      %v2042 = vmax.f32 %v2038, %v2040
      %v2043 = vmax.f32 %v2039, %v2041
      %2044 = vst.msk [vmem:[#allocation5 + $0xc0] sm:$0xff] %vm629, %v2042
      %2045 = vst.msk [vmem:[#allocation5 + $0xc8] sm:$0xff] %vm629, %v2043
      %v2046 = vld [vmem:[#allocation4 + $0x1a0] sm:$0xff]
      %v2047 = vld [vmem:[#allocation4 + $0x1a8] sm:$0xff]
      %v2048 = vld [vmem:[#allocation4 + $0x1b0] sm:$0xff]
      %v2049 = vld [vmem:[#allocation4 + $0x1b8] sm:$0xff]
      %v2050 = vmax.f32 %v2046, %v2048
      %v2051 = vmax.f32 %v2047, %v2049
      %2052 = vst.msk [vmem:[#allocation5 + $0xd0] sm:$0xff] %vm629, %v2050
      %2053 = vst.msk [vmem:[#allocation5 + $0xd8] sm:$0xff] %vm629, %v2051
      %v2054 = vld [vmem:[#allocation4 + $0x1c0] sm:$0xff]
      %v2055 = vld [vmem:[#allocation4 + $0x1c8] sm:$0xff]
      %v2056 = vld [vmem:[#allocation4 + $0x1d0] sm:$0xff]
      %v2057 = vld [vmem:[#allocation4 + $0x1d8] sm:$0xff]
      %v2058 = vmax.f32 %v2054, %v2056
      %v2059 = vmax.f32 %v2055, %v2057
      %2060 = vst.msk [vmem:[#allocation5 + $0xe0] sm:$0xff] %vm629, %v2058
      %2061 = vst.msk [vmem:[#allocation5 + $0xe8] sm:$0xff] %vm629, %v2059
      %v2062 = vld [vmem:[#allocation4 + $0x1e0] sm:$0xff]
      %v2063 = vld [vmem:[#allocation4 + $0x1e8] sm:$0xff]
      %v2064 = vld [vmem:[#allocation4 + $0x1f0] sm:$0xff]
      %v2065 = vld [vmem:[#allocation4 + $0x1f8] sm:$0xff]
      %v2066 = vmax.f32 %v2062, %v2064
      %v2067 = vmax.f32 %v2063, %v2065
      %2068 = vst.msk [vmem:[#allocation5 + $0xf0] sm:$0xff] %vm629, %v2066
      %2069 = vst.msk [vmem:[#allocation5 + $0xf8] sm:$0xff] %vm629, %v2067
      %v2070 = vld [vmem:[#allocation5] sm:$0xff]
      %v2071 = vld [vmem:[#allocation5 + $0x8] sm:$0xff]
      %v2072 = vld [vmem:[#allocation5 + $0x10] sm:$0xff]
      %v2073 = vld [vmem:[#allocation5 + $0x18] sm:$0xff]
      %v2074 = vld [vmem:[#allocation5 + $0x20] sm:$0xff]
      %v2075 = vld [vmem:[#allocation5 + $0x28] sm:$0xff]
      %v2076 = vld [vmem:[#allocation5 + $0x30] sm:$0xff]
      %v2077 = vld [vmem:[#allocation5 + $0x38] sm:$0xff]
      %v2078 = vld [vmem:[#allocation5 + $0x40] sm:$0xff]
      %v2079 = vld [vmem:[#allocation5 + $0x48] sm:$0xff]
      %v2080 = vld [vmem:[#allocation5 + $0x50] sm:$0xff]
      %v2081 = vld [vmem:[#allocation5 + $0x58] sm:$0xff]
      %v2082 = vld [vmem:[#allocation5 + $0x60] sm:$0xff]
      %v2083 = vld [vmem:[#allocation5 + $0x68] sm:$0xff]
      %v2084 = vld [vmem:[#allocation5 + $0x70] sm:$0xff]
      %v2085 = vld [vmem:[#allocation5 + $0x78] sm:$0xff]
      %v2086 = vld [vmem:[#allocation5 + $0x80] sm:$0xff]
      %v2087 = vld [vmem:[#allocation5 + $0x88] sm:$0xff]
      %v2088 = vld [vmem:[#allocation5 + $0x90] sm:$0xff]
      %v2089 = vld [vmem:[#allocation5 + $0x98] sm:$0xff]
      %v2090 = vld [vmem:[#allocation5 + $0xa0] sm:$0xff]
      %v2091 = vld [vmem:[#allocation5 + $0xa8] sm:$0xff]
      %v2092 = vld [vmem:[#allocation5 + $0xb0] sm:$0xff]
      %v2093 = vld [vmem:[#allocation5 + $0xb8] sm:$0xff]
      %v2094 = vld [vmem:[#allocation5 + $0xc0] sm:$0xff]
      %v2095 = vld [vmem:[#allocation5 + $0xc8] sm:$0xff]
      %v2096 = vld [vmem:[#allocation5 + $0xd0] sm:$0xff]
      %v2097 = vld [vmem:[#allocation5 + $0xd8] sm:$0xff]
      %v2098 = vld [vmem:[#allocation5 + $0xe0] sm:$0xff]
      %v2099 = vld [vmem:[#allocation5 + $0xe8] sm:$0xff]
      %v2100 = vld [vmem:[#allocation5 + $0xf0] sm:$0xff]
      %v2101 = vld [vmem:[#allocation5 + $0xf8] sm:$0xff]
      %v2102 = vld [vmem:[%s5] sm:$0x1]
      %v2103 = vperm.slane %v2102, 0
      %v2104 = vadd.f32 %v2070, %v2103
      %v2105 = vadd.f32 %v2071, %v2103
      %v2106 = vadd.f32 %v2072, %v2103
      %v2107 = vadd.f32 %v2073, %v2103
      %v2108 = vadd.f32 %v2074, %v2103
      %v2109 = vadd.f32 %v2075, %v2103
      %v2110 = vadd.f32 %v2076, %v2103
      %v2111 = vadd.f32 %v2077, %v2103
      %v2112 = vadd.f32 %v2078, %v2103
      %v2113 = vadd.f32 %v2079, %v2103
      %v2114 = vadd.f32 %v2080, %v2103
      %v2115 = vadd.f32 %v2081, %v2103
      %v2116 = vadd.f32 %v2082, %v2103
      %v2117 = vadd.f32 %v2083, %v2103
      %v2118 = vadd.f32 %v2084, %v2103
      %v2119 = vadd.f32 %v2085, %v2103
      %v2120 = vadd.f32 %v2086, %v2103
      %v2121 = vadd.f32 %v2087, %v2103
      %v2122 = vadd.f32 %v2088, %v2103
      %v2123 = vadd.f32 %v2089, %v2103
      %v2124 = vadd.f32 %v2090, %v2103
      %v2125 = vadd.f32 %v2091, %v2103
      %v2126 = vadd.f32 %v2092, %v2103
      %v2127 = vadd.f32 %v2093, %v2103
      %v2128 = vadd.f32 %v2094, %v2103
      %v2129 = vadd.f32 %v2095, %v2103
      %v2130 = vadd.f32 %v2096, %v2103
      %v2131 = vadd.f32 %v2097, %v2103
      %v2132 = vadd.f32 %v2098, %v2103
      %v2133 = vadd.f32 %v2099, %v2103
      %v2134 = vadd.f32 %v2100, %v2103
      %v2135 = vadd.f32 %v2101, %v2103
      %v2136 = vmax.f32 %v2104, 0.0
      %v2137 = vmax.f32 %v2105, 0.0
      %v2138 = vmax.f32 %v2106, 0.0
      %v2139 = vmax.f32 %v2107, 0.0
      %v2140 = vmax.f32 %v2108, 0.0
      %v2141 = vmax.f32 %v2109, 0.0
      %v2142 = vmax.f32 %v2110, 0.0
      %v2143 = vmax.f32 %v2111, 0.0
      %v2144 = vmax.f32 %v2112, 0.0
      %v2145 = vmax.f32 %v2113, 0.0
      %v2146 = vmax.f32 %v2114, 0.0
      %v2147 = vmax.f32 %v2115, 0.0
      %v2148 = vmax.f32 %v2116, 0.0
      %v2149 = vmax.f32 %v2117, 0.0
      %v2150 = vmax.f32 %v2118, 0.0
      %v2151 = vmax.f32 %v2119, 0.0
      %v2152 = vmax.f32 %v2120, 0.0
      %v2153 = vmax.f32 %v2121, 0.0
      %v2154 = vmax.f32 %v2122, 0.0
      %v2155 = vmax.f32 %v2123, 0.0
      %v2156 = vmax.f32 %v2124, 0.0
      %v2157 = vmax.f32 %v2125, 0.0
      %v2158 = vmax.f32 %v2126, 0.0
      %v2159 = vmax.f32 %v2127, 0.0
      %v2160 = vmax.f32 %v2128, 0.0
      %v2161 = vmax.f32 %v2129, 0.0
      %v2162 = vmax.f32 %v2130, 0.0
      %v2163 = vmax.f32 %v2131, 0.0
      %v2164 = vmax.f32 %v2132, 0.0
      %v2165 = vmax.f32 %v2133, 0.0
      %v2166 = vmax.f32 %v2134, 0.0
      %v2167 = vmax.f32 %v2135, 0.0
      %v2168 = vld [vmem:[%s5 + $0x1] sm:$0x1]
      %2169 = vst.msk [vmem:[#allocation2] sm:$0xff] %vm629, 0.0
      %2170 = vst.msk [vmem:[#allocation2 + $0x8] sm:$0xff] %vm629, 0.0
      %2171 = vst.msk [vmem:[#allocation2 + $0x10] sm:$0xff] %vm629, 0.0
      %2172 = vst.msk [vmem:[#allocation2 + $0x18] sm:$0xff] %vm629, 0.0
      %2173 = vst.msk [vmem:[#allocation2 + $0x20] sm:$0xff] %vm629, 0.0
      %2174 = vst.msk [vmem:[#allocation2 + $0x28] sm:$0xff] %vm629, 0.0
      %2175 = vst.msk [vmem:[#allocation2 + $0x30] sm:$0xff] %vm629, 0.0
      %2176 = vst.msk [vmem:[#allocation2 + $0x38] sm:$0xff] %vm629, 0.0
      %2177 = vst.msk [vmem:[#allocation2 + $0x40] sm:$0xff] %vm629, 0.0
      %2178 = vst.msk [vmem:[#allocation2 + $0x48] sm:$0xff] %vm629, 0.0
      %2179 = vst.msk [vmem:[#allocation2 + $0x50] sm:$0xff] %vm629, 0.0
      %2180 = vst.msk [vmem:[#allocation2 + $0x58] sm:$0xff] %vm629, 0.0
      %2181 = vst.msk [vmem:[#allocation2 + $0x60] sm:$0xff] %vm629, 0.0
      %2182 = vst.msk [vmem:[#allocation2 + $0x68] sm:$0xff] %vm629, 0.0
      %2183 = vst.msk [vmem:[#allocation2 + $0x70] sm:$0xff] %vm629, 0.0
      %2184 = vst.msk [vmem:[#allocation2 + $0x78] sm:$0xff] %vm629, 0.0
      %2185 = vst.msk [vmem:[#allocation2 + $0x80] sm:$0xff] %vm629, 0.0
      %2186 = vst.msk [vmem:[#allocation2 + $0x88] sm:$0xff] %vm629, 0.0
      %2187 = vst.msk [vmem:[#allocation2 + $0x90] sm:$0xff] %vm629, 0.0
      %2188 = vst.msk [vmem:[#allocation2 + $0x98] sm:$0xff] %vm629, 0.0
      %2189 = vst.msk [vmem:[#allocation2 + $0xa0] sm:$0xff] %vm629, 0.0
      %2190 = vst.msk [vmem:[#allocation2 + $0xa8] sm:$0xff] %vm629, 0.0
      %2191 = vst.msk [vmem:[#allocation2 + $0xb0] sm:$0xff] %vm629, 0.0
      %2192 = vst.msk [vmem:[#allocation2 + $0xb8] sm:$0xff] %vm629, 0.0
      %2193 = vst.msk [vmem:[#allocation2 + $0xc0] sm:$0xff] %vm629, 0.0
      %2194 = vst.msk [vmem:[#allocation2 + $0xc8] sm:$0xff] %vm629, 0.0
      %2195 = vst.msk [vmem:[#allocation2 + $0xd0] sm:$0xff] %vm629, 0.0
      %2196 = vst.msk [vmem:[#allocation2 + $0xd8] sm:$0xff] %vm629, 0.0
      %2197 = vst.msk [vmem:[#allocation2 + $0xe0] sm:$0xff] %vm629, 0.0
      %2198 = vst.msk [vmem:[#allocation2 + $0xe8] sm:$0xff] %vm629, 0.0
      %2199 = vst.msk [vmem:[#allocation2 + $0xf0] sm:$0xff] %vm629, 0.0
      %2200 = vst.msk [vmem:[#allocation2 + $0xf8] sm:$0xff] %vm629, 0.0
      %2201 = vst.msk [vmem:[#allocation2 + $0x100] sm:$0xff] %vm629, 0.0
      %2202 = vst.msk [vmem:[#allocation2 + $0x108] sm:$0xff] %vm629, 0.0
      %2203 = vst.msk [vmem:[#allocation2 + $0x110] sm:$0xff] %vm629, 0.0
      %2204 = vst.msk [vmem:[#allocation2 + $0x118] sm:$0xff] %vm629, 0.0
      %2205 = vst.msk [vmem:[#allocation2 + $0x120] sm:$0xff] %vm629, 0.0
      %2206 = vst.msk [vmem:[#allocation2 + $0x128] sm:$0xff] %vm629, 0.0
      %2207 = vst.msk [vmem:[#allocation2 + $0x18] sm:$0xff] %vm629, %v2136
      %2208 = vst.msk [vmem:[#allocation2 + $0x20] sm:$0xff] %vm629, %v2137
      %2209 = vst.msk [vmem:[#allocation2 + $0x28] sm:$0xff] %vm629, %v2138
      %2210 = vst.msk [vmem:[#allocation2 + $0x30] sm:$0xff] %vm629, %v2139
      %2211 = vst.msk [vmem:[#allocation2 + $0x38] sm:$0xff] %vm629, %v2140
      %2212 = vst.msk [vmem:[#allocation2 + $0x40] sm:$0xff] %vm629, %v2141
      %2213 = vst.msk [vmem:[#allocation2 + $0x48] sm:$0xff] %vm629, %v2142
      %2214 = vst.msk [vmem:[#allocation2 + $0x50] sm:$0xff] %vm629, %v2143
      %2215 = vst.msk [vmem:[#allocation2 + $0x58] sm:$0xff] %vm629, %v2144
      %2216 = vst.msk [vmem:[#allocation2 + $0x60] sm:$0xff] %vm629, %v2145
      %2217 = vst.msk [vmem:[#allocation2 + $0x68] sm:$0xff] %vm629, %v2146
      %2218 = vst.msk [vmem:[#allocation2 + $0x70] sm:$0xff] %vm629, %v2147
      %2219 = vst.msk [vmem:[#allocation2 + $0x78] sm:$0xff] %vm629, %v2148
      %2220 = vst.msk [vmem:[#allocation2 + $0x80] sm:$0xff] %vm629, %v2149
      %2221 = vst.msk [vmem:[#allocation2 + $0x88] sm:$0xff] %vm629, %v2150
      %2222 = vst.msk [vmem:[#allocation2 + $0x90] sm:$0xff] %vm629, %v2151
      %2223 = vst.msk [vmem:[#allocation2 + $0x98] sm:$0xff] %vm629, %v2152
      %2224 = vst.msk [vmem:[#allocation2 + $0xa0] sm:$0xff] %vm629, %v2153
      %2225 = vst.msk [vmem:[#allocation2 + $0xa8] sm:$0xff] %vm629, %v2154
      %2226 = vst.msk [vmem:[#allocation2 + $0xb0] sm:$0xff] %vm629, %v2155
      %2227 = vst.msk [vmem:[#allocation2 + $0xb8] sm:$0xff] %vm629, %v2156
      %2228 = vst.msk [vmem:[#allocation2 + $0xc0] sm:$0xff] %vm629, %v2157
      %2229 = vst.msk [vmem:[#allocation2 + $0xc8] sm:$0xff] %vm629, %v2158
      %2230 = vst.msk [vmem:[#allocation2 + $0xd0] sm:$0xff] %vm629, %v2159
      %2231 = vst.msk [vmem:[#allocation2 + $0xd8] sm:$0xff] %vm629, %v2160
      %2232 = vst.msk [vmem:[#allocation2 + $0xe0] sm:$0xff] %vm629, %v2161
      %2233 = vst.msk [vmem:[#allocation2 + $0xe8] sm:$0xff] %vm629, %v2162
      %2234 = vst.msk [vmem:[#allocation2 + $0xf0] sm:$0xff] %vm629, %v2163
      %2235 = vst.msk [vmem:[#allocation2 + $0xf8] sm:$0xff] %vm629, %v2164
      %2236 = vst.msk [vmem:[#allocation2 + $0x100] sm:$0xff] %vm629, %v2165
      %2237 = vst.msk [vmem:[#allocation2 + $0x108] sm:$0xff] %vm629, %v2166
      %2238 = vst.msk [vmem:[#allocation2 + $0x110] sm:$0xff] %vm629, %v2167
      %v2239 = vlaneseq
      %v2240 = vshrl.u32 %v2239, 7
      %v2241 = vadd.s32 %v2240, 8
      %v2242 = vadd.s32 %v2240, 16
      %v2243 = vadd.s32 %v2240, 24
      %v2244 = vadd.s32 %v2240, 32
      %v2245 = vadd.s32 %v2240, 40
      %v2246 = vadd.s32 %v2240, 48
      %v2247 = vadd.s32 %v2240, 56
      %v2248 = vadd.s32 %v2240, 64
      %v2249 = vadd.s32 %v2240, 72
      %v2250 = vadd.s32 %v2240, 80
      %v2251 = vadd.s32 %v2240, 88
      %v2252 = vadd.s32 %v2240, 96
      %v2253 = vadd.s32 %v2240, 104
      %v2254 = vadd.s32 %v2240, 112
      %v2255 = vadd.s32 %v2240, 120
      %v2256 = vadd.s32 %v2240, 128
      %v2257 = vadd.s32 %v2240, 136
      %v2258 = vadd.s32 %v2240, 144
      %v2259 = vadd.s32 %v2240, 152
      %v2260 = vadd.s32 %v2240, 160
      %v2261 = vadd.s32 %v2240, 168
      %v2262 = vadd.s32 %v2240, 176
      %v2263 = vadd.s32 %v2240, 184
      %v2264 = vadd.s32 %v2240, 192
      %v2265 = vadd.s32 %v2240, 200
      %v2266 = vadd.s32 %v2240, 208
      %v2267 = vadd.s32 %v2240, 216
      %v2268 = vadd.s32 %v2240, 224
      %v2269 = vadd.s32 %v2240, 232
      %v2270 = vadd.s32 %v2240, 240
      %v2271 = vadd.s32 %v2240, 248
      %v2272 = vand.u32 %v2240, 15
      %v2273 = vand.u32 %v2241, 15
      %v2274 = vand.u32 %v2242, 15
      %v2275 = vand.u32 %v2243, 15
      %v2276 = vand.u32 %v2244, 15
      %v2277 = vand.u32 %v2245, 15
      %v2278 = vand.u32 %v2246, 15
      %v2279 = vand.u32 %v2247, 15
      %v2280 = vand.u32 %v2248, 15
      %v2281 = vand.u32 %v2249, 15
      %v2282 = vand.u32 %v2250, 15
      %v2283 = vand.u32 %v2251, 15
      %v2284 = vand.u32 %v2252, 15
      %v2285 = vand.u32 %v2253, 15
      %v2286 = vand.u32 %v2254, 15
      %v2287 = vand.u32 %v2255, 15
      %v2288 = vand.u32 %v2256, 15
      %v2289 = vand.u32 %v2257, 15
      %v2290 = vand.u32 %v2258, 15
      %v2291 = vand.u32 %v2259, 15
      %v2292 = vand.u32 %v2260, 15
      %v2293 = vand.u32 %v2261, 15
      %v2294 = vand.u32 %v2262, 15
      %v2295 = vand.u32 %v2263, 15
      %v2296 = vand.u32 %v2264, 15
      %v2297 = vand.u32 %v2265, 15
      %v2298 = vand.u32 %v2266, 15
      %v2299 = vand.u32 %v2267, 15
      %v2300 = vand.u32 %v2268, 15
      %v2301 = vand.u32 %v2269, 15
      %v2302 = vand.u32 %v2270, 15
      %v2303 = vand.u32 %v2271, 15
      %vm2304 = vcmp.ne.s32.totalorder %v2272, 0
      %vm2305 = vcmp.ne.s32.totalorder %v2273, 0
      %vm2306 = vcmp.ne.s32.totalorder %v2274, 0
      %vm2307 = vcmp.ne.s32.totalorder %v2275, 0
      %vm2308 = vcmp.ne.s32.totalorder %v2276, 0
      %vm2309 = vcmp.ne.s32.totalorder %v2277, 0
      %vm2310 = vcmp.ne.s32.totalorder %v2278, 0
      %vm2311 = vcmp.ne.s32.totalorder %v2279, 0
      %vm2312 = vcmp.ne.s32.totalorder %v2280, 0
      %vm2313 = vcmp.ne.s32.totalorder %v2281, 0
      %vm2314 = vcmp.ne.s32.totalorder %v2282, 0
      %vm2315 = vcmp.ne.s32.totalorder %v2283, 0
      %vm2316 = vcmp.ne.s32.totalorder %v2284, 0
      %vm2317 = vcmp.ne.s32.totalorder %v2285, 0
      %vm2318 = vcmp.ne.s32.totalorder %v2286, 0
      %vm2319 = vcmp.ne.s32.totalorder %v2287, 0
      %vm2320 = vcmp.ne.s32.totalorder %v2288, 0
      %vm2321 = vcmp.ne.s32.totalorder %v2289, 0
      %vm2322 = vcmp.ne.s32.totalorder %v2290, 0
      %vm2323 = vcmp.ne.s32.totalorder %v2291, 0
      %vm2324 = vcmp.ne.s32.totalorder %v2292, 0
      %vm2325 = vcmp.ne.s32.totalorder %v2293, 0
      %vm2326 = vcmp.ne.s32.totalorder %v2294, 0
      %vm2327 = vcmp.ne.s32.totalorder %v2295, 0
      %vm2328 = vcmp.ne.s32.totalorder %v2296, 0
      %vm2329 = vcmp.ne.s32.totalorder %v2297, 0
      %vm2330 = vcmp.ne.s32.totalorder %v2298, 0
      %vm2331 = vcmp.ne.s32.totalorder %v2299, 0
      %vm2332 = vcmp.ne.s32.totalorder %v2300, 0
      %vm2333 = vcmp.ne.s32.totalorder %v2301, 0
      %vm2334 = vcmp.ne.s32.totalorder %v2302, 0
      %vm2335 = vcmp.ne.s32.totalorder %v2303, 0
      %vm2336 = vcmp.ne.s32.totalorder %v2272, 15
      %vm2337 = vcmp.ne.s32.totalorder %v2273, 15
      %vm2338 = vcmp.ne.s32.totalorder %v2274, 15
      %vm2339 = vcmp.ne.s32.totalorder %v2275, 15
      %vm2340 = vcmp.ne.s32.totalorder %v2276, 15
      %vm2341 = vcmp.ne.s32.totalorder %v2277, 15
      %vm2342 = vcmp.ne.s32.totalorder %v2278, 15
      %vm2343 = vcmp.ne.s32.totalorder %v2279, 15
      %vm2344 = vcmp.ne.s32.totalorder %v2280, 15
      %vm2345 = vcmp.ne.s32.totalorder %v2281, 15
      %vm2346 = vcmp.ne.s32.totalorder %v2282, 15
      %vm2347 = vcmp.ne.s32.totalorder %v2283, 15
      %vm2348 = vcmp.ne.s32.totalorder %v2284, 15
      %vm2349 = vcmp.ne.s32.totalorder %v2285, 15
      %vm2350 = vcmp.ne.s32.totalorder %v2286, 15
      %vm2351 = vcmp.ne.s32.totalorder %v2287, 15
      %vm2352 = vcmp.ne.s32.totalorder %v2288, 15
      %vm2353 = vcmp.ne.s32.totalorder %v2289, 15
      %vm2354 = vcmp.ne.s32.totalorder %v2290, 15
      %vm2355 = vcmp.ne.s32.totalorder %v2291, 15
      %vm2356 = vcmp.ne.s32.totalorder %v2292, 15
      %vm2357 = vcmp.ne.s32.totalorder %v2293, 15
      %vm2358 = vcmp.ne.s32.totalorder %v2294, 15
      %vm2359 = vcmp.ne.s32.totalorder %v2295, 15
      %vm2360 = vcmp.ne.s32.totalorder %v2296, 15
      %vm2361 = vcmp.ne.s32.totalorder %v2297, 15
      %vm2362 = vcmp.ne.s32.totalorder %v2298, 15
      %vm2363 = vcmp.ne.s32.totalorder %v2299, 15
      %vm2364 = vcmp.ne.s32.totalorder %v2300, 15
      %vm2365 = vcmp.ne.s32.totalorder %v2301, 15
      %vm2366 = vcmp.ne.s32.totalorder %v2302, 15
      %vm2367 = vcmp.ne.s32.totalorder %v2303, 15
      %v2368 = vld [vmem:[#allocation2 + $0x7] sm:$0xff]
      %v2369 = vld [vmem:[#allocation2 + $0xf] sm:$0xff]
      %v2370 = vld [vmem:[#allocation2 + $0x17] sm:$0xff]
      %v2371 = vld [vmem:[#allocation2 + $0x1f] sm:$0xff]
      %v2372 = vld [vmem:[#allocation2 + $0x27] sm:$0xff]
      %v2373 = vld [vmem:[#allocation2 + $0x2f] sm:$0xff]
      %v2374 = vld [vmem:[#allocation2 + $0x37] sm:$0xff]
      %v2375 = vld [vmem:[#allocation2 + $0x3f] sm:$0xff]
      %v2376 = vld [vmem:[#allocation2 + $0x47] sm:$0xff]
      %v2377 = vld [vmem:[#allocation2 + $0x4f] sm:$0xff]
      %v2378 = vld [vmem:[#allocation2 + $0x57] sm:$0xff]
      %v2379 = vld [vmem:[#allocation2 + $0x5f] sm:$0xff]
      %v2380 = vld [vmem:[#allocation2 + $0x67] sm:$0xff]
      %v2381 = vld [vmem:[#allocation2 + $0x6f] sm:$0xff]
      %v2382 = vld [vmem:[#allocation2 + $0x77] sm:$0xff]
      %v2383 = vld [vmem:[#allocation2 + $0x7f] sm:$0xff]
      %v2384 = vld [vmem:[#allocation2 + $0x87] sm:$0xff]
      %v2385 = vld [vmem:[#allocation2 + $0x8f] sm:$0xff]
      %v2386 = vld [vmem:[#allocation2 + $0x97] sm:$0xff]
      %v2387 = vld [vmem:[#allocation2 + $0x9f] sm:$0xff]
      %v2388 = vld [vmem:[#allocation2 + $0xa7] sm:$0xff]
      %v2389 = vld [vmem:[#allocation2 + $0xaf] sm:$0xff]
      %v2390 = vld [vmem:[#allocation2 + $0xb7] sm:$0xff]
      %v2391 = vld [vmem:[#allocation2 + $0xbf] sm:$0xff]
      %v2392 = vld [vmem:[#allocation2 + $0xc7] sm:$0xff]
      %v2393 = vld [vmem:[#allocation2 + $0xcf] sm:$0xff]
      %v2394 = vld [vmem:[#allocation2 + $0xd7] sm:$0xff]
      %v2395 = vld [vmem:[#allocation2 + $0xdf] sm:$0xff]
      %v2396 = vld [vmem:[#allocation2 + $0xe7] sm:$0xff]
      %v2397 = vld [vmem:[#allocation2 + $0xef] sm:$0xff]
      %v2398 = vld [vmem:[#allocation2 + $0xf7] sm:$0xff]
      %v2399 = vld [vmem:[#allocation2 + $0xff] sm:$0xff]
      %v2400 = vld [vmem:[#allocation2 + $0x107] sm:$0xff]
      %v2401 = vld [vmem:[#allocation2 + $0x10f] sm:$0xff]
      %v2402 = vld [vmem:[#allocation2 + $0x117] sm:$0xff]
      %v2403 = vld [vmem:[#allocation2 + $0x11f] sm:$0xff]
      %2436 = vrot.lane.b32.xlu0 %v2370, 64
      %v2437 = vpop.permute.xlu0 %2436
      %2438 = vrot.lane.b32.xlu0 %v2371, 64
      %v2439 = vpop.permute.xlu0 %2438
      %2440 = vrot.lane.b32.xlu0 %v2372, 64
      %v2441 = vpop.permute.xlu0 %2440
      %2442 = vrot.lane.b32.xlu0 %v2373, 64
      %v2443 = vpop.permute.xlu0 %2442
      %2444 = vrot.lane.b32.xlu0 %v2374, 64
      %v2445 = vpop.permute.xlu0 %2444
      %2446 = vrot.lane.b32.xlu0 %v2375, 64
      %v2447 = vpop.permute.xlu0 %2446
      %2448 = vrot.lane.b32.xlu0 %v2376, 64
      %v2449 = vpop.permute.xlu0 %2448
      %2450 = vrot.lane.b32.xlu0 %v2377, 64
      %v2451 = vpop.permute.xlu0 %2450
      %2452 = vrot.lane.b32.xlu0 %v2378, 64
      %v2453 = vpop.permute.xlu0 %2452
      %2454 = vrot.lane.b32.xlu0 %v2379, 64
      %v2455 = vpop.permute.xlu0 %2454
      %2456 = vrot.lane.b32.xlu0 %v2380, 64
      %v2457 = vpop.permute.xlu0 %2456
      %2458 = vrot.lane.b32.xlu0 %v2381, 64
      %v2459 = vpop.permute.xlu0 %2458
      %2460 = vrot.lane.b32.xlu0 %v2382, 64
      %v2461 = vpop.permute.xlu0 %2460
      %2462 = vrot.lane.b32.xlu0 %v2383, 64
      %v2463 = vpop.permute.xlu0 %2462
      %2464 = vrot.lane.b32.xlu0 %v2384, 64
      %v2465 = vpop.permute.xlu0 %2464
      %2466 = vrot.lane.b32.xlu0 %v2385, 64
      %v2467 = vpop.permute.xlu0 %2466
      %2468 = vrot.lane.b32.xlu0 %v2386, 64
      %v2469 = vpop.permute.xlu0 %2468
      %2470 = vrot.lane.b32.xlu0 %v2387, 64
      %v2471 = vpop.permute.xlu0 %2470
      %2472 = vrot.lane.b32.xlu0 %v2388, 64
      %v2473 = vpop.permute.xlu0 %2472
      %2474 = vrot.lane.b32.xlu0 %v2389, 64
      %v2475 = vpop.permute.xlu0 %2474
      %2476 = vrot.lane.b32.xlu0 %v2390, 64
      %v2477 = vpop.permute.xlu0 %2476
      %2478 = vrot.lane.b32.xlu0 %v2391, 64
      %v2479 = vpop.permute.xlu0 %2478
      %2480 = vrot.lane.b32.xlu0 %v2392, 64
      %v2481 = vpop.permute.xlu0 %2480
      %2482 = vrot.lane.b32.xlu0 %v2393, 64
      %v2483 = vpop.permute.xlu0 %2482
      %2484 = vrot.lane.b32.xlu0 %v2394, 64
      %v2485 = vpop.permute.xlu0 %2484
      %2486 = vrot.lane.b32.xlu0 %v2395, 64
      %v2487 = vpop.permute.xlu0 %2486
      %2488 = vrot.lane.b32.xlu0 %v2396, 64
      %v2489 = vpop.permute.xlu0 %2488
      %2490 = vrot.lane.b32.xlu0 %v2397, 64
      %v2491 = vpop.permute.xlu0 %2490
      %2492 = vrot.lane.b32.xlu0 %v2398, 64
      %v2493 = vpop.permute.xlu0 %2492
      %2494 = vrot.lane.b32.xlu0 %v2399, 64
      %v2495 = vpop.permute.xlu0 %2494
      %2496 = vrot.lane.b32.xlu0 %v2400, 64
      %v2497 = vpop.permute.xlu0 %2496
      %2498 = vrot.lane.b32.xlu0 %v2401, 64
      %v2499 = vpop.permute.xlu0 %2498
      %v2532 = vsel %vm629, %v2368, %v2437
      %v2533 = vsel %vm629, %v2369, %v2439
      %v2534 = vsel %vm629, %v2370, %v2441
      %v2535 = vsel %vm629, %v2371, %v2443
      %v2536 = vsel %vm629, %v2372, %v2445
      %v2537 = vsel %vm629, %v2373, %v2447
      %v2538 = vsel %vm629, %v2374, %v2449
      %v2539 = vsel %vm629, %v2375, %v2451
      %v2540 = vsel %vm629, %v2376, %v2453
      %v2541 = vsel %vm629, %v2377, %v2455
      %v2542 = vsel %vm629, %v2378, %v2457
      %v2543 = vsel %vm629, %v2379, %v2459
      %v2544 = vsel %vm629, %v2380, %v2461
      %v2545 = vsel %vm629, %v2381, %v2463
      %v2546 = vsel %vm629, %v2382, %v2465
      %v2547 = vsel %vm629, %v2383, %v2467
      %v2548 = vsel %vm629, %v2384, %v2469
      %v2549 = vsel %vm629, %v2385, %v2471
      %v2550 = vsel %vm629, %v2386, %v2473
      %v2551 = vsel %vm629, %v2387, %v2475
      %v2552 = vsel %vm629, %v2388, %v2477
      %v2553 = vsel %vm629, %v2389, %v2479
      %v2554 = vsel %vm629, %v2390, %v2481
      %v2555 = vsel %vm629, %v2391, %v2483
      %v2556 = vsel %vm629, %v2392, %v2485
      %v2557 = vsel %vm629, %v2393, %v2487
      %v2558 = vsel %vm629, %v2394, %v2489
      %v2559 = vsel %vm629, %v2395, %v2491
      %v2560 = vsel %vm629, %v2396, %v2493
      %v2561 = vsel %vm629, %v2397, %v2495
      %v2562 = vsel %vm629, %v2398, %v2497
      %v2563 = vsel %vm629, %v2399, %v2499
      %v2564 = vsel %vm2304, 1, 0
      %v2565 = vsel %vm2305, 1, 0
      %v2566 = vsel %vm2306, 1, 0
      %v2567 = vsel %vm2307, 1, 0
      %v2568 = vsel %vm2308, 1, 0
      %v2569 = vsel %vm2309, 1, 0
      %v2570 = vsel %vm2310, 1, 0
      %v2571 = vsel %vm2311, 1, 0
      %v2572 = vsel %vm2312, 1, 0
      %v2573 = vsel %vm2313, 1, 0
      %v2574 = vsel %vm2314, 1, 0
      %v2575 = vsel %vm2315, 1, 0
      %v2576 = vsel %vm2316, 1, 0
      %v2577 = vsel %vm2317, 1, 0
      %v2578 = vsel %vm2318, 1, 0
      %v2579 = vsel %vm2319, 1, 0
      %v2580 = vsel %vm2320, 1, 0
      %v2581 = vsel %vm2321, 1, 0
      %v2582 = vsel %vm2322, 1, 0
      %v2583 = vsel %vm2323, 1, 0
      %v2584 = vsel %vm2324, 1, 0
      %v2585 = vsel %vm2325, 1, 0
      %v2586 = vsel %vm2326, 1, 0
      %v2587 = vsel %vm2327, 1, 0
      %v2588 = vsel %vm2328, 1, 0
      %v2589 = vsel %vm2329, 1, 0
      %v2590 = vsel %vm2330, 1, 0
      %v2591 = vsel %vm2331, 1, 0
      %v2592 = vsel %vm2332, 1, 0
      %v2593 = vsel %vm2333, 1, 0
      %v2594 = vsel %vm2334, 1, 0
      %v2595 = vsel %vm2335, 1, 0
      %vm2596 = vcmp.eq.s32.totalorder %v2564, 1
      %vm2597 = vcmp.eq.s32.totalorder %v2565, 1
      %vm2598 = vcmp.eq.s32.totalorder %v2566, 1
      %vm2599 = vcmp.eq.s32.totalorder %v2567, 1
      %vm2600 = vcmp.eq.s32.totalorder %v2568, 1
      %vm2601 = vcmp.eq.s32.totalorder %v2569, 1
      %vm2602 = vcmp.eq.s32.totalorder %v2570, 1
      %vm2603 = vcmp.eq.s32.totalorder %v2571, 1
      %vm2604 = vcmp.eq.s32.totalorder %v2572, 1
      %vm2605 = vcmp.eq.s32.totalorder %v2573, 1
      %vm2606 = vcmp.eq.s32.totalorder %v2574, 1
      %vm2607 = vcmp.eq.s32.totalorder %v2575, 1
      %vm2608 = vcmp.eq.s32.totalorder %v2576, 1
      %vm2609 = vcmp.eq.s32.totalorder %v2577, 1
      %vm2610 = vcmp.eq.s32.totalorder %v2578, 1
      %vm2611 = vcmp.eq.s32.totalorder %v2579, 1
      %vm2612 = vcmp.eq.s32.totalorder %v2580, 1
      %vm2613 = vcmp.eq.s32.totalorder %v2581, 1
      %vm2614 = vcmp.eq.s32.totalorder %v2582, 1
      %vm2615 = vcmp.eq.s32.totalorder %v2583, 1
      %vm2616 = vcmp.eq.s32.totalorder %v2584, 1
      %vm2617 = vcmp.eq.s32.totalorder %v2585, 1
      %vm2618 = vcmp.eq.s32.totalorder %v2586, 1
      %vm2619 = vcmp.eq.s32.totalorder %v2587, 1
      %vm2620 = vcmp.eq.s32.totalorder %v2588, 1
      %vm2621 = vcmp.eq.s32.totalorder %v2589, 1
      %vm2622 = vcmp.eq.s32.totalorder %v2590, 1
      %vm2623 = vcmp.eq.s32.totalorder %v2591, 1
      %vm2624 = vcmp.eq.s32.totalorder %v2592, 1
      %vm2625 = vcmp.eq.s32.totalorder %v2593, 1
      %vm2626 = vcmp.eq.s32.totalorder %v2594, 1
      %vm2627 = vcmp.eq.s32.totalorder %v2595, 1
      %v2628 = vsel %vm2596, %v2532, 0.0
      %v2629 = vsel %vm2596, %v2372, 0.0
      %v2630 = vsel %vm2597, %v2533, 0.0
      %v2631 = vsel %vm2597, %v2373, 0.0
      %v2632 = vsel %vm2598, %v2534, 0.0
      %v2633 = vsel %vm2598, %v2374, 0.0
      %v2634 = vsel %vm2599, %v2535, 0.0
      %v2635 = vsel %vm2599, %v2375, 0.0
      %v2636 = vsel %vm2600, %v2536, 0.0
      %v2637 = vsel %vm2600, %v2376, 0.0
      %v2638 = vsel %vm2601, %v2537, 0.0
      %v2639 = vsel %vm2601, %v2377, 0.0
      %v2640 = vsel %vm2602, %v2538, 0.0
      %v2641 = vsel %vm2602, %v2378, 0.0
      %v2642 = vsel %vm2603, %v2539, 0.0
      %v2643 = vsel %vm2603, %v2379, 0.0
      %v2644 = vsel %vm2604, %v2540, 0.0
      %v2645 = vsel %vm2604, %v2380, 0.0
      %v2646 = vsel %vm2605, %v2541, 0.0
      %v2647 = vsel %vm2605, %v2381, 0.0
      %v2648 = vsel %vm2606, %v2542, 0.0
      %v2649 = vsel %vm2606, %v2382, 0.0
      %v2650 = vsel %vm2607, %v2543, 0.0
      %v2651 = vsel %vm2607, %v2383, 0.0
      %v2652 = vsel %vm2608, %v2544, 0.0
      %v2653 = vsel %vm2608, %v2384, 0.0
      %v2654 = vsel %vm2609, %v2545, 0.0
      %v2655 = vsel %vm2609, %v2385, 0.0
      %v2656 = vsel %vm2610, %v2546, 0.0
      %v2657 = vsel %vm2610, %v2386, 0.0
      %v2658 = vsel %vm2611, %v2547, 0.0
      %v2659 = vsel %vm2611, %v2387, 0.0
      %v2660 = vsel %vm2612, %v2548, 0.0
      %v2661 = vsel %vm2612, %v2388, 0.0
      %v2662 = vsel %vm2613, %v2549, 0.0
      %v2663 = vsel %vm2613, %v2389, 0.0
      %v2664 = vsel %vm2614, %v2550, 0.0
      %v2665 = vsel %vm2614, %v2390, 0.0
      %v2666 = vsel %vm2615, %v2551, 0.0
      %v2667 = vsel %vm2615, %v2391, 0.0
      %v2668 = vsel %vm2616, %v2552, 0.0
      %v2669 = vsel %vm2616, %v2392, 0.0
      %v2670 = vsel %vm2617, %v2553, 0.0
      %v2671 = vsel %vm2617, %v2393, 0.0
      %v2672 = vsel %vm2618, %v2554, 0.0
      %v2673 = vsel %vm2618, %v2394, 0.0
      %v2674 = vsel %vm2619, %v2555, 0.0
      %v2675 = vsel %vm2619, %v2395, 0.0
      %v2676 = vsel %vm2620, %v2556, 0.0
      %v2677 = vsel %vm2620, %v2396, 0.0
      %v2678 = vsel %vm2621, %v2557, 0.0
      %v2679 = vsel %vm2621, %v2397, 0.0
      %v2680 = vsel %vm2622, %v2558, 0.0
      %v2681 = vsel %vm2622, %v2398, 0.0
      %v2682 = vsel %vm2623, %v2559, 0.0
      %v2683 = vsel %vm2623, %v2399, 0.0
      %v2684 = vsel %vm2624, %v2560, 0.0
      %v2685 = vsel %vm2624, %v2400, 0.0
      %v2686 = vsel %vm2625, %v2561, 0.0
      %v2687 = vsel %vm2625, %v2401, 0.0
      %v2688 = vsel %vm2626, %v2562, 0.0
      %v2689 = vsel %vm2626, %v2402, 0.0
      %v2690 = vsel %vm2627, %v2563, 0.0
      %v2691 = vsel %vm2627, %v2403, 0.0
      %v2692 = vpack.c.bf16 %v2630, %v2628
      %v2693 = vpack.c.bf16 %v2631, %v2629
      %v2694 = vpack.c.bf16 %v2634, %v2632
      %v2695 = vpack.c.bf16 %v2635, %v2633
      %v2696 = vpack.c.bf16 %v2638, %v2636
      %v2697 = vpack.c.bf16 %v2639, %v2637
      %v2698 = vpack.c.bf16 %v2642, %v2640
      %v2699 = vpack.c.bf16 %v2643, %v2641
      %v2700 = vpack.c.bf16 %v2646, %v2644
      %v2701 = vpack.c.bf16 %v2647, %v2645
      %v2702 = vpack.c.bf16 %v2650, %v2648
      %v2703 = vpack.c.bf16 %v2651, %v2649
      %v2704 = vpack.c.bf16 %v2654, %v2652
      %v2705 = vpack.c.bf16 %v2655, %v2653
      %v2706 = vpack.c.bf16 %v2658, %v2656
      %v2707 = vpack.c.bf16 %v2659, %v2657
      %v2708 = vpack.c.bf16 %v2662, %v2660
      %v2709 = vpack.c.bf16 %v2663, %v2661
      %v2710 = vpack.c.bf16 %v2666, %v2664
      %v2711 = vpack.c.bf16 %v2667, %v2665
      %v2712 = vpack.c.bf16 %v2670, %v2668
      %v2713 = vpack.c.bf16 %v2671, %v2669
      %v2714 = vpack.c.bf16 %v2674, %v2672
      %v2715 = vpack.c.bf16 %v2675, %v2673
      %v2716 = vpack.c.bf16 %v2678, %v2676
      %v2717 = vpack.c.bf16 %v2679, %v2677
      %v2718 = vpack.c.bf16 %v2682, %v2680
      %v2719 = vpack.c.bf16 %v2683, %v2681
      %v2720 = vpack.c.bf16 %v2686, %v2684
      %v2721 = vpack.c.bf16 %v2687, %v2685
      %v2722 = vpack.c.bf16 %v2690, %v2688
      %v2723 = vpack.c.bf16 %v2691, %v2689
      %v2724 = vld [vmem:[%s2] sm:$0xf]
      %v2725 = vld [vmem:[%s2 + $0x4] sm:$0xf]
      %v2726 = vld [vmem:[%s2 + $0x8] sm:$0xf]
      %v2727 = vld [vmem:[%s2 + $0xc] sm:$0xf]
      %v2728 = vld [vmem:[%s2 + $0x10] sm:$0xf]
      %v2729 = vld [vmem:[%s2 + $0x14] sm:$0xf]
      %v2730 = vld [vmem:[%s2 + $0x18] sm:$0xf]
      %v2731 = vld [vmem:[%s2 + $0x1c] sm:$0xf]
      %v2732 = vld [vmem:[%s2 + $0x20] sm:$0xf]
      %v2733 = vld [vmem:[%s2 + $0x24] sm:$0xf]
      %v2734 = vld [vmem:[%s2 + $0x28] sm:$0xf]
      %v2735 = vld [vmem:[%s2 + $0x2c] sm:$0xf]
      %v2736 = vld [vmem:[%s2 + $0x30] sm:$0xf]
      %v2737 = vld [vmem:[%s2 + $0x34] sm:$0xf]
      %v2738 = vld [vmem:[%s2 + $0x38] sm:$0xf]
      %v2739 = vld [vmem:[%s2 + $0x3c] sm:$0xf]
      %v2740 = vld [vmem:[%s2 + $0x40] sm:$0xf]
      %v2741 = vld [vmem:[%s2 + $0x44] sm:$0xf]
      %v2742 = vld [vmem:[%s2 + $0x48] sm:$0xf]
      %v2743 = vld [vmem:[%s2 + $0x4c] sm:$0xf]
      %v2744 = vld [vmem:[%s2 + $0x50] sm:$0xf]
      %v2745 = vld [vmem:[%s2 + $0x54] sm:$0xf]
      %v2746 = vld [vmem:[%s2 + $0x58] sm:$0xf]
      %v2747 = vld [vmem:[%s2 + $0x5c] sm:$0xf]
      %v2748 = vld [vmem:[#allocation2 + $0x8] sm:$0xff]
      %v2749 = vld [vmem:[#allocation2 + $0x10] sm:$0xff]
      %v2750 = vld [vmem:[#allocation2 + $0x18] sm:$0xff]
      %v2751 = vld [vmem:[#allocation2 + $0x20] sm:$0xff]
      %v2752 = vld [vmem:[#allocation2 + $0x28] sm:$0xff]
      %v2753 = vld [vmem:[#allocation2 + $0x30] sm:$0xff]
      %v2754 = vld [vmem:[#allocation2 + $0x38] sm:$0xff]
      %v2755 = vld [vmem:[#allocation2 + $0x40] sm:$0xff]
      %v2756 = vld [vmem:[#allocation2 + $0x48] sm:$0xff]
      %v2757 = vld [vmem:[#allocation2 + $0x50] sm:$0xff]
      %v2758 = vld [vmem:[#allocation2 + $0x58] sm:$0xff]
      %v2759 = vld [vmem:[#allocation2 + $0x60] sm:$0xff]
      %v2760 = vld [vmem:[#allocation2 + $0x68] sm:$0xff]
      %v2761 = vld [vmem:[#allocation2 + $0x70] sm:$0xff]
      %v2762 = vld [vmem:[#allocation2 + $0x78] sm:$0xff]
      %v2763 = vld [vmem:[#allocation2 + $0x80] sm:$0xff]
      %v2764 = vld [vmem:[#allocation2 + $0x88] sm:$0xff]
      %v2765 = vld [vmem:[#allocation2 + $0x90] sm:$0xff]
      %v2766 = vld [vmem:[#allocation2 + $0x98] sm:$0xff]
      %v2767 = vld [vmem:[#allocation2 + $0xa0] sm:$0xff]
      %v2768 = vld [vmem:[#allocation2 + $0xa8] sm:$0xff]
      %v2769 = vld [vmem:[#allocation2 + $0xb0] sm:$0xff]
      %v2770 = vld [vmem:[#allocation2 + $0xb8] sm:$0xff]
      %v2771 = vld [vmem:[#allocation2 + $0xc0] sm:$0xff]
      %v2772 = vld [vmem:[#allocation2 + $0xc8] sm:$0xff]
      %v2773 = vld [vmem:[#allocation2 + $0xd0] sm:$0xff]
      %v2774 = vld [vmem:[#allocation2 + $0xd8] sm:$0xff]
      %v2775 = vld [vmem:[#allocation2 + $0xe0] sm:$0xff]
      %v2776 = vld [vmem:[#allocation2 + $0xe8] sm:$0xff]
      %v2777 = vld [vmem:[#allocation2 + $0xf0] sm:$0xff]
      %v2778 = vld [vmem:[#allocation2 + $0xf8] sm:$0xff]
      %v2779 = vld [vmem:[#allocation2 + $0x100] sm:$0xff]
      %v2780 = vld [vmem:[#allocation2 + $0x108] sm:$0xff]
      %v2781 = vld [vmem:[#allocation2 + $0x110] sm:$0xff]
      %v2782 = vld [vmem:[#allocation2 + $0x118] sm:$0xff]
      %v2783 = vld [vmem:[#allocation2 + $0x120] sm:$0xff]
      %2816 = vrot.lane.b32.xlu0 %v2750, 64
      %v2817 = vpop.permute.xlu0 %2816
      %2818 = vrot.lane.b32.xlu0 %v2751, 64
      %v2819 = vpop.permute.xlu0 %2818
      %2820 = vrot.lane.b32.xlu0 %v2752, 64
      %v2821 = vpop.permute.xlu0 %2820
      %2822 = vrot.lane.b32.xlu0 %v2753, 64
      %v2823 = vpop.permute.xlu0 %2822
      %2824 = vrot.lane.b32.xlu0 %v2754, 64
      %v2825 = vpop.permute.xlu0 %2824
      %2826 = vrot.lane.b32.xlu0 %v2755, 64
      %v2827 = vpop.permute.xlu0 %2826
      %2828 = vrot.lane.b32.xlu0 %v2756, 64
      %v2829 = vpop.permute.xlu0 %2828
      %2830 = vrot.lane.b32.xlu0 %v2757, 64
      %v2831 = vpop.permute.xlu0 %2830
      %2832 = vrot.lane.b32.xlu0 %v2758, 64
      %v2833 = vpop.permute.xlu0 %2832
      %2834 = vrot.lane.b32.xlu0 %v2759, 64
      %v2835 = vpop.permute.xlu0 %2834
      %2836 = vrot.lane.b32.xlu0 %v2760, 64
      %v2837 = vpop.permute.xlu0 %2836
      %2838 = vrot.lane.b32.xlu0 %v2761, 64
      %v2839 = vpop.permute.xlu0 %2838
      %2840 = vrot.lane.b32.xlu0 %v2762, 64
      %v2841 = vpop.permute.xlu0 %2840
      %2842 = vrot.lane.b32.xlu0 %v2763, 64
      %v2843 = vpop.permute.xlu0 %2842
      %2844 = vrot.lane.b32.xlu0 %v2764, 64
      %v2845 = vpop.permute.xlu0 %2844
      %2846 = vrot.lane.b32.xlu0 %v2765, 64
      %v2847 = vpop.permute.xlu0 %2846
      %2848 = vrot.lane.b32.xlu0 %v2766, 64
      %v2849 = vpop.permute.xlu0 %2848
      %2850 = vrot.lane.b32.xlu0 %v2767, 64
      %v2851 = vpop.permute.xlu0 %2850
      %2852 = vrot.lane.b32.xlu0 %v2768, 64
      %v2853 = vpop.permute.xlu0 %2852
      %2854 = vrot.lane.b32.xlu0 %v2769, 64
      %v2855 = vpop.permute.xlu0 %2854
      %2856 = vrot.lane.b32.xlu0 %v2770, 64
      %v2857 = vpop.permute.xlu0 %2856
      %2858 = vrot.lane.b32.xlu0 %v2771, 64
      %v2859 = vpop.permute.xlu0 %2858
      %2860 = vrot.lane.b32.xlu0 %v2772, 64
      %v2861 = vpop.permute.xlu0 %2860
      %2862 = vrot.lane.b32.xlu0 %v2773, 64
      %v2863 = vpop.permute.xlu0 %2862
      %2864 = vrot.lane.b32.xlu0 %v2774, 64
      %v2865 = vpop.permute.xlu0 %2864
      %2866 = vrot.lane.b32.xlu0 %v2775, 64
      %v2867 = vpop.permute.xlu0 %2866
      %2868 = vrot.lane.b32.xlu0 %v2776, 64
      %v2869 = vpop.permute.xlu0 %2868
      %2870 = vrot.lane.b32.xlu0 %v2777, 64
      %v2871 = vpop.permute.xlu0 %2870
      %2872 = vrot.lane.b32.xlu0 %v2778, 64
      %v2873 = vpop.permute.xlu0 %2872
      %2874 = vrot.lane.b32.xlu0 %v2779, 64
      %v2875 = vpop.permute.xlu0 %2874
      %2876 = vrot.lane.b32.xlu0 %v2780, 64
      %v2877 = vpop.permute.xlu0 %2876
      %2878 = vrot.lane.b32.xlu0 %v2781, 64
      %v2879 = vpop.permute.xlu0 %2878
      %v2912 = vsel %vm629, %v2748, %v2817
      %v2913 = vsel %vm629, %v2749, %v2819
      %v2914 = vsel %vm629, %v2750, %v2821
      %v2915 = vsel %vm629, %v2751, %v2823
      %v2916 = vsel %vm629, %v2752, %v2825
      %v2917 = vsel %vm629, %v2753, %v2827
      %v2918 = vsel %vm629, %v2754, %v2829
      %v2919 = vsel %vm629, %v2755, %v2831
      %v2920 = vsel %vm629, %v2756, %v2833
      %v2921 = vsel %vm629, %v2757, %v2835
      %v2922 = vsel %vm629, %v2758, %v2837
      %v2923 = vsel %vm629, %v2759, %v2839
      %v2924 = vsel %vm629, %v2760, %v2841
      %v2925 = vsel %vm629, %v2761, %v2843
      %v2926 = vsel %vm629, %v2762, %v2845
      %v2927 = vsel %vm629, %v2763, %v2847
      %v2928 = vsel %vm629, %v2764, %v2849
      %v2929 = vsel %vm629, %v2765, %v2851
      %v2930 = vsel %vm629, %v2766, %v2853
      %v2931 = vsel %vm629, %v2767, %v2855
      %v2932 = vsel %vm629, %v2768, %v2857
      %v2933 = vsel %vm629, %v2769, %v2859
      %v2934 = vsel %vm629, %v2770, %v2861
      %v2935 = vsel %vm629, %v2771, %v2863
      %v2936 = vsel %vm629, %v2772, %v2865
      %v2937 = vsel %vm629, %v2773, %v2867
      %v2938 = vsel %vm629, %v2774, %v2869
      %v2939 = vsel %vm629, %v2775, %v2871
      %v2940 = vsel %vm629, %v2776, %v2873
      %v2941 = vsel %vm629, %v2777, %v2875
      %v2942 = vsel %vm629, %v2778, %v2877
      %v2943 = vsel %vm629, %v2779, %v2879
      %v2944 = vpack.c.bf16 %v2913, %v2912
      %v2945 = vpack.c.bf16 %v2753, %v2752
      %v2946 = vpack.c.bf16 %v2915, %v2914
      %v2947 = vpack.c.bf16 %v2755, %v2754
      %v2948 = vpack.c.bf16 %v2917, %v2916
      %v2949 = vpack.c.bf16 %v2757, %v2756
      %v2950 = vpack.c.bf16 %v2919, %v2918
      %v2951 = vpack.c.bf16 %v2759, %v2758
      %v2952 = vpack.c.bf16 %v2921, %v2920
      %v2953 = vpack.c.bf16 %v2761, %v2760
      %v2954 = vpack.c.bf16 %v2923, %v2922
      %v2955 = vpack.c.bf16 %v2763, %v2762
      %v2956 = vpack.c.bf16 %v2925, %v2924
      %v2957 = vpack.c.bf16 %v2765, %v2764
      %v2958 = vpack.c.bf16 %v2927, %v2926
      %v2959 = vpack.c.bf16 %v2767, %v2766
      %v2960 = vpack.c.bf16 %v2929, %v2928
      %v2961 = vpack.c.bf16 %v2769, %v2768
      %v2962 = vpack.c.bf16 %v2931, %v2930
      %v2963 = vpack.c.bf16 %v2771, %v2770
      %v2964 = vpack.c.bf16 %v2933, %v2932
      %v2965 = vpack.c.bf16 %v2773, %v2772
      %v2966 = vpack.c.bf16 %v2935, %v2934
      %v2967 = vpack.c.bf16 %v2775, %v2774
      %v2968 = vpack.c.bf16 %v2937, %v2936
      %v2969 = vpack.c.bf16 %v2777, %v2776
      %v2970 = vpack.c.bf16 %v2939, %v2938
      %v2971 = vpack.c.bf16 %v2779, %v2778
      %v2972 = vpack.c.bf16 %v2941, %v2940
      %v2973 = vpack.c.bf16 %v2781, %v2780
      %v2974 = vpack.c.bf16 %v2943, %v2942
      %v2975 = vpack.c.bf16 %v2783, %v2782
      %s2976 = scalar_lea.vmem %s2, 96
      %v2977 = vld [vmem:[%s2976] sm:$0xf]
      %v2978 = vld [vmem:[%s2976 + $0x4] sm:$0xf]
      %v2979 = vld [vmem:[%s2976 + $0x8] sm:$0xf]
      %v2980 = vld [vmem:[%s2976 + $0xc] sm:$0xf]
      %v2981 = vld [vmem:[%s2976 + $0x10] sm:$0xf]
      %v2982 = vld [vmem:[%s2976 + $0x14] sm:$0xf]
      %v2983 = vld [vmem:[%s2976 + $0x18] sm:$0xf]
      %v2984 = vld [vmem:[%s2976 + $0x1c] sm:$0xf]
      %v2985 = vld [vmem:[%s2976 + $0x20] sm:$0xf]
      %v2986 = vld [vmem:[%s2976 + $0x24] sm:$0xf]
      %v2987 = vld [vmem:[%s2976 + $0x28] sm:$0xf]
      %v2988 = vld [vmem:[%s2976 + $0x2c] sm:$0xf]
      %v2989 = vld [vmem:[%s2976 + $0x30] sm:$0xf]
      %v2990 = vld [vmem:[%s2976 + $0x34] sm:$0xf]
      %v2991 = vld [vmem:[%s2976 + $0x38] sm:$0xf]
      %v2992 = vld [vmem:[%s2976 + $0x3c] sm:$0xf]
      %v2993 = vld [vmem:[%s2976 + $0x40] sm:$0xf]
      %v2994 = vld [vmem:[%s2976 + $0x44] sm:$0xf]
      %v2995 = vld [vmem:[%s2976 + $0x48] sm:$0xf]
      %v2996 = vld [vmem:[%s2976 + $0x4c] sm:$0xf]
      %v2997 = vld [vmem:[%s2976 + $0x50] sm:$0xf]
      %v2998 = vld [vmem:[%s2976 + $0x54] sm:$0xf]
      %v2999 = vld [vmem:[%s2976 + $0x58] sm:$0xf]
      %v3000 = vld [vmem:[%s2976 + $0x5c] sm:$0xf]
      %v3025 = vunpack.c.l.b16 %v2977
      %v3026 = vunpack.c.l.b16 %v2978
      %v3027 = vunpack.c.l.b16 %v2979
      %v3028 = vunpack.c.l.b16 %v2980
      %v3029 = vunpack.c.l.b16 %v2981
      %v3030 = vunpack.c.l.b16 %v2982
      %v3031 = vunpack.c.l.b16 %v2983
      %v3032 = vunpack.c.l.b16 %v2984
      %v3033 = vunpack.c.l.b16 %v2985
      %v3034 = vunpack.c.l.b16 %v2986
      %v3035 = vunpack.c.l.b16 %v2987
      %v3036 = vunpack.c.l.b16 %v2988
      %v3037 = vunpack.c.l.b16 %v2989
      %v3038 = vunpack.c.l.b16 %v2990
      %v3039 = vunpack.c.l.b16 %v2991
      %v3040 = vunpack.c.l.b16 %v2992
      %v3041 = vunpack.c.l.b16 %v2993
      %v3042 = vunpack.c.l.b16 %v2994
      %v3043 = vunpack.c.l.b16 %v2995
      %v3044 = vunpack.c.l.b16 %v2996
      %v3045 = vunpack.c.l.b16 %v2997
      %v3046 = vunpack.c.l.b16 %v2998
      %v3047 = vunpack.c.l.b16 %v2999
      %v3048 = vunpack.c.l.b16 %v3000
      %v3049 = vpack.c.b16 %v3026, %v3025
      %v3050 = vpack.c.b16 %v3028, %v3027
      %v3051 = vpack.c.b16 %v3030, %v3029
      %v3052 = vpack.c.b16 %v3032, %v3031
      %v3053 = vpack.c.b16 %v3034, %v3033
      %v3054 = vpack.c.b16 %v3036, %v3035
      %v3055 = vpack.c.b16 %v3038, %v3037
      %v3056 = vpack.c.b16 %v3040, %v3039
      %v3057 = vpack.c.b16 %v3042, %v3041
      %v3058 = vpack.c.b16 %v3044, %v3043
      %v3059 = vpack.c.b16 %v3046, %v3045
      %v3060 = vpack.c.b16 %v3048, %v3047
      %v3074 = vsel %vm629, %v2945, 0
      %v3077 = vsel %vm629, %v2947, 0
      %v3080 = vsel %vm629, %v2949, 0
      %v3083 = vsel %vm629, %v2951, 0
      %v3086 = vsel %vm629, %v2953, 0
      %v3089 = vsel %vm629, %v2955, 0
      %v3092 = vsel %vm629, %v2957, 0
      %v3095 = vsel %vm629, %v2959, 0
      %v3098 = vsel %vm629, %v2961, 0
      %v3101 = vsel %vm629, %v2963, 0
      %v3104 = vsel %vm629, %v2965, 0
      %v3107 = vsel %vm629, %v2967, 0
      %v3110 = vsel %vm629, %v2969, 0
      %v3113 = vsel %vm629, %v2971, 0
      %v3116 = vsel %vm629, %v2973, 0
      %v3119 = vsel %vm629, %v2975, 0
      %3121 = vmatpush.bf16.msra.mxu0 %v3056
      %3122 = vmatpush.bf16.msra.mxu0 %v3055
      %3123 = vmatpush.bf16.msra.mxu0 %v3054
      %3124 = vmatpush.bf16.msra.mxu0 %v3053
      %3125 = vmatpush.bf16.msra.mxu0 %v3052
      %3126 = vmatpush.bf16.msra.mxu0 %v3051
      %3127 = vmatpush.bf16.msra.mxu0 %v3050
      %3128 = vmatpush.bf16.msra.mxu0 %v3049
      %3129 = vmatmul.bf16.gmra.mxu0 %v2944
      %v3130 = vpop.f32.mrf.mxu0
      %v3131 = vadd.f32 0.0, %v3130
      %v3132 = vpop.f32.mrf.mxu0
      %v3133 = vadd.f32 0.0, %v3132
      %3134 = vmatmul.bf16.gmra.mxu0 %v2946
      %v3135 = vpop.f32.mrf.mxu0
      %v3136 = vadd.f32 0.0, %v3135
      %v3137 = vpop.f32.mrf.mxu0
      %v3138 = vadd.f32 0.0, %v3137
      %3139 = vmatmul.bf16.gmra.mxu0 %v2948
      %v3140 = vpop.f32.mrf.mxu0
      %v3141 = vadd.f32 0.0, %v3140
      %v3142 = vpop.f32.mrf.mxu0
      %v3143 = vadd.f32 0.0, %v3142
      %3144 = vmatmul.bf16.gmra.mxu0 %v2950
      %v3145 = vpop.f32.mrf.mxu0
      %v3146 = vadd.f32 0.0, %v3145
      %v3147 = vpop.f32.mrf.mxu0
      %v3148 = vadd.f32 0.0, %v3147
      %3149 = vmatmul.bf16.gmra.mxu0 %v2952
      %v3150 = vpop.f32.mrf.mxu0
      %v3151 = vadd.f32 0.0, %v3150
      %v3152 = vpop.f32.mrf.mxu0
      %v3153 = vadd.f32 0.0, %v3152
      %3154 = vmatmul.bf16.gmra.mxu0 %v2954
      %v3155 = vpop.f32.mrf.mxu0
      %v3156 = vadd.f32 0.0, %v3155
      %v3157 = vpop.f32.mrf.mxu0
      %v3158 = vadd.f32 0.0, %v3157
      %3159 = vmatmul.bf16.gmra.mxu0 %v2956
      %v3160 = vpop.f32.mrf.mxu0
      %v3161 = vadd.f32 0.0, %v3160
      %v3162 = vpop.f32.mrf.mxu0
      %v3163 = vadd.f32 0.0, %v3162
      %3164 = vmatmul.bf16.gmra.mxu0 %v2958
      %v3165 = vpop.f32.mrf.mxu0
      %v3166 = vadd.f32 0.0, %v3165
      %v3167 = vpop.f32.mrf.mxu0
      %v3168 = vadd.f32 0.0, %v3167
      %3169 = vmatmul.bf16.gmra.mxu0 %v2960
      %v3170 = vpop.f32.mrf.mxu0
      %v3171 = vadd.f32 0.0, %v3170
      %v3172 = vpop.f32.mrf.mxu0
      %v3173 = vadd.f32 0.0, %v3172
      %3174 = vmatmul.bf16.gmra.mxu0 %v2962
      %v3175 = vpop.f32.mrf.mxu0
      %v3176 = vadd.f32 0.0, %v3175
      %v3177 = vpop.f32.mrf.mxu0
      %v3178 = vadd.f32 0.0, %v3177
      %3179 = vmatmul.bf16.gmra.mxu0 %v2964
      %v3180 = vpop.f32.mrf.mxu0
      %v3181 = vadd.f32 0.0, %v3180
      %v3182 = vpop.f32.mrf.mxu0
      %v3183 = vadd.f32 0.0, %v3182
      %3184 = vmatmul.bf16.gmra.mxu0 %v2966
      %v3185 = vpop.f32.mrf.mxu0
      %v3186 = vadd.f32 0.0, %v3185
      %v3187 = vpop.f32.mrf.mxu0
      %v3188 = vadd.f32 0.0, %v3187
      %3189 = vmatmul.bf16.gmra.mxu0 %v2968
      %v3190 = vpop.f32.mrf.mxu0
      %v3191 = vadd.f32 0.0, %v3190
      %v3192 = vpop.f32.mrf.mxu0
      %v3193 = vadd.f32 0.0, %v3192
      %3194 = vmatmul.bf16.gmra.mxu0 %v2970
      %v3195 = vpop.f32.mrf.mxu0
      %v3196 = vadd.f32 0.0, %v3195
      %v3197 = vpop.f32.mrf.mxu0
      %v3198 = vadd.f32 0.0, %v3197
      %3199 = vmatmul.bf16.gmra.mxu0 %v2972
      %v3200 = vpop.f32.mrf.mxu0
      %v3201 = vadd.f32 0.0, %v3200
      %v3202 = vpop.f32.mrf.mxu0
      %v3203 = vadd.f32 0.0, %v3202
      %3204 = vmatmul.bf16.gmra.mxu0 %v2974
      %v3205 = vpop.f32.mrf.mxu0
      %v3206 = vadd.f32 0.0, %v3205
      %v3207 = vpop.f32.mrf.mxu0
      %v3208 = vadd.f32 0.0, %v3207
      %3209 = vdwg.mxu0
      %3210 = vmatpush.bf16.msra.mxu0 0
      %3211 = vmatpush.bf16.msra.mxu0 0
      %3212 = vmatpush.bf16.msra.mxu0 0
      %3213 = vmatpush.bf16.msra.mxu0 0
      %3214 = vmatpush.bf16.msra.mxu0 %v3060
      %3215 = vmatpush.bf16.msra.mxu0 %v3059
      %3216 = vmatpush.bf16.msra.mxu0 %v3058
      %3217 = vmatpush.bf16.msra.mxu0 %v3057
      %3218 = vmatmul.bf16.gmra.mxu0 %v3074
      %v3219 = vpop.f32.mrf.mxu0
      %v3220 = vadd.f32 %v3131, %v3219
      %v3221 = vpop.f32.mrf.mxu0
      %v3222 = vadd.f32 %v3133, %v3221
      %3223 = vmatmul.bf16.gmra.mxu0 %v3077
      %v3224 = vpop.f32.mrf.mxu0
      %v3225 = vadd.f32 %v3136, %v3224
      %v3226 = vpop.f32.mrf.mxu0
      %v3227 = vadd.f32 %v3138, %v3226
      %3228 = vmatmul.bf16.gmra.mxu0 %v3080
      %v3229 = vpop.f32.mrf.mxu0
      %v3230 = vadd.f32 %v3141, %v3229
      %v3231 = vpop.f32.mrf.mxu0
      %v3232 = vadd.f32 %v3143, %v3231
      %3233 = vmatmul.bf16.gmra.mxu0 %v3083
      %v3234 = vpop.f32.mrf.mxu0
      %v3235 = vadd.f32 %v3146, %v3234
      %v3236 = vpop.f32.mrf.mxu0
      %v3237 = vadd.f32 %v3148, %v3236
      %3238 = vmatmul.bf16.gmra.mxu0 %v3086
      %v3239 = vpop.f32.mrf.mxu0
      %v3240 = vadd.f32 %v3151, %v3239
      %v3241 = vpop.f32.mrf.mxu0
      %v3242 = vadd.f32 %v3153, %v3241
      %3243 = vmatmul.bf16.gmra.mxu0 %v3089
      %v3244 = vpop.f32.mrf.mxu0
      %v3245 = vadd.f32 %v3156, %v3244
      %v3246 = vpop.f32.mrf.mxu0
      %v3247 = vadd.f32 %v3158, %v3246
      %3248 = vmatmul.bf16.gmra.mxu0 %v3092
      %v3249 = vpop.f32.mrf.mxu0
      %v3250 = vadd.f32 %v3161, %v3249
      %v3251 = vpop.f32.mrf.mxu0
      %v3252 = vadd.f32 %v3163, %v3251
      %3253 = vmatmul.bf16.gmra.mxu0 %v3095
      %v3254 = vpop.f32.mrf.mxu0
      %v3255 = vadd.f32 %v3166, %v3254
      %v3256 = vpop.f32.mrf.mxu0
      %v3257 = vadd.f32 %v3168, %v3256
      %3258 = vmatmul.bf16.gmra.mxu0 %v3098
      %v3259 = vpop.f32.mrf.mxu0
      %v3260 = vadd.f32 %v3171, %v3259
      %v3261 = vpop.f32.mrf.mxu0
      %v3262 = vadd.f32 %v3173, %v3261
      %3263 = vmatmul.bf16.gmra.mxu0 %v3101
      %v3264 = vpop.f32.mrf.mxu0
      %v3265 = vadd.f32 %v3176, %v3264
      %v3266 = vpop.f32.mrf.mxu0
      %v3267 = vadd.f32 %v3178, %v3266
      %3268 = vmatmul.bf16.gmra.mxu0 %v3104
      %v3269 = vpop.f32.mrf.mxu0
      %v3270 = vadd.f32 %v3181, %v3269
      %v3271 = vpop.f32.mrf.mxu0
      %v3272 = vadd.f32 %v3183, %v3271
      %3273 = vmatmul.bf16.gmra.mxu0 %v3107
      %v3274 = vpop.f32.mrf.mxu0
      %v3275 = vadd.f32 %v3186, %v3274
      %v3276 = vpop.f32.mrf.mxu0
      %v3277 = vadd.f32 %v3188, %v3276
      %3278 = vmatmul.bf16.gmra.mxu0 %v3110
      %v3279 = vpop.f32.mrf.mxu0
      %v3280 = vadd.f32 %v3191, %v3279
      %v3281 = vpop.f32.mrf.mxu0
      %v3282 = vadd.f32 %v3193, %v3281
      %3283 = vmatmul.bf16.gmra.mxu0 %v3113
      %v3284 = vpop.f32.mrf.mxu0
      %v3285 = vadd.f32 %v3196, %v3284
      %v3286 = vpop.f32.mrf.mxu0
      %v3287 = vadd.f32 %v3198, %v3286
      %3288 = vmatmul.bf16.gmra.mxu0 %v3116
      %v3289 = vpop.f32.mrf.mxu0
      %v3290 = vadd.f32 %v3201, %v3289
      %v3291 = vpop.f32.mrf.mxu0
      %v3292 = vadd.f32 %v3203, %v3291
      %3293 = vmatmul.bf16.gmra.mxu0 %v3119
      %v3294 = vpop.f32.mrf.mxu0
      %v3295 = vadd.f32 %v3206, %v3294
      %v3296 = vpop.f32.mrf.mxu0
      %v3297 = vadd.f32 %v3208, %v3296
      %3298 = vdwg.mxu0
      %v3323 = vunpack.c.l.b16 %v2724
      %v3324 = vunpack.c.l.b16 %v2725
      %v3325 = vunpack.c.l.b16 %v2726
      %v3326 = vunpack.c.l.b16 %v2727
      %v3327 = vunpack.c.l.b16 %v2728
      %v3328 = vunpack.c.l.b16 %v2729
      %v3329 = vunpack.c.l.b16 %v2730
      %v3330 = vunpack.c.l.b16 %v2731
      %v3331 = vunpack.c.l.b16 %v2732
      %v3332 = vunpack.c.l.b16 %v2733
      %v3333 = vunpack.c.l.b16 %v2734
      %v3334 = vunpack.c.l.b16 %v2735
      %v3335 = vunpack.c.l.b16 %v2736
      %v3336 = vunpack.c.l.b16 %v2737
      %v3337 = vunpack.c.l.b16 %v2738
      %v3338 = vunpack.c.l.b16 %v2739
      %v3339 = vunpack.c.l.b16 %v2740
      %v3340 = vunpack.c.l.b16 %v2741
      %v3341 = vunpack.c.l.b16 %v2742
      %v3342 = vunpack.c.l.b16 %v2743
      %v3343 = vunpack.c.l.b16 %v2744
      %v3344 = vunpack.c.l.b16 %v2745
      %v3345 = vunpack.c.l.b16 %v2746
      %v3346 = vunpack.c.l.b16 %v2747
      %v3347 = vpack.c.b16 %v3324, %v3323
      %v3348 = vpack.c.b16 %v3326, %v3325
      %v3349 = vpack.c.b16 %v3328, %v3327
      %v3350 = vpack.c.b16 %v3330, %v3329
      %v3351 = vpack.c.b16 %v3332, %v3331
      %v3352 = vpack.c.b16 %v3334, %v3333
      %v3353 = vpack.c.b16 %v3336, %v3335
      %v3354 = vpack.c.b16 %v3338, %v3337
      %v3355 = vpack.c.b16 %v3340, %v3339
      %v3356 = vpack.c.b16 %v3342, %v3341
      %v3357 = vpack.c.b16 %v3344, %v3343
      %v3358 = vpack.c.b16 %v3346, %v3345
      %v3372 = vsel %vm629, %v2693, 0
      %v3375 = vsel %vm629, %v2695, 0
      %v3378 = vsel %vm629, %v2697, 0
      %v3381 = vsel %vm629, %v2699, 0
      %v3384 = vsel %vm629, %v2701, 0
      %v3387 = vsel %vm629, %v2703, 0
      %v3390 = vsel %vm629, %v2705, 0
      %v3393 = vsel %vm629, %v2707, 0
      %v3396 = vsel %vm629, %v2709, 0
      %v3399 = vsel %vm629, %v2711, 0
      %v3402 = vsel %vm629, %v2713, 0
      %v3405 = vsel %vm629, %v2715, 0
      %v3408 = vsel %vm629, %v2717, 0
      %v3411 = vsel %vm629, %v2719, 0
      %v3414 = vsel %vm629, %v2721, 0
      %v3417 = vsel %vm629, %v2723, 0
      %3419 = vmatpush.bf16.msra.mxu0 %v3354
      %3420 = vmatpush.bf16.msra.mxu0 %v3353
      %3421 = vmatpush.bf16.msra.mxu0 %v3352
      %3422 = vmatpush.bf16.msra.mxu0 %v3351
      %3423 = vmatpush.bf16.msra.mxu0 %v3350
      %3424 = vmatpush.bf16.msra.mxu0 %v3349
      %3425 = vmatpush.bf16.msra.mxu0 %v3348
      %3426 = vmatpush.bf16.msra.mxu0 %v3347
      %3427 = vmatmul.bf16.gmra.mxu0 %v2692
      %v3428 = vpop.f32.mrf.mxu0
      %v3429 = vadd.f32 %v3220, %v3428
      %v3430 = vpop.f32.mrf.mxu0
      %v3431 = vadd.f32 %v3222, %v3430
      %3432 = vmatmul.bf16.gmra.mxu0 %v2694
      %v3433 = vpop.f32.mrf.mxu0
      %v3434 = vadd.f32 %v3225, %v3433
      %v3435 = vpop.f32.mrf.mxu0
      %v3436 = vadd.f32 %v3227, %v3435
      %3437 = vmatmul.bf16.gmra.mxu0 %v2696
      %v3438 = vpop.f32.mrf.mxu0
      %v3439 = vadd.f32 %v3230, %v3438
      %v3440 = vpop.f32.mrf.mxu0
      %v3441 = vadd.f32 %v3232, %v3440
      %3442 = vmatmul.bf16.gmra.mxu0 %v2698
      %v3443 = vpop.f32.mrf.mxu0
      %v3444 = vadd.f32 %v3235, %v3443
      %v3445 = vpop.f32.mrf.mxu0
      %v3446 = vadd.f32 %v3237, %v3445
      %3447 = vmatmul.bf16.gmra.mxu0 %v2700
      %v3448 = vpop.f32.mrf.mxu0
      %v3449 = vadd.f32 %v3240, %v3448
      %v3450 = vpop.f32.mrf.mxu0
      %v3451 = vadd.f32 %v3242, %v3450
      %3452 = vmatmul.bf16.gmra.mxu0 %v2702
      %v3453 = vpop.f32.mrf.mxu0
      %v3454 = vadd.f32 %v3245, %v3453
      %v3455 = vpop.f32.mrf.mxu0
      %v3456 = vadd.f32 %v3247, %v3455
      %3457 = vmatmul.bf16.gmra.mxu0 %v2704
      %v3458 = vpop.f32.mrf.mxu0
      %v3459 = vadd.f32 %v3250, %v3458
      %v3460 = vpop.f32.mrf.mxu0
      %v3461 = vadd.f32 %v3252, %v3460
      %3462 = vmatmul.bf16.gmra.mxu0 %v2706
      %v3463 = vpop.f32.mrf.mxu0
      %v3464 = vadd.f32 %v3255, %v3463
      %v3465 = vpop.f32.mrf.mxu0
      %v3466 = vadd.f32 %v3257, %v3465
      %3467 = vmatmul.bf16.gmra.mxu0 %v2708
      %v3468 = vpop.f32.mrf.mxu0
      %v3469 = vadd.f32 %v3260, %v3468
      %v3470 = vpop.f32.mrf.mxu0
      %v3471 = vadd.f32 %v3262, %v3470
      %3472 = vmatmul.bf16.gmra.mxu0 %v2710
      %v3473 = vpop.f32.mrf.mxu0
      %v3474 = vadd.f32 %v3265, %v3473
      %v3475 = vpop.f32.mrf.mxu0
      %v3476 = vadd.f32 %v3267, %v3475
      %3477 = vmatmul.bf16.gmra.mxu0 %v2712
      %v3478 = vpop.f32.mrf.mxu0
      %v3479 = vadd.f32 %v3270, %v3478
      %v3480 = vpop.f32.mrf.mxu0
      %v3481 = vadd.f32 %v3272, %v3480
      %3482 = vmatmul.bf16.gmra.mxu0 %v2714
      %v3483 = vpop.f32.mrf.mxu0
      %v3484 = vadd.f32 %v3275, %v3483
      %v3485 = vpop.f32.mrf.mxu0
      %v3486 = vadd.f32 %v3277, %v3485
      %3487 = vmatmul.bf16.gmra.mxu0 %v2716
      %v3488 = vpop.f32.mrf.mxu0
      %v3489 = vadd.f32 %v3280, %v3488
      %v3490 = vpop.f32.mrf.mxu0
      %v3491 = vadd.f32 %v3282, %v3490
      %3492 = vmatmul.bf16.gmra.mxu0 %v2718
      %v3493 = vpop.f32.mrf.mxu0
      %v3494 = vadd.f32 %v3285, %v3493
      %v3495 = vpop.f32.mrf.mxu0
      %v3496 = vadd.f32 %v3287, %v3495
      %3497 = vmatmul.bf16.gmra.mxu0 %v2720
      %v3498 = vpop.f32.mrf.mxu0
      %v3499 = vadd.f32 %v3290, %v3498
      %v3500 = vpop.f32.mrf.mxu0
      %v3501 = vadd.f32 %v3292, %v3500
      %3502 = vmatmul.bf16.gmra.mxu0 %v2722
      %v3503 = vpop.f32.mrf.mxu0
      %v3504 = vadd.f32 %v3295, %v3503
      %v3505 = vpop.f32.mrf.mxu0
      %v3506 = vadd.f32 %v3297, %v3505
      %3507 = vdwg.mxu0
      %3508 = vmatpush.bf16.msra.mxu0 0
      %3509 = vmatpush.bf16.msra.mxu0 0
      %3510 = vmatpush.bf16.msra.mxu0 0
      %3511 = vmatpush.bf16.msra.mxu0 0
      %3512 = vmatpush.bf16.msra.mxu0 %v3358
      %3513 = vmatpush.bf16.msra.mxu0 %v3357
      %3514 = vmatpush.bf16.msra.mxu0 %v3356
      %3515 = vmatpush.bf16.msra.mxu0 %v3355
      %3516 = vmatmul.bf16.gmra.mxu0 %v3372
      %v3517 = vpop.f32.mrf.mxu0
      %v3518 = vadd.f32 %v3429, %v3517
      %v3519 = vpop.f32.mrf.mxu0
      %v3520 = vadd.f32 %v3431, %v3519
      %3521 = vmatmul.bf16.gmra.mxu0 %v3375
      %v3522 = vpop.f32.mrf.mxu0
      %v3523 = vadd.f32 %v3434, %v3522
      %v3524 = vpop.f32.mrf.mxu0
      %v3525 = vadd.f32 %v3436, %v3524
      %3526 = vmatmul.bf16.gmra.mxu0 %v3378
      %v3527 = vpop.f32.mrf.mxu0
      %v3528 = vadd.f32 %v3439, %v3527
      %v3529 = vpop.f32.mrf.mxu0
      %v3530 = vadd.f32 %v3441, %v3529
      %3531 = vmatmul.bf16.gmra.mxu0 %v3381
      %v3532 = vpop.f32.mrf.mxu0
      %v3533 = vadd.f32 %v3444, %v3532
      %v3534 = vpop.f32.mrf.mxu0
      %v3535 = vadd.f32 %v3446, %v3534
      %3536 = vmatmul.bf16.gmra.mxu0 %v3384
      %v3537 = vpop.f32.mrf.mxu0
      %v3538 = vadd.f32 %v3449, %v3537
      %v3539 = vpop.f32.mrf.mxu0
      %v3540 = vadd.f32 %v3451, %v3539
      %3541 = vmatmul.bf16.gmra.mxu0 %v3387
      %v3542 = vpop.f32.mrf.mxu0
      %v3543 = vadd.f32 %v3454, %v3542
      %v3544 = vpop.f32.mrf.mxu0
      %v3545 = vadd.f32 %v3456, %v3544
      %3546 = vmatmul.bf16.gmra.mxu0 %v3390
      %v3547 = vpop.f32.mrf.mxu0
      %v3548 = vadd.f32 %v3459, %v3547
      %v3549 = vpop.f32.mrf.mxu0
      %v3550 = vadd.f32 %v3461, %v3549
      %3551 = vmatmul.bf16.gmra.mxu0 %v3393
      %v3552 = vpop.f32.mrf.mxu0
      %v3553 = vadd.f32 %v3464, %v3552
      %v3554 = vpop.f32.mrf.mxu0
      %v3555 = vadd.f32 %v3466, %v3554
      %3556 = vmatmul.bf16.gmra.mxu0 %v3396
      %v3557 = vpop.f32.mrf.mxu0
      %v3558 = vadd.f32 %v3469, %v3557
      %v3559 = vpop.f32.mrf.mxu0
      %v3560 = vadd.f32 %v3471, %v3559
      %3561 = vmatmul.bf16.gmra.mxu0 %v3399
      %v3562 = vpop.f32.mrf.mxu0
      %v3563 = vadd.f32 %v3474, %v3562
      %v3564 = vpop.f32.mrf.mxu0
      %v3565 = vadd.f32 %v3476, %v3564
      %3566 = vmatmul.bf16.gmra.mxu0 %v3402
      %v3567 = vpop.f32.mrf.mxu0
      %v3568 = vadd.f32 %v3479, %v3567
      %v3569 = vpop.f32.mrf.mxu0
      %v3570 = vadd.f32 %v3481, %v3569
      %3571 = vmatmul.bf16.gmra.mxu0 %v3405
      %v3572 = vpop.f32.mrf.mxu0
      %v3573 = vadd.f32 %v3484, %v3572
      %v3574 = vpop.f32.mrf.mxu0
      %v3575 = vadd.f32 %v3486, %v3574
      %3576 = vmatmul.bf16.gmra.mxu0 %v3408
      %v3577 = vpop.f32.mrf.mxu0
      %v3578 = vadd.f32 %v3489, %v3577
      %v3579 = vpop.f32.mrf.mxu0
      %v3580 = vadd.f32 %v3491, %v3579
      %3581 = vmatmul.bf16.gmra.mxu0 %v3411
      %v3582 = vpop.f32.mrf.mxu0
      %v3583 = vadd.f32 %v3494, %v3582
      %v3584 = vpop.f32.mrf.mxu0
      %v3585 = vadd.f32 %v3496, %v3584
      %3586 = vmatmul.bf16.gmra.mxu0 %v3414
      %v3587 = vpop.f32.mrf.mxu0
      %v3588 = vadd.f32 %v3499, %v3587
      %v3589 = vpop.f32.mrf.mxu0
      %v3590 = vadd.f32 %v3501, %v3589
      %3591 = vmatmul.bf16.gmra.mxu0 %v3417
      %v3592 = vpop.f32.mrf.mxu0
      %v3593 = vadd.f32 %v3504, %v3592
      %v3594 = vpop.f32.mrf.mxu0
      %v3595 = vadd.f32 %v3506, %v3594
      %3596 = vdwg.mxu0
      %v3597 = vld [vmem:[#allocation2 + $0x9] sm:$0xff]
      %v3598 = vld [vmem:[#allocation2 + $0x11] sm:$0xff]
      %v3599 = vld [vmem:[#allocation2 + $0x19] sm:$0xff]
      %v3600 = vld [vmem:[#allocation2 + $0x21] sm:$0xff]
      %v3601 = vld [vmem:[#allocation2 + $0x29] sm:$0xff]
      %v3602 = vld [vmem:[#allocation2 + $0x31] sm:$0xff]
      %v3603 = vld [vmem:[#allocation2 + $0x39] sm:$0xff]
      %v3604 = vld [vmem:[#allocation2 + $0x41] sm:$0xff]
      %v3605 = vld [vmem:[#allocation2 + $0x49] sm:$0xff]
      %v3606 = vld [vmem:[#allocation2 + $0x51] sm:$0xff]
      %v3607 = vld [vmem:[#allocation2 + $0x59] sm:$0xff]
      %v3608 = vld [vmem:[#allocation2 + $0x61] sm:$0xff]
      %v3609 = vld [vmem:[#allocation2 + $0x69] sm:$0xff]
      %v3610 = vld [vmem:[#allocation2 + $0x71] sm:$0xff]
      %v3611 = vld [vmem:[#allocation2 + $0x79] sm:$0xff]
      %v3612 = vld [vmem:[#allocation2 + $0x81] sm:$0xff]
      %v3613 = vld [vmem:[#allocation2 + $0x89] sm:$0xff]
      %v3614 = vld [vmem:[#allocation2 + $0x91] sm:$0xff]
      %v3615 = vld [vmem:[#allocation2 + $0x99] sm:$0xff]
      %v3616 = vld [vmem:[#allocation2 + $0xa1] sm:$0xff]
      %v3617 = vld [vmem:[#allocation2 + $0xa9] sm:$0xff]
      %v3618 = vld [vmem:[#allocation2 + $0xb1] sm:$0xff]
      %v3619 = vld [vmem:[#allocation2 + $0xb9] sm:$0xff]
      %v3620 = vld [vmem:[#allocation2 + $0xc1] sm:$0xff]
      %v3621 = vld [vmem:[#allocation2 + $0xc9] sm:$0xff]
      %v3622 = vld [vmem:[#allocation2 + $0xd1] sm:$0xff]
      %v3623 = vld [vmem:[#allocation2 + $0xd9] sm:$0xff]
      %v3624 = vld [vmem:[#allocation2 + $0xe1] sm:$0xff]
      %v3625 = vld [vmem:[#allocation2 + $0xe9] sm:$0xff]
      %v3626 = vld [vmem:[#allocation2 + $0xf1] sm:$0xff]
      %v3627 = vld [vmem:[#allocation2 + $0xf9] sm:$0xff]
      %v3628 = vld [vmem:[#allocation2 + $0x101] sm:$0xff]
      %v3629 = vld [vmem:[#allocation2 + $0x109] sm:$0xff]
      %v3630 = vld [vmem:[#allocation2 + $0x111] sm:$0xff]
      %v3631 = vld [vmem:[#allocation2 + $0x119] sm:$0xff]
      %v3632 = vld [vmem:[#allocation2 + $0x121] sm:$0xff]
      %3665 = vrot.lane.b32.xlu0 %v3599, 64
      %v3666 = vpop.permute.xlu0 %3665
      %3667 = vrot.lane.b32.xlu0 %v3600, 64
      %v3668 = vpop.permute.xlu0 %3667
      %3669 = vrot.lane.b32.xlu0 %v3601, 64
      %v3670 = vpop.permute.xlu0 %3669
      %3671 = vrot.lane.b32.xlu0 %v3602, 64
      %v3672 = vpop.permute.xlu0 %3671
      %3673 = vrot.lane.b32.xlu0 %v3603, 64
      %v3674 = vpop.permute.xlu0 %3673
      %3675 = vrot.lane.b32.xlu0 %v3604, 64
      %v3676 = vpop.permute.xlu0 %3675
      %3677 = vrot.lane.b32.xlu0 %v3605, 64
      %v3678 = vpop.permute.xlu0 %3677
      %3679 = vrot.lane.b32.xlu0 %v3606, 64
      %v3680 = vpop.permute.xlu0 %3679
      %3681 = vrot.lane.b32.xlu0 %v3607, 64
      %v3682 = vpop.permute.xlu0 %3681
      %3683 = vrot.lane.b32.xlu0 %v3608, 64
      %v3684 = vpop.permute.xlu0 %3683
      %3685 = vrot.lane.b32.xlu0 %v3609, 64
      %v3686 = vpop.permute.xlu0 %3685
      %3687 = vrot.lane.b32.xlu0 %v3610, 64
      %v3688 = vpop.permute.xlu0 %3687
      %3689 = vrot.lane.b32.xlu0 %v3611, 64
      %v3690 = vpop.permute.xlu0 %3689
      %3691 = vrot.lane.b32.xlu0 %v3612, 64
      %v3692 = vpop.permute.xlu0 %3691
      %3693 = vrot.lane.b32.xlu0 %v3613, 64
      %v3694 = vpop.permute.xlu0 %3693
      %3695 = vrot.lane.b32.xlu0 %v3614, 64
      %v3696 = vpop.permute.xlu0 %3695
      %3697 = vrot.lane.b32.xlu0 %v3615, 64
      %v3698 = vpop.permute.xlu0 %3697
      %3699 = vrot.lane.b32.xlu0 %v3616, 64
      %v3700 = vpop.permute.xlu0 %3699
      %3701 = vrot.lane.b32.xlu0 %v3617, 64
      %v3702 = vpop.permute.xlu0 %3701
      %3703 = vrot.lane.b32.xlu0 %v3618, 64
      %v3704 = vpop.permute.xlu0 %3703
      %3705 = vrot.lane.b32.xlu0 %v3619, 64
      %v3706 = vpop.permute.xlu0 %3705
      %3707 = vrot.lane.b32.xlu0 %v3620, 64
      %v3708 = vpop.permute.xlu0 %3707
      %3709 = vrot.lane.b32.xlu0 %v3621, 64
      %v3710 = vpop.permute.xlu0 %3709
      %3711 = vrot.lane.b32.xlu0 %v3622, 64
      %v3712 = vpop.permute.xlu0 %3711
      %3713 = vrot.lane.b32.xlu0 %v3623, 64
      %v3714 = vpop.permute.xlu0 %3713
      %3715 = vrot.lane.b32.xlu0 %v3624, 64
      %v3716 = vpop.permute.xlu0 %3715
      %3717 = vrot.lane.b32.xlu0 %v3625, 64
      %v3718 = vpop.permute.xlu0 %3717
      %3719 = vrot.lane.b32.xlu0 %v3626, 64
      %v3720 = vpop.permute.xlu0 %3719
      %3721 = vrot.lane.b32.xlu0 %v3627, 64
      %v3722 = vpop.permute.xlu0 %3721
      %3723 = vrot.lane.b32.xlu0 %v3628, 64
      %v3724 = vpop.permute.xlu0 %3723
      %3725 = vrot.lane.b32.xlu0 %v3629, 64
      %v3726 = vpop.permute.xlu0 %3725
      %3727 = vrot.lane.b32.xlu0 %v3630, 64
      %v3728 = vpop.permute.xlu0 %3727
      %v3761 = vsel %vm629, %v3597, %v3666
      %v3762 = vsel %vm629, %v3598, %v3668
      %v3763 = vsel %vm629, %v3599, %v3670
      %v3764 = vsel %vm629, %v3600, %v3672
      %v3765 = vsel %vm629, %v3601, %v3674
      %v3766 = vsel %vm629, %v3602, %v3676
      %v3767 = vsel %vm629, %v3603, %v3678
      %v3768 = vsel %vm629, %v3604, %v3680
      %v3769 = vsel %vm629, %v3605, %v3682
      %v3770 = vsel %vm629, %v3606, %v3684
      %v3771 = vsel %vm629, %v3607, %v3686
      %v3772 = vsel %vm629, %v3608, %v3688
      %v3773 = vsel %vm629, %v3609, %v3690
      %v3774 = vsel %vm629, %v3610, %v3692
      %v3775 = vsel %vm629, %v3611, %v3694
      %v3776 = vsel %vm629, %v3612, %v3696
      %v3777 = vsel %vm629, %v3613, %v3698
      %v3778 = vsel %vm629, %v3614, %v3700
      %v3779 = vsel %vm629, %v3615, %v3702
      %v3780 = vsel %vm629, %v3616, %v3704
      %v3781 = vsel %vm629, %v3617, %v3706
      %v3782 = vsel %vm629, %v3618, %v3708
      %v3783 = vsel %vm629, %v3619, %v3710
      %v3784 = vsel %vm629, %v3620, %v3712
      %v3785 = vsel %vm629, %v3621, %v3714
      %v3786 = vsel %vm629, %v3622, %v3716
      %v3787 = vsel %vm629, %v3623, %v3718
      %v3788 = vsel %vm629, %v3624, %v3720
      %v3789 = vsel %vm629, %v3625, %v3722
      %v3790 = vsel %vm629, %v3626, %v3724
      %v3791 = vsel %vm629, %v3627, %v3726
      %v3792 = vsel %vm629, %v3628, %v3728
      %v3793 = vsel %vm2336, 1, 0
      %v3794 = vsel %vm2337, 1, 0
      %v3795 = vsel %vm2338, 1, 0
      %v3796 = vsel %vm2339, 1, 0
      %v3797 = vsel %vm2340, 1, 0
      %v3798 = vsel %vm2341, 1, 0
      %v3799 = vsel %vm2342, 1, 0
      %v3800 = vsel %vm2343, 1, 0
      %v3801 = vsel %vm2344, 1, 0
      %v3802 = vsel %vm2345, 1, 0
      %v3803 = vsel %vm2346, 1, 0
      %v3804 = vsel %vm2347, 1, 0
      %v3805 = vsel %vm2348, 1, 0
      %v3806 = vsel %vm2349, 1, 0
      %v3807 = vsel %vm2350, 1, 0
      %v3808 = vsel %vm2351, 1, 0
      %v3809 = vsel %vm2352, 1, 0
      %v3810 = vsel %vm2353, 1, 0
      %v3811 = vsel %vm2354, 1, 0
      %v3812 = vsel %vm2355, 1, 0
      %v3813 = vsel %vm2356, 1, 0
      %v3814 = vsel %vm2357, 1, 0
      %v3815 = vsel %vm2358, 1, 0
      %v3816 = vsel %vm2359, 1, 0
      %v3817 = vsel %vm2360, 1, 0
      %v3818 = vsel %vm2361, 1, 0
      %v3819 = vsel %vm2362, 1, 0
      %v3820 = vsel %vm2363, 1, 0
      %v3821 = vsel %vm2364, 1, 0
      %v3822 = vsel %vm2365, 1, 0
      %v3823 = vsel %vm2366, 1, 0
      %v3824 = vsel %vm2367, 1, 0
      %vm3825 = vcmp.eq.s32.totalorder %v3793, 1
      %vm3826 = vcmp.eq.s32.totalorder %v3794, 1
      %vm3827 = vcmp.eq.s32.totalorder %v3795, 1
      %vm3828 = vcmp.eq.s32.totalorder %v3796, 1
      %vm3829 = vcmp.eq.s32.totalorder %v3797, 1
      %vm3830 = vcmp.eq.s32.totalorder %v3798, 1
      %vm3831 = vcmp.eq.s32.totalorder %v3799, 1
      %vm3832 = vcmp.eq.s32.totalorder %v3800, 1
      %vm3833 = vcmp.eq.s32.totalorder %v3801, 1
      %vm3834 = vcmp.eq.s32.totalorder %v3802, 1
      %vm3835 = vcmp.eq.s32.totalorder %v3803, 1
      %vm3836 = vcmp.eq.s32.totalorder %v3804, 1
      %vm3837 = vcmp.eq.s32.totalorder %v3805, 1
      %vm3838 = vcmp.eq.s32.totalorder %v3806, 1
      %vm3839 = vcmp.eq.s32.totalorder %v3807, 1
      %vm3840 = vcmp.eq.s32.totalorder %v3808, 1
      %vm3841 = vcmp.eq.s32.totalorder %v3809, 1
      %vm3842 = vcmp.eq.s32.totalorder %v3810, 1
      %vm3843 = vcmp.eq.s32.totalorder %v3811, 1
      %vm3844 = vcmp.eq.s32.totalorder %v3812, 1
      %vm3845 = vcmp.eq.s32.totalorder %v3813, 1
      %vm3846 = vcmp.eq.s32.totalorder %v3814, 1
      %vm3847 = vcmp.eq.s32.totalorder %v3815, 1
      %vm3848 = vcmp.eq.s32.totalorder %v3816, 1
      %vm3849 = vcmp.eq.s32.totalorder %v3817, 1
      %vm3850 = vcmp.eq.s32.totalorder %v3818, 1
      %vm3851 = vcmp.eq.s32.totalorder %v3819, 1
      %vm3852 = vcmp.eq.s32.totalorder %v3820, 1
      %vm3853 = vcmp.eq.s32.totalorder %v3821, 1
      %vm3854 = vcmp.eq.s32.totalorder %v3822, 1
      %vm3855 = vcmp.eq.s32.totalorder %v3823, 1
      %vm3856 = vcmp.eq.s32.totalorder %v3824, 1
      %v3857 = vsel %vm3825, %v3761, 0.0
      %v3858 = vsel %vm3825, %v3601, 0.0
      %v3859 = vsel %vm3826, %v3762, 0.0
      %v3860 = vsel %vm3826, %v3602, 0.0
      %v3861 = vsel %vm3827, %v3763, 0.0
      %v3862 = vsel %vm3827, %v3603, 0.0
      %v3863 = vsel %vm3828, %v3764, 0.0
      %v3864 = vsel %vm3828, %v3604, 0.0
      %v3865 = vsel %vm3829, %v3765, 0.0
      %v3866 = vsel %vm3829, %v3605, 0.0
      %v3867 = vsel %vm3830, %v3766, 0.0
      %v3868 = vsel %vm3830, %v3606, 0.0
      %v3869 = vsel %vm3831, %v3767, 0.0
      %v3870 = vsel %vm3831, %v3607, 0.0
      %v3871 = vsel %vm3832, %v3768, 0.0
      %v3872 = vsel %vm3832, %v3608, 0.0
      %v3873 = vsel %vm3833, %v3769, 0.0
      %v3874 = vsel %vm3833, %v3609, 0.0
      %v3875 = vsel %vm3834, %v3770, 0.0
      %v3876 = vsel %vm3834, %v3610, 0.0
      %v3877 = vsel %vm3835, %v3771, 0.0
      %v3878 = vsel %vm3835, %v3611, 0.0
      %v3879 = vsel %vm3836, %v3772, 0.0
      %v3880 = vsel %vm3836, %v3612, 0.0
      %v3881 = vsel %vm3837, %v3773, 0.0
      %v3882 = vsel %vm3837, %v3613, 0.0
      %v3883 = vsel %vm3838, %v3774, 0.0
      %v3884 = vsel %vm3838, %v3614, 0.0
      %v3885 = vsel %vm3839, %v3775, 0.0
      %v3886 = vsel %vm3839, %v3615, 0.0
      %v3887 = vsel %vm3840, %v3776, 0.0
      %v3888 = vsel %vm3840, %v3616, 0.0
      %v3889 = vsel %vm3841, %v3777, 0.0
      %v3890 = vsel %vm3841, %v3617, 0.0
      %v3891 = vsel %vm3842, %v3778, 0.0
      %v3892 = vsel %vm3842, %v3618, 0.0
      %v3893 = vsel %vm3843, %v3779, 0.0
      %v3894 = vsel %vm3843, %v3619, 0.0
      %v3895 = vsel %vm3844, %v3780, 0.0
      %v3896 = vsel %vm3844, %v3620, 0.0
      %v3897 = vsel %vm3845, %v3781, 0.0
      %v3898 = vsel %vm3845, %v3621, 0.0
      %v3899 = vsel %vm3846, %v3782, 0.0
      %v3900 = vsel %vm3846, %v3622, 0.0
      %v3901 = vsel %vm3847, %v3783, 0.0
      %v3902 = vsel %vm3847, %v3623, 0.0
      %v3903 = vsel %vm3848, %v3784, 0.0
      %v3904 = vsel %vm3848, %v3624, 0.0
      %v3905 = vsel %vm3849, %v3785, 0.0
      %v3906 = vsel %vm3849, %v3625, 0.0
      %v3907 = vsel %vm3850, %v3786, 0.0
      %v3908 = vsel %vm3850, %v3626, 0.0
      %v3909 = vsel %vm3851, %v3787, 0.0
      %v3910 = vsel %vm3851, %v3627, 0.0
      %v3911 = vsel %vm3852, %v3788, 0.0
      %v3912 = vsel %vm3852, %v3628, 0.0
      %v3913 = vsel %vm3853, %v3789, 0.0
      %v3914 = vsel %vm3853, %v3629, 0.0
      %v3915 = vsel %vm3854, %v3790, 0.0
      %v3916 = vsel %vm3854, %v3630, 0.0
      %v3917 = vsel %vm3855, %v3791, 0.0
      %v3918 = vsel %vm3855, %v3631, 0.0
      %v3919 = vsel %vm3856, %v3792, 0.0
      %v3920 = vsel %vm3856, %v3632, 0.0
      %v3921 = vpack.c.bf16 %v3859, %v3857
      %v3922 = vpack.c.bf16 %v3860, %v3858
      %v3923 = vpack.c.bf16 %v3863, %v3861
      %v3924 = vpack.c.bf16 %v3864, %v3862
      %v3925 = vpack.c.bf16 %v3867, %v3865
      %v3926 = vpack.c.bf16 %v3868, %v3866
      %v3927 = vpack.c.bf16 %v3871, %v3869
      %v3928 = vpack.c.bf16 %v3872, %v3870
      %v3929 = vpack.c.bf16 %v3875, %v3873
      %v3930 = vpack.c.bf16 %v3876, %v3874
      %v3931 = vpack.c.bf16 %v3879, %v3877
      %v3932 = vpack.c.bf16 %v3880, %v3878
      %v3933 = vpack.c.bf16 %v3883, %v3881
      %v3934 = vpack.c.bf16 %v3884, %v3882
      %v3935 = vpack.c.bf16 %v3887, %v3885
      %v3936 = vpack.c.bf16 %v3888, %v3886
      %v3937 = vpack.c.bf16 %v3891, %v3889
      %v3938 = vpack.c.bf16 %v3892, %v3890
      %v3939 = vpack.c.bf16 %v3895, %v3893
      %v3940 = vpack.c.bf16 %v3896, %v3894
      %v3941 = vpack.c.bf16 %v3899, %v3897
      %v3942 = vpack.c.bf16 %v3900, %v3898
      %v3943 = vpack.c.bf16 %v3903, %v3901
      %v3944 = vpack.c.bf16 %v3904, %v3902
      %v3945 = vpack.c.bf16 %v3907, %v3905
      %v3946 = vpack.c.bf16 %v3908, %v3906
      %v3947 = vpack.c.bf16 %v3911, %v3909
      %v3948 = vpack.c.bf16 %v3912, %v3910
      %v3949 = vpack.c.bf16 %v3915, %v3913
      %v3950 = vpack.c.bf16 %v3916, %v3914
      %v3951 = vpack.c.bf16 %v3919, %v3917
      %v3952 = vpack.c.bf16 %v3920, %v3918
      %s3953 = scalar_lea.vmem %s2, 192
      %v3954 = vld [vmem:[%s3953] sm:$0xf]
      %v3955 = vld [vmem:[%s3953 + $0x4] sm:$0xf]
      %v3956 = vld [vmem:[%s3953 + $0x8] sm:$0xf]
      %v3957 = vld [vmem:[%s3953 + $0xc] sm:$0xf]
      %v3958 = vld [vmem:[%s3953 + $0x10] sm:$0xf]
      %v3959 = vld [vmem:[%s3953 + $0x14] sm:$0xf]
      %v3960 = vld [vmem:[%s3953 + $0x18] sm:$0xf]
      %v3961 = vld [vmem:[%s3953 + $0x1c] sm:$0xf]
      %v3962 = vld [vmem:[%s3953 + $0x20] sm:$0xf]
      %v3963 = vld [vmem:[%s3953 + $0x24] sm:$0xf]
      %v3964 = vld [vmem:[%s3953 + $0x28] sm:$0xf]
      %v3965 = vld [vmem:[%s3953 + $0x2c] sm:$0xf]
      %v3966 = vld [vmem:[%s3953 + $0x30] sm:$0xf]
      %v3967 = vld [vmem:[%s3953 + $0x34] sm:$0xf]
      %v3968 = vld [vmem:[%s3953 + $0x38] sm:$0xf]
      %v3969 = vld [vmem:[%s3953 + $0x3c] sm:$0xf]
      %v3970 = vld [vmem:[%s3953 + $0x40] sm:$0xf]
      %v3971 = vld [vmem:[%s3953 + $0x44] sm:$0xf]
      %v3972 = vld [vmem:[%s3953 + $0x48] sm:$0xf]
      %v3973 = vld [vmem:[%s3953 + $0x4c] sm:$0xf]
      %v3974 = vld [vmem:[%s3953 + $0x50] sm:$0xf]
      %v3975 = vld [vmem:[%s3953 + $0x54] sm:$0xf]
      %v3976 = vld [vmem:[%s3953 + $0x58] sm:$0xf]
      %v3977 = vld [vmem:[%s3953 + $0x5c] sm:$0xf]
      %v4002 = vunpack.c.l.b16 %v3954
      %v4003 = vunpack.c.l.b16 %v3955
      %v4004 = vunpack.c.l.b16 %v3956
      %v4005 = vunpack.c.l.b16 %v3957
      %v4006 = vunpack.c.l.b16 %v3958
      %v4007 = vunpack.c.l.b16 %v3959
      %v4008 = vunpack.c.l.b16 %v3960
      %v4009 = vunpack.c.l.b16 %v3961
      %v4010 = vunpack.c.l.b16 %v3962
      %v4011 = vunpack.c.l.b16 %v3963
      %v4012 = vunpack.c.l.b16 %v3964
      %v4013 = vunpack.c.l.b16 %v3965
      %v4014 = vunpack.c.l.b16 %v3966
      %v4015 = vunpack.c.l.b16 %v3967
      %v4016 = vunpack.c.l.b16 %v3968
      %v4017 = vunpack.c.l.b16 %v3969
      %v4018 = vunpack.c.l.b16 %v3970
      %v4019 = vunpack.c.l.b16 %v3971
      %v4020 = vunpack.c.l.b16 %v3972
      %v4021 = vunpack.c.l.b16 %v3973
      %v4022 = vunpack.c.l.b16 %v3974
      %v4023 = vunpack.c.l.b16 %v3975
      %v4024 = vunpack.c.l.b16 %v3976
      %v4025 = vunpack.c.l.b16 %v3977
      %v4026 = vpack.c.b16 %v4003, %v4002
      %v4027 = vpack.c.b16 %v4005, %v4004
      %v4028 = vpack.c.b16 %v4007, %v4006
      %v4029 = vpack.c.b16 %v4009, %v4008
      %v4030 = vpack.c.b16 %v4011, %v4010
      %v4031 = vpack.c.b16 %v4013, %v4012
      %v4032 = vpack.c.b16 %v4015, %v4014
      %v4033 = vpack.c.b16 %v4017, %v4016
      %v4034 = vpack.c.b16 %v4019, %v4018
      %v4035 = vpack.c.b16 %v4021, %v4020
      %v4036 = vpack.c.b16 %v4023, %v4022
      %v4037 = vpack.c.b16 %v4025, %v4024
      %v4051 = vsel %vm629, %v3922, 0
      %v4054 = vsel %vm629, %v3924, 0
      %v4057 = vsel %vm629, %v3926, 0
      %v4060 = vsel %vm629, %v3928, 0
      %v4063 = vsel %vm629, %v3930, 0
      %v4066 = vsel %vm629, %v3932, 0
      %v4069 = vsel %vm629, %v3934, 0
      %v4072 = vsel %vm629, %v3936, 0
      %v4075 = vsel %vm629, %v3938, 0
      %v4078 = vsel %vm629, %v3940, 0
      %v4081 = vsel %vm629, %v3942, 0
      %v4084 = vsel %vm629, %v3944, 0
      %v4087 = vsel %vm629, %v3946, 0
      %v4090 = vsel %vm629, %v3948, 0
      %v4093 = vsel %vm629, %v3950, 0
      %v4096 = vsel %vm629, %v3952, 0
      %4098 = vmatpush.bf16.msra.mxu0 %v4033
      %4099 = vmatpush.bf16.msra.mxu0 %v4032
      %4100 = vmatpush.bf16.msra.mxu0 %v4031
      %4101 = vmatpush.bf16.msra.mxu0 %v4030
      %4102 = vmatpush.bf16.msra.mxu0 %v4029
      %4103 = vmatpush.bf16.msra.mxu0 %v4028
      %4104 = vmatpush.bf16.msra.mxu0 %v4027
      %4105 = vmatpush.bf16.msra.mxu0 %v4026
      %4106 = vmatmul.bf16.gmra.mxu0 %v3921
      %v4107 = vpop.f32.mrf.mxu0
      %v4108 = vadd.f32 0.0, %v4107
      %v4109 = vpop.f32.mrf.mxu0
      %v4110 = vadd.f32 0.0, %v4109
      %4111 = vmatmul.bf16.gmra.mxu0 %v3923
      %v4112 = vpop.f32.mrf.mxu0
      %v4113 = vadd.f32 0.0, %v4112
      %v4114 = vpop.f32.mrf.mxu0
      %v4115 = vadd.f32 0.0, %v4114
      %4116 = vmatmul.bf16.gmra.mxu0 %v3925
      %v4117 = vpop.f32.mrf.mxu0
      %v4118 = vadd.f32 0.0, %v4117
      %v4119 = vpop.f32.mrf.mxu0
      %v4120 = vadd.f32 0.0, %v4119
      %4121 = vmatmul.bf16.gmra.mxu0 %v3927
      %v4122 = vpop.f32.mrf.mxu0
      %v4123 = vadd.f32 0.0, %v4122
      %v4124 = vpop.f32.mrf.mxu0
      %v4125 = vadd.f32 0.0, %v4124
      %4126 = vmatmul.bf16.gmra.mxu0 %v3929
      %v4127 = vpop.f32.mrf.mxu0
      %v4128 = vadd.f32 0.0, %v4127
      %v4129 = vpop.f32.mrf.mxu0
      %v4130 = vadd.f32 0.0, %v4129
      %4131 = vmatmul.bf16.gmra.mxu0 %v3931
      %v4132 = vpop.f32.mrf.mxu0
      %v4133 = vadd.f32 0.0, %v4132
      %v4134 = vpop.f32.mrf.mxu0
      %v4135 = vadd.f32 0.0, %v4134
      %4136 = vmatmul.bf16.gmra.mxu0 %v3933
      %v4137 = vpop.f32.mrf.mxu0
      %v4138 = vadd.f32 0.0, %v4137
      %v4139 = vpop.f32.mrf.mxu0
      %v4140 = vadd.f32 0.0, %v4139
      %4141 = vmatmul.bf16.gmra.mxu0 %v3935
      %v4142 = vpop.f32.mrf.mxu0
      %v4143 = vadd.f32 0.0, %v4142
      %v4144 = vpop.f32.mrf.mxu0
      %v4145 = vadd.f32 0.0, %v4144
      %4146 = vmatmul.bf16.gmra.mxu0 %v3937
      %v4147 = vpop.f32.mrf.mxu0
      %v4148 = vadd.f32 0.0, %v4147
      %v4149 = vpop.f32.mrf.mxu0
      %v4150 = vadd.f32 0.0, %v4149
      %4151 = vmatmul.bf16.gmra.mxu0 %v3939
      %v4152 = vpop.f32.mrf.mxu0
      %v4153 = vadd.f32 0.0, %v4152
      %v4154 = vpop.f32.mrf.mxu0
      %v4155 = vadd.f32 0.0, %v4154
      %4156 = vmatmul.bf16.gmra.mxu0 %v3941
      %v4157 = vpop.f32.mrf.mxu0
      %v4158 = vadd.f32 0.0, %v4157
      %v4159 = vpop.f32.mrf.mxu0
      %v4160 = vadd.f32 0.0, %v4159
      %4161 = vmatmul.bf16.gmra.mxu0 %v3943
      %v4162 = vpop.f32.mrf.mxu0
      %v4163 = vadd.f32 0.0, %v4162
      %v4164 = vpop.f32.mrf.mxu0
      %v4165 = vadd.f32 0.0, %v4164
      %4166 = vmatmul.bf16.gmra.mxu0 %v3945
      %v4167 = vpop.f32.mrf.mxu0
      %v4168 = vadd.f32 0.0, %v4167
      %v4169 = vpop.f32.mrf.mxu0
      %v4170 = vadd.f32 0.0, %v4169
      %4171 = vmatmul.bf16.gmra.mxu0 %v3947
      %v4172 = vpop.f32.mrf.mxu0
      %v4173 = vadd.f32 0.0, %v4172
      %v4174 = vpop.f32.mrf.mxu0
      %v4175 = vadd.f32 0.0, %v4174
      %4176 = vmatmul.bf16.gmra.mxu0 %v3949
      %v4177 = vpop.f32.mrf.mxu0
      %v4178 = vadd.f32 0.0, %v4177
      %v4179 = vpop.f32.mrf.mxu0
      %v4180 = vadd.f32 0.0, %v4179
      %4181 = vmatmul.bf16.gmra.mxu0 %v3951
      %v4182 = vpop.f32.mrf.mxu0
      %v4183 = vadd.f32 0.0, %v4182
      %v4184 = vpop.f32.mrf.mxu0
      %v4185 = vadd.f32 0.0, %v4184
      %4186 = vdwg.mxu0
      %4187 = vmatpush.bf16.msra.mxu0 0
      %4188 = vmatpush.bf16.msra.mxu0 0
      %4189 = vmatpush.bf16.msra.mxu0 0
      %4190 = vmatpush.bf16.msra.mxu0 0
      %4191 = vmatpush.bf16.msra.mxu0 %v4037
      %4192 = vmatpush.bf16.msra.mxu0 %v4036
      %4193 = vmatpush.bf16.msra.mxu0 %v4035
      %4194 = vmatpush.bf16.msra.mxu0 %v4034
      %4195 = vmatmul.bf16.gmra.mxu0 %v4051
      %v4196 = vpop.f32.mrf.mxu0
      %v4197 = vadd.f32 %v4108, %v4196
      %v4198 = vpop.f32.mrf.mxu0
      %v4199 = vadd.f32 %v4110, %v4198
      %4200 = vmatmul.bf16.gmra.mxu0 %v4054
      %v4201 = vpop.f32.mrf.mxu0
      %v4202 = vadd.f32 %v4113, %v4201
      %v4203 = vpop.f32.mrf.mxu0
      %v4204 = vadd.f32 %v4115, %v4203
      %4205 = vmatmul.bf16.gmra.mxu0 %v4057
      %v4206 = vpop.f32.mrf.mxu0
      %v4207 = vadd.f32 %v4118, %v4206
      %v4208 = vpop.f32.mrf.mxu0
      %v4209 = vadd.f32 %v4120, %v4208
      %4210 = vmatmul.bf16.gmra.mxu0 %v4060
      %v4211 = vpop.f32.mrf.mxu0
      %v4212 = vadd.f32 %v4123, %v4211
      %v4213 = vpop.f32.mrf.mxu0
      %v4214 = vadd.f32 %v4125, %v4213
      %4215 = vmatmul.bf16.gmra.mxu0 %v4063
      %v4216 = vpop.f32.mrf.mxu0
      %v4217 = vadd.f32 %v4128, %v4216
      %v4218 = vpop.f32.mrf.mxu0
      %v4219 = vadd.f32 %v4130, %v4218
      %4220 = vmatmul.bf16.gmra.mxu0 %v4066
      %v4221 = vpop.f32.mrf.mxu0
      %v4222 = vadd.f32 %v4133, %v4221
      %v4223 = vpop.f32.mrf.mxu0
      %v4224 = vadd.f32 %v4135, %v4223
      %4225 = vmatmul.bf16.gmra.mxu0 %v4069
      %v4226 = vpop.f32.mrf.mxu0
      %v4227 = vadd.f32 %v4138, %v4226
      %v4228 = vpop.f32.mrf.mxu0
      %v4229 = vadd.f32 %v4140, %v4228
      %4230 = vmatmul.bf16.gmra.mxu0 %v4072
      %v4231 = vpop.f32.mrf.mxu0
      %v4232 = vadd.f32 %v4143, %v4231
      %v4233 = vpop.f32.mrf.mxu0
      %v4234 = vadd.f32 %v4145, %v4233
      %4235 = vmatmul.bf16.gmra.mxu0 %v4075
      %v4236 = vpop.f32.mrf.mxu0
      %v4237 = vadd.f32 %v4148, %v4236
      %v4238 = vpop.f32.mrf.mxu0
      %v4239 = vadd.f32 %v4150, %v4238
      %4240 = vmatmul.bf16.gmra.mxu0 %v4078
      %v4241 = vpop.f32.mrf.mxu0
      %v4242 = vadd.f32 %v4153, %v4241
      %v4243 = vpop.f32.mrf.mxu0
      %v4244 = vadd.f32 %v4155, %v4243
      %4245 = vmatmul.bf16.gmra.mxu0 %v4081
      %v4246 = vpop.f32.mrf.mxu0
      %v4247 = vadd.f32 %v4158, %v4246
      %v4248 = vpop.f32.mrf.mxu0
      %v4249 = vadd.f32 %v4160, %v4248
      %4250 = vmatmul.bf16.gmra.mxu0 %v4084
      %v4251 = vpop.f32.mrf.mxu0
      %v4252 = vadd.f32 %v4163, %v4251
      %v4253 = vpop.f32.mrf.mxu0
      %v4254 = vadd.f32 %v4165, %v4253
      %4255 = vmatmul.bf16.gmra.mxu0 %v4087
      %v4256 = vpop.f32.mrf.mxu0
      %v4257 = vadd.f32 %v4168, %v4256
      %v4258 = vpop.f32.mrf.mxu0
      %v4259 = vadd.f32 %v4170, %v4258
      %4260 = vmatmul.bf16.gmra.mxu0 %v4090
      %v4261 = vpop.f32.mrf.mxu0
      %v4262 = vadd.f32 %v4173, %v4261
      %v4263 = vpop.f32.mrf.mxu0
      %v4264 = vadd.f32 %v4175, %v4263
      %4265 = vmatmul.bf16.gmra.mxu0 %v4093
      %v4266 = vpop.f32.mrf.mxu0
      %v4267 = vadd.f32 %v4178, %v4266
      %v4268 = vpop.f32.mrf.mxu0
      %v4269 = vadd.f32 %v4180, %v4268
      %4270 = vmatmul.bf16.gmra.mxu0 %v4096
      %v4271 = vpop.f32.mrf.mxu0
      %v4272 = vadd.f32 %v4183, %v4271
      %v4273 = vpop.f32.mrf.mxu0
      %v4274 = vadd.f32 %v4185, %v4273
      %4275 = vdwg.mxu0
      %v4276 = vadd.f32 %v3518, %v4197
      %v4277 = vadd.f32 %v3520, %v4199
      %v4278 = vadd.f32 %v3523, %v4202
      %v4279 = vadd.f32 %v3525, %v4204
      %v4280 = vadd.f32 %v3528, %v4207
      %v4281 = vadd.f32 %v3530, %v4209
      %v4282 = vadd.f32 %v3533, %v4212
      %v4283 = vadd.f32 %v3535, %v4214
      %v4284 = vadd.f32 %v3538, %v4217
      %v4285 = vadd.f32 %v3540, %v4219
      %v4286 = vadd.f32 %v3543, %v4222
      %v4287 = vadd.f32 %v3545, %v4224
      %v4288 = vadd.f32 %v3548, %v4227
      %v4289 = vadd.f32 %v3550, %v4229
      %v4290 = vadd.f32 %v3553, %v4232
      %v4291 = vadd.f32 %v3555, %v4234
      %v4292 = vadd.f32 %v3558, %v4237
      %v4293 = vadd.f32 %v3560, %v4239
      %v4294 = vadd.f32 %v3563, %v4242
      %v4295 = vadd.f32 %v3565, %v4244
      %v4296 = vadd.f32 %v3568, %v4247
      %v4297 = vadd.f32 %v3570, %v4249
      %v4298 = vadd.f32 %v3573, %v4252
      %v4299 = vadd.f32 %v3575, %v4254
      %v4300 = vadd.f32 %v3578, %v4257
      %v4301 = vadd.f32 %v3580, %v4259
      %v4302 = vadd.f32 %v3583, %v4262
      %v4303 = vadd.f32 %v3585, %v4264
      %v4304 = vadd.f32 %v3588, %v4267
      %v4305 = vadd.f32 %v3590, %v4269
      %v4306 = vadd.f32 %v3593, %v4272
      %v4307 = vadd.f32 %v3595, %v4274
      %4308 = vst.msk [vmem:[#allocation3] sm:$0xff] %vm629, %v4276
      %4309 = vst.msk [vmem:[#allocation3 + $0x8] sm:$0xff] %vm629, %v4277
      %4310 = vst.msk [vmem:[#allocation3 + $0x10] sm:$0xff] %vm629, %v4278
      %4311 = vst.msk [vmem:[#allocation3 + $0x18] sm:$0xff] %vm629, %v4279
      %4312 = vst.msk [vmem:[#allocation3 + $0x20] sm:$0xff] %vm629, %v4280
      %4313 = vst.msk [vmem:[#allocation3 + $0x28] sm:$0xff] %vm629, %v4281
      %4314 = vst.msk [vmem:[#allocation3 + $0x30] sm:$0xff] %vm629, %v4282
      %4315 = vst.msk [vmem:[#allocation3 + $0x38] sm:$0xff] %vm629, %v4283
      %4316 = vst.msk [vmem:[#allocation3 + $0x40] sm:$0xff] %vm629, %v4284
      %4317 = vst.msk [vmem:[#allocation3 + $0x48] sm:$0xff] %vm629, %v4285
      %4318 = vst.msk [vmem:[#allocation3 + $0x50] sm:$0xff] %vm629, %v4286
      %4319 = vst.msk [vmem:[#allocation3 + $0x58] sm:$0xff] %vm629, %v4287
      %4320 = vst.msk [vmem:[#allocation3 + $0x60] sm:$0xff] %vm629, %v4288
      %4321 = vst.msk [vmem:[#allocation3 + $0x68] sm:$0xff] %vm629, %v4289
      %4322 = vst.msk [vmem:[#allocation3 + $0x70] sm:$0xff] %vm629, %v4290
      %4323 = vst.msk [vmem:[#allocation3 + $0x78] sm:$0xff] %vm629, %v4291
      %4324 = vst.msk [vmem:[#allocation3 + $0x80] sm:$0xff] %vm629, %v4292
      %4325 = vst.msk [vmem:[#allocation3 + $0x88] sm:$0xff] %vm629, %v4293
      %4326 = vst.msk [vmem:[#allocation3 + $0x90] sm:$0xff] %vm629, %v4294
      %4327 = vst.msk [vmem:[#allocation3 + $0x98] sm:$0xff] %vm629, %v4295
      %4328 = vst.msk [vmem:[#allocation3 + $0xa0] sm:$0xff] %vm629, %v4296
      %4329 = vst.msk [vmem:[#allocation3 + $0xa8] sm:$0xff] %vm629, %v4297
      %4330 = vst.msk [vmem:[#allocation3 + $0xb0] sm:$0xff] %vm629, %v4298
      %4331 = vst.msk [vmem:[#allocation3 + $0xb8] sm:$0xff] %vm629, %v4299
      %4332 = vst.msk [vmem:[#allocation3 + $0xc0] sm:$0xff] %vm629, %v4300
      %4333 = vst.msk [vmem:[#allocation3 + $0xc8] sm:$0xff] %vm629, %v4301
      %4334 = vst.msk [vmem:[#allocation3 + $0xd0] sm:$0xff] %vm629, %v4302
      %4335 = vst.msk [vmem:[#allocation3 + $0xd8] sm:$0xff] %vm629, %v4303
      %4336 = vst.msk [vmem:[#allocation3 + $0xe0] sm:$0xff] %vm629, %v4304
      %4337 = vst.msk [vmem:[#allocation3 + $0xe8] sm:$0xff] %vm629, %v4305
      %4338 = vst.msk [vmem:[#allocation3 + $0xf0] sm:$0xff] %vm629, %v4306
      %4339 = vst.msk [vmem:[#allocation3 + $0xf8] sm:$0xff] %vm629, %v4307
      %v4340 = vld [vmem:[#allocation3] ss:$2 sm:$0xff]
      %v4341 = vld [vmem:[%s1560] ss:$2 sm:$0xff]
      %v4342 = vld [vmem:[%s1562] ss:$2 sm:$0xff]
      %v4343 = vld [vmem:[%s1564] ss:$2 sm:$0xff]
      %v4344 = vld [vmem:[%s1566] ss:$2 sm:$0xff]
      %v4345 = vld [vmem:[%s1568] ss:$2 sm:$0xff]
      %v4346 = vld [vmem:[%s1570] ss:$2 sm:$0xff]
      %v4347 = vld [vmem:[%s1572] ss:$2 sm:$0xff]
      %v4348 = vld [vmem:[%s1574] ss:$2 sm:$0xff]
      %v4349 = vld [vmem:[%s1576] ss:$2 sm:$0xff]
      %v4350 = vld [vmem:[%s1578] ss:$2 sm:$0xff]
      %v4351 = vld [vmem:[%s1580] ss:$2 sm:$0xff]
      %v4352 = vld [vmem:[%s1582] ss:$2 sm:$0xff]
      %v4353 = vld [vmem:[%s1584] ss:$2 sm:$0xff]
      %v4354 = vld [vmem:[%s1586] ss:$2 sm:$0xff]
      %v4355 = vld [vmem:[%s1588] ss:$2 sm:$0xff]
      %v4356 = vld [vmem:[%s1686] ss:$2 sm:$0xff]
      %v4357 = vld [vmem:[%s1688] ss:$2 sm:$0xff]
      %v4358 = vld [vmem:[%s1690] ss:$2 sm:$0xff]
      %v4359 = vld [vmem:[%s1692] ss:$2 sm:$0xff]
      %v4360 = vld [vmem:[%s1694] ss:$2 sm:$0xff]
      %v4361 = vld [vmem:[%s1696] ss:$2 sm:$0xff]
      %v4362 = vld [vmem:[%s1698] ss:$2 sm:$0xff]
      %v4363 = vld [vmem:[%s1700] ss:$2 sm:$0xff]
      %v4364 = vld [vmem:[%s1702] ss:$2 sm:$0xff]
      %v4365 = vld [vmem:[%s1704] ss:$2 sm:$0xff]
      %v4366 = vld [vmem:[%s1706] ss:$2 sm:$0xff]
      %v4367 = vld [vmem:[%s1708] ss:$2 sm:$0xff]
      %v4368 = vld [vmem:[%s1710] ss:$2 sm:$0xff]
      %v4369 = vld [vmem:[%s1712] ss:$2 sm:$0xff]
      %v4370 = vld [vmem:[%s1714] ss:$2 sm:$0xff]
      %v4371 = vld [vmem:[%s1716] ss:$2 sm:$0xff]
      %v4372 = vmax.f32 %v4340, %v4356
      %v4373 = vmax.f32 %v4341, %v4357
      %v4374 = vmax.f32 %v4342, %v4358
      %v4375 = vmax.f32 %v4343, %v4359
      %v4376 = vmax.f32 %v4344, %v4360
      %v4377 = vmax.f32 %v4345, %v4361
      %v4378 = vmax.f32 %v4346, %v4362
      %v4379 = vmax.f32 %v4347, %v4363
      %v4380 = vmax.f32 %v4348, %v4364
      %v4381 = vmax.f32 %v4349, %v4365
      %v4382 = vmax.f32 %v4350, %v4366
      %v4383 = vmax.f32 %v4351, %v4367
      %v4384 = vmax.f32 %v4352, %v4368
      %v4385 = vmax.f32 %v4353, %v4369
      %v4386 = vmax.f32 %v4354, %v4370
      %v4387 = vmax.f32 %v4355, %v4371
      %4388 = vst.msk [vmem:[#allocation4] sm:$0xff] %vm629, %v4372
      %4389 = vst.msk [vmem:[#allocation4 + $0x8] sm:$0xff] %vm629, %v4373
      %4390 = vst.msk [vmem:[#allocation4 + $0x10] sm:$0xff] %vm629, %v4374
      %4391 = vst.msk [vmem:[#allocation4 + $0x18] sm:$0xff] %vm629, %v4375
      %4392 = vst.msk [vmem:[#allocation4 + $0x20] sm:$0xff] %vm629, %v4376
      %4393 = vst.msk [vmem:[#allocation4 + $0x28] sm:$0xff] %vm629, %v4377
      %4394 = vst.msk [vmem:[#allocation4 + $0x30] sm:$0xff] %vm629, %v4378
      %4395 = vst.msk [vmem:[#allocation4 + $0x38] sm:$0xff] %vm629, %v4379
      %4396 = vst.msk [vmem:[#allocation4 + $0x40] sm:$0xff] %vm629, %v4380
      %4397 = vst.msk [vmem:[#allocation4 + $0x48] sm:$0xff] %vm629, %v4381
      %4398 = vst.msk [vmem:[#allocation4 + $0x50] sm:$0xff] %vm629, %v4382
      %4399 = vst.msk [vmem:[#allocation4 + $0x58] sm:$0xff] %vm629, %v4383
      %4400 = vst.msk [vmem:[#allocation4 + $0x60] sm:$0xff] %vm629, %v4384
      %4401 = vst.msk [vmem:[#allocation4 + $0x68] sm:$0xff] %vm629, %v4385
      %4402 = vst.msk [vmem:[#allocation4 + $0x70] sm:$0xff] %vm629, %v4386
      %4403 = vst.msk [vmem:[#allocation4 + $0x78] sm:$0xff] %vm629, %v4387
      %v4404 = vld [vmem:[#allocation4] sm:$0xff]
      %v4405 = vld [vmem:[#allocation4 + $0x8] sm:$0xff]
      %v4406 = vmax.f32 %v4404, %v4405
      %4407 = vst.msk [vmem:[#allocation5] sm:$0xff] %vm629, %v4406
      %v4408 = vld [vmem:[#allocation4 + $0x10] sm:$0xff]
      %v4409 = vld [vmem:[#allocation4 + $0x18] sm:$0xff]
      %v4410 = vmax.f32 %v4408, %v4409
      %4411 = vst.msk [vmem:[#allocation5 + $0x8] sm:$0xff] %vm629, %v4410
      %v4412 = vld [vmem:[#allocation4 + $0x20] sm:$0xff]
      %v4413 = vld [vmem:[#allocation4 + $0x28] sm:$0xff]
      %v4414 = vmax.f32 %v4412, %v4413
      %4415 = vst.msk [vmem:[#allocation5 + $0x10] sm:$0xff] %vm629, %v4414
      %v4416 = vld [vmem:[#allocation4 + $0x30] sm:$0xff]
      %v4417 = vld [vmem:[#allocation4 + $0x38] sm:$0xff]
      %v4418 = vmax.f32 %v4416, %v4417
      %4419 = vst.msk [vmem:[#allocation5 + $0x18] sm:$0xff] %vm629, %v4418
      %v4420 = vld [vmem:[#allocation4 + $0x40] sm:$0xff]
      %v4421 = vld [vmem:[#allocation4 + $0x48] sm:$0xff]
      %v4422 = vmax.f32 %v4420, %v4421
      %4423 = vst.msk [vmem:[#allocation5 + $0x20] sm:$0xff] %vm629, %v4422
      %v4424 = vld [vmem:[#allocation4 + $0x50] sm:$0xff]
      %v4425 = vld [vmem:[#allocation4 + $0x58] sm:$0xff]
      %v4426 = vmax.f32 %v4424, %v4425
      %4427 = vst.msk [vmem:[#allocation5 + $0x28] sm:$0xff] %vm629, %v4426
      %v4428 = vld [vmem:[#allocation4 + $0x60] sm:$0xff]
      %v4429 = vld [vmem:[#allocation4 + $0x68] sm:$0xff]
      %v4430 = vmax.f32 %v4428, %v4429
      %4431 = vst.msk [vmem:[#allocation5 + $0x30] sm:$0xff] %vm629, %v4430
      %v4432 = vld [vmem:[#allocation4 + $0x70] sm:$0xff]
      %v4433 = vld [vmem:[#allocation4 + $0x78] sm:$0xff]
      %v4434 = vmax.f32 %v4432, %v4433
      %4435 = vst.msk [vmem:[#allocation5 + $0x38] sm:$0xff] %vm629, %v4434
      %v4436 = vld [vmem:[#allocation5] sm:$0xff]
      %v4437 = vld [vmem:[#allocation5 + $0x8] sm:$0xff]
      %v4438 = vld [vmem:[#allocation5 + $0x10] sm:$0xff]
      %v4439 = vld [vmem:[#allocation5 + $0x18] sm:$0xff]
      %v4440 = vld [vmem:[#allocation5 + $0x20] sm:$0xff]
      %v4441 = vld [vmem:[#allocation5 + $0x28] sm:$0xff]
      %v4442 = vld [vmem:[#allocation5 + $0x30] sm:$0xff]
      %v4443 = vld [vmem:[#allocation5 + $0x38] sm:$0xff]
      %v4444 = vperm.slane %v2168, 0
      %v4445 = vadd.f32 %v4436, %v4444
      %v4446 = vadd.f32 %v4437, %v4444
      %v4447 = vadd.f32 %v4438, %v4444
      %v4448 = vadd.f32 %v4439, %v4444
      %v4449 = vadd.f32 %v4440, %v4444
      %v4450 = vadd.f32 %v4441, %v4444
      %v4451 = vadd.f32 %v4442, %v4444
      %v4452 = vadd.f32 %v4443, %v4444
      %v4453 = vmax.f32 %v4445, 0.0
      %v4454 = vmax.f32 %v4446, 0.0
      %v4455 = vmax.f32 %v4447, 0.0
      %v4456 = vmax.f32 %v4448, 0.0
      %v4457 = vmax.f32 %v4449, 0.0
      %v4458 = vmax.f32 %v4450, 0.0
      %v4459 = vmax.f32 %v4451, 0.0
      %v4460 = vmax.f32 %v4452, 0.0
      %v4461 = vld [vmem:[%s5 + $0x2] sm:$0x1]
      %4462 = vst.msk [vmem:[#allocation2] sm:$0xff] %vm629, 0.0
      %4463 = vst.msk [vmem:[#allocation2 + $0x8] sm:$0xff] %vm629, 0.0
      %4464 = vst.msk [vmem:[#allocation2 + $0x10] sm:$0xff] %vm629, 0.0
      %4465 = vst.msk [vmem:[#allocation2 + $0x18] sm:$0xff] %vm629, 0.0
      %4466 = vst.msk [vmem:[#allocation2 + $0x20] sm:$0xff] %vm629, 0.0
      %4467 = vst.msk [vmem:[#allocation2 + $0x28] sm:$0xff] %vm629, 0.0
      %4468 = vst.msk [vmem:[#allocation2 + $0x30] sm:$0xff] %vm629, 0.0
      %4469 = vst.msk [vmem:[#allocation2 + $0x38] sm:$0xff] %vm629, 0.0
      %4470 = vst.msk [vmem:[#allocation2 + $0x40] sm:$0xff] %vm629, 0.0
      %4471 = vst.msk [vmem:[#allocation2 + $0x48] sm:$0xff] %vm629, 0.0
      %4472 = vst.msk [vmem:[#allocation2 + $0x50] sm:$0xff] %vm629, 0.0
      %4473 = vst.msk [vmem:[#allocation2 + $0x58] sm:$0xff] %vm629, 0.0
      %4474 = vst.msk [vmem:[#allocation2 + $0x60] sm:$0xff] %vm629, 0.0
      %4475 = vst.msk [vmem:[#allocation2 + $0x68] sm:$0xff] %vm629, 0.0
      %4476 = vst.msk [vmem:[#allocation2 + $0x70] sm:$0xff] %vm629, 0.0
      %4477 = vst.msk [vmem:[#allocation2 + $0x78] sm:$0xff] %vm629, 0.0
      %4478 = vst.msk [vmem:[#allocation2 + $0x80] sm:$0xff] %vm629, 0.0
      %4479 = vst.msk [vmem:[#allocation2 + $0x88] sm:$0xff] %vm629, 0.0
      %4480 = vst.msk [vmem:[#allocation2 + $0x90] sm:$0xff] %vm629, 0.0
      %4481 = vst.msk [vmem:[#allocation2 + $0x98] sm:$0xff] %vm629, 0.0
      %4482 = vst.msk [vmem:[#allocation2 + $0xa0] sm:$0xff] %vm629, 0.0
      %4483 = vst.msk [vmem:[#allocation2 + $0xa8] sm:$0xff] %vm629, 0.0
      %4484 = vst.msk [vmem:[#allocation2 + $0xb0] sm:$0xff] %vm629, 0.0
      %4485 = vst.msk [vmem:[#allocation2 + $0xb8] sm:$0xff] %vm629, 0.0
      %4486 = vst.msk [vmem:[#allocation2 + $0xc0] sm:$0xff] %vm629, 0.0
      %4487 = vst.msk [vmem:[#allocation2 + $0xc8] sm:$0xff] %vm629, 0.0
      %4488 = vst.msk [vmem:[#allocation2 + $0xd0] sm:$0xff] %vm629, 0.0
      %4489 = vst.msk [vmem:[#allocation2 + $0xd8] sm:$0xff] %vm629, 0.0
      %4490 = vst.msk [vmem:[#allocation2 + $0xe0] sm:$0xff] %vm629, 0.0
      %4491 = vst.msk [vmem:[#allocation2 + $0xe8] sm:$0xff] %vm629, 0.0
      %4492 = vst.msk [vmem:[#allocation2 + $0xf0] sm:$0xff] %vm629, 0.0
      %4493 = vst.msk [vmem:[#allocation2 + $0xf8] sm:$0xff] %vm629, 0.0
      %4494 = vst.msk [vmem:[#allocation2 + $0x100] sm:$0xff] %vm629, 0.0
      %4495 = vst.msk [vmem:[#allocation2 + $0x108] sm:$0xff] %vm629, 0.0
      %4496 = vst.msk [vmem:[#allocation2 + $0x110] sm:$0xff] %vm629, 0.0
      %4497 = vst.msk [vmem:[#allocation2 + $0x118] sm:$0xff] %vm629, 0.0
      %4498 = vst.msk [vmem:[#allocation2 + $0x120] sm:$0xff] %vm629, 0.0
      %4499 = vst.msk [vmem:[#allocation2 + $0x128] sm:$0xff] %vm629, 0.0
      %4500 = vst.msk [vmem:[#allocation2 + $0x10] sm:$0xff] %vm629, %v4453
      %4501 = vst.msk [vmem:[#allocation2 + $0x18] sm:$0xff] %vm629, %v4454
      %4502 = vst.msk [vmem:[#allocation2 + $0x20] sm:$0xff] %vm629, %v4455
      %4503 = vst.msk [vmem:[#allocation2 + $0x28] sm:$0xff] %vm629, %v4456
      %4504 = vst.msk [vmem:[#allocation2 + $0x30] sm:$0xff] %vm629, %v4457
      %4505 = vst.msk [vmem:[#allocation2 + $0x38] sm:$0xff] %vm629, %v4458
      %4506 = vst.msk [vmem:[#allocation2 + $0x40] sm:$0xff] %vm629, %v4459
      %4507 = vst.msk [vmem:[#allocation2 + $0x48] sm:$0xff] %vm629, %v4460
      %v4508 = vand.u32 %v2240, 7
      %v4509 = vand.u32 %v2241, 7
      %v4510 = vand.u32 %v2242, 7
      %v4511 = vand.u32 %v2243, 7
      %v4512 = vand.u32 %v2244, 7
      %v4513 = vand.u32 %v2245, 7
      %v4514 = vand.u32 %v2246, 7
      %v4515 = vand.u32 %v2247, 7
      %vm4516 = vcmp.ne.s32.totalorder %v4508, 0
      %vm4517 = vcmp.ne.s32.totalorder %v4509, 0
      %vm4518 = vcmp.ne.s32.totalorder %v4510, 0
      %vm4519 = vcmp.ne.s32.totalorder %v4511, 0
      %vm4520 = vcmp.ne.s32.totalorder %v4512, 0
      %vm4521 = vcmp.ne.s32.totalorder %v4513, 0
      %vm4522 = vcmp.ne.s32.totalorder %v4514, 0
      %vm4523 = vcmp.ne.s32.totalorder %v4515, 0
      %vm4524 = vcmp.ne.s32.totalorder %v4508, 7
      %vm4525 = vcmp.ne.s32.totalorder %v4509, 7
      %vm4526 = vcmp.ne.s32.totalorder %v4510, 7
      %vm4527 = vcmp.ne.s32.totalorder %v4511, 7
      %vm4528 = vcmp.ne.s32.totalorder %v4512, 7
      %vm4529 = vcmp.ne.s32.totalorder %v4513, 7
      %vm4530 = vcmp.ne.s32.totalorder %v4514, 7
      %vm4531 = vcmp.ne.s32.totalorder %v4515, 7
      %v4532 = vld [vmem:[#allocation2 + $0x7] sm:$0xff]
      %v4533 = vld [vmem:[#allocation2 + $0xf] sm:$0xff]
      %v4534 = vld [vmem:[#allocation2 + $0x17] sm:$0xff]
      %v4535 = vld [vmem:[#allocation2 + $0x1f] sm:$0xff]
      %v4536 = vld [vmem:[#allocation2 + $0x27] sm:$0xff]
      %v4537 = vld [vmem:[#allocation2 + $0x2f] sm:$0xff]
      %v4538 = vld [vmem:[#allocation2 + $0x37] sm:$0xff]
      %v4539 = vld [vmem:[#allocation2 + $0x3f] sm:$0xff]
      %v4540 = vld [vmem:[#allocation2 + $0x47] sm:$0xff]
      %v4541 = vld [vmem:[#allocation2 + $0x4f] sm:$0xff]
      %4550 = vrot.lane.b32.xlu0 %v4533, 64
      %v4551 = vpop.permute.xlu0 %4550
      %4552 = vrot.lane.b32.xlu0 %v4534, 64
      %v4553 = vpop.permute.xlu0 %4552
      %4554 = vrot.lane.b32.xlu0 %v4535, 64
      %v4555 = vpop.permute.xlu0 %4554
      %4556 = vrot.lane.b32.xlu0 %v4536, 64
      %v4557 = vpop.permute.xlu0 %4556
      %4558 = vrot.lane.b32.xlu0 %v4537, 64
      %v4559 = vpop.permute.xlu0 %4558
      %4560 = vrot.lane.b32.xlu0 %v4538, 64
      %v4561 = vpop.permute.xlu0 %4560
      %4562 = vrot.lane.b32.xlu0 %v4539, 64
      %v4563 = vpop.permute.xlu0 %4562
      %4564 = vrot.lane.b32.xlu0 %v4540, 64
      %v4565 = vpop.permute.xlu0 %4564
      %v4574 = vsel %vm629, %v4532, %v4551
      %v4575 = vsel %vm629, %v4533, %v4553
      %v4576 = vsel %vm629, %v4534, %v4555
      %v4577 = vsel %vm629, %v4535, %v4557
      %v4578 = vsel %vm629, %v4536, %v4559
      %v4579 = vsel %vm629, %v4537, %v4561
      %v4580 = vsel %vm629, %v4538, %v4563
      %v4581 = vsel %vm629, %v4539, %v4565
      %v4582 = vsel %vm4516, 1, 0
      %v4583 = vsel %vm4517, 1, 0
      %v4584 = vsel %vm4518, 1, 0
      %v4585 = vsel %vm4519, 1, 0
      %v4586 = vsel %vm4520, 1, 0
      %v4587 = vsel %vm4521, 1, 0
      %v4588 = vsel %vm4522, 1, 0
      %v4589 = vsel %vm4523, 1, 0
      %vm4590 = vcmp.eq.s32.totalorder %v4582, 1
      %vm4591 = vcmp.eq.s32.totalorder %v4583, 1
      %vm4592 = vcmp.eq.s32.totalorder %v4584, 1
      %vm4593 = vcmp.eq.s32.totalorder %v4585, 1
      %vm4594 = vcmp.eq.s32.totalorder %v4586, 1
      %vm4595 = vcmp.eq.s32.totalorder %v4587, 1
      %vm4596 = vcmp.eq.s32.totalorder %v4588, 1
      %vm4597 = vcmp.eq.s32.totalorder %v4589, 1
      %v4598 = vsel %vm4590, %v4574, 0.0
      %v4599 = vsel %vm4590, %v4534, 0.0
      %v4600 = vsel %vm4591, %v4575, 0.0
      %v4601 = vsel %vm4591, %v4535, 0.0
      %v4602 = vsel %vm4592, %v4576, 0.0
      %v4603 = vsel %vm4592, %v4536, 0.0
      %v4604 = vsel %vm4593, %v4577, 0.0
      %v4605 = vsel %vm4593, %v4537, 0.0
      %v4606 = vsel %vm4594, %v4578, 0.0
      %v4607 = vsel %vm4594, %v4538, 0.0
      %v4608 = vsel %vm4595, %v4579, 0.0
      %v4609 = vsel %vm4595, %v4539, 0.0
      %v4610 = vsel %vm4596, %v4580, 0.0
      %v4611 = vsel %vm4596, %v4540, 0.0
      %v4612 = vsel %vm4597, %v4581, 0.0
      %v4613 = vsel %vm4597, %v4541, 0.0
      %v4614 = vpack.c.bf16 %v4600, %v4598
      %v4615 = vpack.c.bf16 %v4601, %v4599
      %v4616 = vpack.c.bf16 %v4604, %v4602
      %v4617 = vpack.c.bf16 %v4605, %v4603
      %v4618 = vpack.c.bf16 %v4608, %v4606
      %v4619 = vpack.c.bf16 %v4609, %v4607
      %v4620 = vpack.c.bf16 %v4612, %v4610
      %v4621 = vpack.c.bf16 %v4613, %v4611
      %v4622 = vld [vmem:[%s3] sm:$0xf]
      %v4623 = vld [vmem:[%s3 + $0x4] sm:$0xf]
      %v4624 = vld [vmem:[%s3 + $0x8] sm:$0xf]
      %v4625 = vld [vmem:[%s3 + $0xc] sm:$0xf]
      %v4626 = vld [vmem:[%s3 + $0x10] sm:$0xf]
      %v4627 = vld [vmem:[%s3 + $0x14] sm:$0xf]
      %v4628 = vld [vmem:[%s3 + $0x18] sm:$0xf]
      %v4629 = vld [vmem:[%s3 + $0x1c] sm:$0xf]
      %v4630 = vld [vmem:[%s3 + $0x20] sm:$0xf]
      %v4631 = vld [vmem:[%s3 + $0x24] sm:$0xf]
      %v4632 = vld [vmem:[%s3 + $0x28] sm:$0xf]
      %v4633 = vld [vmem:[%s3 + $0x2c] sm:$0xf]
      %v4634 = vld [vmem:[%s3 + $0x30] sm:$0xf]
      %v4635 = vld [vmem:[%s3 + $0x34] sm:$0xf]
      %v4636 = vld [vmem:[%s3 + $0x38] sm:$0xf]
      %v4637 = vld [vmem:[%s3 + $0x3c] sm:$0xf]
      %v4638 = vld [vmem:[%s3 + $0x40] sm:$0xf]
      %v4639 = vld [vmem:[%s3 + $0x44] sm:$0xf]
      %v4640 = vld [vmem:[%s3 + $0x48] sm:$0xf]
      %v4641 = vld [vmem:[%s3 + $0x4c] sm:$0xf]
      %v4642 = vld [vmem:[%s3 + $0x50] sm:$0xf]
      %v4643 = vld [vmem:[%s3 + $0x54] sm:$0xf]
      %v4644 = vld [vmem:[%s3 + $0x58] sm:$0xf]
      %v4645 = vld [vmem:[%s3 + $0x5c] sm:$0xf]
      %v4646 = vld [vmem:[#allocation2 + $0x8] sm:$0xff]
      %v4647 = vld [vmem:[#allocation2 + $0x10] sm:$0xff]
      %v4648 = vld [vmem:[#allocation2 + $0x18] sm:$0xff]
      %v4649 = vld [vmem:[#allocation2 + $0x20] sm:$0xff]
      %v4650 = vld [vmem:[#allocation2 + $0x28] sm:$0xff]
      %v4651 = vld [vmem:[#allocation2 + $0x30] sm:$0xff]
      %v4652 = vld [vmem:[#allocation2 + $0x38] sm:$0xff]
      %v4653 = vld [vmem:[#allocation2 + $0x40] sm:$0xff]
      %v4654 = vld [vmem:[#allocation2 + $0x48] sm:$0xff]
      %v4655 = vld [vmem:[#allocation2 + $0x50] sm:$0xff]
      %4664 = vrot.lane.b32.xlu0 %v4647, 64
      %v4665 = vpop.permute.xlu0 %4664
      %4666 = vrot.lane.b32.xlu0 %v4648, 64
      %v4667 = vpop.permute.xlu0 %4666
      %4668 = vrot.lane.b32.xlu0 %v4649, 64
      %v4669 = vpop.permute.xlu0 %4668
      %4670 = vrot.lane.b32.xlu0 %v4650, 64
      %v4671 = vpop.permute.xlu0 %4670
      %4672 = vrot.lane.b32.xlu0 %v4651, 64
      %v4673 = vpop.permute.xlu0 %4672
      %4674 = vrot.lane.b32.xlu0 %v4652, 64
      %v4675 = vpop.permute.xlu0 %4674
      %4676 = vrot.lane.b32.xlu0 %v4653, 64
      %v4677 = vpop.permute.xlu0 %4676
      %4678 = vrot.lane.b32.xlu0 %v4654, 64
      %v4679 = vpop.permute.xlu0 %4678
      %v4688 = vsel %vm629, %v4646, %v4665
      %v4689 = vsel %vm629, %v4647, %v4667
      %v4690 = vsel %vm629, %v4648, %v4669
      %v4691 = vsel %vm629, %v4649, %v4671
      %v4692 = vsel %vm629, %v4650, %v4673
      %v4693 = vsel %vm629, %v4651, %v4675
      %v4694 = vsel %vm629, %v4652, %v4677
      %v4695 = vsel %vm629, %v4653, %v4679
      %v4696 = vpack.c.bf16 %v4689, %v4688
      %v4697 = vpack.c.bf16 %v4649, %v4648
      %v4698 = vpack.c.bf16 %v4691, %v4690
      %v4699 = vpack.c.bf16 %v4651, %v4650
      %v4700 = vpack.c.bf16 %v4693, %v4692
      %v4701 = vpack.c.bf16 %v4653, %v4652
      %v4702 = vpack.c.bf16 %v4695, %v4694
      %v4703 = vpack.c.bf16 %v4655, %v4654
      %s4704 = scalar_lea.vmem %s3, 96
      %v4705 = vld [vmem:[%s4704] sm:$0xf]
      %v4706 = vld [vmem:[%s4704 + $0x4] sm:$0xf]
      %v4707 = vld [vmem:[%s4704 + $0x8] sm:$0xf]
      %v4708 = vld [vmem:[%s4704 + $0xc] sm:$0xf]
      %v4709 = vld [vmem:[%s4704 + $0x10] sm:$0xf]
      %v4710 = vld [vmem:[%s4704 + $0x14] sm:$0xf]
      %v4711 = vld [vmem:[%s4704 + $0x18] sm:$0xf]
      %v4712 = vld [vmem:[%s4704 + $0x1c] sm:$0xf]
      %v4713 = vld [vmem:[%s4704 + $0x20] sm:$0xf]
      %v4714 = vld [vmem:[%s4704 + $0x24] sm:$0xf]
      %v4715 = vld [vmem:[%s4704 + $0x28] sm:$0xf]
      %v4716 = vld [vmem:[%s4704 + $0x2c] sm:$0xf]
      %v4717 = vld [vmem:[%s4704 + $0x30] sm:$0xf]
      %v4718 = vld [vmem:[%s4704 + $0x34] sm:$0xf]
      %v4719 = vld [vmem:[%s4704 + $0x38] sm:$0xf]
      %v4720 = vld [vmem:[%s4704 + $0x3c] sm:$0xf]
      %v4721 = vld [vmem:[%s4704 + $0x40] sm:$0xf]
      %v4722 = vld [vmem:[%s4704 + $0x44] sm:$0xf]
      %v4723 = vld [vmem:[%s4704 + $0x48] sm:$0xf]
      %v4724 = vld [vmem:[%s4704 + $0x4c] sm:$0xf]
      %v4725 = vld [vmem:[%s4704 + $0x50] sm:$0xf]
      %v4726 = vld [vmem:[%s4704 + $0x54] sm:$0xf]
      %v4727 = vld [vmem:[%s4704 + $0x58] sm:$0xf]
      %v4728 = vld [vmem:[%s4704 + $0x5c] sm:$0xf]
      %v4753 = vunpack.c.l.b16 %v4705
      %v4754 = vunpack.c.l.b16 %v4706
      %v4755 = vunpack.c.l.b16 %v4707
      %v4756 = vunpack.c.l.b16 %v4708
      %v4757 = vunpack.c.l.b16 %v4709
      %v4758 = vunpack.c.l.b16 %v4710
      %v4759 = vunpack.c.l.b16 %v4711
      %v4760 = vunpack.c.l.b16 %v4712
      %v4761 = vunpack.c.l.b16 %v4713
      %v4762 = vunpack.c.l.b16 %v4714
      %v4763 = vunpack.c.l.b16 %v4715
      %v4764 = vunpack.c.l.b16 %v4716
      %v4765 = vunpack.c.l.b16 %v4717
      %v4766 = vunpack.c.l.b16 %v4718
      %v4767 = vunpack.c.l.b16 %v4719
      %v4768 = vunpack.c.l.b16 %v4720
      %v4769 = vunpack.c.l.b16 %v4721
      %v4770 = vunpack.c.l.b16 %v4722
      %v4771 = vunpack.c.l.b16 %v4723
      %v4772 = vunpack.c.l.b16 %v4724
      %v4773 = vunpack.c.l.b16 %v4725
      %v4774 = vunpack.c.l.b16 %v4726
      %v4775 = vunpack.c.l.b16 %v4727
      %v4776 = vunpack.c.l.b16 %v4728
      %v4777 = vpack.c.b16 %v4754, %v4753
      %v4778 = vpack.c.b16 %v4756, %v4755
      %v4779 = vpack.c.b16 %v4758, %v4757
      %v4780 = vpack.c.b16 %v4760, %v4759
      %v4781 = vpack.c.b16 %v4762, %v4761
      %v4782 = vpack.c.b16 %v4764, %v4763
      %v4783 = vpack.c.b16 %v4766, %v4765
      %v4784 = vpack.c.b16 %v4768, %v4767
      %v4785 = vpack.c.b16 %v4770, %v4769
      %v4786 = vpack.c.b16 %v4772, %v4771
      %v4787 = vpack.c.b16 %v4774, %v4773
      %v4788 = vpack.c.b16 %v4776, %v4775
      %v4802 = vsel %vm629, %v4697, 0
      %v4805 = vsel %vm629, %v4699, 0
      %v4808 = vsel %vm629, %v4701, 0
      %v4811 = vsel %vm629, %v4703, 0
      %4813 = vmatpush.bf16.msra.mxu0 %v4784
      %4814 = vmatpush.bf16.msra.mxu0 %v4783
      %4815 = vmatpush.bf16.msra.mxu0 %v4782
      %4816 = vmatpush.bf16.msra.mxu0 %v4781
      %4817 = vmatpush.bf16.msra.mxu0 %v4780
      %4818 = vmatpush.bf16.msra.mxu0 %v4779
      %4819 = vmatpush.bf16.msra.mxu0 %v4778
      %4820 = vmatpush.bf16.msra.mxu0 %v4777
      %4821 = vmatmul.bf16.gmra.mxu0 %v4696
      %v4822 = vpop.f32.mrf.mxu0
      %v4823 = vadd.f32 0.0, %v4822
      %v4824 = vpop.f32.mrf.mxu0
      %v4825 = vadd.f32 0.0, %v4824
      %4826 = vmatmul.bf16.gmra.mxu0 %v4698
      %v4827 = vpop.f32.mrf.mxu0
      %v4828 = vadd.f32 0.0, %v4827
      %v4829 = vpop.f32.mrf.mxu0
      %v4830 = vadd.f32 0.0, %v4829
      %4831 = vmatmul.bf16.gmra.mxu0 %v4700
      %v4832 = vpop.f32.mrf.mxu0
      %v4833 = vadd.f32 0.0, %v4832
      %v4834 = vpop.f32.mrf.mxu0
      %v4835 = vadd.f32 0.0, %v4834
      %4836 = vmatmul.bf16.gmra.mxu0 %v4702
      %v4837 = vpop.f32.mrf.mxu0
      %v4838 = vadd.f32 0.0, %v4837
      %v4839 = vpop.f32.mrf.mxu0
      %v4840 = vadd.f32 0.0, %v4839
      %4841 = vdwg.mxu0
      %4842 = vmatpush.bf16.msra.mxu0 0
      %4843 = vmatpush.bf16.msra.mxu0 0
      %4844 = vmatpush.bf16.msra.mxu0 0
      %4845 = vmatpush.bf16.msra.mxu0 0
      %4846 = vmatpush.bf16.msra.mxu0 %v4788
      %4847 = vmatpush.bf16.msra.mxu0 %v4787
      %4848 = vmatpush.bf16.msra.mxu0 %v4786
      %4849 = vmatpush.bf16.msra.mxu0 %v4785
      %4850 = vmatmul.bf16.gmra.mxu0 %v4802
      %v4851 = vpop.f32.mrf.mxu0
      %v4852 = vadd.f32 %v4823, %v4851
      %v4853 = vpop.f32.mrf.mxu0
      %v4854 = vadd.f32 %v4825, %v4853
      %4855 = vmatmul.bf16.gmra.mxu0 %v4805
      %v4856 = vpop.f32.mrf.mxu0
      %v4857 = vadd.f32 %v4828, %v4856
      %v4858 = vpop.f32.mrf.mxu0
      %v4859 = vadd.f32 %v4830, %v4858
      %4860 = vmatmul.bf16.gmra.mxu0 %v4808
      %v4861 = vpop.f32.mrf.mxu0
      %v4862 = vadd.f32 %v4833, %v4861
      %v4863 = vpop.f32.mrf.mxu0
      %v4864 = vadd.f32 %v4835, %v4863
      %4865 = vmatmul.bf16.gmra.mxu0 %v4811
      %v4866 = vpop.f32.mrf.mxu0
      %v4867 = vadd.f32 %v4838, %v4866
      %v4868 = vpop.f32.mrf.mxu0
      %v4869 = vadd.f32 %v4840, %v4868
      %4870 = vdwg.mxu0
      %v4895 = vunpack.c.l.b16 %v4622
      %v4896 = vunpack.c.l.b16 %v4623
      %v4897 = vunpack.c.l.b16 %v4624
      %v4898 = vunpack.c.l.b16 %v4625
      %v4899 = vunpack.c.l.b16 %v4626
      %v4900 = vunpack.c.l.b16 %v4627
      %v4901 = vunpack.c.l.b16 %v4628
      %v4902 = vunpack.c.l.b16 %v4629
      %v4903 = vunpack.c.l.b16 %v4630
      %v4904 = vunpack.c.l.b16 %v4631
      %v4905 = vunpack.c.l.b16 %v4632
      %v4906 = vunpack.c.l.b16 %v4633
      %v4907 = vunpack.c.l.b16 %v4634
      %v4908 = vunpack.c.l.b16 %v4635
      %v4909 = vunpack.c.l.b16 %v4636
      %v4910 = vunpack.c.l.b16 %v4637
      %v4911 = vunpack.c.l.b16 %v4638
      %v4912 = vunpack.c.l.b16 %v4639
      %v4913 = vunpack.c.l.b16 %v4640
      %v4914 = vunpack.c.l.b16 %v4641
      %v4915 = vunpack.c.l.b16 %v4642
      %v4916 = vunpack.c.l.b16 %v4643
      %v4917 = vunpack.c.l.b16 %v4644
      %v4918 = vunpack.c.l.b16 %v4645
      %v4919 = vpack.c.b16 %v4896, %v4895
      %v4920 = vpack.c.b16 %v4898, %v4897
      %v4921 = vpack.c.b16 %v4900, %v4899
      %v4922 = vpack.c.b16 %v4902, %v4901
      %v4923 = vpack.c.b16 %v4904, %v4903
      %v4924 = vpack.c.b16 %v4906, %v4905
      %v4925 = vpack.c.b16 %v4908, %v4907
      %v4926 = vpack.c.b16 %v4910, %v4909
      %v4927 = vpack.c.b16 %v4912, %v4911
      %v4928 = vpack.c.b16 %v4914, %v4913
      %v4929 = vpack.c.b16 %v4916, %v4915
      %v4930 = vpack.c.b16 %v4918, %v4917
      %v4944 = vsel %vm629, %v4615, 0
      %v4947 = vsel %vm629, %v4617, 0
      %v4950 = vsel %vm629, %v4619, 0
      %v4953 = vsel %vm629, %v4621, 0
      %4955 = vmatpush.bf16.msra.mxu0 %v4926
      %4956 = vmatpush.bf16.msra.mxu0 %v4925
      %4957 = vmatpush.bf16.msra.mxu0 %v4924
      %4958 = vmatpush.bf16.msra.mxu0 %v4923
      %4959 = vmatpush.bf16.msra.mxu0 %v4922
      %4960 = vmatpush.bf16.msra.mxu0 %v4921
      %4961 = vmatpush.bf16.msra.mxu0 %v4920
      %4962 = vmatpush.bf16.msra.mxu0 %v4919
      %4963 = vmatmul.bf16.gmra.mxu0 %v4614
      %v4964 = vpop.f32.mrf.mxu0
      %v4965 = vadd.f32 %v4852, %v4964
      %v4966 = vpop.f32.mrf.mxu0
      %v4967 = vadd.f32 %v4854, %v4966
      %4968 = vmatmul.bf16.gmra.mxu0 %v4616
      %v4969 = vpop.f32.mrf.mxu0
      %v4970 = vadd.f32 %v4857, %v4969
      %v4971 = vpop.f32.mrf.mxu0
      %v4972 = vadd.f32 %v4859, %v4971
      %4973 = vmatmul.bf16.gmra.mxu0 %v4618
      %v4974 = vpop.f32.mrf.mxu0
      %v4975 = vadd.f32 %v4862, %v4974
      %v4976 = vpop.f32.mrf.mxu0
      %v4977 = vadd.f32 %v4864, %v4976
      %4978 = vmatmul.bf16.gmra.mxu0 %v4620
      %v4979 = vpop.f32.mrf.mxu0
      %v4980 = vadd.f32 %v4867, %v4979
      %v4981 = vpop.f32.mrf.mxu0
      %v4982 = vadd.f32 %v4869, %v4981
      %4983 = vdwg.mxu0
      %4984 = vmatpush.bf16.msra.mxu0 0
      %4985 = vmatpush.bf16.msra.mxu0 0
      %4986 = vmatpush.bf16.msra.mxu0 0
      %4987 = vmatpush.bf16.msra.mxu0 0
      %4988 = vmatpush.bf16.msra.mxu0 %v4930
      %4989 = vmatpush.bf16.msra.mxu0 %v4929
      %4990 = vmatpush.bf16.msra.mxu0 %v4928
      %4991 = vmatpush.bf16.msra.mxu0 %v4927
      %4992 = vmatmul.bf16.gmra.mxu0 %v4944
      %v4993 = vpop.f32.mrf.mxu0
      %v4994 = vadd.f32 %v4965, %v4993
      %v4995 = vpop.f32.mrf.mxu0
      %v4996 = vadd.f32 %v4967, %v4995
      %4997 = vmatmul.bf16.gmra.mxu0 %v4947
      %v4998 = vpop.f32.mrf.mxu0
      %v4999 = vadd.f32 %v4970, %v4998
      %v5000 = vpop.f32.mrf.mxu0
      %v5001 = vadd.f32 %v4972, %v5000
      %5002 = vmatmul.bf16.gmra.mxu0 %v4950
      %v5003 = vpop.f32.mrf.mxu0
      %v5004 = vadd.f32 %v4975, %v5003
      %v5005 = vpop.f32.mrf.mxu0
      %v5006 = vadd.f32 %v4977, %v5005
      %5007 = vmatmul.bf16.gmra.mxu0 %v4953
      %v5008 = vpop.f32.mrf.mxu0
      %v5009 = vadd.f32 %v4980, %v5008
      %v5010 = vpop.f32.mrf.mxu0
      %v5011 = vadd.f32 %v4982, %v5010
      %5012 = vdwg.mxu0
      %v5013 = vld [vmem:[#allocation2 + $0x9] sm:$0xff]
      %v5014 = vld [vmem:[#allocation2 + $0x11] sm:$0xff]
      %v5015 = vld [vmem:[#allocation2 + $0x19] sm:$0xff]
      %v5016 = vld [vmem:[#allocation2 + $0x21] sm:$0xff]
      %v5017 = vld [vmem:[#allocation2 + $0x29] sm:$0xff]
      %v5018 = vld [vmem:[#allocation2 + $0x31] sm:$0xff]
      %v5019 = vld [vmem:[#allocation2 + $0x39] sm:$0xff]
      %v5020 = vld [vmem:[#allocation2 + $0x41] sm:$0xff]
      %v5021 = vld [vmem:[#allocation2 + $0x49] sm:$0xff]
      %v5022 = vld [vmem:[#allocation2 + $0x51] sm:$0xff]
      %5031 = vrot.lane.b32.xlu0 %v5014, 64
      %v5032 = vpop.permute.xlu0 %5031
      %5033 = vrot.lane.b32.xlu0 %v5015, 64
      %v5034 = vpop.permute.xlu0 %5033
      %5035 = vrot.lane.b32.xlu0 %v5016, 64
      %v5036 = vpop.permute.xlu0 %5035
      %5037 = vrot.lane.b32.xlu0 %v5017, 64
      %v5038 = vpop.permute.xlu0 %5037
      %5039 = vrot.lane.b32.xlu0 %v5018, 64
      %v5040 = vpop.permute.xlu0 %5039
      %5041 = vrot.lane.b32.xlu0 %v5019, 64
      %v5042 = vpop.permute.xlu0 %5041
      %5043 = vrot.lane.b32.xlu0 %v5020, 64
      %v5044 = vpop.permute.xlu0 %5043
      %5045 = vrot.lane.b32.xlu0 %v5021, 64
      %v5046 = vpop.permute.xlu0 %5045
      %v5055 = vsel %vm629, %v5013, %v5032
      %v5056 = vsel %vm629, %v5014, %v5034
      %v5057 = vsel %vm629, %v5015, %v5036
      %v5058 = vsel %vm629, %v5016, %v5038
      %v5059 = vsel %vm629, %v5017, %v5040
      %v5060 = vsel %vm629, %v5018, %v5042
      %v5061 = vsel %vm629, %v5019, %v5044
      %v5062 = vsel %vm629, %v5020, %v5046
      %v5063 = vsel %vm4524, 1, 0
      %v5064 = vsel %vm4525, 1, 0
      %v5065 = vsel %vm4526, 1, 0
      %v5066 = vsel %vm4527, 1, 0
      %v5067 = vsel %vm4528, 1, 0
      %v5068 = vsel %vm4529, 1, 0
      %v5069 = vsel %vm4530, 1, 0
      %v5070 = vsel %vm4531, 1, 0
      %vm5071 = vcmp.eq.s32.totalorder %v5063, 1
      %vm5072 = vcmp.eq.s32.totalorder %v5064, 1
      %vm5073 = vcmp.eq.s32.totalorder %v5065, 1
      %vm5074 = vcmp.eq.s32.totalorder %v5066, 1
      %vm5075 = vcmp.eq.s32.totalorder %v5067, 1
      %vm5076 = vcmp.eq.s32.totalorder %v5068, 1
      %vm5077 = vcmp.eq.s32.totalorder %v5069, 1
      %vm5078 = vcmp.eq.s32.totalorder %v5070, 1
      %v5079 = vsel %vm5071, %v5055, 0.0
      %v5080 = vsel %vm5071, %v5015, 0.0
      %v5081 = vsel %vm5072, %v5056, 0.0
      %v5082 = vsel %vm5072, %v5016, 0.0
      %v5083 = vsel %vm5073, %v5057, 0.0
      %v5084 = vsel %vm5073, %v5017, 0.0
      %v5085 = vsel %vm5074, %v5058, 0.0
      %v5086 = vsel %vm5074, %v5018, 0.0
      %v5087 = vsel %vm5075, %v5059, 0.0
      %v5088 = vsel %vm5075, %v5019, 0.0
      %v5089 = vsel %vm5076, %v5060, 0.0
      %v5090 = vsel %vm5076, %v5020, 0.0
      %v5091 = vsel %vm5077, %v5061, 0.0
      %v5092 = vsel %vm5077, %v5021, 0.0
      %v5093 = vsel %vm5078, %v5062, 0.0
      %v5094 = vsel %vm5078, %v5022, 0.0
      %v5095 = vpack.c.bf16 %v5081, %v5079
      %v5096 = vpack.c.bf16 %v5082, %v5080
      %v5097 = vpack.c.bf16 %v5085, %v5083
      %v5098 = vpack.c.bf16 %v5086, %v5084
      %v5099 = vpack.c.bf16 %v5089, %v5087
      %v5100 = vpack.c.bf16 %v5090, %v5088
      %v5101 = vpack.c.bf16 %v5093, %v5091
      %v5102 = vpack.c.bf16 %v5094, %v5092
      %s5103 = scalar_lea.vmem %s3, 192
      %v5104 = vld [vmem:[%s5103] sm:$0xf]
      %v5105 = vld [vmem:[%s5103 + $0x4] sm:$0xf]
      %v5106 = vld [vmem:[%s5103 + $0x8] sm:$0xf]
      %v5107 = vld [vmem:[%s5103 + $0xc] sm:$0xf]
      %v5108 = vld [vmem:[%s5103 + $0x10] sm:$0xf]
      %v5109 = vld [vmem:[%s5103 + $0x14] sm:$0xf]
      %v5110 = vld [vmem:[%s5103 + $0x18] sm:$0xf]
      %v5111 = vld [vmem:[%s5103 + $0x1c] sm:$0xf]
      %v5112 = vld [vmem:[%s5103 + $0x20] sm:$0xf]
      %v5113 = vld [vmem:[%s5103 + $0x24] sm:$0xf]
      %v5114 = vld [vmem:[%s5103 + $0x28] sm:$0xf]
      %v5115 = vld [vmem:[%s5103 + $0x2c] sm:$0xf]
      %v5116 = vld [vmem:[%s5103 + $0x30] sm:$0xf]
      %v5117 = vld [vmem:[%s5103 + $0x34] sm:$0xf]
      %v5118 = vld [vmem:[%s5103 + $0x38] sm:$0xf]
      %v5119 = vld [vmem:[%s5103 + $0x3c] sm:$0xf]
      %v5120 = vld [vmem:[%s5103 + $0x40] sm:$0xf]
      %v5121 = vld [vmem:[%s5103 + $0x44] sm:$0xf]
      %v5122 = vld [vmem:[%s5103 + $0x48] sm:$0xf]
      %v5123 = vld [vmem:[%s5103 + $0x4c] sm:$0xf]
      %v5124 = vld [vmem:[%s5103 + $0x50] sm:$0xf]
      %v5125 = vld [vmem:[%s5103 + $0x54] sm:$0xf]
      %v5126 = vld [vmem:[%s5103 + $0x58] sm:$0xf]
      %v5127 = vld [vmem:[%s5103 + $0x5c] sm:$0xf]
      %v5152 = vunpack.c.l.b16 %v5104
      %v5153 = vunpack.c.l.b16 %v5105
      %v5154 = vunpack.c.l.b16 %v5106
      %v5155 = vunpack.c.l.b16 %v5107
      %v5156 = vunpack.c.l.b16 %v5108
      %v5157 = vunpack.c.l.b16 %v5109
      %v5158 = vunpack.c.l.b16 %v5110
      %v5159 = vunpack.c.l.b16 %v5111
      %v5160 = vunpack.c.l.b16 %v5112
      %v5161 = vunpack.c.l.b16 %v5113
      %v5162 = vunpack.c.l.b16 %v5114
      %v5163 = vunpack.c.l.b16 %v5115
      %v5164 = vunpack.c.l.b16 %v5116
      %v5165 = vunpack.c.l.b16 %v5117
      %v5166 = vunpack.c.l.b16 %v5118
      %v5167 = vunpack.c.l.b16 %v5119
      %v5168 = vunpack.c.l.b16 %v5120
      %v5169 = vunpack.c.l.b16 %v5121
      %v5170 = vunpack.c.l.b16 %v5122
      %v5171 = vunpack.c.l.b16 %v5123
      %v5172 = vunpack.c.l.b16 %v5124
      %v5173 = vunpack.c.l.b16 %v5125
      %v5174 = vunpack.c.l.b16 %v5126
      %v5175 = vunpack.c.l.b16 %v5127
      %v5176 = vpack.c.b16 %v5153, %v5152
      %v5177 = vpack.c.b16 %v5155, %v5154
      %v5178 = vpack.c.b16 %v5157, %v5156
      %v5179 = vpack.c.b16 %v5159, %v5158
      %v5180 = vpack.c.b16 %v5161, %v5160
      %v5181 = vpack.c.b16 %v5163, %v5162
      %v5182 = vpack.c.b16 %v5165, %v5164
      %v5183 = vpack.c.b16 %v5167, %v5166
      %v5184 = vpack.c.b16 %v5169, %v5168
      %v5185 = vpack.c.b16 %v5171, %v5170
      %v5186 = vpack.c.b16 %v5173, %v5172
      %v5187 = vpack.c.b16 %v5175, %v5174
      %v5201 = vsel %vm629, %v5096, 0
      %v5204 = vsel %vm629, %v5098, 0
      %v5207 = vsel %vm629, %v5100, 0
      %v5210 = vsel %vm629, %v5102, 0
      %5212 = vmatpush.bf16.msra.mxu0 %v5183
      %5213 = vmatpush.bf16.msra.mxu0 %v5182
      %5214 = vmatpush.bf16.msra.mxu0 %v5181
      %5215 = vmatpush.bf16.msra.mxu0 %v5180
      %5216 = vmatpush.bf16.msra.mxu0 %v5179
      %5217 = vmatpush.bf16.msra.mxu0 %v5178
      %5218 = vmatpush.bf16.msra.mxu0 %v5177
      %5219 = vmatpush.bf16.msra.mxu0 %v5176
      %5220 = vmatmul.bf16.gmra.mxu0 %v5095
      %v5221 = vpop.f32.mrf.mxu0
      %v5222 = vadd.f32 0.0, %v5221
      %v5223 = vpop.f32.mrf.mxu0
      %v5224 = vadd.f32 0.0, %v5223
      %5225 = vmatmul.bf16.gmra.mxu0 %v5097
      %v5226 = vpop.f32.mrf.mxu0
      %v5227 = vadd.f32 0.0, %v5226
      %v5228 = vpop.f32.mrf.mxu0
      %v5229 = vadd.f32 0.0, %v5228
      %5230 = vmatmul.bf16.gmra.mxu0 %v5099
      %v5231 = vpop.f32.mrf.mxu0
      %v5232 = vadd.f32 0.0, %v5231
      %v5233 = vpop.f32.mrf.mxu0
      %v5234 = vadd.f32 0.0, %v5233
      %5235 = vmatmul.bf16.gmra.mxu0 %v5101
      %v5236 = vpop.f32.mrf.mxu0
      %v5237 = vadd.f32 0.0, %v5236
      %v5238 = vpop.f32.mrf.mxu0
      %v5239 = vadd.f32 0.0, %v5238
      %5240 = vdwg.mxu0
      %5241 = vmatpush.bf16.msra.mxu0 0
      %5242 = vmatpush.bf16.msra.mxu0 0
      %5243 = vmatpush.bf16.msra.mxu0 0
      %5244 = vmatpush.bf16.msra.mxu0 0
      %5245 = vmatpush.bf16.msra.mxu0 %v5187
      %5246 = vmatpush.bf16.msra.mxu0 %v5186
      %5247 = vmatpush.bf16.msra.mxu0 %v5185
      %5248 = vmatpush.bf16.msra.mxu0 %v5184
      %5249 = vmatmul.bf16.gmra.mxu0 %v5201
      %v5250 = vpop.f32.mrf.mxu0
      %v5251 = vadd.f32 %v5222, %v5250
      %v5252 = vpop.f32.mrf.mxu0
      %v5253 = vadd.f32 %v5224, %v5252
      %5254 = vmatmul.bf16.gmra.mxu0 %v5204
      %v5255 = vpop.f32.mrf.mxu0
      %v5256 = vadd.f32 %v5227, %v5255
      %v5257 = vpop.f32.mrf.mxu0
      %v5258 = vadd.f32 %v5229, %v5257
      %5259 = vmatmul.bf16.gmra.mxu0 %v5207
      %v5260 = vpop.f32.mrf.mxu0
      %v5261 = vadd.f32 %v5232, %v5260
      %v5262 = vpop.f32.mrf.mxu0
      %v5263 = vadd.f32 %v5234, %v5262
      %5264 = vmatmul.bf16.gmra.mxu0 %v5210
      %v5265 = vpop.f32.mrf.mxu0
      %v5266 = vadd.f32 %v5237, %v5265
      %v5267 = vpop.f32.mrf.mxu0
      %v5268 = vadd.f32 %v5239, %v5267
      %5269 = vdwg.mxu0
      %v5270 = vadd.f32 %v4994, %v5251
      %v5271 = vadd.f32 %v4996, %v5253
      %v5272 = vadd.f32 %v4999, %v5256
      %v5273 = vadd.f32 %v5001, %v5258
      %v5274 = vadd.f32 %v5004, %v5261
      %v5275 = vadd.f32 %v5006, %v5263
      %v5276 = vadd.f32 %v5009, %v5266
      %v5277 = vadd.f32 %v5011, %v5268
      %5278 = vst.msk [vmem:[#allocation3] sm:$0xff] %vm629, %v5270
      %5279 = vst.msk [vmem:[#allocation3 + $0x8] sm:$0xff] %vm629, %v5271
      %5280 = vst.msk [vmem:[#allocation3 + $0x10] sm:$0xff] %vm629, %v5272
      %5281 = vst.msk [vmem:[#allocation3 + $0x18] sm:$0xff] %vm629, %v5273
      %5282 = vst.msk [vmem:[#allocation3 + $0x20] sm:$0xff] %vm629, %v5274
      %5283 = vst.msk [vmem:[#allocation3 + $0x28] sm:$0xff] %vm629, %v5275
      %5284 = vst.msk [vmem:[#allocation3 + $0x30] sm:$0xff] %vm629, %v5276
      %5285 = vst.msk [vmem:[#allocation3 + $0x38] sm:$0xff] %vm629, %v5277
      %v5286 = vld [vmem:[#allocation3] ss:$2 sm:$0xff]
      %v5287 = vld [vmem:[%s1560] ss:$2 sm:$0xff]
      %v5288 = vld [vmem:[%s1562] ss:$2 sm:$0xff]
      %v5289 = vld [vmem:[%s1564] ss:$2 sm:$0xff]
      %v5290 = vld [vmem:[%s1686] ss:$2 sm:$0xff]
      %v5291 = vld [vmem:[%s1688] ss:$2 sm:$0xff]
      %v5292 = vld [vmem:[%s1690] ss:$2 sm:$0xff]
      %v5293 = vld [vmem:[%s1692] ss:$2 sm:$0xff]
      %v5294 = vmax.f32 %v5286, %v5290
      %v5295 = vmax.f32 %v5287, %v5291
      %v5296 = vmax.f32 %v5288, %v5292
      %v5297 = vmax.f32 %v5289, %v5293
      %5298 = vst.msk [vmem:[#allocation4] sm:$0xff] %vm629, %v5294
      %5299 = vst.msk [vmem:[#allocation4 + $0x8] sm:$0xff] %vm629, %v5295
      %5300 = vst.msk [vmem:[#allocation4 + $0x10] sm:$0xff] %vm629, %v5296
      %5301 = vst.msk [vmem:[#allocation4 + $0x18] sm:$0xff] %vm629, %v5297
      %v5302 = vld [vmem:[#allocation4] sm:$0xf]
      %v5303 = vld [vmem:[#allocation4 + $0x4] sm:$0xf]
      %v5304 = vmax.f32 %v5302, %v5303
      %vm5305 = vcmask 519168
      %5306 = vst.msk [vmem:[#allocation5] sm:$0xf] %vm5305, %v5304
      %v5307 = vld [vmem:[#allocation4 + $0x8] sm:$0xf]
      %v5308 = vld [vmem:[#allocation4 + $0xc] sm:$0xf]
      %v5309 = vmax.f32 %v5307, %v5308
      %5310 = vst.msk [vmem:[#allocation5 + $0x4] sm:$0xf] %vm5305, %v5309
      %v5311 = vld [vmem:[#allocation4 + $0x10] sm:$0xf]
      %v5312 = vld [vmem:[#allocation4 + $0x14] sm:$0xf]
      %v5313 = vmax.f32 %v5311, %v5312
      %5314 = vst.msk [vmem:[#allocation5 + $0x8] sm:$0xf] %vm5305, %v5313
      %v5315 = vld [vmem:[#allocation4 + $0x18] sm:$0xf]
      %v5316 = vld [vmem:[#allocation4 + $0x1c] sm:$0xf]
      %v5317 = vmax.f32 %v5315, %v5316
      %5318 = vst.msk [vmem:[#allocation5 + $0xc] sm:$0xf] %vm5305, %v5317
      %v5319 = vld [vmem:[#allocation5] sm:$0xff]
      %v5320 = vld [vmem:[#allocation5 + $0x8] sm:$0xff]
      %v5321 = vperm.slane %v4461, 0
      %v5322 = vadd.f32 %v5319, %v5321
      %v5323 = vadd.f32 %v5320, %v5321
      %v5324 = vmax.f32 %v5322, 0.0
      %v5325 = vmax.f32 %v5323, 0.0
      %v5326 = vld [vmem:[%s5 + $0x3] sm:$0x1]
      %5327 = vst.msk [vmem:[#allocation2] sm:$0xff] %vm629, 0.0
      %5328 = vst.msk [vmem:[#allocation2 + $0x8] sm:$0xff] %vm629, 0.0
      %5329 = vst.msk [vmem:[#allocation2 + $0x10] sm:$0xff] %vm629, 0.0
      %5330 = vst.msk [vmem:[#allocation2 + $0x18] sm:$0xff] %vm629, 0.0
      %5331 = vst.msk [vmem:[#allocation2 + $0x20] sm:$0xff] %vm629, 0.0
      %5332 = vst.msk [vmem:[#allocation2 + $0x28] sm:$0xff] %vm629, 0.0
      %5333 = vst.msk [vmem:[#allocation2 + $0x30] sm:$0xff] %vm629, 0.0
      %5334 = vst.msk [vmem:[#allocation2 + $0x38] sm:$0xff] %vm629, 0.0
      %5335 = vst.msk [vmem:[#allocation2 + $0x40] sm:$0xff] %vm629, 0.0
      %5336 = vst.msk [vmem:[#allocation2 + $0x48] sm:$0xff] %vm629, 0.0
      %5337 = vst.msk [vmem:[#allocation2 + $0x50] sm:$0xff] %vm629, 0.0
      %5338 = vst.msk [vmem:[#allocation2 + $0x58] sm:$0xff] %vm629, 0.0
      %5339 = vst.msk [vmem:[#allocation2 + $0x60] sm:$0xff] %vm629, 0.0
      %5340 = vst.msk [vmem:[#allocation2 + $0x68] sm:$0xff] %vm629, 0.0
      %5341 = vst.msk [vmem:[#allocation2 + $0x70] sm:$0xff] %vm629, 0.0
      %5342 = vst.msk [vmem:[#allocation2 + $0x78] sm:$0xff] %vm629, 0.0
      %5343 = vst.msk [vmem:[#allocation2 + $0x80] sm:$0xff] %vm629, 0.0
      %5344 = vst.msk [vmem:[#allocation2 + $0x88] sm:$0xff] %vm629, 0.0
      %5345 = vst.msk [vmem:[#allocation2 + $0x90] sm:$0xff] %vm629, 0.0
      %5346 = vst.msk [vmem:[#allocation2 + $0x98] sm:$0xff] %vm629, 0.0
      %5347 = vst.msk [vmem:[#allocation2 + $0xa0] sm:$0xff] %vm629, 0.0
      %5348 = vst.msk [vmem:[#allocation2 + $0xa8] sm:$0xff] %vm629, 0.0
      %5349 = vst.msk [vmem:[#allocation2 + $0xb0] sm:$0xff] %vm629, 0.0
      %5350 = vst.msk [vmem:[#allocation2 + $0xb8] sm:$0xff] %vm629, 0.0
      %5351 = vst.msk [vmem:[#allocation2 + $0xc0] sm:$0xff] %vm629, 0.0
      %5352 = vst.msk [vmem:[#allocation2 + $0xc8] sm:$0xff] %vm629, 0.0
      %5353 = vst.msk [vmem:[#allocation2 + $0xd0] sm:$0xff] %vm629, 0.0
      %5354 = vst.msk [vmem:[#allocation2 + $0xd8] sm:$0xff] %vm629, 0.0
      %5355 = vst.msk [vmem:[#allocation2 + $0xe0] sm:$0xff] %vm629, 0.0
      %5356 = vst.msk [vmem:[#allocation2 + $0xe8] sm:$0xff] %vm629, 0.0
      %5357 = vst.msk [vmem:[#allocation2 + $0xf0] sm:$0xff] %vm629, 0.0
      %5358 = vst.msk [vmem:[#allocation2 + $0xf8] sm:$0xff] %vm629, 0.0
      %5359 = vst.msk [vmem:[#allocation2 + $0x100] sm:$0xff] %vm629, 0.0
      %5360 = vst.msk [vmem:[#allocation2 + $0x108] sm:$0xff] %vm629, 0.0
      %5361 = vst.msk [vmem:[#allocation2 + $0x110] sm:$0xff] %vm629, 0.0
      %5362 = vst.msk [vmem:[#allocation2 + $0x118] sm:$0xff] %vm629, 0.0
      %5363 = vst.msk [vmem:[#allocation2 + $0x120] sm:$0xff] %vm629, 0.0
      %5364 = vst.msk [vmem:[#allocation2 + $0x128] sm:$0xff] %vm629, 0.0
      %5365 = vst.msk [vmem:[#allocation2 + $0x8] sm:$0xff] %vm629, %v5324
      %5366 = vst.msk [vmem:[#allocation2 + $0x10] sm:$0xff] %vm629, %v5325
      %v5367 = vand.u32 %v2240, 3
      %v5368 = vand.u32 %v2241, 3
      %vm5369 = vcmp.ne.s32.totalorder %v5367, 0
      %vm5370 = vcmp.ne.s32.totalorder %v5368, 0
      %vm5371 = vcmp.ne.s32.totalorder %v5367, 3
      %vm5372 = vcmp.ne.s32.totalorder %v5368, 3
      %v5373 = vld [vmem:[#allocation2 + $0x3] sm:$0xff]
      %v5374 = vld [vmem:[#allocation2 + $0xb] sm:$0xff]
      %v5375 = vld [vmem:[#allocation2 + $0x7] sm:$0xff]
      %v5376 = vld [vmem:[#allocation2 + $0xf] sm:$0xff]
      %v5377 = vld [vmem:[#allocation2 + $0x13] sm:$0xff]
      %5380 = vrot.lane.b32.xlu0 %v5375, 64
      %v5381 = vpop.permute.xlu0 %5380
      %5382 = vrot.lane.b32.xlu0 %v5376, 64
      %v5383 = vpop.permute.xlu0 %5382
      %v5386 = vsel %vm629, %v5373, %v5381
      %v5387 = vsel %vm629, %v5374, %v5383
      %v5388 = vsel %vm5369, 1, 0
      %v5389 = vsel %vm5370, 1, 0
      %vm5390 = vcmp.eq.s32.totalorder %v5388, 1
      %vm5391 = vcmp.eq.s32.totalorder %v5389, 1
      %v5392 = vsel %vm5390, %v5386, 0.0
      %v5393 = vsel %vm5390, %v5374, 0.0
      %v5394 = vsel %vm5391, %v5387, 0.0
      %v5395 = vsel %vm5391, %v5377, 0.0
      %v5396 = vpack.c.bf16 %v5394, %v5392
      %v5397 = vpack.c.bf16 %v5395, %v5393
      %v5398 = vld [vmem:[%s4] sm:$0xf]
      %v5399 = vld [vmem:[%s4 + $0x4] sm:$0xf]
      %v5400 = vld [vmem:[%s4 + $0x8] sm:$0xf]
      %v5401 = vld [vmem:[%s4 + $0xc] sm:$0xf]
      %v5402 = vld [vmem:[%s4 + $0x10] sm:$0xf]
      %v5403 = vld [vmem:[%s4 + $0x14] sm:$0xf]
      %v5404 = vld [vmem:[%s4 + $0x18] sm:$0xf]
      %v5405 = vld [vmem:[%s4 + $0x1c] sm:$0xf]
      %v5406 = vld [vmem:[%s4 + $0x20] sm:$0xf]
      %v5407 = vld [vmem:[%s4 + $0x24] sm:$0xf]
      %v5408 = vld [vmem:[%s4 + $0x28] sm:$0xf]
      %v5409 = vld [vmem:[%s4 + $0x2c] sm:$0xf]
      %v5410 = vld [vmem:[%s4 + $0x30] sm:$0xf]
      %v5411 = vld [vmem:[%s4 + $0x34] sm:$0xf]
      %v5412 = vld [vmem:[%s4 + $0x38] sm:$0xf]
      %v5413 = vld [vmem:[%s4 + $0x3c] sm:$0xf]
      %v5414 = vld [vmem:[%s4 + $0x40] sm:$0xf]
      %v5415 = vld [vmem:[%s4 + $0x44] sm:$0xf]
      %v5416 = vld [vmem:[%s4 + $0x48] sm:$0xf]
      %v5417 = vld [vmem:[%s4 + $0x4c] sm:$0xf]
      %v5418 = vld [vmem:[%s4 + $0x50] sm:$0xf]
      %v5419 = vld [vmem:[%s4 + $0x54] sm:$0xf]
      %v5420 = vld [vmem:[%s4 + $0x58] sm:$0xf]
      %v5421 = vld [vmem:[%s4 + $0x5c] sm:$0xf]
      %v5422 = vld [vmem:[#allocation2 + $0x4] sm:$0xff]
      %v5423 = vld [vmem:[#allocation2 + $0xc] sm:$0xff]
      %v5424 = vld [vmem:[#allocation2 + $0x8] sm:$0xff]
      %v5425 = vld [vmem:[#allocation2 + $0x10] sm:$0xff]
      %v5426 = vld [vmem:[#allocation2 + $0x14] sm:$0xff]
      %5429 = vrot.lane.b32.xlu0 %v5424, 64
      %v5430 = vpop.permute.xlu0 %5429
      %5431 = vrot.lane.b32.xlu0 %v5425, 64
      %v5432 = vpop.permute.xlu0 %5431
      %v5435 = vsel %vm629, %v5422, %v5430
      %v5436 = vsel %vm629, %v5423, %v5432
      %v5437 = vpack.c.bf16 %v5436, %v5435
      %v5438 = vpack.c.bf16 %v5426, %v5423
      %s5439 = scalar_lea.vmem %s4, 96
      %v5440 = vld [vmem:[%s5439] sm:$0xf]
      %v5441 = vld [vmem:[%s5439 + $0x4] sm:$0xf]
      %v5442 = vld [vmem:[%s5439 + $0x8] sm:$0xf]
      %v5443 = vld [vmem:[%s5439 + $0xc] sm:$0xf]
      %v5444 = vld [vmem:[%s5439 + $0x10] sm:$0xf]
      %v5445 = vld [vmem:[%s5439 + $0x14] sm:$0xf]
      %v5446 = vld [vmem:[%s5439 + $0x18] sm:$0xf]
      %v5447 = vld [vmem:[%s5439 + $0x1c] sm:$0xf]
      %v5448 = vld [vmem:[%s5439 + $0x20] sm:$0xf]
      %v5449 = vld [vmem:[%s5439 + $0x24] sm:$0xf]
      %v5450 = vld [vmem:[%s5439 + $0x28] sm:$0xf]
      %v5451 = vld [vmem:[%s5439 + $0x2c] sm:$0xf]
      %v5452 = vld [vmem:[%s5439 + $0x30] sm:$0xf]
      %v5453 = vld [vmem:[%s5439 + $0x34] sm:$0xf]
      %v5454 = vld [vmem:[%s5439 + $0x38] sm:$0xf]
      %v5455 = vld [vmem:[%s5439 + $0x3c] sm:$0xf]
      %v5456 = vld [vmem:[%s5439 + $0x40] sm:$0xf]
      %v5457 = vld [vmem:[%s5439 + $0x44] sm:$0xf]
      %v5458 = vld [vmem:[%s5439 + $0x48] sm:$0xf]
      %v5459 = vld [vmem:[%s5439 + $0x4c] sm:$0xf]
      %v5460 = vld [vmem:[%s5439 + $0x50] sm:$0xf]
      %v5461 = vld [vmem:[%s5439 + $0x54] sm:$0xf]
      %v5462 = vld [vmem:[%s5439 + $0x58] sm:$0xf]
      %v5463 = vld [vmem:[%s5439 + $0x5c] sm:$0xf]
      %v5488 = vunpack.c.l.b16 %v5440
      %v5489 = vunpack.c.l.b16 %v5441
      %v5490 = vunpack.c.l.b16 %v5442
      %v5491 = vunpack.c.l.b16 %v5443
      %v5492 = vunpack.c.l.b16 %v5444
      %v5493 = vunpack.c.l.b16 %v5445
      %v5494 = vunpack.c.l.b16 %v5446
      %v5495 = vunpack.c.l.b16 %v5447
      %v5496 = vunpack.c.l.b16 %v5448
      %v5497 = vunpack.c.l.b16 %v5449
      %v5498 = vunpack.c.l.b16 %v5450
      %v5499 = vunpack.c.l.b16 %v5451
      %v5500 = vunpack.c.l.b16 %v5452
      %v5501 = vunpack.c.l.b16 %v5453
      %v5502 = vunpack.c.l.b16 %v5454
      %v5503 = vunpack.c.l.b16 %v5455
      %v5504 = vunpack.c.l.b16 %v5456
      %v5505 = vunpack.c.l.b16 %v5457
      %v5506 = vunpack.c.l.b16 %v5458
      %v5507 = vunpack.c.l.b16 %v5459
      %v5508 = vunpack.c.l.b16 %v5460
      %v5509 = vunpack.c.l.b16 %v5461
      %v5510 = vunpack.c.l.b16 %v5462
      %v5511 = vunpack.c.l.b16 %v5463
      %v5512 = vpack.c.b16 %v5489, %v5488
      %v5513 = vpack.c.b16 %v5491, %v5490
      %v5514 = vpack.c.b16 %v5493, %v5492
      %v5515 = vpack.c.b16 %v5495, %v5494
      %v5516 = vpack.c.b16 %v5497, %v5496
      %v5517 = vpack.c.b16 %v5499, %v5498
      %v5518 = vpack.c.b16 %v5501, %v5500
      %v5519 = vpack.c.b16 %v5503, %v5502
      %v5520 = vpack.c.b16 %v5505, %v5504
      %v5521 = vpack.c.b16 %v5507, %v5506
      %v5522 = vpack.c.b16 %v5509, %v5508
      %v5523 = vpack.c.b16 %v5511, %v5510
      %v5537 = vsel %vm629, %v5438, 0
      %5539 = vmatpush.bf16.msra.mxu0 %v5519
      %5540 = vmatpush.bf16.msra.mxu0 %v5518
      %5541 = vmatpush.bf16.msra.mxu0 %v5517
      %5542 = vmatpush.bf16.msra.mxu0 %v5516
      %5543 = vmatpush.bf16.msra.mxu0 %v5515
      %5544 = vmatpush.bf16.msra.mxu0 %v5514
      %5545 = vmatpush.bf16.msra.mxu0 %v5513
      %5546 = vmatpush.bf16.msra.mxu0 %v5512
      %5547 = vmatmul.bf16.gmra.mxu0 %v5437
      %v5548 = vpop.f32.mrf.mxu0
      %v5549 = vadd.f32 0.0, %v5548
      %v5550 = vpop.f32.mrf.mxu0
      %v5551 = vadd.f32 0.0, %v5550
      %5552 = vdwg.mxu0
      %5553 = vmatpush.bf16.msra.mxu0 0
      %5554 = vmatpush.bf16.msra.mxu0 0
      %5555 = vmatpush.bf16.msra.mxu0 0
      %5556 = vmatpush.bf16.msra.mxu0 0
      %5557 = vmatpush.bf16.msra.mxu0 %v5523
      %5558 = vmatpush.bf16.msra.mxu0 %v5522
      %5559 = vmatpush.bf16.msra.mxu0 %v5521
      %5560 = vmatpush.bf16.msra.mxu0 %v5520
      %5561 = vmatmul.bf16.gmra.mxu0 %v5537
      %v5562 = vpop.f32.mrf.mxu0
      %v5563 = vadd.f32 %v5549, %v5562
      %v5564 = vpop.f32.mrf.mxu0
      %v5565 = vadd.f32 %v5551, %v5564
      %5566 = vdwg.mxu0
      %v5591 = vunpack.c.l.b16 %v5398
      %v5592 = vunpack.c.l.b16 %v5399
      %v5593 = vunpack.c.l.b16 %v5400
      %v5594 = vunpack.c.l.b16 %v5401
      %v5595 = vunpack.c.l.b16 %v5402
      %v5596 = vunpack.c.l.b16 %v5403
      %v5597 = vunpack.c.l.b16 %v5404
      %v5598 = vunpack.c.l.b16 %v5405
      %v5599 = vunpack.c.l.b16 %v5406
      %v5600 = vunpack.c.l.b16 %v5407
      %v5601 = vunpack.c.l.b16 %v5408
      %v5602 = vunpack.c.l.b16 %v5409
      %v5603 = vunpack.c.l.b16 %v5410
      %v5604 = vunpack.c.l.b16 %v5411
      %v5605 = vunpack.c.l.b16 %v5412
      %v5606 = vunpack.c.l.b16 %v5413
      %v5607 = vunpack.c.l.b16 %v5414
      %v5608 = vunpack.c.l.b16 %v5415
      %v5609 = vunpack.c.l.b16 %v5416
      %v5610 = vunpack.c.l.b16 %v5417
      %v5611 = vunpack.c.l.b16 %v5418
      %v5612 = vunpack.c.l.b16 %v5419
      %v5613 = vunpack.c.l.b16 %v5420
      %v5614 = vunpack.c.l.b16 %v5421
      %v5615 = vpack.c.b16 %v5592, %v5591
      %v5616 = vpack.c.b16 %v5594, %v5593
      %v5617 = vpack.c.b16 %v5596, %v5595
      %v5618 = vpack.c.b16 %v5598, %v5597
      %v5619 = vpack.c.b16 %v5600, %v5599
      %v5620 = vpack.c.b16 %v5602, %v5601
      %v5621 = vpack.c.b16 %v5604, %v5603
      %v5622 = vpack.c.b16 %v5606, %v5605
      %v5623 = vpack.c.b16 %v5608, %v5607
      %v5624 = vpack.c.b16 %v5610, %v5609
      %v5625 = vpack.c.b16 %v5612, %v5611
      %v5626 = vpack.c.b16 %v5614, %v5613
      %v5640 = vsel %vm629, %v5397, 0
      %5642 = vmatpush.bf16.msra.mxu0 %v5622
      %5643 = vmatpush.bf16.msra.mxu0 %v5621
      %5644 = vmatpush.bf16.msra.mxu0 %v5620
      %5645 = vmatpush.bf16.msra.mxu0 %v5619
      %5646 = vmatpush.bf16.msra.mxu0 %v5618
      %5647 = vmatpush.bf16.msra.mxu0 %v5617
      %5648 = vmatpush.bf16.msra.mxu0 %v5616
      %5649 = vmatpush.bf16.msra.mxu0 %v5615
      %5650 = vmatmul.bf16.gmra.mxu0 %v5396
      %v5651 = vpop.f32.mrf.mxu0
      %v5652 = vadd.f32 %v5563, %v5651
      %v5653 = vpop.f32.mrf.mxu0
      %v5654 = vadd.f32 %v5565, %v5653
      %5655 = vdwg.mxu0
      %5656 = vmatpush.bf16.msra.mxu0 0
      %5657 = vmatpush.bf16.msra.mxu0 0
      %5658 = vmatpush.bf16.msra.mxu0 0
      %5659 = vmatpush.bf16.msra.mxu0 0
      %5660 = vmatpush.bf16.msra.mxu0 %v5626
      %5661 = vmatpush.bf16.msra.mxu0 %v5625
      %5662 = vmatpush.bf16.msra.mxu0 %v5624
      %5663 = vmatpush.bf16.msra.mxu0 %v5623
      %5664 = vmatmul.bf16.gmra.mxu0 %v5640
      %v5665 = vpop.f32.mrf.mxu0
      %v5666 = vadd.f32 %v5652, %v5665
      %v5667 = vpop.f32.mrf.mxu0
      %v5668 = vadd.f32 %v5654, %v5667
      %5669 = vdwg.mxu0
      %v5670 = vld [vmem:[#allocation2 + $0x5] sm:$0xff]
      %v5671 = vld [vmem:[#allocation2 + $0xd] sm:$0xff]
      %v5672 = vld [vmem:[#allocation2 + $0x9] sm:$0xff]
      %v5673 = vld [vmem:[#allocation2 + $0x11] sm:$0xff]
      %v5674 = vld [vmem:[#allocation2 + $0x15] sm:$0xff]
      %5677 = vrot.lane.b32.xlu0 %v5672, 64
      %v5678 = vpop.permute.xlu0 %5677
      %5679 = vrot.lane.b32.xlu0 %v5673, 64
      %v5680 = vpop.permute.xlu0 %5679
      %v5683 = vsel %vm629, %v5670, %v5678
      %v5684 = vsel %vm629, %v5671, %v5680
      %v5685 = vsel %vm5371, 1, 0
      %v5686 = vsel %vm5372, 1, 0
      %vm5687 = vcmp.eq.s32.totalorder %v5685, 1
      %vm5688 = vcmp.eq.s32.totalorder %v5686, 1
      %v5689 = vsel %vm5687, %v5683, 0.0
      %v5690 = vsel %vm5687, %v5671, 0.0
      %v5691 = vsel %vm5688, %v5684, 0.0
      %v5692 = vsel %vm5688, %v5674, 0.0
      %v5693 = vpack.c.bf16 %v5691, %v5689
      %v5694 = vpack.c.bf16 %v5692, %v5690
      %s5695 = scalar_lea.vmem %s4, 192
      %v5696 = vld [vmem:[%s5695] sm:$0xf]
      %v5697 = vld [vmem:[%s5695 + $0x4] sm:$0xf]
      %v5698 = vld [vmem:[%s5695 + $0x8] sm:$0xf]
      %v5699 = vld [vmem:[%s5695 + $0xc] sm:$0xf]
      %v5700 = vld [vmem:[%s5695 + $0x10] sm:$0xf]
      %v5701 = vld [vmem:[%s5695 + $0x14] sm:$0xf]
      %v5702 = vld [vmem:[%s5695 + $0x18] sm:$0xf]
      %v5703 = vld [vmem:[%s5695 + $0x1c] sm:$0xf]
      %v5704 = vld [vmem:[%s5695 + $0x20] sm:$0xf]
      %v5705 = vld [vmem:[%s5695 + $0x24] sm:$0xf]
      %v5706 = vld [vmem:[%s5695 + $0x28] sm:$0xf]
      %v5707 = vld [vmem:[%s5695 + $0x2c] sm:$0xf]
      %v5708 = vld [vmem:[%s5695 + $0x30] sm:$0xf]
      %v5709 = vld [vmem:[%s5695 + $0x34] sm:$0xf]
      %v5710 = vld [vmem:[%s5695 + $0x38] sm:$0xf]
      %v5711 = vld [vmem:[%s5695 + $0x3c] sm:$0xf]
      %v5712 = vld [vmem:[%s5695 + $0x40] sm:$0xf]
      %v5713 = vld [vmem:[%s5695 + $0x44] sm:$0xf]
      %v5714 = vld [vmem:[%s5695 + $0x48] sm:$0xf]
      %v5715 = vld [vmem:[%s5695 + $0x4c] sm:$0xf]
      %v5716 = vld [vmem:[%s5695 + $0x50] sm:$0xf]
      %v5717 = vld [vmem:[%s5695 + $0x54] sm:$0xf]
      %v5718 = vld [vmem:[%s5695 + $0x58] sm:$0xf]
      %v5719 = vld [vmem:[%s5695 + $0x5c] sm:$0xf]
      %v5744 = vunpack.c.l.b16 %v5696
      %v5745 = vunpack.c.l.b16 %v5697
      %v5746 = vunpack.c.l.b16 %v5698
      %v5747 = vunpack.c.l.b16 %v5699
      %v5748 = vunpack.c.l.b16 %v5700
      %v5749 = vunpack.c.l.b16 %v5701
      %v5750 = vunpack.c.l.b16 %v5702
      %v5751 = vunpack.c.l.b16 %v5703
      %v5752 = vunpack.c.l.b16 %v5704
      %v5753 = vunpack.c.l.b16 %v5705
      %v5754 = vunpack.c.l.b16 %v5706
      %v5755 = vunpack.c.l.b16 %v5707
      %v5756 = vunpack.c.l.b16 %v5708
      %v5757 = vunpack.c.l.b16 %v5709
      %v5758 = vunpack.c.l.b16 %v5710
      %v5759 = vunpack.c.l.b16 %v5711
      %v5760 = vunpack.c.l.b16 %v5712
      %v5761 = vunpack.c.l.b16 %v5713
      %v5762 = vunpack.c.l.b16 %v5714
      %v5763 = vunpack.c.l.b16 %v5715
      %v5764 = vunpack.c.l.b16 %v5716
      %v5765 = vunpack.c.l.b16 %v5717
      %v5766 = vunpack.c.l.b16 %v5718
      %v5767 = vunpack.c.l.b16 %v5719
      %v5768 = vpack.c.b16 %v5745, %v5744
      %v5769 = vpack.c.b16 %v5747, %v5746
      %v5770 = vpack.c.b16 %v5749, %v5748
      %v5771 = vpack.c.b16 %v5751, %v5750
      %v5772 = vpack.c.b16 %v5753, %v5752
      %v5773 = vpack.c.b16 %v5755, %v5754
      %v5774 = vpack.c.b16 %v5757, %v5756
      %v5775 = vpack.c.b16 %v5759, %v5758
      %v5776 = vpack.c.b16 %v5761, %v5760
      %v5777 = vpack.c.b16 %v5763, %v5762
      %v5778 = vpack.c.b16 %v5765, %v5764
      %v5779 = vpack.c.b16 %v5767, %v5766
      %v5793 = vsel %vm629, %v5694, 0
      %5795 = vmatpush.bf16.msra.mxu0 %v5775
      %5796 = vmatpush.bf16.msra.mxu0 %v5774
      %5797 = vmatpush.bf16.msra.mxu0 %v5773
      %5798 = vmatpush.bf16.msra.mxu0 %v5772
      %5799 = vmatpush.bf16.msra.mxu0 %v5771
      %5800 = vmatpush.bf16.msra.mxu0 %v5770
      %5801 = vmatpush.bf16.msra.mxu0 %v5769
      %5802 = vmatpush.bf16.msra.mxu0 %v5768
      %5803 = vmatmul.bf16.gmra.mxu0 %v5693
      %v5804 = vpop.f32.mrf.mxu0
      %v5805 = vadd.f32 0.0, %v5804
      %v5806 = vpop.f32.mrf.mxu0
      %v5807 = vadd.f32 0.0, %v5806
      %5808 = vdwg.mxu0
      %5809 = vmatpush.bf16.msra.mxu0 0
      %5810 = vmatpush.bf16.msra.mxu0 0
      %5811 = vmatpush.bf16.msra.mxu0 0
      %5812 = vmatpush.bf16.msra.mxu0 0
      %5813 = vmatpush.bf16.msra.mxu0 %v5779
      %5814 = vmatpush.bf16.msra.mxu0 %v5778
      %5815 = vmatpush.bf16.msra.mxu0 %v5777
      %5816 = vmatpush.bf16.msra.mxu0 %v5776
      %5817 = vmatmul.bf16.gmra.mxu0 %v5793
      %v5818 = vpop.f32.mrf.mxu0
      %v5819 = vadd.f32 %v5805, %v5818
      %v5820 = vpop.f32.mrf.mxu0
      %v5821 = vadd.f32 %v5807, %v5820
      %5822 = vdwg.mxu0
      %v5823 = vadd.f32 %v5666, %v5819
      %v5824 = vadd.f32 %v5668, %v5821
      %5825 = vst.msk [vmem:[#allocation3] sm:$0xff] %vm629, %v5823
      %5826 = vst.msk [vmem:[#allocation3 + $0x8] sm:$0xff] %vm629, %v5824
      %v5827 = vld [vmem:[#allocation3] ss:$2 sm:$0xff]
      %v5828 = vld [vmem:[%s1686] ss:$2 sm:$0xff]
      %v5829 = vmax.f32 %v5827, %v5828
      %5830 = vst.msk [vmem:[#allocation4] sm:$0xff] %vm629, %v5829
      %v5831 = vld [vmem:[#allocation4] sm:$0x3]
      %v5832 = vld [vmem:[#allocation4 + $0x2] sm:$0x3]
      %v5833 = vmax.f32 %v5831, %v5832
      %vm5834 = vcmask 517120
      %5835 = vst.msk [vmem:[#allocation5] sm:$0x3] %vm5834, %v5833
      %v5836 = vld [vmem:[#allocation4 + $0x4] sm:$0x3]
      %v5837 = vld [vmem:[#allocation4 + $0x6] sm:$0x3]
      %v5838 = vmax.f32 %v5836, %v5837
      %5839 = vst.msk [vmem:[#allocation5 + $0x2] sm:$0x3] %vm5834, %v5838
      %v5840 = vld [vmem:[#allocation5] sm:$0xf]
      %v5841 = vperm.slane %v5326, 0
      %v5842 = vadd.f32 %v5840, %v5841
      %v5843 = vmax.f32 %v5842, 0.0
      %v5845 = vrot.slane %v5843, 1
      %5846 = vrot.lane.b32.xlu0 %v5845, 64
      %v5847 = vpop.permute.xlu0 %5846
      %v5849 = vrot.slane %v5843, 2
      %v5851 = vrot.slane %v5843, 3
      %5852 = vrot.lane.b32.xlu0 %v5851, 64
      %v5853 = vpop.permute.xlu0 %5852
      %v5855 = vsel %vm629, %v5843, %v5847
      %v5856 = vsel %vm629, %v5849, %v5853
      %v5857 = vld [vmem:[%s6] sm:$0xff]
      %v5858 = vld [vmem:[%s6 + $0x8] sm:$0xff]
      %v5859 = vld [vmem:[%s6 + $0x10] sm:$0xff]
      %v5860 = vld [vmem:[%s6 + $0x18] sm:$0xff]
      %v5861 = vld [vmem:[%s6 + $0x20] sm:$0xff]
      %v5862 = vld [vmem:[%s6 + $0x28] sm:$0xff]
      %v5863 = vld [vmem:[%s6 + $0x30] sm:$0xff]
      %v5864 = vld [vmem:[%s6 + $0x38] sm:$0xff]
      %v5865 = vld [vmem:[%s6 + $0x40] sm:$0xff]
      %v5866 = vld [vmem:[%s6 + $0x48] sm:$0xff]
      %v5867 = vld [vmem:[%s6 + $0x50] sm:$0xff]
      %v5868 = vld [vmem:[%s6 + $0x58] sm:$0xff]
      %v5869 = vld [vmem:[%s6 + $0x60] sm:$0xff]
      %v5870 = vld [vmem:[%s6 + $0x68] sm:$0xff]
      %v5871 = vld [vmem:[%s6 + $0x70] sm:$0xff]
      %v5872 = vld [vmem:[%s6 + $0x78] sm:$0xff]
      %v5873 = vld [vmem:[%s6 + $0x80] sm:$0xff]
      %v5874 = vld [vmem:[%s6 + $0x88] sm:$0xff]
      %v5875 = vld [vmem:[%s6 + $0x90] sm:$0xff]
      %v5876 = vld [vmem:[%s6 + $0x98] sm:$0xff]
      %v5877 = vld [vmem:[%s6 + $0xa0] sm:$0xff]
      %v5878 = vld [vmem:[%s6 + $0xa8] sm:$0xff]
      %v5879 = vld [vmem:[%s6 + $0xb0] sm:$0xff]
      %v5880 = vld [vmem:[%s6 + $0xb8] sm:$0xff]
      %v5881 = vld [vmem:[%s6 + $0xc0] sm:$0xff]
      %v5882 = vld [vmem:[%s6 + $0xc8] sm:$0xff]
      %v5883 = vld [vmem:[%s6 + $0xd0] sm:$0xff]
      %v5884 = vld [vmem:[%s6 + $0xd8] sm:$0xff]
      %v5885 = vld [vmem:[%s6 + $0xe0] sm:$0xff]
      %v5886 = vld [vmem:[%s6 + $0xe8] sm:$0xff]
      %v5887 = vld [vmem:[%s6 + $0xf0] sm:$0xff]
      %v5888 = vld [vmem:[%s6 + $0xf8] sm:$0xff]
      %v5889 = vld [vmem:[%s7] sm:$0x1]
      %5890 = vmatpush.msra.mxu0 %v5872
      %5891 = vmatpush.msra.mxu0 %v5871
      %5892 = vmatpush.msra.mxu0 %v5870
      %5893 = vmatpush.msra.mxu0 %v5869
      %5894 = vmatpush.msra.mxu0 %v5868
      %5895 = vmatpush.msra.mxu0 %v5867
      %5896 = vmatpush.msra.mxu0 %v5866
      %5897 = vmatpush.msra.mxu0 %v5865
      %5898 = vmatpush.msra.mxu0 %v5864
      %5899 = vmatpush.msra.mxu0 %v5863
      %5900 = vmatpush.msra.mxu0 %v5862
      %5901 = vmatpush.msra.mxu0 %v5861
      %5902 = vmatpush.msra.mxu0 %v5860
      %5903 = vmatpush.msra.mxu0 %v5859
      %5904 = vmatpush.msra.mxu0 %v5858
      %5905 = vmatpush.msra.mxu0 %v5857
      %5906 = vmatmul.f32.gmra.mxu0 %v5855
      %v5907 = vpop.f32.mrf.mxu0
      %v5908 = vadd.f32 %v5889, %v5907
      %5909 = vdwg.mxu0
      %5910 = vmatpush.msra.mxu0 %v5888
      %5911 = vmatpush.msra.mxu0 %v5887
      %5912 = vmatpush.msra.mxu0 %v5886
      %5913 = vmatpush.msra.mxu0 %v5885
      %5914 = vmatpush.msra.mxu0 %v5884
      %5915 = vmatpush.msra.mxu0 %v5883
      %5916 = vmatpush.msra.mxu0 %v5882
      %5917 = vmatpush.msra.mxu0 %v5881
      %5918 = vmatpush.msra.mxu0 %v5880
      %5919 = vmatpush.msra.mxu0 %v5879
      %5920 = vmatpush.msra.mxu0 %v5878
      %5921 = vmatpush.msra.mxu0 %v5877
      %5922 = vmatpush.msra.mxu0 %v5876
      %5923 = vmatpush.msra.mxu0 %v5875
      %5924 = vmatpush.msra.mxu0 %v5874
      %5925 = vmatpush.msra.mxu0 %v5873
      %5926 = vmatmul.f32.gmra.mxu0 %v5856
      %v5927 = vpop.f32.mrf.mxu0
      %v5928 = vadd.f32 %v5908, %v5927
      %5929 = vdwg.mxu0
      %v5930 = vld [vmem:[%s8] sm:$0xff]
      %v5931 = vld [vmem:[%s8 + $0x8] sm:$0xff]
      %v5932 = vld [vmem:[%s8 + $0x10] sm:$0xff]
      %v5933 = vld [vmem:[%s8 + $0x18] sm:$0xff]
      %v5934 = vld [vmem:[%s8 + $0x20] sm:$0xff]
      %v5935 = vld [vmem:[%s8 + $0x28] sm:$0xff]
      %v5936 = vld [vmem:[%s8 + $0x30] sm:$0xff]
      %v5937 = vld [vmem:[%s8 + $0x38] sm:$0xff]
      %v5938 = vld [vmem:[%s8 + $0x40] sm:$0xff]
      %v5939 = vld [vmem:[%s8 + $0x48] sm:$0xff]
      %v5940 = vld [vmem:[%s8 + $0x50] sm:$0xff]
      %v5941 = vld [vmem:[%s8 + $0x58] sm:$0xff]
      %v5942 = vld [vmem:[%s8 + $0x60] sm:$0xff]
      %v5943 = vld [vmem:[%s8 + $0x68] sm:$0xff]
      %v5944 = vld [vmem:[%s8 + $0x70] sm:$0xff]
      %v5945 = vld [vmem:[%s8 + $0x78] sm:$0xff]
      %v5946 = vld [vmem:[%s9] sm:$0x1]
      %5947 = vmatpush.msra.mxu0 %v5945
      %5948 = vmatpush.msra.mxu0 %v5944
      %5949 = vmatpush.msra.mxu0 %v5943
      %5950 = vmatpush.msra.mxu0 %v5942
      %5951 = vmatpush.msra.mxu0 %v5941
      %5952 = vmatpush.msra.mxu0 %v5940
      %5953 = vmatpush.msra.mxu0 %v5939
      %5954 = vmatpush.msra.mxu0 %v5938
      %5955 = vmatpush.msra.mxu0 %v5937
      %5956 = vmatpush.msra.mxu0 %v5936
      %5957 = vmatpush.msra.mxu0 %v5935
      %5958 = vmatpush.msra.mxu0 %v5934
      %5959 = vmatpush.msra.mxu0 %v5933
      %5960 = vmatpush.msra.mxu0 %v5932
      %5961 = vmatpush.msra.mxu0 %v5931
      %5962 = vmatpush.msra.mxu0 %v5930
      %5963 = vmatmul.f32.gmra.mxu0 %v5928
      %v5964 = vpop.f32.mrf.mxu0
      %v5965 = vadd.f32 %v5946, %v5964
      %5966 = vdwg.mxu0
      %vm5967 = vcmask 114688
      %5968 = vst.msk [vmem:[%s355] sm:$0x1] %vm5967, %v5965
      %p5969 = scmp.lt.s32.totalorder %s21, 1
      %s5970 = scalar_select %p5969, %s21, 1
      %s5971 = scalar_lea.vmem %s10, %s5970
      // Predicated region
      $region61: #{_lambda_.1} parent=59 // pred_check
        %p5972 = pneg %p254
      $region62: #{_lambda_.1} parent=59 // pred_check_branch
        %5974 = sbr.rel (%p5972) target = $region64
      $region63: #{_lambda_.1} parent=59 // pred_region
        _
      $region64: #{_lambda_.1} parent=59 // pred_fallthru
        _
    $region60: #{_lambda_.1} parent=5 // pred_fallthru
      _
    %p5975 = scmp.le.s32.totalorder 2, %s16
    // Predicated region
    $region65: #{_lambda_.1} parent=5 // pred_check
      %p5976 = pneg %p5975
    $region66: #{_lambda_.1} parent=5 // pred_check_branch
      %5978 = sbr.rel (%p5976) target = $region68
    $region67: #{_lambda_.1} parent=5 // pred_region
      %s5979 = ssub.s32 %s16, 2
      // Predicated region
      $region69: #{_lambda_.1} parent=67 // pred_check
        %p5980 = pneg %p260
      $region70: #{_lambda_.1} parent=67 // pred_check_branch
        %5982 = sbr.rel (%p5980) target = $region72
      $region71: #{_lambda_.1} parent=67 // pred_region
        %p5983 = scmp.lt.s32.totalorder %s22, 1
        %s5984 = scalar_select %p5983, %s22, 1
        %s5985 = scalar_lea.vmem %s10, %s5984
      $region72: #{_lambda_.1} parent=67 // pred_fallthru
        _
    $region68: #{_lambda_.1} parent=5 // pred_fallthru
      _
  $region6: #{_lambda_.1} parent=0 // loop_footer
    %s20 = sadd.s32 1, %s16
  $region7: #{_lambda_.1} parent=0 // loop_footer_branch
    %15 = sbr.rel target = $region3
  $region8: #{_lambda_.1} parent=0 // loop_exit
    _

</llo_original>
